<compile_context>
chip_gen: v7x
topology: tpu7x:2x2x1
jax: 0.10.0
libtpu: 0.0.40
codegen_flags: <defaults>
</compile_context>

<pallas_src>
from functools import partial

import jax
import jax.numpy as jnp
import numpy as np
from jax.experimental import pallas as pl
from jax.experimental.pallas import tpu as pltpu

_LANES = 128   # padded lane width for conv outputs / a1 / a2 slots


def _mm(a, b):
    """MXU matmul; weights carry the compute dtype (host-cast), f32 accumulate."""
    return jnp.dot(a.astype(b.dtype), b, preferred_element_type=jnp.float32)


# ---------------------------------------------------------------------------
# The fused kernel (conv1+relu+pool, conv2+relu+pool, fc1, fc2, fc3)
# ---------------------------------------------------------------------------
def _lenet_kernel(x_ref, t1_ref, b1_ref, t2_ref, b2_ref,
                  wf1_ref, bf1_ref, wf2_ref, bf2_ref, wf3_ref, bf3_ref,
                  out_ref, a1_ref, a2_ref):
    k = t1_ref.shape[0]                 # conv kernel size (5)
    tb = out_ref.shape[0]               # samples per grid step
    npad = a1_ref.shape[1]              # 128
    hp1 = a1_ref.shape[0] // tb         # pooled conv1 height (14)
    hp2 = a2_ref.shape[0] // tb         # pooled conv2 height (5)

    def conv_relu_pool(load_slab, t_ref, b_ref, dst_ref, hp):
        """Valid kxk conv + bias + ReLU + 2x2/2 max-pool for TB samples.

        load_slab(kh, ho) -> (ho*TB, K) slab of input rows [kh, kh+ho), rows
        ordered (row, sample).  t_ref[kh] is the merged even|odd banded weight
        (K, 2*128): stride-2 even-W outputs in lanes [0,128), odd in [128,256),
        so max over the two halves is the W pool; the H pool is a max of two
        TB-row-aligned slices.  relu(maxpool(conv)+b) == maxpool(relu(conv+b))
        by monotonicity, so pooling fuses into the conv epilogue exactly.
        """
        ho = 2 * hp
        acc = jnp.zeros((ho * tb, 2 * npad), jnp.float32)
        for kh in range(k):                              # conv = sum over kernel rows
            acc = acc + _mm(load_slab(kh, ho), t_ref[kh])
        for q in range(hp):                              # fused pool + bias + ReLU
            blk = acc[2 * q * tb:(2 * q + 2) * tb, :]
            m = jnp.maximum(blk[:, :npad], blk[:, npad:])        # W pool
            m = jnp.maximum(m[:tb, :], m[tb:, :])                # H pool
            dst_ref[q * tb:(q + 1) * tb, :] = jnp.maximum(m + b_ref[...], 0.0)

    # conv1 -> a1 (14*TB, 128), conv2 -> a2 (5*TB, 128); both live only in VMEM.
    conv_relu_pool(lambda kh, ho: x_ref[0, kh * tb:(kh + ho) * tb, :],
                   t1_ref, b1_ref, a1_ref, hp1)
    conv_relu_pool(lambda kh, ho: a1_ref[kh * tb:(kh + ho) * tb, :],
                   t2_ref, b2_ref, a2_ref, hp2)

    # fc1: 5 accumulating (TB,128)@(128,120) matmuls; the NCHW flatten order and
    # the 128-lane a2 slot layout are baked into wf1 on the host.
    acc = jnp.zeros((tb, wf1_ref.shape[2]), jnp.float32)
    for hh in range(hp2):
        acc = acc + _mm(a2_ref[hh * tb:(hh + 1) * tb, :], wf1_ref[hh])
    h1 = jnp.maximum(acc + bf1_ref[...], 0.0)                        # (TB, 120)
    h2 = jnp.maximum(_mm(h1, wf2_ref[...]) + bf2_ref[...], 0.0)      # (TB, 84)
    y = _mm(h2, wf3_ref[...]) + bf3_ref[...]                         # (TB, ncls)
    out_ref[...] = y.astype(out_ref.dtype)


# ---------------------------------------------------------------------------
# One-time host-side weight repacking (layout plumbing, off the hot path)
# ---------------------------------------------------------------------------
def _merged_toeplitz(w_oihw, w_in, n_out, k_rows, n_pad=_LANES):
    """Banded weight with the stride-2 W-pool folded in.

    T[kh, w*Cin + c, parity*n_pad + p*Cout + co] = w[co, c, kh, w - (2p+parity)]
    so (rows, W_in*Cin) @ T[kh] yields, for every input row, the valid-conv
    outputs at width 2p (lanes [0,n_pad)) and 2p+1 (lanes [n_pad, 2*n_pad)).
    """
    w = np.asarray(w_oihw, np.float32)
    cout, cin, k, _ = w.shape
    t = np.zeros((k, k_rows, 2 * n_pad), np.float32)
    for kh in range(k):
        for kw in range(k):
            blk = w[:, :, kh, kw].T                     # (cin, cout)
            for parity in (0, 1):
                for p in range(n_out):
                    ww = 2 * p + parity + kw
                    if ww >= w_in:
                        continue
                    r0 = ww * cin
                    c0 = parity * n_pad + p * cout
                    t[kh, r0:r0 + cin, c0:c0 + cout] = blk
    return t


def _pad_lanes(v, n_pad=_LANES):
    out = np.zeros((n_pad,), np.float32)
    out[:v.shape[0]] = np.asarray(v, np.float32)
    return out


def prepare_kernel_params(p, h_in=32, w_in=32, compute_dtype=jnp.float32):
    """Repack weights for the kernel.

    compute_dtype=jnp.bfloat16 pre-casts matmul weights on the host for the
    MXU-bound path on v6e/v7x (the kernel then only casts activations; f32
    accumulation is kept).  That path needs a looser tolerance than the f32
    parity check in __main__, so the default stays f32.  Keep f32 on v5e.
    """
    w1 = np.asarray(p["w1"], np.float32)
    w2 = np.asarray(p["w2"], np.float32)
    cout1, cin1, k, _ = w1.shape
    cout2 = w2.shape[0]
    wp1 = (w_in - k + 1) // 2                 # 14
    hp1 = (h_in - k + 1) // 2                 # 14
    wp2 = (wp1 - k + 1) // 2                  # 5
    hp2 = (hp1 - k + 1) // 2                  # 5
    nf1 = p["wf1"].shape[1]

    # Merged even|odd banded conv weights (stride-2 W pool folded in).
    t1 = _merged_toeplitz(w1, w_in, wp1, w_in * cin1)      # (5, 96, 256)
    t2 = _merged_toeplitz(w2, wp1, wp2, _LANES)            # (5, 128, 256); K = padded a1 lanes

    b1 = _pad_lanes(np.tile(np.asarray(p["b1"], np.float32), wp1))[None, :]
    b2 = _pad_lanes(np.tile(np.asarray(p["b2"], np.float32), wp2))[None, :]

    # fc1: group rows per pooled row h, reorder (w, c) to match a2's lane layout
    # (w*Cout2 + c), zero rows at the padded lanes.
    wf1 = np.asarray(p["wf1"], np.float32).reshape(cout2, hp2, wp2, nf1)
    wf1 = wf1.transpose(1, 2, 0, 3).reshape(hp2, wp2 * cout2, nf1)
    wf1p = np.zeros((hp2, _LANES, nf1), np.float32)
    wf1p[:, :wp2 * cout2, :] = wf1

    cd = compute_dtype
    return {
        "t1": jnp.asarray(t1, cd), "b1": jnp.asarray(b1),
        "t2": jnp.asarray(t2, cd), "b2": jnp.asarray(b2),
        "wf1": jnp.asarray(wf1p, cd),
        "bf1": jnp.asarray(p["bf1"], jnp.float32)[None, :],
        "wf2": jnp.asarray(p["wf2"], cd),
        "bf2": jnp.asarray(p["bf2"], jnp.float32)[None, :],
        "wf3": jnp.asarray(p["wf3"], cd),
        "bf3": jnp.asarray(p["bf3"], jnp.float32)[None, :],
    }


# ---------------------------------------------------------------------------
# Forward wrapper: one pallas_call, batch-blocked grid
# ---------------------------------------------------------------------------
@partial(jax.jit, static_argnames=("tb",))
def cifar_lenet_forward(x_nchw, kp, tb=32):
    """tb = samples per grid step (multiple of 8; 16-64 is the sweet spot; keep
    at least 2 grid steps so both v7x TensorCores get work)."""
    assert tb % 8 == 0, "tb must be a multiple of 8 (sublane tile alignment)"
    b, c_in, h_in, w_in = x_nchw.shape
    wc = w_in * c_in
    k = kp["t1"].shape[0]
    npad = kp["b1"].shape[-1]
    ncls = kp["wf3"].shape[1]
    hp1 = (h_in - k + 1) // 2
    hp2 = (hp1 - k + 1) // 2

    nb = pl.cdiv(b, tb)
    b_pad = nb * tb

    # NCHW -> per-block slabs (nb, H*TB, W*C) with rows ordered (h, sample):
    # one-time layout plumbing done by XLA outside the kernel so every in-kernel
    # conv slab is a contiguous, lane-dense 2-D slice.
    xr = jnp.transpose(x_nchw, (0, 2, 3, 1)).reshape(b, h_in, wc)
    if b_pad != b:
        xr = jnp.pad(xr, ((0, b_pad - b), (0, 0), (0, 0)))
    xr = (xr.reshape(nb, tb, h_in, wc)
            .transpose(0, 2, 1, 3)
            .reshape(nb, h_in * tb, wc))

    def resident(arr):                       # whole array, VMEM-resident block
        nd = arr.ndim
        return pl.BlockSpec(arr.shape, lambda i, _z=(0,) * nd: _z)

    flops_per_block = 2 * (
        k * (2 * hp1 * tb) * wc * (2 * npad)          # conv1 banded matmuls
        + k * (2 * hp2 * tb) * npad * (2 * npad)      # conv2 banded matmuls
        + hp2 * tb * npad * kp["wf1"].shape[2]        # fc1
        + tb * kp["wf2"].shape[0] * kp["wf2"].shape[1]
        + tb * kp["wf3"].shape[0] * ncls)
    weight_bytes = sum(int(v.size) * v.dtype.itemsize for v in kp.values())
    cost = pl.CostEstimate(
        flops=int(nb * flops_per_block),
        transcendentals=0,
        bytes_accessed=int(xr.size * 4 + b_pad * ncls * 4 + weight_bytes))

    out = pl.pallas_call(
        _lenet_kernel,
        out_shape=jax.ShapeDtypeStruct((b_pad, ncls), jnp.float32),
        grid_spec=pltpu.PrefetchScalarGridSpec(
            num_scalar_prefetch=0,
            grid=(nb,),
            in_specs=[
                pl.BlockSpec((1, h_in * tb, wc), lambda i: (i, 0, 0)),
                resident(kp["t1"]), resident(kp["b1"]),
                resident(kp["t2"]), resident(kp["b2"]),
                resident(kp["wf1"]), resident(kp["bf1"]),
                resident(kp["wf2"]), resident(kp["bf2"]),
                resident(kp["wf3"]), resident(kp["bf3"]),
            ],
            out_specs=pl.BlockSpec((tb, ncls), lambda i: (i, 0)),
            scratch_shapes=[
                pltpu.VMEM((hp1 * tb, npad), jnp.float32),   # pooled conv1 acts
                pltpu.VMEM((hp2 * tb, npad), jnp.float32),   # pooled conv2 acts
            ],
        ),
        compiler_params=pltpu.CompilerParams(
            dimension_semantics=("parallel",),   # megacore sharding on v7x
        ),
        cost_estimate=cost,
    )(xr, kp["t1"], kp["b1"], kp["t2"], kp["b2"],
      kp["wf1"], kp["bf1"], kp["wf2"], kp["bf2"], kp["wf3"], kp["bf3"])
    return out[:b]


# ---------------------------------------------------------------------------
# Deterministic parameter init (PyTorch-style uniform(-1/sqrt(fan_in))).
# FC weights stored as (in, out), i.e. transpose of torch's Linear.weight.
# ---------------------------------------------------------------------------
def init_params(key, class_num=10):
    ks = jax.random.split(key, 10)

    def u(k, shape, fan_in):
        bound = 1.0 / float(jnp.sqrt(float(fan_in)))
        return jax.random.uniform(k, shape, jnp.float32, -bound, bound)

    return {
        "w1": u(ks[0], (6, 3, 5, 5), 3 * 25),   "b1": u(ks[1], (6,), 3 * 25),
        "w2": u(ks[2], (16, 6, 5, 5), 6 * 25),  "b2": u(ks[3], (16,), 6 * 25),
        "wf1": u(ks[4], (400, 120), 400),       "bf1": u(ks[5], (120,), 400),
        "wf2": u(ks[6], (120, 84), 120),        "bf2": u(ks[7], (84,), 120),
        "wf3": u(ks[8], (84, class_num), 84),   "bf3": u(ks[9], (class_num,), 84),
    }


# ---------------------------------------------------------------------------
# Pure-JAX reference (HIGHEST precision) for the correctness check
# ---------------------------------------------------------------------------
def reference_forward(x_nchw, p):
    hi = jax.lax.Precision.HIGHEST

    def conv(x, w, b):
        dn = jax.lax.conv_dimension_numbers(x.shape, w.shape,
                                            ("NCHW", "OIHW", "NCHW"))
        y = jax.lax.conv_general_dilated(x, w, (1, 1), "VALID",
                                         dimension_numbers=dn, precision=hi)
        return jax.nn.relu(y + b[None, :, None, None])

    def pool(x):
        return jax.lax.reduce_window(x, -jnp.inf, jax.lax.max,
                                     (1, 1, 2, 2), (1, 1, 2, 2), "VALID")

    y = pool(conv(x_nchw, p["w1"], p["b1"]))
    y = pool(conv(y, p["w2"], p["b2"]))
    y = y.reshape(y.shape[0], -1)
    y = jax.nn.relu(jnp.dot(y, p["wf1"], precision=hi) + p["bf1"])
    y = jax.nn.relu(jnp.dot(y, p["wf2"], precision=hi) + p["bf2"])
    return jnp.dot(y, p["wf3"], precision=hi) + p["bf3"]


if __name__ == "__main__":
    key = jax.random.PRNGKey(0)
    k_x, k_p = jax.random.split(key)

    # CifarLeNet requires 32x32x3 input (fc1 expects 16*5*5 features).
    # B=48 with tb=32 exercises both the batch-padding path (48 -> 64) and a
    # 2-step "parallel" grid (both v7x TensorCores active).
    B = 48
    x = jax.random.normal(k_x, (B, 3, 32, 32), dtype=jnp.float32)
    params = init_params(k_p, class_num=10)
    kparams = prepare_kernel_params(params)          # f32 path (exact parity)

    out = jax.block_until_ready(cifar_lenet_forward(x, kparams, tb=32))
    assert out.shape == (B, 10), out.shape

    ref = jax.block_until_ready(reference_forward(x, params))
    err = float(jnp.max(jnp.abs(out - ref)))
    assert jnp.allclose(out, ref, atol=1e-3, rtol=1e-3), ("mismatch", err)

    print("KERNEL_OK")
</pallas_src>

<mosaic_0001>
module attributes {stable_mosaic.version = 11 : i64} {
  func.func @_lenet_kernel(%arg0: i32, %arg1: memref<1x1024x96xf32, #tpu.memory_space<vmem>>, %arg2: memref<5x96x256xf32, #tpu.memory_space<vmem>>, %arg3: memref<1x128xf32, #tpu.memory_space<vmem>>, %arg4: memref<5x128x256xf32, #tpu.memory_space<vmem>>, %arg5: memref<1x128xf32, #tpu.memory_space<vmem>>, %arg6: memref<5x128x120xf32, #tpu.memory_space<vmem>>, %arg7: memref<1x120xf32, #tpu.memory_space<vmem>>, %arg8: memref<120x84xf32, #tpu.memory_space<vmem>>, %arg9: memref<1x84xf32, #tpu.memory_space<vmem>>, %arg10: memref<84x10xf32, #tpu.memory_space<vmem>>, %arg11: memref<1x10xf32, #tpu.memory_space<vmem>>, %arg12: memref<32x10xf32, #tpu.memory_space<vmem>>, %arg13: memref<448x128xf32, #tpu.memory_space<vmem>>, %arg14: memref<160x128xf32, #tpu.memory_space<vmem>>) attributes {dimension_semantics = [#tpu.dimension_semantics<parallel>], iteration_bounds = array<i64: 2>, scalar_prefetch = 0 : i64, scratch_operands = 2 : i64, tpu.core_type = #tpu.core_type<tc>, window_params = [{transform_indices = @transform_0, window_bounds = array<i64: 1, 1024, 96>}, {pipeline_mode = #tpu.pipeline_mode<synchronous>, transform_indices = @transform_1, window_bounds = array<i64: 5, 96, 256>}, {pipeline_mode = #tpu.pipeline_mode<synchronous>, transform_indices = @transform_2, window_bounds = array<i64: 1, 128>}, {pipeline_mode = #tpu.pipeline_mode<synchronous>, transform_indices = @transform_3, window_bounds = array<i64: 5, 128, 256>}, {pipeline_mode = #tpu.pipeline_mode<synchronous>, transform_indices = @transform_4, window_bounds = array<i64: 1, 128>}, {pipeline_mode = #tpu.pipeline_mode<synchronous>, transform_indices = @transform_5, window_bounds = array<i64: 5, 128, 120>}, {pipeline_mode = #tpu.pipeline_mode<synchronous>, transform_indices = @transform_6, window_bounds = array<i64: 1, 120>}, {pipeline_mode = #tpu.pipeline_mode<synchronous>, transform_indices = @transform_7, window_bounds = array<i64: 120, 84>}, {pipeline_mode = #tpu.pipeline_mode<synchronous>, transform_indices = @transform_8, window_bounds = array<i64: 1, 84>}, {pipeline_mode = #tpu.pipeline_mode<synchronous>, transform_indices = @transform_9, window_bounds = array<i64: 84, 10>}, {pipeline_mode = #tpu.pipeline_mode<synchronous>, transform_indices = @transform_10, window_bounds = array<i64: 1, 10>}, {transform_indices = @transform_11, window_bounds = array<i64: 32, 10>}]} {
    %cst = arith.constant 0.000000e+00 : f32
    %0 = vector.broadcast %cst : f32 to vector<896x256xf32>
    %c0 = arith.constant 0 : index
    %c0_0 = arith.constant 0 : index
    %c0_1 = arith.constant 0 : index
    %1 = vector.load %arg1[%c0, %c0_0, %c0_1] : memref<1x1024x96xf32, #tpu.memory_space<vmem>>, vector<1x896x96xf32>
    %2 = vector.shape_cast %1 : vector<1x896x96xf32> to vector<896x96xf32>
    %c0_2 = arith.constant 0 : index
    %c0_3 = arith.constant 0 : index
    %c0_4 = arith.constant 0 : index
    %3 = vector.load %arg2[%c0_2, %c0_3, %c0_4] : memref<5x96x256xf32, #tpu.memory_space<vmem>>, vector<1x96x256xf32>
    %4 = vector.shape_cast %3 : vector<1x96x256xf32> to vector<96x256xf32>
    %cst_5 = arith.constant dense<0.000000e+00> : vector<896x256xf32>
    %5 = tpu.matmul %2, %4, %cst_5 {dimension_numbers = #tpu.dot_dimension_numbers<[1], [0], [0], [1], [0, 0, 1, 1], [], []>} : vector<896x96xf32>, vector<96x256xf32>, vector<896x256xf32> -> vector<896x256xf32>
    %6 = arith.addf %0, %5 : vector<896x256xf32>
    %c0_6 = arith.constant 0 : index
    %c32 = arith.constant 32 : index
    %c0_7 = arith.constant 0 : index
    %7 = vector.load %arg1[%c0_6, %c32, %c0_7] : memref<1x1024x96xf32, #tpu.memory_space<vmem>>, vector<1x896x96xf32>
    %8 = vector.shape_cast %7 : vector<1x896x96xf32> to vector<896x96xf32>
    %c1 = arith.constant 1 : index
    %c0_8 = arith.constant 0 : index
    %c0_9 = arith.constant 0 : index
    %9 = vector.load %arg2[%c1, %c0_8, %c0_9] : memref<5x96x256xf32, #tpu.memory_space<vmem>>, vector<1x96x256xf32>
    %10 = vector.shape_cast %9 : vector<1x96x256xf32> to vector<96x256xf32>
    %cst_10 = arith.constant dense<0.000000e+00> : vector<896x256xf32>
    %11 = tpu.matmul %8, %10, %cst_10 {dimension_numbers = #tpu.dot_dimension_numbers<[1], [0], [0], [1], [0, 0, 1, 1], [], []>} : vector<896x96xf32>, vector<96x256xf32>, vector<896x256xf32> -> vector<896x256xf32>
    %12 = arith.addf %6, %11 : vector<896x256xf32>
    %c0_11 = arith.constant 0 : index
    %c64 = arith.constant 64 : index
    %c0_12 = arith.constant 0 : index
    %13 = vector.load %arg1[%c0_11, %c64, %c0_12] : memref<1x1024x96xf32, #tpu.memory_space<vmem>>, vector<1x896x96xf32>
    %14 = vector.shape_cast %13 : vector<1x896x96xf32> to vector<896x96xf32>
    %c2 = arith.constant 2 : index
    %c0_13 = arith.constant 0 : index
    %c0_14 = arith.constant 0 : index
    %15 = vector.load %arg2[%c2, %c0_13, %c0_14] : memref<5x96x256xf32, #tpu.memory_space<vmem>>, vector<1x96x256xf32>
    %16 = vector.shape_cast %15 : vector<1x96x256xf32> to vector<96x256xf32>
    %cst_15 = arith.constant dense<0.000000e+00> : vector<896x256xf32>
    %17 = tpu.matmul %14, %16, %cst_15 {dimension_numbers = #tpu.dot_dimension_numbers<[1], [0], [0], [1], [0, 0, 1, 1], [], []>} : vector<896x96xf32>, vector<96x256xf32>, vector<896x256xf32> -> vector<896x256xf32>
    %18 = arith.addf %12, %17 : vector<896x256xf32>
    %c0_16 = arith.constant 0 : index
    %c96 = arith.constant 96 : index
    %c0_17 = arith.constant 0 : index
    %19 = vector.load %arg1[%c0_16, %c96, %c0_17] : memref<1x1024x96xf32, #tpu.memory_space<vmem>>, vector<1x896x96xf32>
    %20 = vector.shape_cast %19 : vector<1x896x96xf32> to vector<896x96xf32>
    %c3 = arith.constant 3 : index
    %c0_18 = arith.constant 0 : index
    %c0_19 = arith.constant 0 : index
    %21 = vector.load %arg2[%c3, %c0_18, %c0_19] : memref<5x96x256xf32, #tpu.memory_space<vmem>>, vector<1x96x256xf32>
    %22 = vector.shape_cast %21 : vector<1x96x256xf32> to vector<96x256xf32>
    %cst_20 = arith.constant dense<0.000000e+00> : vector<896x256xf32>
    %23 = tpu.matmul %20, %22, %cst_20 {dimension_numbers = #tpu.dot_dimension_numbers<[1], [0], [0], [1], [0, 0, 1, 1], [], []>} : vector<896x96xf32>, vector<96x256xf32>, vector<896x256xf32> -> vector<896x256xf32>
    %24 = arith.addf %18, %23 : vector<896x256xf32>
    %c0_21 = arith.constant 0 : index
    %c128 = arith.constant 128 : index
    %c0_22 = arith.constant 0 : index
    %25 = vector.load %arg1[%c0_21, %c128, %c0_22] : memref<1x1024x96xf32, #tpu.memory_space<vmem>>, vector<1x896x96xf32>
    %26 = vector.shape_cast %25 : vector<1x896x96xf32> to vector<896x96xf32>
    %c4 = arith.constant 4 : index
    %c0_23 = arith.constant 0 : index
    %c0_24 = arith.constant 0 : index
    %27 = vector.load %arg2[%c4, %c0_23, %c0_24] : memref<5x96x256xf32, #tpu.memory_space<vmem>>, vector<1x96x256xf32>
    %28 = vector.shape_cast %27 : vector<1x96x256xf32> to vector<96x256xf32>
    %cst_25 = arith.constant dense<0.000000e+00> : vector<896x256xf32>
    %29 = tpu.matmul %26, %28, %cst_25 {dimension_numbers = #tpu.dot_dimension_numbers<[1], [0], [0], [1], [0, 0, 1, 1], [], []>} : vector<896x96xf32>, vector<96x256xf32>, vector<896x256xf32> -> vector<896x256xf32>
    %30 = arith.addf %24, %29 : vector<896x256xf32>
    %31 = vector.extract_strided_slice %30 {offsets = [0, 0], sizes = [64, 256], strides = [1, 1]} : vector<896x256xf32> to vector<64x256xf32>
    %32 = vector.extract_strided_slice %31 {offsets = [0, 0], sizes = [64, 128], strides = [1, 1]} : vector<64x256xf32> to vector<64x128xf32>
    %33 = vector.extract_strided_slice %31 {offsets = [0, 128], sizes = [64, 128], strides = [1, 1]} : vector<64x256xf32> to vector<64x128xf32>
    %34 = arith.maximumf %32, %33 : vector<64x128xf32>
    %35 = vector.extract_strided_slice %34 {offsets = [0, 0], sizes = [32, 128], strides = [1, 1]} : vector<64x128xf32> to vector<32x128xf32>
    %36 = vector.extract_strided_slice %34 {offsets = [32, 0], sizes = [32, 128], strides = [1, 1]} : vector<64x128xf32> to vector<32x128xf32>
    %37 = arith.maximumf %35, %36 : vector<32x128xf32>
    %c0_26 = arith.constant 0 : index
    %c0_27 = arith.constant 0 : index
    %38 = vector.load %arg3[%c0_26, %c0_27] : memref<1x128xf32, #tpu.memory_space<vmem>>, vector<1x128xf32>
    %39 = vector.broadcast %38 : vector<1x128xf32> to vector<32x128xf32>
    %40 = arith.addf %37, %39 : vector<32x128xf32>
    %cst_28 = arith.constant 0.000000e+00 : f32
    %41 = vector.broadcast %cst_28 : f32 to vector<32x128xf32>
    %42 = arith.maximumf %40, %41 : vector<32x128xf32>
    %c0_29 = arith.constant 0 : index
    %c0_30 = arith.constant 0 : index
    %43 = vector.load %arg13[%c0_29, %c0_30] : memref<448x128xf32, #tpu.memory_space<vmem>>, vector<32x128xf32>
    tpu.vector_store %arg13[%c0_29, %c0_30], %42 {strides = array<i32>} : memref<448x128xf32, #tpu.memory_space<vmem>>, vector<32x128xf32>,
    %44 = vector.extract_strided_slice %30 {offsets = [64, 0], sizes = [64, 256], strides = [1, 1]} : vector<896x256xf32> to vector<64x256xf32>
    %45 = vector.extract_strided_slice %44 {offsets = [0, 0], sizes = [64, 128], strides = [1, 1]} : vector<64x256xf32> to vector<64x128xf32>
    %46 = vector.extract_strided_slice %44 {offsets = [0, 128], sizes = [64, 128], strides = [1, 1]} : vector<64x256xf32> to vector<64x128xf32>
    %47 = arith.maximumf %45, %46 : vector<64x128xf32>
    %48 = vector.extract_strided_slice %47 {offsets = [0, 0], sizes = [32, 128], strides = [1, 1]} : vector<64x128xf32> to vector<32x128xf32>
    %49 = vector.extract_strided_slice %47 {offsets = [32, 0], sizes = [32, 128], strides = [1, 1]} : vector<64x128xf32> to vector<32x128xf32>
    %50 = arith.maximumf %48, %49 : vector<32x128xf32>
    %c0_31 = arith.constant 0 : index
    %c0_32 = arith.constant 0 : index
    %51 = vector.load %arg3[%c0_31, %c0_32] : memref<1x128xf32, #tpu.memory_space<vmem>>, vector<1x128xf32>
    %52 = vector.broadcast %51 : vector<1x128xf32> to vector<32x128xf32>
    %53 = arith.addf %50, %52 : vector<32x128xf32>
    %cst_33 = arith.constant 0.000000e+00 : f32
    %54 = vector.broadcast %cst_33 : f32 to vector<32x128xf32>
    %55 = arith.maximumf %53, %54 : vector<32x128xf32>
    %c32_34 = arith.constant 32 : index
    %c0_35 = arith.constant 0 : index
    %56 = vector.load %arg13[%c32_34, %c0_35] : memref<448x128xf32, #tpu.memory_space<vmem>>, vector<32x128xf32>
    tpu.vector_store %arg13[%c32_34, %c0_35], %55 {strides = array<i32>} : memref<448x128xf32, #tpu.memory_space<vmem>>, vector<32x128xf32>,
    %57 = vector.extract_strided_slice %30 {offsets = [128, 0], sizes = [64, 256], strides = [1, 1]} : vector<896x256xf32> to vector<64x256xf32>
    %58 = vector.extract_strided_slice %57 {offsets = [0, 0], sizes = [64, 128], strides = [1, 1]} : vector<64x256xf32> to vector<64x128xf32>
    %59 = vector.extract_strided_slice %57 {offsets = [0, 128], sizes = [64, 128], strides = [1, 1]} : vector<64x256xf32> to vector<64x128xf32>
    %60 = arith.maximumf %58, %59 : vector<64x128xf32>
    %61 = vector.extract_strided_slice %60 {offsets = [0, 0], sizes = [32, 128], strides = [1, 1]} : vector<64x128xf32> to vector<32x128xf32>
    %62 = vector.extract_strided_slice %60 {offsets = [32, 0], sizes = [32, 128], strides = [1, 1]} : vector<64x128xf32> to vector<32x128xf32>
    %63 = arith.maximumf %61, %62 : vector<32x128xf32>
    %c0_36 = arith.constant 0 : index
    %c0_37 = arith.constant 0 : index
    %64 = vector.load %arg3[%c0_36, %c0_37] : memref<1x128xf32, #tpu.memory_space<vmem>>, vector<1x128xf32>
    %65 = vector.broadcast %64 : vector<1x128xf32> to vector<32x128xf32>
    %66 = arith.addf %63, %65 : vector<32x128xf32>
    %cst_38 = arith.constant 0.000000e+00 : f32
    %67 = vector.broadcast %cst_38 : f32 to vector<32x128xf32>
    %68 = arith.maximumf %66, %67 : vector<32x128xf32>
    %c64_39 = arith.constant 64 : index
    %c0_40 = arith.constant 0 : index
    %69 = vector.load %arg13[%c64_39, %c0_40] : memref<448x128xf32, #tpu.memory_space<vmem>>, vector<32x128xf32>
    tpu.vector_store %arg13[%c64_39, %c0_40], %68 {strides = array<i32>} : memref<448x128xf32, #tpu.memory_space<vmem>>, vector<32x128xf32>,
    %70 = vector.extract_strided_slice %30 {offsets = [192, 0], sizes = [64, 256], strides = [1, 1]} : vector<896x256xf32> to vector<64x256xf32>
    %71 = vector.extract_strided_slice %70 {offsets = [0, 0], sizes = [64, 128], strides = [1, 1]} : vector<64x256xf32> to vector<64x128xf32>
    %72 = vector.extract_strided_slice %70 {offsets = [0, 128], sizes = [64, 128], strides = [1, 1]} : vector<64x256xf32> to vector<64x128xf32>
    %73 = arith.maximumf %71, %72 : vector<64x128xf32>
    %74 = vector.extract_strided_slice %73 {offsets = [0, 0], sizes = [32, 128], strides = [1, 1]} : vector<64x128xf32> to vector<32x128xf32>
    %75 = vector.extract_strided_slice %73 {offsets = [32, 0], sizes = [32, 128], strides = [1, 1]} : vector<64x128xf32> to vector<32x128xf32>
    %76 = arith.maximumf %74, %75 : vector<32x128xf32>
    %c0_41 = arith.constant 0 : index
    %c0_42 = arith.constant 0 : index
    %77 = vector.load %arg3[%c0_41, %c0_42] : memref<1x128xf32, #tpu.memory_space<vmem>>, vector<1x128xf32>
    %78 = vector.broadcast %77 : vector<1x128xf32> to vector<32x128xf32>
    %79 = arith.addf %76, %78 : vector<32x128xf32>
    %cst_43 = arith.constant 0.000000e+00 : f32
    %80 = vector.broadcast %cst_43 : f32 to vector<32x128xf32>
    %81 = arith.maximumf %79, %80 : vector<32x128xf32>
    %c96_44 = arith.constant 96 : index
    %c0_45 = arith.constant 0 : index
    %82 = vector.load %arg13[%c96_44, %c0_45] : memref<448x128xf32, #tpu.memory_space<vmem>>, vector<32x128xf32>
    tpu.vector_store %arg13[%c96_44, %c0_45], %81 {strides = array<i32>} : memref<448x128xf32, #tpu.memory_space<vmem>>, vector<32x128xf32>,
    %83 = vector.extract_strided_slice %30 {offsets = [256, 0], sizes = [64, 256], strides = [1, 1]} : vector<896x256xf32> to vector<64x256xf32>
    %84 = vector.extract_strided_slice %83 {offsets = [0, 0], sizes = [64, 128], strides = [1, 1]} : vector<64x256xf32> to vector<64x128xf32>
    %85 = vector.extract_strided_slice %83 {offsets = [0, 128], sizes = [64, 128], strides = [1, 1]} : vector<64x256xf32> to vector<64x128xf32>
    %86 = arith.maximumf %84, %85 : vector<64x128xf32>
    %87 = vector.extract_strided_slice %86 {offsets = [0, 0], sizes = [32, 128], strides = [1, 1]} : vector<64x128xf32> to vector<32x128xf32>
    %88 = vector.extract_strided_slice %86 {offsets = [32, 0], sizes = [32, 128], strides = [1, 1]} : vector<64x128xf32> to vector<32x128xf32>
    %89 = arith.maximumf %87, %88 : vector<32x128xf32>
    %c0_46 = arith.constant 0 : index
    %c0_47 = arith.constant 0 : index
    %90 = vector.load %arg3[%c0_46, %c0_47] : memref<1x128xf32, #tpu.memory_space<vmem>>, vector<1x128xf32>
    %91 = vector.broadcast %90 : vector<1x128xf32> to vector<32x128xf32>
    %92 = arith.addf %89, %91 : vector<32x128xf32>
    %cst_48 = arith.constant 0.000000e+00 : f32
    %93 = vector.broadcast %cst_48 : f32 to vector<32x128xf32>
    %94 = arith.maximumf %92, %93 : vector<32x128xf32>
    %c128_49 = arith.constant 128 : index
    %c0_50 = arith.constant 0 : index
    %95 = vector.load %arg13[%c128_49, %c0_50] : memref<448x128xf32, #tpu.memory_space<vmem>>, vector<32x128xf32>
    tpu.vector_store %arg13[%c128_49, %c0_50], %94 {strides = array<i32>} : memref<448x128xf32, #tpu.memory_space<vmem>>, vector<32x128xf32>,
    %96 = vector.extract_strided_slice %30 {offsets = [320, 0], sizes = [64, 256], strides = [1, 1]} : vector<896x256xf32> to vector<64x256xf32>
    %97 = vector.extract_strided_slice %96 {offsets = [0, 0], sizes = [64, 128], strides = [1, 1]} : vector<64x256xf32> to vector<64x128xf32>
    %98 = vector.extract_strided_slice %96 {offsets = [0, 128], sizes = [64, 128], strides = [1, 1]} : vector<64x256xf32> to vector<64x128xf32>
    %99 = arith.maximumf %97, %98 : vector<64x128xf32>
    %100 = vector.extract_strided_slice %99 {offsets = [0, 0], sizes = [32, 128], strides = [1, 1]} : vector<64x128xf32> to vector<32x128xf32>
    %101 = vector.extract_strided_slice %99 {offsets = [32, 0], sizes = [32, 128], strides = [1, 1]} : vector<64x128xf32> to vector<32x128xf32>
    %102 = arith.maximumf %100, %101 : vector<32x128xf32>
    %c0_51 = arith.constant 0 : index
    %c0_52 = arith.constant 0 : index
    %103 = vector.load %arg3[%c0_51, %c0_52] : memref<1x128xf32, #tpu.memory_space<vmem>>, vector<1x128xf32>
    %104 = vector.broadcast %103 : vector<1x128xf32> to vector<32x128xf32>
    %105 = arith.addf %102, %104 : vector<32x128xf32>
    %cst_53 = arith.constant 0.000000e+00 : f32
    %106 = vector.broadcast %cst_53 : f32 to vector<32x128xf32>
    %107 = arith.maximumf %105, %106 : vector<32x128xf32>
    %c160 = arith.constant 160 : index
    %c0_54 = arith.constant 0 : index
    %108 = vector.load %arg13[%c160, %c0_54] : memref<448x128xf32, #tpu.memory_space<vmem>>, vector<32x128xf32>
    tpu.vector_store %arg13[%c160, %c0_54], %107 {strides = array<i32>} : memref<448x128xf32, #tpu.memory_space<vmem>>, vector<32x128xf32>,
    %109 = vector.extract_strided_slice %30 {offsets = [384, 0], sizes = [64, 256], strides = [1, 1]} : vector<896x256xf32> to vector<64x256xf32>
    %110 = vector.extract_strided_slice %109 {offsets = [0, 0], sizes = [64, 128], strides = [1, 1]} : vector<64x256xf32> to vector<64x128xf32>
    %111 = vector.extract_strided_slice %109 {offsets = [0, 128], sizes = [64, 128], strides = [1, 1]} : vector<64x256xf32> to vector<64x128xf32>
    %112 = arith.maximumf %110, %111 : vector<64x128xf32>
    %113 = vector.extract_strided_slice %112 {offsets = [0, 0], sizes = [32, 128], strides = [1, 1]} : vector<64x128xf32> to vector<32x128xf32>
    %114 = vector.extract_strided_slice %112 {offsets = [32, 0], sizes = [32, 128], strides = [1, 1]} : vector<64x128xf32> to vector<32x128xf32>
    %115 = arith.maximumf %113, %114 : vector<32x128xf32>
    %c0_55 = arith.constant 0 : index
    %c0_56 = arith.constant 0 : index
    %116 = vector.load %arg3[%c0_55, %c0_56] : memref<1x128xf32, #tpu.memory_space<vmem>>, vector<1x128xf32>
    %117 = vector.broadcast %116 : vector<1x128xf32> to vector<32x128xf32>
    %118 = arith.addf %115, %117 : vector<32x128xf32>
    %cst_57 = arith.constant 0.000000e+00 : f32
    %119 = vector.broadcast %cst_57 : f32 to vector<32x128xf32>
    %120 = arith.maximumf %118, %119 : vector<32x128xf32>
    %c192 = arith.constant 192 : index
    %c0_58 = arith.constant 0 : index
    %121 = vector.load %arg13[%c192, %c0_58] : memref<448x128xf32, #tpu.memory_space<vmem>>, vector<32x128xf32>
    tpu.vector_store %arg13[%c192, %c0_58], %120 {strides = array<i32>} : memref<448x128xf32, #tpu.memory_space<vmem>>, vector<32x128xf32>,
    %122 = vector.extract_strided_slice %30 {offsets = [448, 0], sizes = [64, 256], strides = [1, 1]} : vector<896x256xf32> to vector<64x256xf32>
    %123 = vector.extract_strided_slice %122 {offsets = [0, 0], sizes = [64, 128], strides = [1, 1]} : vector<64x256xf32> to vector<64x128xf32>
    %124 = vector.extract_strided_slice %122 {offsets = [0, 128], sizes = [64, 128], strides = [1, 1]} : vector<64x256xf32> to vector<64x128xf32>
    %125 = arith.maximumf %123, %124 : vector<64x128xf32>
    %126 = vector.extract_strided_slice %125 {offsets = [0, 0], sizes = [32, 128], strides = [1, 1]} : vector<64x128xf32> to vector<32x128xf32>
    %127 = vector.extract_strided_slice %125 {offsets = [32, 0], sizes = [32, 128], strides = [1, 1]} : vector<64x128xf32> to vector<32x128xf32>
    %128 = arith.maximumf %126, %127 : vector<32x128xf32>
    %c0_59 = arith.constant 0 : index
    %c0_60 = arith.constant 0 : index
    %129 = vector.load %arg3[%c0_59, %c0_60] : memref<1x128xf32, #tpu.memory_space<vmem>>, vector<1x128xf32>
    %130 = vector.broadcast %129 : vector<1x128xf32> to vector<32x128xf32>
    %131 = arith.addf %128, %130 : vector<32x128xf32>
    %cst_61 = arith.constant 0.000000e+00 : f32
    %132 = vector.broadcast %cst_61 : f32 to vector<32x128xf32>
    %133 = arith.maximumf %131, %132 : vector<32x128xf32>
    %c224 = arith.constant 224 : index
    %c0_62 = arith.constant 0 : index
    %134 = vector.load %arg13[%c224, %c0_62] : memref<448x128xf32, #tpu.memory_space<vmem>>, vector<32x128xf32>
    tpu.vector_store %arg13[%c224, %c0_62], %133 {strides = array<i32>} : memref<448x128xf32, #tpu.memory_space<vmem>>, vector<32x128xf32>,
    %135 = vector.extract_strided_slice %30 {offsets = [512, 0], sizes = [64, 256], strides = [1, 1]} : vector<896x256xf32> to vector<64x256xf32>
    %136 = vector.extract_strided_slice %135 {offsets = [0, 0], sizes = [64, 128], strides = [1, 1]} : vector<64x256xf32> to vector<64x128xf32>
    %137 = vector.extract_strided_slice %135 {offsets = [0, 128], sizes = [64, 128], strides = [1, 1]} : vector<64x256xf32> to vector<64x128xf32>
    %138 = arith.maximumf %136, %137 : vector<64x128xf32>
    %139 = vector.extract_strided_slice %138 {offsets = [0, 0], sizes = [32, 128], strides = [1, 1]} : vector<64x128xf32> to vector<32x128xf32>
    %140 = vector.extract_strided_slice %138 {offsets = [32, 0], sizes = [32, 128], strides = [1, 1]} : vector<64x128xf32> to vector<32x128xf32>
    %141 = arith.maximumf %139, %140 : vector<32x128xf32>
    %c0_63 = arith.constant 0 : index
    %c0_64 = arith.constant 0 : index
    %142 = vector.load %arg3[%c0_63, %c0_64] : memref<1x128xf32, #tpu.memory_space<vmem>>, vector<1x128xf32>
    %143 = vector.broadcast %142 : vector<1x128xf32> to vector<32x128xf32>
    %144 = arith.addf %141, %143 : vector<32x128xf32>
    %cst_65 = arith.constant 0.000000e+00 : f32
    %145 = vector.broadcast %cst_65 : f32 to vector<32x128xf32>
    %146 = arith.maximumf %144, %145 : vector<32x128xf32>
    %c256 = arith.constant 256 : index
    %c0_66 = arith.constant 0 : index
    %147 = vector.load %arg13[%c256, %c0_66] : memref<448x128xf32, #tpu.memory_space<vmem>>, vector<32x128xf32>
    tpu.vector_store %arg13[%c256, %c0_66], %146 {strides = array<i32>} : memref<448x128xf32, #tpu.memory_space<vmem>>, vector<32x128xf32>,
    %148 = vector.extract_strided_slice %30 {offsets = [576, 0], sizes = [64, 256], strides = [1, 1]} : vector<896x256xf32> to vector<64x256xf32>
    %149 = vector.extract_strided_slice %148 {offsets = [0, 0], sizes = [64, 128], strides = [1, 1]} : vector<64x256xf32> to vector<64x128xf32>
    %150 = vector.extract_strided_slice %148 {offsets = [0, 128], sizes = [64, 128], strides = [1, 1]} : vector<64x256xf32> to vector<64x128xf32>
    %151 = arith.maximumf %149, %150 : vector<64x128xf32>
    %152 = vector.extract_strided_slice %151 {offsets = [0, 0], sizes = [32, 128], strides = [1, 1]} : vector<64x128xf32> to vector<32x128xf32>
    %153 = vector.extract_strided_slice %151 {offsets = [32, 0], sizes = [32, 128], strides = [1, 1]} : vector<64x128xf32> to vector<32x128xf32>
    %154 = arith.maximumf %152, %153 : vector<32x128xf32>
    %c0_67 = arith.constant 0 : index
    %c0_68 = arith.constant 0 : index
    %155 = vector.load %arg3[%c0_67, %c0_68] : memref<1x128xf32, #tpu.memory_space<vmem>>, vector<1x128xf32>
    %156 = vector.broadcast %155 : vector<1x128xf32> to vector<32x128xf32>
    %157 = arith.addf %154, %156 : vector<32x128xf32>
    %cst_69 = arith.constant 0.000000e+00 : f32
    %158 = vector.broadcast %cst_69 : f32 to vector<32x128xf32>
    %159 = arith.maximumf %157, %158 : vector<32x128xf32>
    %c288 = arith.constant 288 : index
    %c0_70 = arith.constant 0 : index
    %160 = vector.load %arg13[%c288, %c0_70] : memref<448x128xf32, #tpu.memory_space<vmem>>, vector<32x128xf32>
    tpu.vector_store %arg13[%c288, %c0_70], %159 {strides = array<i32>} : memref<448x128xf32, #tpu.memory_space<vmem>>, vector<32x128xf32>,
    %161 = vector.extract_strided_slice %30 {offsets = [640, 0], sizes = [64, 256], strides = [1, 1]} : vector<896x256xf32> to vector<64x256xf32>
    %162 = vector.extract_strided_slice %161 {offsets = [0, 0], sizes = [64, 128], strides = [1, 1]} : vector<64x256xf32> to vector<64x128xf32>
    %163 = vector.extract_strided_slice %161 {offsets = [0, 128], sizes = [64, 128], strides = [1, 1]} : vector<64x256xf32> to vector<64x128xf32>
    %164 = arith.maximumf %162, %163 : vector<64x128xf32>
    %165 = vector.extract_strided_slice %164 {offsets = [0, 0], sizes = [32, 128], strides = [1, 1]} : vector<64x128xf32> to vector<32x128xf32>
    %166 = vector.extract_strided_slice %164 {offsets = [32, 0], sizes = [32, 128], strides = [1, 1]} : vector<64x128xf32> to vector<32x128xf32>
    %167 = arith.maximumf %165, %166 : vector<32x128xf32>
    %c0_71 = arith.constant 0 : index
    %c0_72 = arith.constant 0 : index
    %168 = vector.load %arg3[%c0_71, %c0_72] : memref<1x128xf32, #tpu.memory_space<vmem>>, vector<1x128xf32>
    %169 = vector.broadcast %168 : vector<1x128xf32> to vector<32x128xf32>
    %170 = arith.addf %167, %169 : vector<32x128xf32>
    %cst_73 = arith.constant 0.000000e+00 : f32
    %171 = vector.broadcast %cst_73 : f32 to vector<32x128xf32>
    %172 = arith.maximumf %170, %171 : vector<32x128xf32>
    %c320 = arith.constant 320 : index
    %c0_74 = arith.constant 0 : index
    %173 = vector.load %arg13[%c320, %c0_74] : memref<448x128xf32, #tpu.memory_space<vmem>>, vector<32x128xf32>
    tpu.vector_store %arg13[%c320, %c0_74], %172 {strides = array<i32>} : memref<448x128xf32, #tpu.memory_space<vmem>>, vector<32x128xf32>,
    %174 = vector.extract_strided_slice %30 {offsets = [704, 0], sizes = [64, 256], strides = [1, 1]} : vector<896x256xf32> to vector<64x256xf32>
    %175 = vector.extract_strided_slice %174 {offsets = [0, 0], sizes = [64, 128], strides = [1, 1]} : vector<64x256xf32> to vector<64x128xf32>
    %176 = vector.extract_strided_slice %174 {offsets = [0, 128], sizes = [64, 128], strides = [1, 1]} : vector<64x256xf32> to vector<64x128xf32>
    %177 = arith.maximumf %175, %176 : vector<64x128xf32>
    %178 = vector.extract_strided_slice %177 {offsets = [0, 0], sizes = [32, 128], strides = [1, 1]} : vector<64x128xf32> to vector<32x128xf32>
    %179 = vector.extract_strided_slice %177 {offsets = [32, 0], sizes = [32, 128], strides = [1, 1]} : vector<64x128xf32> to vector<32x128xf32>
    %180 = arith.maximumf %178, %179 : vector<32x128xf32>
    %c0_75 = arith.constant 0 : index
    %c0_76 = arith.constant 0 : index
    %181 = vector.load %arg3[%c0_75, %c0_76] : memref<1x128xf32, #tpu.memory_space<vmem>>, vector<1x128xf32>
    %182 = vector.broadcast %181 : vector<1x128xf32> to vector<32x128xf32>
    %183 = arith.addf %180, %182 : vector<32x128xf32>
    %cst_77 = arith.constant 0.000000e+00 : f32
    %184 = vector.broadcast %cst_77 : f32 to vector<32x128xf32>
    %185 = arith.maximumf %183, %184 : vector<32x128xf32>
    %c352 = arith.constant 352 : index
    %c0_78 = arith.constant 0 : index
    %186 = vector.load %arg13[%c352, %c0_78] : memref<448x128xf32, #tpu.memory_space<vmem>>, vector<32x128xf32>
    tpu.vector_store %arg13[%c352, %c0_78], %185 {strides = array<i32>} : memref<448x128xf32, #tpu.memory_space<vmem>>, vector<32x128xf32>,
    %187 = vector.extract_strided_slice %30 {offsets = [768, 0], sizes = [64, 256], strides = [1, 1]} : vector<896x256xf32> to vector<64x256xf32>
    %188 = vector.extract_strided_slice %187 {offsets = [0, 0], sizes = [64, 128], strides = [1, 1]} : vector<64x256xf32> to vector<64x128xf32>
    %189 = vector.extract_strided_slice %187 {offsets = [0, 128], sizes = [64, 128], strides = [1, 1]} : vector<64x256xf32> to vector<64x128xf32>
    %190 = arith.maximumf %188, %189 : vector<64x128xf32>
    %191 = vector.extract_strided_slice %190 {offsets = [0, 0], sizes = [32, 128], strides = [1, 1]} : vector<64x128xf32> to vector<32x128xf32>
    %192 = vector.extract_strided_slice %190 {offsets = [32, 0], sizes = [32, 128], strides = [1, 1]} : vector<64x128xf32> to vector<32x128xf32>
    %193 = arith.maximumf %191, %192 : vector<32x128xf32>
    %c0_79 = arith.constant 0 : index
    %c0_80 = arith.constant 0 : index
    %194 = vector.load %arg3[%c0_79, %c0_80] : memref<1x128xf32, #tpu.memory_space<vmem>>, vector<1x128xf32>
    %195 = vector.broadcast %194 : vector<1x128xf32> to vector<32x128xf32>
    %196 = arith.addf %193, %195 : vector<32x128xf32>
    %cst_81 = arith.constant 0.000000e+00 : f32
    %197 = vector.broadcast %cst_81 : f32 to vector<32x128xf32>
    %198 = arith.maximumf %196, %197 : vector<32x128xf32>
    %c384 = arith.constant 384 : index
    %c0_82 = arith.constant 0 : index
    %199 = vector.load %arg13[%c384, %c0_82] : memref<448x128xf32, #tpu.memory_space<vmem>>, vector<32x128xf32>
    tpu.vector_store %arg13[%c384, %c0_82], %198 {strides = array<i32>} : memref<448x128xf32, #tpu.memory_space<vmem>>, vector<32x128xf32>,
    %200 = vector.extract_strided_slice %30 {offsets = [832, 0], sizes = [64, 256], strides = [1, 1]} : vector<896x256xf32> to vector<64x256xf32>
    %201 = vector.extract_strided_slice %200 {offsets = [0, 0], sizes = [64, 128], strides = [1, 1]} : vector<64x256xf32> to vector<64x128xf32>
    %202 = vector.extract_strided_slice %200 {offsets = [0, 128], sizes = [64, 128], strides = [1, 1]} : vector<64x256xf32> to vector<64x128xf32>
    %203 = arith.maximumf %201, %202 : vector<64x128xf32>
    %204 = vector.extract_strided_slice %203 {offsets = [0, 0], sizes = [32, 128], strides = [1, 1]} : vector<64x128xf32> to vector<32x128xf32>
    %205 = vector.extract_strided_slice %203 {offsets = [32, 0], sizes = [32, 128], strides = [1, 1]} : vector<64x128xf32> to vector<32x128xf32>
    %206 = arith.maximumf %204, %205 : vector<32x128xf32>
    %c0_83 = arith.constant 0 : index
    %c0_84 = arith.constant 0 : index
    %207 = vector.load %arg3[%c0_83, %c0_84] : memref<1x128xf32, #tpu.memory_space<vmem>>, vector<1x128xf32>
    %208 = vector.broadcast %207 : vector<1x128xf32> to vector<32x128xf32>
    %209 = arith.addf %206, %208 : vector<32x128xf32>
    %cst_85 = arith.constant 0.000000e+00 : f32
    %210 = vector.broadcast %cst_85 : f32 to vector<32x128xf32>
    %211 = arith.maximumf %209, %210 : vector<32x128xf32>
    %c416 = arith.constant 416 : index
    %c0_86 = arith.constant 0 : index
    %212 = vector.load %arg13[%c416, %c0_86] : memref<448x128xf32, #tpu.memory_space<vmem>>, vector<32x128xf32>
    tpu.vector_store %arg13[%c416, %c0_86], %211 {strides = array<i32>} : memref<448x128xf32, #tpu.memory_space<vmem>>, vector<32x128xf32>,
    %cst_87 = arith.constant 0.000000e+00 : f32
    %213 = vector.broadcast %cst_87 : f32 to vector<320x256xf32>
    %c0_88 = arith.constant 0 : index
    %c0_89 = arith.constant 0 : index
    %214 = vector.load %arg13[%c0_88, %c0_89] : memref<448x128xf32, #tpu.memory_space<vmem>>, vector<320x128xf32>
    %c0_90 = arith.constant 0 : index
    %c0_91 = arith.constant 0 : index
    %c0_92 = arith.constant 0 : index
    %215 = vector.load %arg4[%c0_90, %c0_91, %c0_92] : memref<5x128x256xf32, #tpu.memory_space<vmem>>, vector<1x128x256xf32>
    %216 = vector.shape_cast %215 : vector<1x128x256xf32> to vector<128x256xf32>
    %cst_93 = arith.constant dense<0.000000e+00> : vector<320x256xf32>
    %217 = tpu.matmul %214, %216, %cst_93 {dimension_numbers = #tpu.dot_dimension_numbers<[1], [0], [0], [1], [0, 0, 1, 1], [], []>} : vector<320x128xf32>, vector<128x256xf32>, vector<320x256xf32> -> vector<320x256xf32>
    %218 = arith.addf %213, %217 : vector<320x256xf32>
    %c32_94 = arith.constant 32 : index
    %c0_95 = arith.constant 0 : index
    %219 = vector.load %arg13[%c32_94, %c0_95] : memref<448x128xf32, #tpu.memory_space<vmem>>, vector<320x128xf32>
    %c1_96 = arith.constant 1 : index
    %c0_97 = arith.constant 0 : index
    %c0_98 = arith.constant 0 : index
    %220 = vector.load %arg4[%c1_96, %c0_97, %c0_98] : memref<5x128x256xf32, #tpu.memory_space<vmem>>, vector<1x128x256xf32>
    %221 = vector.shape_cast %220 : vector<1x128x256xf32> to vector<128x256xf32>
    %cst_99 = arith.constant dense<0.000000e+00> : vector<320x256xf32>
    %222 = tpu.matmul %219, %221, %cst_99 {dimension_numbers = #tpu.dot_dimension_numbers<[1], [0], [0], [1], [0, 0, 1, 1], [], []>} : vector<320x128xf32>, vector<128x256xf32>, vector<320x256xf32> -> vector<320x256xf32>
    %223 = arith.addf %218, %222 : vector<320x256xf32>
    %c64_100 = arith.constant 64 : index
    %c0_101 = arith.constant 0 : index
    %224 = vector.load %arg13[%c64_100, %c0_101] : memref<448x128xf32, #tpu.memory_space<vmem>>, vector<320x128xf32>
    %c2_102 = arith.constant 2 : index
    %c0_103 = arith.constant 0 : index
    %c0_104 = arith.constant 0 : index
    %225 = vector.load %arg4[%c2_102, %c0_103, %c0_104] : memref<5x128x256xf32, #tpu.memory_space<vmem>>, vector<1x128x256xf32>
    %226 = vector.shape_cast %225 : vector<1x128x256xf32> to vector<128x256xf32>
    %cst_105 = arith.constant dense<0.000000e+00> : vector<320x256xf32>
    %227 = tpu.matmul %224, %226, %cst_105 {dimension_numbers = #tpu.dot_dimension_numbers<[1], [0], [0], [1], [0, 0, 1, 1], [], []>} : vector<320x128xf32>, vector<128x256xf32>, vector<320x256xf32> -> vector<320x256xf32>
    %228 = arith.addf %223, %227 : vector<320x256xf32>
    %c96_106 = arith.constant 96 : index
    %c0_107 = arith.constant 0 : index
    %229 = vector.load %arg13[%c96_106, %c0_107] : memref<448x128xf32, #tpu.memory_space<vmem>>, vector<320x128xf32>
    %c3_108 = arith.constant 3 : index
    %c0_109 = arith.constant 0 : index
    %c0_110 = arith.constant 0 : index
    %230 = vector.load %arg4[%c3_108, %c0_109, %c0_110] : memref<5x128x256xf32, #tpu.memory_space<vmem>>, vector<1x128x256xf32>
    %231 = vector.shape_cast %230 : vector<1x128x256xf32> to vector<128x256xf32>
    %cst_111 = arith.constant dense<0.000000e+00> : vector<320x256xf32>
    %232 = tpu.matmul %229, %231, %cst_111 {dimension_numbers = #tpu.dot_dimension_numbers<[1], [0], [0], [1], [0, 0, 1, 1], [], []>} : vector<320x128xf32>, vector<128x256xf32>, vector<320x256xf32> -> vector<320x256xf32>
    %233 = arith.addf %228, %232 : vector<320x256xf32>
    %c128_112 = arith.constant 128 : index
    %c0_113 = arith.constant 0 : index
    %234 = vector.load %arg13[%c128_112, %c0_113] : memref<448x128xf32, #tpu.memory_space<vmem>>, vector<320x128xf32>
    %c4_114 = arith.constant 4 : index
    %c0_115 = arith.constant 0 : index
    %c0_116 = arith.constant 0 : index
    %235 = vector.load %arg4[%c4_114, %c0_115, %c0_116] : memref<5x128x256xf32, #tpu.memory_space<vmem>>, vector<1x128x256xf32>
    %236 = vector.shape_cast %235 : vector<1x128x256xf32> to vector<128x256xf32>
    %cst_117 = arith.constant dense<0.000000e+00> : vector<320x256xf32>
    %237 = tpu.matmul %234, %236, %cst_117 {dimension_numbers = #tpu.dot_dimension_numbers<[1], [0], [0], [1], [0, 0, 1, 1], [], []>} : vector<320x128xf32>, vector<128x256xf32>, vector<320x256xf32> -> vector<320x256xf32>
    %238 = arith.addf %233, %237 : vector<320x256xf32>
    %239 = vector.extract_strided_slice %238 {offsets = [0, 0], sizes = [64, 256], strides = [1, 1]} : vector<320x256xf32> to vector<64x256xf32>
    %240 = vector.extract_strided_slice %239 {offsets = [0, 0], sizes = [64, 128], strides = [1, 1]} : vector<64x256xf32> to vector<64x128xf32>
    %241 = vector.extract_strided_slice %239 {offsets = [0, 128], sizes = [64, 128], strides = [1, 1]} : vector<64x256xf32> to vector<64x128xf32>
    %242 = arith.maximumf %240, %241 : vector<64x128xf32>
    %243 = vector.extract_strided_slice %242 {offsets = [0, 0], sizes = [32, 128], strides = [1, 1]} : vector<64x128xf32> to vector<32x128xf32>
    %244 = vector.extract_strided_slice %242 {offsets = [32, 0], sizes = [32, 128], strides = [1, 1]} : vector<64x128xf32> to vector<32x128xf32>
    %245 = arith.maximumf %243, %244 : vector<32x128xf32>
    %c0_118 = arith.constant 0 : index
    %c0_119 = arith.constant 0 : index
    %246 = vector.load %arg5[%c0_118, %c0_119] : memref<1x128xf32, #tpu.memory_space<vmem>>, vector<1x128xf32>
    %247 = vector.broadcast %246 : vector<1x128xf32> to vector<32x128xf32>
    %248 = arith.addf %245, %247 : vector<32x128xf32>
    %cst_120 = arith.constant 0.000000e+00 : f32
    %249 = vector.broadcast %cst_120 : f32 to vector<32x128xf32>
    %250 = arith.maximumf %248, %249 : vector<32x128xf32>
    %c0_121 = arith.constant 0 : index
    %c0_122 = arith.constant 0 : index
    %251 = vector.load %arg14[%c0_121, %c0_122] : memref<160x128xf32, #tpu.memory_space<vmem>>, vector<32x128xf32>
    tpu.vector_store %arg14[%c0_121, %c0_122], %250 {strides = array<i32>} : memref<160x128xf32, #tpu.memory_space<vmem>>, vector<32x128xf32>,
    %252 = vector.extract_strided_slice %238 {offsets = [64, 0], sizes = [64, 256], strides = [1, 1]} : vector<320x256xf32> to vector<64x256xf32>
    %253 = vector.extract_strided_slice %252 {offsets = [0, 0], sizes = [64, 128], strides = [1, 1]} : vector<64x256xf32> to vector<64x128xf32>
    %254 = vector.extract_strided_slice %252 {offsets = [0, 128], sizes = [64, 128], strides = [1, 1]} : vector<64x256xf32> to vector<64x128xf32>
    %255 = arith.maximumf %253, %254 : vector<64x128xf32>
    %256 = vector.extract_strided_slice %255 {offsets = [0, 0], sizes = [32, 128], strides = [1, 1]} : vector<64x128xf32> to vector<32x128xf32>
    %257 = vector.extract_strided_slice %255 {offsets = [32, 0], sizes = [32, 128], strides = [1, 1]} : vector<64x128xf32> to vector<32x128xf32>
    %258 = arith.maximumf %256, %257 : vector<32x128xf32>
    %c0_123 = arith.constant 0 : index
    %c0_124 = arith.constant 0 : index
    %259 = vector.load %arg5[%c0_123, %c0_124] : memref<1x128xf32, #tpu.memory_space<vmem>>, vector<1x128xf32>
    %260 = vector.broadcast %259 : vector<1x128xf32> to vector<32x128xf32>
    %261 = arith.addf %258, %260 : vector<32x128xf32>
    %cst_125 = arith.constant 0.000000e+00 : f32
    %262 = vector.broadcast %cst_125 : f32 to vector<32x128xf32>
    %263 = arith.maximumf %261, %262 : vector<32x128xf32>
    %c32_126 = arith.constant 32 : index
    %c0_127 = arith.constant 0 : index
    %264 = vector.load %arg14[%c32_126, %c0_127] : memref<160x128xf32, #tpu.memory_space<vmem>>, vector<32x128xf32>
    tpu.vector_store %arg14[%c32_126, %c0_127], %263 {strides = array<i32>} : memref<160x128xf32, #tpu.memory_space<vmem>>, vector<32x128xf32>,
    %265 = vector.extract_strided_slice %238 {offsets = [128, 0], sizes = [64, 256], strides = [1, 1]} : vector<320x256xf32> to vector<64x256xf32>
    %266 = vector.extract_strided_slice %265 {offsets = [0, 0], sizes = [64, 128], strides = [1, 1]} : vector<64x256xf32> to vector<64x128xf32>
    %267 = vector.extract_strided_slice %265 {offsets = [0, 128], sizes = [64, 128], strides = [1, 1]} : vector<64x256xf32> to vector<64x128xf32>
    %268 = arith.maximumf %266, %267 : vector<64x128xf32>
    %269 = vector.extract_strided_slice %268 {offsets = [0, 0], sizes = [32, 128], strides = [1, 1]} : vector<64x128xf32> to vector<32x128xf32>
    %270 = vector.extract_strided_slice %268 {offsets = [32, 0], sizes = [32, 128], strides = [1, 1]} : vector<64x128xf32> to vector<32x128xf32>
    %271 = arith.maximumf %269, %270 : vector<32x128xf32>
    %c0_128 = arith.constant 0 : index
    %c0_129 = arith.constant 0 : index
    %272 = vector.load %arg5[%c0_128, %c0_129] : memref<1x128xf32, #tpu.memory_space<vmem>>, vector<1x128xf32>
    %273 = vector.broadcast %272 : vector<1x128xf32> to vector<32x128xf32>
    %274 = arith.addf %271, %273 : vector<32x128xf32>
    %cst_130 = arith.constant 0.000000e+00 : f32
    %275 = vector.broadcast %cst_130 : f32 to vector<32x128xf32>
    %276 = arith.maximumf %274, %275 : vector<32x128xf32>
    %c64_131 = arith.constant 64 : index
    %c0_132 = arith.constant 0 : index
    %277 = vector.load %arg14[%c64_131, %c0_132] : memref<160x128xf32, #tpu.memory_space<vmem>>, vector<32x128xf32>
    tpu.vector_store %arg14[%c64_131, %c0_132], %276 {strides = array<i32>} : memref<160x128xf32, #tpu.memory_space<vmem>>, vector<32x128xf32>,
    %278 = vector.extract_strided_slice %238 {offsets = [192, 0], sizes = [64, 256], strides = [1, 1]} : vector<320x256xf32> to vector<64x256xf32>
    %279 = vector.extract_strided_slice %278 {offsets = [0, 0], sizes = [64, 128], strides = [1, 1]} : vector<64x256xf32> to vector<64x128xf32>
    %280 = vector.extract_strided_slice %278 {offsets = [0, 128], sizes = [64, 128], strides = [1, 1]} : vector<64x256xf32> to vector<64x128xf32>
    %281 = arith.maximumf %279, %280 : vector<64x128xf32>
    %282 = vector.extract_strided_slice %281 {offsets = [0, 0], sizes = [32, 128], strides = [1, 1]} : vector<64x128xf32> to vector<32x128xf32>
    %283 = vector.extract_strided_slice %281 {offsets = [32, 0], sizes = [32, 128], strides = [1, 1]} : vector<64x128xf32> to vector<32x128xf32>
    %284 = arith.maximumf %282, %283 : vector<32x128xf32>
    %c0_133 = arith.constant 0 : index
    %c0_134 = arith.constant 0 : index
    %285 = vector.load %arg5[%c0_133, %c0_134] : memref<1x128xf32, #tpu.memory_space<vmem>>, vector<1x128xf32>
    %286 = vector.broadcast %285 : vector<1x128xf32> to vector<32x128xf32>
    %287 = arith.addf %284, %286 : vector<32x128xf32>
    %cst_135 = arith.constant 0.000000e+00 : f32
    %288 = vector.broadcast %cst_135 : f32 to vector<32x128xf32>
    %289 = arith.maximumf %287, %288 : vector<32x128xf32>
    %c96_136 = arith.constant 96 : index
    %c0_137 = arith.constant 0 : index
    %290 = vector.load %arg14[%c96_136, %c0_137] : memref<160x128xf32, #tpu.memory_space<vmem>>, vector<32x128xf32>
    tpu.vector_store %arg14[%c96_136, %c0_137], %289 {strides = array<i32>} : memref<160x128xf32, #tpu.memory_space<vmem>>, vector<32x128xf32>,
    %291 = vector.extract_strided_slice %238 {offsets = [256, 0], sizes = [64, 256], strides = [1, 1]} : vector<320x256xf32> to vector<64x256xf32>
    %292 = vector.extract_strided_slice %291 {offsets = [0, 0], sizes = [64, 128], strides = [1, 1]} : vector<64x256xf32> to vector<64x128xf32>
    %293 = vector.extract_strided_slice %291 {offsets = [0, 128], sizes = [64, 128], strides = [1, 1]} : vector<64x256xf32> to vector<64x128xf32>
    %294 = arith.maximumf %292, %293 : vector<64x128xf32>
    %295 = vector.extract_strided_slice %294 {offsets = [0, 0], sizes = [32, 128], strides = [1, 1]} : vector<64x128xf32> to vector<32x128xf32>
    %296 = vector.extract_strided_slice %294 {offsets = [32, 0], sizes = [32, 128], strides = [1, 1]} : vector<64x128xf32> to vector<32x128xf32>
    %297 = arith.maximumf %295, %296 : vector<32x128xf32>
    %c0_138 = arith.constant 0 : index
    %c0_139 = arith.constant 0 : index
    %298 = vector.load %arg5[%c0_138, %c0_139] : memref<1x128xf32, #tpu.memory_space<vmem>>, vector<1x128xf32>
    %299 = vector.broadcast %298 : vector<1x128xf32> to vector<32x128xf32>
    %300 = arith.addf %297, %299 : vector<32x128xf32>
    %cst_140 = arith.constant 0.000000e+00 : f32
    %301 = vector.broadcast %cst_140 : f32 to vector<32x128xf32>
    %302 = arith.maximumf %300, %301 : vector<32x128xf32>
    %c128_141 = arith.constant 128 : index
    %c0_142 = arith.constant 0 : index
    %303 = vector.load %arg14[%c128_141, %c0_142] : memref<160x128xf32, #tpu.memory_space<vmem>>, vector<32x128xf32>
    tpu.vector_store %arg14[%c128_141, %c0_142], %302 {strides = array<i32>} : memref<160x128xf32, #tpu.memory_space<vmem>>, vector<32x128xf32>,
    %cst_143 = arith.constant 0.000000e+00 : f32
    %304 = vector.broadcast %cst_143 : f32 to vector<32x120xf32>
    %c0_144 = arith.constant 0 : index
    %c0_145 = arith.constant 0 : index
    %305 = vector.load %arg14[%c0_144, %c0_145] : memref<160x128xf32, #tpu.memory_space<vmem>>, vector<32x128xf32>
    %c0_146 = arith.constant 0 : index
    %c0_147 = arith.constant 0 : index
    %c0_148 = arith.constant 0 : index
    %306 = vector.load %arg6[%c0_146, %c0_147, %c0_148] : memref<5x128x120xf32, #tpu.memory_space<vmem>>, vector<1x128x120xf32>
    %307 = vector.shape_cast %306 : vector<1x128x120xf32> to vector<128x120xf32>
    %cst_149 = arith.constant dense<0.000000e+00> : vector<32x120xf32>
    %308 = tpu.matmul %305, %307, %cst_149 {dimension_numbers = #tpu.dot_dimension_numbers<[1], [0], [0], [1], [0, 0, 1, 1], [], []>} : vector<32x128xf32>, vector<128x120xf32>, vector<32x120xf32> -> vector<32x120xf32>
    %309 = arith.addf %304, %308 : vector<32x120xf32>
    %c32_150 = arith.constant 32 : index
    %c0_151 = arith.constant 0 : index
    %310 = vector.load %arg14[%c32_150, %c0_151] : memref<160x128xf32, #tpu.memory_space<vmem>>, vector<32x128xf32>
    %c1_152 = arith.constant 1 : index
    %c0_153 = arith.constant 0 : index
    %c0_154 = arith.constant 0 : index
    %311 = vector.load %arg6[%c1_152, %c0_153, %c0_154] : memref<5x128x120xf32, #tpu.memory_space<vmem>>, vector<1x128x120xf32>
    %312 = vector.shape_cast %311 : vector<1x128x120xf32> to vector<128x120xf32>
    %cst_155 = arith.constant dense<0.000000e+00> : vector<32x120xf32>
    %313 = tpu.matmul %310, %312, %cst_155 {dimension_numbers = #tpu.dot_dimension_numbers<[1], [0], [0], [1], [0, 0, 1, 1], [], []>} : vector<32x128xf32>, vector<128x120xf32>, vector<32x120xf32> -> vector<32x120xf32>
    %314 = arith.addf %309, %313 : vector<32x120xf32>
    %c64_156 = arith.constant 64 : index
    %c0_157 = arith.constant 0 : index
    %315 = vector.load %arg14[%c64_156, %c0_157] : memref<160x128xf32, #tpu.memory_space<vmem>>, vector<32x128xf32>
    %c2_158 = arith.constant 2 : index
    %c0_159 = arith.constant 0 : index
    %c0_160 = arith.constant 0 : index
    %316 = vector.load %arg6[%c2_158, %c0_159, %c0_160] : memref<5x128x120xf32, #tpu.memory_space<vmem>>, vector<1x128x120xf32>
    %317 = vector.shape_cast %316 : vector<1x128x120xf32> to vector<128x120xf32>
    %cst_161 = arith.constant dense<0.000000e+00> : vector<32x120xf32>
    %318 = tpu.matmul %315, %317, %cst_161 {dimension_numbers = #tpu.dot_dimension_numbers<[1], [0], [0], [1], [0, 0, 1, 1], [], []>} : vector<32x128xf32>, vector<128x120xf32>, vector<32x120xf32> -> vector<32x120xf32>
    %319 = arith.addf %314, %318 : vector<32x120xf32>
    %c96_162 = arith.constant 96 : index
    %c0_163 = arith.constant 0 : index
    %320 = vector.load %arg14[%c96_162, %c0_163] : memref<160x128xf32, #tpu.memory_space<vmem>>, vector<32x128xf32>
    %c3_164 = arith.constant 3 : index
    %c0_165 = arith.constant 0 : index
    %c0_166 = arith.constant 0 : index
    %321 = vector.load %arg6[%c3_164, %c0_165, %c0_166] : memref<5x128x120xf32, #tpu.memory_space<vmem>>, vector<1x128x120xf32>
    %322 = vector.shape_cast %321 : vector<1x128x120xf32> to vector<128x120xf32>
    %cst_167 = arith.constant dense<0.000000e+00> : vector<32x120xf32>
    %323 = tpu.matmul %320, %322, %cst_167 {dimension_numbers = #tpu.dot_dimension_numbers<[1], [0], [0], [1], [0, 0, 1, 1], [], []>} : vector<32x128xf32>, vector<128x120xf32>, vector<32x120xf32> -> vector<32x120xf32>
    %324 = arith.addf %319, %323 : vector<32x120xf32>
    %c128_168 = arith.constant 128 : index
    %c0_169 = arith.constant 0 : index
    %325 = vector.load %arg14[%c128_168, %c0_169] : memref<160x128xf32, #tpu.memory_space<vmem>>, vector<32x128xf32>
    %c4_170 = arith.constant 4 : index
    %c0_171 = arith.constant 0 : index
    %c0_172 = arith.constant 0 : index
    %326 = vector.load %arg6[%c4_170, %c0_171, %c0_172] : memref<5x128x120xf32, #tpu.memory_space<vmem>>, vector<1x128x120xf32>
    %327 = vector.shape_cast %326 : vector<1x128x120xf32> to vector<128x120xf32>
    %cst_173 = arith.constant dense<0.000000e+00> : vector<32x120xf32>
    %328 = tpu.matmul %325, %327, %cst_173 {dimension_numbers = #tpu.dot_dimension_numbers<[1], [0], [0], [1], [0, 0, 1, 1], [], []>} : vector<32x128xf32>, vector<128x120xf32>, vector<32x120xf32> -> vector<32x120xf32>
    %329 = arith.addf %324, %328 : vector<32x120xf32>
    %c0_174 = arith.constant 0 : index
    %c0_175 = arith.constant 0 : index
    %330 = vector.load %arg7[%c0_174, %c0_175] : memref<1x120xf32, #tpu.memory_space<vmem>>, vector<1x120xf32>
    %331 = vector.broadcast %330 : vector<1x120xf32> to vector<32x120xf32>
    %332 = arith.addf %329, %331 : vector<32x120xf32>
    %cst_176 = arith.constant 0.000000e+00 : f32
    %333 = vector.broadcast %cst_176 : f32 to vector<32x120xf32>
    %334 = arith.maximumf %332, %333 : vector<32x120xf32>
    %c0_177 = arith.constant 0 : index
    %c0_178 = arith.constant 0 : index
    %335 = vector.load %arg8[%c0_177, %c0_178] : memref<120x84xf32, #tpu.memory_space<vmem>>, vector<120x84xf32>
    %cst_179 = arith.constant dense<0.000000e+00> : vector<32x84xf32>
    %336 = tpu.matmul %334, %335, %cst_179 {dimension_numbers = #tpu.dot_dimension_numbers<[1], [0], [0], [1], [0, 0, 1, 1], [], []>} : vector<32x120xf32>, vector<120x84xf32>, vector<32x84xf32> -> vector<32x84xf32>
    %c0_180 = arith.constant 0 : index
    %c0_181 = arith.constant 0 : index
    %337 = vector.load %arg9[%c0_180, %c0_181] : memref<1x84xf32, #tpu.memory_space<vmem>>, vector<1x84xf32>
    %338 = vector.broadcast %337 : vector<1x84xf32> to vector<32x84xf32>
    %339 = arith.addf %336, %338 : vector<32x84xf32>
    %cst_182 = arith.constant 0.000000e+00 : f32
    %340 = vector.broadcast %cst_182 : f32 to vector<32x84xf32>
    %341 = arith.maximumf %339, %340 : vector<32x84xf32>
    %c0_183 = arith.constant 0 : index
    %c0_184 = arith.constant 0 : index
    %342 = vector.load %arg10[%c0_183, %c0_184] : memref<84x10xf32, #tpu.memory_space<vmem>>, vector<84x10xf32>
    %cst_185 = arith.constant dense<0.000000e+00> : vector<32x10xf32>
    %343 = tpu.matmul %341, %342, %cst_185 {dimension_numbers = #tpu.dot_dimension_numbers<[1], [0], [0], [1], [0, 0, 1, 1], [], []>} : vector<32x84xf32>, vector<84x10xf32>, vector<32x10xf32> -> vector<32x10xf32>
    %c0_186 = arith.constant 0 : index
    %c0_187 = arith.constant 0 : index
    %344 = vector.load %arg11[%c0_186, %c0_187] : memref<1x10xf32, #tpu.memory_space<vmem>>, vector<1x10xf32>
    %345 = vector.broadcast %344 : vector<1x10xf32> to vector<32x10xf32>
    %346 = arith.addf %343, %345 : vector<32x10xf32>
    %c0_188 = arith.constant 0 : index
    %c0_189 = arith.constant 0 : index
    %347 = vector.load %arg12[%c0_188, %c0_189] : memref<32x10xf32, #tpu.memory_space<vmem>>, vector<32x10xf32>
    tpu.vector_store %arg12[%c0_188, %c0_189], %346 {strides = array<i32>} : memref<32x10xf32, #tpu.memory_space<vmem>>, vector<32x10xf32>,
    return
  }
  func.func @transform_0(%arg0: i32) -> (i32, i32, i32) {
    %c0_i32 = arith.constant 0 : i32
    %c0_i32_0 = arith.constant 0 : i32
    %c0_i32_1 = arith.constant 0 : i32
    return %arg0, %c0_i32, %c0_i32_0 : i32, i32, i32
  }
  func.func @transform_1(%arg0: i32) -> (i32, i32, i32) {
    %c0_i32 = arith.constant 0 : i32
    %c0_i32_0 = arith.constant 0 : i32
    %c0_i32_1 = arith.constant 0 : i32
    %c0_i32_2 = arith.constant 0 : i32
    return %c0_i32, %c0_i32_0, %c0_i32_1 : i32, i32, i32
  }
  func.func @transform_2(%arg0: i32) -> (i32, i32) {
    %c0_i32 = arith.constant 0 : i32
    %c0_i32_0 = arith.constant 0 : i32
    %c0_i32_1 = arith.constant 0 : i32
    return %c0_i32, %c0_i32_0 : i32, i32
  }
  func.func @transform_3(%arg0: i32) -> (i32, i32, i32) {
    %c0_i32 = arith.constant 0 : i32
    %c0_i32_0 = arith.constant 0 : i32
    %c0_i32_1 = arith.constant 0 : i32
    %c0_i32_2 = arith.constant 0 : i32
    return %c0_i32, %c0_i32_0, %c0_i32_1 : i32, i32, i32
  }
  func.func @transform_4(%arg0: i32) -> (i32, i32) {
    %c0_i32 = arith.constant 0 : i32
    %c0_i32_0 = arith.constant 0 : i32
    %c0_i32_1 = arith.constant 0 : i32
    return %c0_i32, %c0_i32_0 : i32, i32
  }
  func.func @transform_5(%arg0: i32) -> (i32, i32, i32) {
    %c0_i32 = arith.constant 0 : i32
    %c0_i32_0 = arith.constant 0 : i32
    %c0_i32_1 = arith.constant 0 : i32
    %c0_i32_2 = arith.constant 0 : i32
    return %c0_i32, %c0_i32_0, %c0_i32_1 : i32, i32, i32
  }
  func.func @transform_6(%arg0: i32) -> (i32, i32) {
    %c0_i32 = arith.constant 0 : i32
    %c0_i32_0 = arith.constant 0 : i32
    %c0_i32_1 = arith.constant 0 : i32
    return %c0_i32, %c0_i32_0 : i32, i32
  }
  func.func @transform_7(%arg0: i32) -> (i32, i32) {
    %c0_i32 = arith.constant 0 : i32
    %c0_i32_0 = arith.constant 0 : i32
    %c0_i32_1 = arith.constant 0 : i32
    return %c0_i32, %c0_i32_0 : i32, i32
  }
  func.func @transform_8(%arg0: i32) -> (i32, i32) {
    %c0_i32 = arith.constant 0 : i32
    %c0_i32_0 = arith.constant 0 : i32
    %c0_i32_1 = arith.constant 0 : i32
    return %c0_i32, %c0_i32_0 : i32, i32
  }
  func.func @transform_9(%arg0: i32) -> (i32, i32) {
    %c0_i32 = arith.constant 0 : i32
    %c0_i32_0 = arith.constant 0 : i32
    %c0_i32_1 = arith.constant 0 : i32
    return %c0_i32, %c0_i32_0 : i32, i32
  }
  func.func @transform_10(%arg0: i32) -> (i32, i32) {
    %c0_i32 = arith.constant 0 : i32
    %c0_i32_0 = arith.constant 0 : i32
    %c0_i32_1 = arith.constant 0 : i32
    return %c0_i32, %c0_i32_0 : i32, i32
  }
  func.func @transform_11(%arg0: i32) -> (i32, i32) {
    %c0_i32 = arith.constant 0 : i32
    %c0_i32_0 = arith.constant 0 : i32
    return %arg0, %c0_i32 : i32, i32
  }
}

</mosaic_0001>

<llo_original>
// kernel: cifar_lenet_forward.1
$region0: #{cifar_lenet_forward.1}
  #allocation0 [shape = 'u32[]', space=smem, size = 0x4, offset = 0x4, fixed_abs, tag = 'smem constant byte address 0x4 - core index']
  #allocation1 [shape = 'u32[144,128]{1,0:T(1,128)}', space=vmem, size = 0x12000, scoped, tag = 'internal scratch']
  #allocation2 [shape = 'f32[448,128]{1,0:T(8,128)}', space=vmem, size = 0x38000, scoped, tag = 'scratch operand']
  #allocation3 [shape = 'f32[160,128]{1,0:T(8,128)}', space=vmem, size = 0x14000, scoped, tag = 'scratch operand']
  %s0 = inlined_call_operand.vmem [shape: f32[2,1024,96], index: 0, kind: input, shape index: {}]
  %s1 = inlined_call_operand.vmem [shape: f32[5,96,256], index: 1, kind: input, shape index: {}]
  %s2 = inlined_call_operand.vmem [shape: f32[1,128], index: 2, kind: input, shape index: {}]
  %s3 = inlined_call_operand.vmem [shape: f32[5,128,256], index: 3, kind: input, shape index: {}]
  %s4 = inlined_call_operand.vmem [shape: f32[1,128], index: 4, kind: input, shape index: {}]
  %s5 = inlined_call_operand.vmem [shape: f32[5,128,120], index: 5, kind: input, shape index: {}]
  %s6 = inlined_call_operand.vmem [shape: f32[1,120], index: 6, kind: input, shape index: {}]
  %s7 = inlined_call_operand.vmem [shape: f32[120,84], index: 7, kind: input, shape index: {}]
  %s8 = inlined_call_operand.vmem [shape: f32[1,84], index: 8, kind: input, shape index: {}]
  %s9 = inlined_call_operand.vmem [shape: f32[84,10], index: 9, kind: input, shape index: {}]
  %s10 = inlined_call_operand.vmem [shape: f32[1,10], index: 10, kind: input, shape index: {}]
  %s11 = inlined_call_operand.vmem [shape: f32[64,10], index: 11, kind: output, shape index: {}]
  %s12 = sld [smem:[#allocation0]]
  $region77: #{cifar_lenet_forward.1} parent=0
    _
  %s14 = ssub.s32 1, %s12
  %s15 = scalar_select 0, %s14, %s12
  loop: start=0, step=1, limit=4
  $region2: #{cifar_lenet_forward.1} parent=0 // loop_pre_header
    _
  $region3: #{cifar_lenet_forward.1} parent=0 // loop_header
    %s17 = sphi 0, %s21
    %p18 = scmp.ge.s32.totalorder %s17, 4
    %s27 = sphi 0, %s29
    %s30 = sphi 0, %s27
    %s31 = sphi 0, %s30
    %s47 = sphi 0, %s31
    %s51 = sphi 0, %s51
    %s53 = sphi 0, %s51
    %s54 = sphi 0, %s53
    %s68 = sphi 0, %s54
    %s72 = sphi 0, %s72
    %s74 = sphi 0, %s72
    %s75 = sphi 0, %s74
    %s89 = sphi 0, %s75
    %s93 = sphi 0, %s93
    %s95 = sphi 0, %s93
    %s96 = sphi 0, %s95
    %s110 = sphi 0, %s96
    %s114 = sphi 0, %s114
    %s116 = sphi 0, %s114
    %s117 = sphi 0, %s116
    %s131 = sphi 0, %s117
    %s135 = sphi 0, %s135
    %s137 = sphi 0, %s135
    %s138 = sphi 0, %s137
    %s152 = sphi 0, %s138
    %s156 = sphi 0, %s156
    %s158 = sphi 0, %s156
    %s159 = sphi 0, %s158
    %s173 = sphi 0, %s159
    %s177 = sphi 0, %s177
    %s179 = sphi 0, %s177
    %s180 = sphi 0, %s179
    %s194 = sphi 0, %s180
    %s198 = sphi 0, %s198
    %s200 = sphi 0, %s198
    %s201 = sphi 0, %s200
    %s215 = sphi 0, %s201
    %s219 = sphi 0, %s219
    %s221 = sphi 0, %s219
    %s222 = sphi 0, %s221
    %s236 = sphi 0, %s222
    %s240 = sphi 0, %s240
    %s242 = sphi 0, %s240
    %s243 = sphi 0, %s242
    %s257 = sphi 0, %s243
    %s263 = sphi 0, %s265
    %s266 = sphi 0, %s263
    %s267 = sphi 0, %s266
    %s283 = sphi 0, %s267
  $region4: #{cifar_lenet_forward.1} parent=0 // loop_header_branch
    %20 = sbr.rel (%p18) target = $region8
  $region5: #{cifar_lenet_forward.1} parent=0 // loop_body
    %s22 = ssub.s32 %s17, 1
    %s23 = ssub.s32 %s17, 2
    %s24 = sadd.s32 %s17, 1
    %s25 = ssub.s32 %s17, %s24
    %p26 = scmp.eq.s32.totalorder %s25, 0
    %s28 = sadd.s32 %s27, 1
    %s29 = scalar_select %p26, %s27, %s28
    %p32 = pneg %p26
    %p33 = scmp.eq.s32.totalorder %s17, 1
    %p34 = por %p32, %p33
    %p35 = scmp.ne.s32.totalorder %s27, %s30
    %p36 = scmp.eq.s32.totalorder %s17, 0
    %p37 = por %p35, %p36
    %p38 = scmp.ne.s32.totalorder %s27, %s30
    %p39 = scmp.eq.s32.totalorder %s22, 1
    %p40 = por %p38, %p39
    %p41 = scmp.ne.s32.totalorder %s30, %s31
    %p42 = scmp.eq.s32.totalorder %s22, 0
    %p43 = por %p41, %p42
    %p44 = scmp.ne.s32.totalorder %s30, %s31
    %p45 = scmp.eq.s32.totalorder %s23, 1
    %p46 = por %p44, %p45
    %p48 = scmp.ne.s32.totalorder %s31, %s47
    %p49 = scmp.eq.s32.totalorder %s23, 0
    %p50 = por %p48, %p49
    %s52 = sadd.s32 %s51, 1
    %p55 = scmp.eq.s32.totalorder %s17, 1
    %p56 = scmp.ne.s32.totalorder %s51, %s53
    %p57 = scmp.eq.s32.totalorder %s17, 0
    %p58 = por %p56, %p57
    %p59 = scmp.ne.s32.totalorder %s51, %s53
    %p60 = scmp.eq.s32.totalorder %s22, 1
    %p61 = por %p59, %p60
    %p62 = scmp.ne.s32.totalorder %s53, %s54
    %p63 = scmp.eq.s32.totalorder %s22, 0
    %p64 = por %p62, %p63
    %p65 = scmp.ne.s32.totalorder %s53, %s54
    %p66 = scmp.eq.s32.totalorder %s23, 1
    %p67 = por %p65, %p66
    %p69 = scmp.ne.s32.totalorder %s54, %s68
    %p70 = scmp.eq.s32.totalorder %s23, 0
    %p71 = por %p69, %p70
    %s73 = sadd.s32 %s72, 1
    %p76 = scmp.eq.s32.totalorder %s17, 1
    %p77 = scmp.ne.s32.totalorder %s72, %s74
    %p78 = scmp.eq.s32.totalorder %s17, 0
    %p79 = por %p77, %p78
    %p80 = scmp.ne.s32.totalorder %s72, %s74
    %p81 = scmp.eq.s32.totalorder %s22, 1
    %p82 = por %p80, %p81
    %p83 = scmp.ne.s32.totalorder %s74, %s75
    %p84 = scmp.eq.s32.totalorder %s22, 0
    %p85 = por %p83, %p84
    %p86 = scmp.ne.s32.totalorder %s74, %s75
    %p87 = scmp.eq.s32.totalorder %s23, 1
    %p88 = por %p86, %p87
    %p90 = scmp.ne.s32.totalorder %s75, %s89
    %p91 = scmp.eq.s32.totalorder %s23, 0
    %p92 = por %p90, %p91
    %s94 = sadd.s32 %s93, 1
    %p97 = scmp.eq.s32.totalorder %s17, 1
    %p98 = scmp.ne.s32.totalorder %s93, %s95
    %p99 = scmp.eq.s32.totalorder %s17, 0
    %p100 = por %p98, %p99
    %p101 = scmp.ne.s32.totalorder %s93, %s95
    %p102 = scmp.eq.s32.totalorder %s22, 1
    %p103 = por %p101, %p102
    %p104 = scmp.ne.s32.totalorder %s95, %s96
    %p105 = scmp.eq.s32.totalorder %s22, 0
    %p106 = por %p104, %p105
    %p107 = scmp.ne.s32.totalorder %s95, %s96
    %p108 = scmp.eq.s32.totalorder %s23, 1
    %p109 = por %p107, %p108
    %p111 = scmp.ne.s32.totalorder %s96, %s110
    %p112 = scmp.eq.s32.totalorder %s23, 0
    %p113 = por %p111, %p112
    %s115 = sadd.s32 %s114, 1
    %p118 = scmp.eq.s32.totalorder %s17, 1
    %p119 = scmp.ne.s32.totalorder %s114, %s116
    %p120 = scmp.eq.s32.totalorder %s17, 0
    %p121 = por %p119, %p120
    %p122 = scmp.ne.s32.totalorder %s114, %s116
    %p123 = scmp.eq.s32.totalorder %s22, 1
    %p124 = por %p122, %p123
    %p125 = scmp.ne.s32.totalorder %s116, %s117
    %p126 = scmp.eq.s32.totalorder %s22, 0
    %p127 = por %p125, %p126
    %p128 = scmp.ne.s32.totalorder %s116, %s117
    %p129 = scmp.eq.s32.totalorder %s23, 1
    %p130 = por %p128, %p129
    %p132 = scmp.ne.s32.totalorder %s117, %s131
    %p133 = scmp.eq.s32.totalorder %s23, 0
    %p134 = por %p132, %p133
    %s136 = sadd.s32 %s135, 1
    %p139 = scmp.eq.s32.totalorder %s17, 1
    %p140 = scmp.ne.s32.totalorder %s135, %s137
    %p141 = scmp.eq.s32.totalorder %s17, 0
    %p142 = por %p140, %p141
    %p143 = scmp.ne.s32.totalorder %s135, %s137
    %p144 = scmp.eq.s32.totalorder %s22, 1
    %p145 = por %p143, %p144
    %p146 = scmp.ne.s32.totalorder %s137, %s138
    %p147 = scmp.eq.s32.totalorder %s22, 0
    %p148 = por %p146, %p147
    %p149 = scmp.ne.s32.totalorder %s137, %s138
    %p150 = scmp.eq.s32.totalorder %s23, 1
    %p151 = por %p149, %p150
    %p153 = scmp.ne.s32.totalorder %s138, %s152
    %p154 = scmp.eq.s32.totalorder %s23, 0
    %p155 = por %p153, %p154
    %s157 = sadd.s32 %s156, 1
    %p160 = scmp.eq.s32.totalorder %s17, 1
    %p161 = scmp.ne.s32.totalorder %s156, %s158
    %p162 = scmp.eq.s32.totalorder %s17, 0
    %p163 = por %p161, %p162
    %p164 = scmp.ne.s32.totalorder %s156, %s158
    %p165 = scmp.eq.s32.totalorder %s22, 1
    %p166 = por %p164, %p165
    %p167 = scmp.ne.s32.totalorder %s158, %s159
    %p168 = scmp.eq.s32.totalorder %s22, 0
    %p169 = por %p167, %p168
    %p170 = scmp.ne.s32.totalorder %s158, %s159
    %p171 = scmp.eq.s32.totalorder %s23, 1
    %p172 = por %p170, %p171
    %p174 = scmp.ne.s32.totalorder %s159, %s173
    %p175 = scmp.eq.s32.totalorder %s23, 0
    %p176 = por %p174, %p175
    %s178 = sadd.s32 %s177, 1
    %p181 = scmp.eq.s32.totalorder %s17, 1
    %p182 = scmp.ne.s32.totalorder %s177, %s179
    %p183 = scmp.eq.s32.totalorder %s17, 0
    %p184 = por %p182, %p183
    %p185 = scmp.ne.s32.totalorder %s177, %s179
    %p186 = scmp.eq.s32.totalorder %s22, 1
    %p187 = por %p185, %p186
    %p188 = scmp.ne.s32.totalorder %s179, %s180
    %p189 = scmp.eq.s32.totalorder %s22, 0
    %p190 = por %p188, %p189
    %p191 = scmp.ne.s32.totalorder %s179, %s180
    %p192 = scmp.eq.s32.totalorder %s23, 1
    %p193 = por %p191, %p192
    %p195 = scmp.ne.s32.totalorder %s180, %s194
    %p196 = scmp.eq.s32.totalorder %s23, 0
    %p197 = por %p195, %p196
    %s199 = sadd.s32 %s198, 1
    %p202 = scmp.eq.s32.totalorder %s17, 1
    %p203 = scmp.ne.s32.totalorder %s198, %s200
    %p204 = scmp.eq.s32.totalorder %s17, 0
    %p205 = por %p203, %p204
    %p206 = scmp.ne.s32.totalorder %s198, %s200
    %p207 = scmp.eq.s32.totalorder %s22, 1
    %p208 = por %p206, %p207
    %p209 = scmp.ne.s32.totalorder %s200, %s201
    %p210 = scmp.eq.s32.totalorder %s22, 0
    %p211 = por %p209, %p210
    %p212 = scmp.ne.s32.totalorder %s200, %s201
    %p213 = scmp.eq.s32.totalorder %s23, 1
    %p214 = por %p212, %p213
    %p216 = scmp.ne.s32.totalorder %s201, %s215
    %p217 = scmp.eq.s32.totalorder %s23, 0
    %p218 = por %p216, %p217
    %s220 = sadd.s32 %s219, 1
    %p223 = scmp.eq.s32.totalorder %s17, 1
    %p224 = scmp.ne.s32.totalorder %s219, %s221
    %p225 = scmp.eq.s32.totalorder %s17, 0
    %p226 = por %p224, %p225
    %p227 = scmp.ne.s32.totalorder %s219, %s221
    %p228 = scmp.eq.s32.totalorder %s22, 1
    %p229 = por %p227, %p228
    %p230 = scmp.ne.s32.totalorder %s221, %s222
    %p231 = scmp.eq.s32.totalorder %s22, 0
    %p232 = por %p230, %p231
    %p233 = scmp.ne.s32.totalorder %s221, %s222
    %p234 = scmp.eq.s32.totalorder %s23, 1
    %p235 = por %p233, %p234
    %p237 = scmp.ne.s32.totalorder %s222, %s236
    %p238 = scmp.eq.s32.totalorder %s23, 0
    %p239 = por %p237, %p238
    %s241 = sadd.s32 %s240, 1
    %p244 = scmp.eq.s32.totalorder %s17, 1
    %p245 = scmp.ne.s32.totalorder %s240, %s242
    %p246 = scmp.eq.s32.totalorder %s17, 0
    %p247 = por %p245, %p246
    %p248 = scmp.ne.s32.totalorder %s240, %s242
    %p249 = scmp.eq.s32.totalorder %s22, 1
    %p250 = por %p248, %p249
    %p251 = scmp.ne.s32.totalorder %s242, %s243
    %p252 = scmp.eq.s32.totalorder %s22, 0
    %p253 = por %p251, %p252
    %p254 = scmp.ne.s32.totalorder %s242, %s243
    %p255 = scmp.eq.s32.totalorder %s23, 1
    %p256 = por %p254, %p255
    %p258 = scmp.ne.s32.totalorder %s243, %s257
    %p259 = scmp.eq.s32.totalorder %s23, 0
    %p260 = por %p258, %p259
    %s261 = ssub.s32 %s17, %s24
    %p262 = scmp.eq.s32.totalorder %s261, 0
    %s264 = sadd.s32 %s263, 1
    %s265 = scalar_select %p262, %s263, %s264
    %p268 = pneg %p262
    %p269 = scmp.eq.s32.totalorder %s17, 1
    %p270 = por %p268, %p269
    %p271 = scmp.ne.s32.totalorder %s263, %s266
    %p272 = scmp.eq.s32.totalorder %s17, 0
    %p273 = por %p271, %p272
    %p274 = scmp.ne.s32.totalorder %s263, %s266
    %p275 = scmp.eq.s32.totalorder %s22, 1
    %p276 = por %p274, %p275
    %p277 = scmp.ne.s32.totalorder %s266, %s267
    %p278 = scmp.eq.s32.totalorder %s22, 0
    %p279 = por %p277, %p278
    %p280 = scmp.ne.s32.totalorder %s266, %s267
    %p281 = scmp.eq.s32.totalorder %s23, 1
    %p282 = por %p280, %p281
    %p284 = scmp.ne.s32.totalorder %s267, %s283
    %p285 = scmp.eq.s32.totalorder %s23, 0
    %p286 = por %p284, %p285
    %p287 = scmp.le.s32.totalorder 1, %s17
    %p288 = scmp.lt.s32.totalorder %s17, 3
    %p289 = pnand %p287, %p288
    %p290 = pneg %p289
    // Predicated region
    $region9: #{cifar_lenet_forward.1} parent=5 // pred_check
      _
    $region10: #{cifar_lenet_forward.1} parent=5 // pred_check_branch
      %292 = sbr.rel (%p289) target = $region12
    $region11: #{cifar_lenet_forward.1} parent=5 // pred_region
      %s293 = ssub.s32 %s17, 1
      // Predicated region
      $region13: #{cifar_lenet_forward.1} parent=11 // pred_check
        %p294 = pneg %p64
      $region14: #{cifar_lenet_forward.1} parent=11 // pred_check_branch
        %296 = sbr.rel (%p294) target = $region16
      $region15: #{cifar_lenet_forward.1} parent=11 // pred_region
        _
      $region16: #{cifar_lenet_forward.1} parent=11 // pred_fallthru
        _
      // Predicated region
      $region17: #{cifar_lenet_forward.1} parent=11 // pred_check
        %p297 = pneg %p85
      $region18: #{cifar_lenet_forward.1} parent=11 // pred_check_branch
        %299 = sbr.rel (%p297) target = $region20
      $region19: #{cifar_lenet_forward.1} parent=11 // pred_region
        _
      $region20: #{cifar_lenet_forward.1} parent=11 // pred_fallthru
        _
      // Predicated region
      $region21: #{cifar_lenet_forward.1} parent=11 // pred_check
        %p300 = pneg %p106
      $region22: #{cifar_lenet_forward.1} parent=11 // pred_check_branch
        %302 = sbr.rel (%p300) target = $region24
      $region23: #{cifar_lenet_forward.1} parent=11 // pred_region
        _
      $region24: #{cifar_lenet_forward.1} parent=11 // pred_fallthru
        _
      // Predicated region
      $region25: #{cifar_lenet_forward.1} parent=11 // pred_check
        %p303 = pneg %p127
      $region26: #{cifar_lenet_forward.1} parent=11 // pred_check_branch
        %305 = sbr.rel (%p303) target = $region28
      $region27: #{cifar_lenet_forward.1} parent=11 // pred_region
        _
      $region28: #{cifar_lenet_forward.1} parent=11 // pred_fallthru
        _
      // Predicated region
      $region29: #{cifar_lenet_forward.1} parent=11 // pred_check
        %p306 = pneg %p148
      $region30: #{cifar_lenet_forward.1} parent=11 // pred_check_branch
        %308 = sbr.rel (%p306) target = $region32
      $region31: #{cifar_lenet_forward.1} parent=11 // pred_region
        _
      $region32: #{cifar_lenet_forward.1} parent=11 // pred_fallthru
        _
      // Predicated region
      $region33: #{cifar_lenet_forward.1} parent=11 // pred_check
        %p309 = pneg %p169
      $region34: #{cifar_lenet_forward.1} parent=11 // pred_check_branch
        %311 = sbr.rel (%p309) target = $region36
      $region35: #{cifar_lenet_forward.1} parent=11 // pred_region
        _
      $region36: #{cifar_lenet_forward.1} parent=11 // pred_fallthru
        _
      // Predicated region
      $region37: #{cifar_lenet_forward.1} parent=11 // pred_check
        %p312 = pneg %p190
      $region38: #{cifar_lenet_forward.1} parent=11 // pred_check_branch
        %314 = sbr.rel (%p312) target = $region40
      $region39: #{cifar_lenet_forward.1} parent=11 // pred_region
        _
      $region40: #{cifar_lenet_forward.1} parent=11 // pred_fallthru
        _
      // Predicated region
      $region41: #{cifar_lenet_forward.1} parent=11 // pred_check
        %p315 = pneg %p211
      $region42: #{cifar_lenet_forward.1} parent=11 // pred_check_branch
        %317 = sbr.rel (%p315) target = $region44
      $region43: #{cifar_lenet_forward.1} parent=11 // pred_region
        _
      $region44: #{cifar_lenet_forward.1} parent=11 // pred_fallthru
        _
      // Predicated region
      $region45: #{cifar_lenet_forward.1} parent=11 // pred_check
        %p318 = pneg %p232
      $region46: #{cifar_lenet_forward.1} parent=11 // pred_check_branch
        %320 = sbr.rel (%p318) target = $region48
      $region47: #{cifar_lenet_forward.1} parent=11 // pred_region
        _
      $region48: #{cifar_lenet_forward.1} parent=11 // pred_fallthru
        _
      // Predicated region
      $region49: #{cifar_lenet_forward.1} parent=11 // pred_check
        %p321 = pneg %p253
      $region50: #{cifar_lenet_forward.1} parent=11 // pred_check_branch
        %323 = sbr.rel (%p321) target = $region52
      $region51: #{cifar_lenet_forward.1} parent=11 // pred_region
        _
      $region52: #{cifar_lenet_forward.1} parent=11 // pred_fallthru
        _
    $region12: #{cifar_lenet_forward.1} parent=5 // pred_fallthru
      _
    %p324 = scmp.lt.s32.totalorder %s17, 2
    // Predicated region
    $region53: #{cifar_lenet_forward.1} parent=5 // pred_check
      %p325 = pneg %p324
    $region54: #{cifar_lenet_forward.1} parent=5 // pred_check_branch
      %327 = sbr.rel (%p325) target = $region56
    $region55: #{cifar_lenet_forward.1} parent=5 // pred_region
      // Predicated region
      $region57: #{cifar_lenet_forward.1} parent=55 // pred_check
        %p328 = pneg %p37
      $region58: #{cifar_lenet_forward.1} parent=55 // pred_check_branch
        %330 = sbr.rel (%p328) target = $region60
      $region59: #{cifar_lenet_forward.1} parent=55 // pred_region
        %p331 = scmp.lt.s32.totalorder %s17, 1
        %s332 = scalar_select %p331, %s17, 1
        %s333 = smul.addr %s332, 128
        %s334 = smul.addr %s333, 8
        %s335 = scalar_lea.vmem %s0, %s334
      $region60: #{cifar_lenet_forward.1} parent=55 // pred_fallthru
        _
    $region56: #{cifar_lenet_forward.1} parent=5 // pred_fallthru
      _
    %p336 = scmp.le.s32.totalorder 1, %s17
    %p337 = scmp.lt.s32.totalorder %s17, 3
    %p338 = pnand %p336, %p337
    %p339 = pneg %p338
    // Predicated region
    $region61: #{cifar_lenet_forward.1} parent=5 // pred_check
      _
    $region62: #{cifar_lenet_forward.1} parent=5 // pred_check_branch
      %341 = sbr.rel (%p338) target = $region64
    $region63: #{cifar_lenet_forward.1} parent=5 // pred_region
      %s342 = ssub.s32 %s17, 1
      %p343 = scmp.lt.s32.totalorder %s22, 1
      %s344 = scalar_select %p343, %s22, 1
      %s345 = smul.addr %s344, 128
      %s346 = smul.addr %s345, 8
      %s347 = scalar_lea.vmem %s0, %s346
      %p348 = pneg %p43
      %p349 = pneg %p40
      %p350 = pneg %p64
      %p351 = pneg %p61
      %p352 = pneg %p85
      %p353 = pneg %p82
      %p354 = pneg %p106
      %p355 = pneg %p103
      %p356 = pneg %p127
      %p357 = pneg %p124
      %p358 = pneg %p148
      %p359 = pneg %p145
      %p360 = pneg %p169
      %p361 = pneg %p166
      %p362 = pneg %p190
      %p363 = pneg %p187
      %p364 = pneg %p211
      %p365 = pneg %p208
      %p366 = pneg %p232
      %p367 = pneg %p229
      %p368 = pneg %p253
      %p369 = pneg %p250
      %p370 = pneg %p279
      %p371 = pneg %p276
      %s372 = smul.u32 4, %s22
      %p373 = scmp.lt.s32.totalorder %s372, 7
      %s374 = scalar_select %p373, %s372, 7
      %s375 = smul.addr %s374, 8
      %s376 = scalar_lea.vmem %s11, %s375
      %p377 = scmp.lt.s32.totalorder %s22, 1
      %s378 = scalar_select %p377, %s22, 1
      %s379 = smul.addr %s378, 128
      %s380 = smul.addr %s379, 8
      %s381 = scalar_lea.vmem %s0, %s380
      %s382 = smul.u32 4, %s22
      %p383 = scmp.lt.s32.totalorder %s382, 7
      %s384 = scalar_select %p383, %s382, 7
      %s385 = smul.addr %s384, 8
      %s386 = scalar_lea.vmem %s11, %s385
      %s387 = smul.u32 4, %s22
      %v388 = vld [vmem:[%s381] sm:$0xff]
      %v389 = vld [vmem:[%s381 + $0x8] sm:$0xff]
      %v390 = vld [vmem:[%s381 + $0x10] sm:$0xff]
      %v391 = vld [vmem:[%s381 + $0x18] sm:$0xff]
      %v392 = vld [vmem:[%s381 + $0x20] sm:$0xff]
      %v393 = vld [vmem:[%s381 + $0x28] sm:$0xff]
      %v394 = vld [vmem:[%s381 + $0x30] sm:$0xff]
      %v395 = vld [vmem:[%s381 + $0x38] sm:$0xff]
      %v396 = vld [vmem:[%s381 + $0x40] sm:$0xff]
      %v397 = vld [vmem:[%s381 + $0x48] sm:$0xff]
      %v398 = vld [vmem:[%s381 + $0x50] sm:$0xff]
      %v399 = vld [vmem:[%s381 + $0x58] sm:$0xff]
      %v400 = vld [vmem:[%s381 + $0x60] sm:$0xff]
      %v401 = vld [vmem:[%s381 + $0x68] sm:$0xff]
      %v402 = vld [vmem:[%s381 + $0x70] sm:$0xff]
      %v403 = vld [vmem:[%s381 + $0x78] sm:$0xff]
      %v404 = vld [vmem:[%s381 + $0x80] sm:$0xff]
      %v405 = vld [vmem:[%s381 + $0x88] sm:$0xff]
      %v406 = vld [vmem:[%s381 + $0x90] sm:$0xff]
      %v407 = vld [vmem:[%s381 + $0x98] sm:$0xff]
      %v408 = vld [vmem:[%s381 + $0xa0] sm:$0xff]
      %v409 = vld [vmem:[%s381 + $0xa8] sm:$0xff]
      %v410 = vld [vmem:[%s381 + $0xb0] sm:$0xff]
      %v411 = vld [vmem:[%s381 + $0xb8] sm:$0xff]
      %v412 = vld [vmem:[%s381 + $0xc0] sm:$0xff]
      %v413 = vld [vmem:[%s381 + $0xc8] sm:$0xff]
      %v414 = vld [vmem:[%s381 + $0xd0] sm:$0xff]
      %v415 = vld [vmem:[%s381 + $0xd8] sm:$0xff]
      %v416 = vld [vmem:[%s381 + $0xe0] sm:$0xff]
      %v417 = vld [vmem:[%s381 + $0xe8] sm:$0xff]
      %v418 = vld [vmem:[%s381 + $0xf0] sm:$0xff]
      %v419 = vld [vmem:[%s381 + $0xf8] sm:$0xff]
      %v420 = vld [vmem:[%s381 + $0x100] sm:$0xff]
      %v421 = vld [vmem:[%s381 + $0x108] sm:$0xff]
      %v422 = vld [vmem:[%s381 + $0x110] sm:$0xff]
      %v423 = vld [vmem:[%s381 + $0x118] sm:$0xff]
      %v424 = vld [vmem:[%s381 + $0x120] sm:$0xff]
      %v425 = vld [vmem:[%s381 + $0x128] sm:$0xff]
      %v426 = vld [vmem:[%s381 + $0x130] sm:$0xff]
      %v427 = vld [vmem:[%s381 + $0x138] sm:$0xff]
      %v428 = vld [vmem:[%s381 + $0x140] sm:$0xff]
      %v429 = vld [vmem:[%s381 + $0x148] sm:$0xff]
      %v430 = vld [vmem:[%s381 + $0x150] sm:$0xff]
      %v431 = vld [vmem:[%s381 + $0x158] sm:$0xff]
      %v432 = vld [vmem:[%s381 + $0x160] sm:$0xff]
      %v433 = vld [vmem:[%s381 + $0x168] sm:$0xff]
      %v434 = vld [vmem:[%s381 + $0x170] sm:$0xff]
      %v435 = vld [vmem:[%s381 + $0x178] sm:$0xff]
      %v436 = vld [vmem:[%s381 + $0x180] sm:$0xff]
      %v437 = vld [vmem:[%s381 + $0x188] sm:$0xff]
      %v438 = vld [vmem:[%s381 + $0x190] sm:$0xff]
      %v439 = vld [vmem:[%s381 + $0x198] sm:$0xff]
      %v440 = vld [vmem:[%s381 + $0x1a0] sm:$0xff]
      %v441 = vld [vmem:[%s381 + $0x1a8] sm:$0xff]
      %v442 = vld [vmem:[%s381 + $0x1b0] sm:$0xff]
      %v443 = vld [vmem:[%s381 + $0x1b8] sm:$0xff]
      %v444 = vld [vmem:[%s381 + $0x1c0] sm:$0xff]
      %v445 = vld [vmem:[%s381 + $0x1c8] sm:$0xff]
      %v446 = vld [vmem:[%s381 + $0x1d0] sm:$0xff]
      %v447 = vld [vmem:[%s381 + $0x1d8] sm:$0xff]
      %v448 = vld [vmem:[%s381 + $0x1e0] sm:$0xff]
      %v449 = vld [vmem:[%s381 + $0x1e8] sm:$0xff]
      %v450 = vld [vmem:[%s381 + $0x1f0] sm:$0xff]
      %v451 = vld [vmem:[%s381 + $0x1f8] sm:$0xff]
      %v452 = vld [vmem:[%s381 + $0x200] sm:$0xff]
      %v453 = vld [vmem:[%s381 + $0x208] sm:$0xff]
      %v454 = vld [vmem:[%s381 + $0x210] sm:$0xff]
      %v455 = vld [vmem:[%s381 + $0x218] sm:$0xff]
      %v456 = vld [vmem:[%s381 + $0x220] sm:$0xff]
      %v457 = vld [vmem:[%s381 + $0x228] sm:$0xff]
      %v458 = vld [vmem:[%s381 + $0x230] sm:$0xff]
      %v459 = vld [vmem:[%s381 + $0x238] sm:$0xff]
      %v460 = vld [vmem:[%s381 + $0x240] sm:$0xff]
      %v461 = vld [vmem:[%s381 + $0x248] sm:$0xff]
      %v462 = vld [vmem:[%s381 + $0x250] sm:$0xff]
      %v463 = vld [vmem:[%s381 + $0x258] sm:$0xff]
      %v464 = vld [vmem:[%s381 + $0x260] sm:$0xff]
      %v465 = vld [vmem:[%s381 + $0x268] sm:$0xff]
      %v466 = vld [vmem:[%s381 + $0x270] sm:$0xff]
      %v467 = vld [vmem:[%s381 + $0x278] sm:$0xff]
      %v468 = vld [vmem:[%s381 + $0x280] sm:$0xff]
      %v469 = vld [vmem:[%s381 + $0x288] sm:$0xff]
      %v470 = vld [vmem:[%s381 + $0x290] sm:$0xff]
      %v471 = vld [vmem:[%s381 + $0x298] sm:$0xff]
      %v472 = vld [vmem:[%s381 + $0x2a0] sm:$0xff]
      %v473 = vld [vmem:[%s381 + $0x2a8] sm:$0xff]
      %v474 = vld [vmem:[%s381 + $0x2b0] sm:$0xff]
      %v475 = vld [vmem:[%s381 + $0x2b8] sm:$0xff]
      %v476 = vld [vmem:[%s381 + $0x2c0] sm:$0xff]
      %v477 = vld [vmem:[%s381 + $0x2c8] sm:$0xff]
      %v478 = vld [vmem:[%s381 + $0x2d0] sm:$0xff]
      %v479 = vld [vmem:[%s381 + $0x2d8] sm:$0xff]
      %v480 = vld [vmem:[%s381 + $0x2e0] sm:$0xff]
      %v481 = vld [vmem:[%s381 + $0x2e8] sm:$0xff]
      %v482 = vld [vmem:[%s381 + $0x2f0] sm:$0xff]
      %v483 = vld [vmem:[%s381 + $0x2f8] sm:$0xff]
      %v484 = vld [vmem:[%s381 + $0x300] sm:$0xff]
      %v485 = vld [vmem:[%s381 + $0x308] sm:$0xff]
      %v486 = vld [vmem:[%s381 + $0x310] sm:$0xff]
      %v487 = vld [vmem:[%s381 + $0x318] sm:$0xff]
      %v488 = vld [vmem:[%s381 + $0x320] sm:$0xff]
      %v489 = vld [vmem:[%s381 + $0x328] sm:$0xff]
      %v490 = vld [vmem:[%s381 + $0x330] sm:$0xff]
      %v491 = vld [vmem:[%s381 + $0x338] sm:$0xff]
      %v492 = vld [vmem:[%s381 + $0x340] sm:$0xff]
      %v493 = vld [vmem:[%s381 + $0x348] sm:$0xff]
      %v494 = vld [vmem:[%s381 + $0x350] sm:$0xff]
      %v495 = vld [vmem:[%s381 + $0x358] sm:$0xff]
      %v496 = vld [vmem:[%s381 + $0x360] sm:$0xff]
      %v497 = vld [vmem:[%s381 + $0x368] sm:$0xff]
      %v498 = vld [vmem:[%s381 + $0x370] sm:$0xff]
      %v499 = vld [vmem:[%s381 + $0x378] sm:$0xff]
      %v500 = vld [vmem:[%s1] sm:$0xff]
      %v501 = vld [vmem:[%s1 + $0x8] sm:$0xff]
      %v502 = vld [vmem:[%s1 + $0x10] sm:$0xff]
      %v503 = vld [vmem:[%s1 + $0x18] sm:$0xff]
      %v504 = vld [vmem:[%s1 + $0x20] sm:$0xff]
      %v505 = vld [vmem:[%s1 + $0x28] sm:$0xff]
      %v506 = vld [vmem:[%s1 + $0x30] sm:$0xff]
      %v507 = vld [vmem:[%s1 + $0x38] sm:$0xff]
      %v508 = vld [vmem:[%s1 + $0x40] sm:$0xff]
      %v509 = vld [vmem:[%s1 + $0x48] sm:$0xff]
      %v510 = vld [vmem:[%s1 + $0x50] sm:$0xff]
      %v511 = vld [vmem:[%s1 + $0x58] sm:$0xff]
      %v512 = vld [vmem:[%s1 + $0x60] sm:$0xff]
      %v513 = vld [vmem:[%s1 + $0x68] sm:$0xff]
      %v514 = vld [vmem:[%s1 + $0x70] sm:$0xff]
      %v515 = vld [vmem:[%s1 + $0x78] sm:$0xff]
      %v516 = vld [vmem:[%s1 + $0x80] sm:$0xff]
      %v517 = vld [vmem:[%s1 + $0x88] sm:$0xff]
      %v518 = vld [vmem:[%s1 + $0x90] sm:$0xff]
      %v519 = vld [vmem:[%s1 + $0x98] sm:$0xff]
      %v520 = vld [vmem:[%s1 + $0xa0] sm:$0xff]
      %v521 = vld [vmem:[%s1 + $0xa8] sm:$0xff]
      %v522 = vld [vmem:[%s1 + $0xb0] sm:$0xff]
      %v523 = vld [vmem:[%s1 + $0xb8] sm:$0xff]
      %v524 = vld [vmem:[%s381 + $0x380] sm:$0xff]
      %v525 = vld [vmem:[%s381 + $0x388] sm:$0xff]
      %v526 = vld [vmem:[%s381 + $0x390] sm:$0xff]
      %v527 = vld [vmem:[%s381 + $0x398] sm:$0xff]
      %s528 = scalar_lea.vmem %s1, 192
      %v529 = vld [vmem:[%s528] sm:$0xff]
      %v530 = vld [vmem:[%s528 + $0x8] sm:$0xff]
      %v531 = vld [vmem:[%s528 + $0x10] sm:$0xff]
      %v532 = vld [vmem:[%s528 + $0x18] sm:$0xff]
      %v533 = vld [vmem:[%s528 + $0x20] sm:$0xff]
      %v534 = vld [vmem:[%s528 + $0x28] sm:$0xff]
      %v535 = vld [vmem:[%s528 + $0x30] sm:$0xff]
      %v536 = vld [vmem:[%s528 + $0x38] sm:$0xff]
      %v537 = vld [vmem:[%s528 + $0x40] sm:$0xff]
      %v538 = vld [vmem:[%s528 + $0x48] sm:$0xff]
      %v539 = vld [vmem:[%s528 + $0x50] sm:$0xff]
      %v540 = vld [vmem:[%s528 + $0x58] sm:$0xff]
      %v541 = vld [vmem:[%s528 + $0x60] sm:$0xff]
      %v542 = vld [vmem:[%s528 + $0x68] sm:$0xff]
      %v543 = vld [vmem:[%s528 + $0x70] sm:$0xff]
      %v544 = vld [vmem:[%s528 + $0x78] sm:$0xff]
      %v545 = vld [vmem:[%s528 + $0x80] sm:$0xff]
      %v546 = vld [vmem:[%s528 + $0x88] sm:$0xff]
      %v547 = vld [vmem:[%s528 + $0x90] sm:$0xff]
      %v548 = vld [vmem:[%s528 + $0x98] sm:$0xff]
      %v549 = vld [vmem:[%s528 + $0xa0] sm:$0xff]
      %v550 = vld [vmem:[%s528 + $0xa8] sm:$0xff]
      %v551 = vld [vmem:[%s528 + $0xb0] sm:$0xff]
      %v552 = vld [vmem:[%s528 + $0xb8] sm:$0xff]
      %vm553 = vcmask 785408
      %v555 = vsel %vm553, %v392, 0
      %v558 = vsel %vm553, %v393, 0
      %v561 = vsel %vm553, %v394, 0
      %v564 = vsel %vm553, %v395, 0
      %v567 = vsel %vm553, %v396, 0
      %v570 = vsel %vm553, %v397, 0
      %v573 = vsel %vm553, %v398, 0
      %v576 = vsel %vm553, %v399, 0
      %v579 = vsel %vm553, %v400, 0
      %v582 = vsel %vm553, %v401, 0
      %v585 = vsel %vm553, %v402, 0
      %v588 = vsel %vm553, %v403, 0
      %v591 = vsel %vm553, %v404, 0
      %v594 = vsel %vm553, %v405, 0
      %v597 = vsel %vm553, %v406, 0
      %v600 = vsel %vm553, %v407, 0
      %v603 = vsel %vm553, %v408, 0
      %v606 = vsel %vm553, %v409, 0
      %v609 = vsel %vm553, %v410, 0
      %v612 = vsel %vm553, %v411, 0
      %v615 = vsel %vm553, %v412, 0
      %v618 = vsel %vm553, %v413, 0
      %v621 = vsel %vm553, %v414, 0
      %v624 = vsel %vm553, %v415, 0
      %v627 = vsel %vm553, %v416, 0
      %v630 = vsel %vm553, %v417, 0
      %v633 = vsel %vm553, %v418, 0
      %v636 = vsel %vm553, %v419, 0
      %v639 = vsel %vm553, %v420, 0
      %v642 = vsel %vm553, %v421, 0
      %v645 = vsel %vm553, %v422, 0
      %v648 = vsel %vm553, %v423, 0
      %v651 = vsel %vm553, %v424, 0
      %v654 = vsel %vm553, %v425, 0
      %v657 = vsel %vm553, %v426, 0
      %v660 = vsel %vm553, %v427, 0
      %v663 = vsel %vm553, %v428, 0
      %v666 = vsel %vm553, %v429, 0
      %v669 = vsel %vm553, %v430, 0
      %v672 = vsel %vm553, %v431, 0
      %v675 = vsel %vm553, %v432, 0
      %v678 = vsel %vm553, %v433, 0
      %v681 = vsel %vm553, %v434, 0
      %v684 = vsel %vm553, %v435, 0
      %v687 = vsel %vm553, %v436, 0
      %v690 = vsel %vm553, %v437, 0
      %v693 = vsel %vm553, %v438, 0
      %v696 = vsel %vm553, %v439, 0
      %v699 = vsel %vm553, %v440, 0
      %v702 = vsel %vm553, %v441, 0
      %v705 = vsel %vm553, %v442, 0
      %v708 = vsel %vm553, %v443, 0
      %v711 = vsel %vm553, %v444, 0
      %v714 = vsel %vm553, %v445, 0
      %v717 = vsel %vm553, %v446, 0
      %v720 = vsel %vm553, %v447, 0
      %v723 = vsel %vm553, %v448, 0
      %v726 = vsel %vm553, %v449, 0
      %v729 = vsel %vm553, %v450, 0
      %v732 = vsel %vm553, %v451, 0
      %v735 = vsel %vm553, %v452, 0
      %v738 = vsel %vm553, %v453, 0
      %v741 = vsel %vm553, %v454, 0
      %v744 = vsel %vm553, %v455, 0
      %v747 = vsel %vm553, %v456, 0
      %v750 = vsel %vm553, %v457, 0
      %v753 = vsel %vm553, %v458, 0
      %v756 = vsel %vm553, %v459, 0
      %v759 = vsel %vm553, %v460, 0
      %v762 = vsel %vm553, %v461, 0
      %v765 = vsel %vm553, %v462, 0
      %v768 = vsel %vm553, %v463, 0
      %v771 = vsel %vm553, %v464, 0
      %v774 = vsel %vm553, %v465, 0
      %v777 = vsel %vm553, %v466, 0
      %v780 = vsel %vm553, %v467, 0
      %v783 = vsel %vm553, %v468, 0
      %v786 = vsel %vm553, %v469, 0
      %v789 = vsel %vm553, %v470, 0
      %v792 = vsel %vm553, %v471, 0
      %v795 = vsel %vm553, %v472, 0
      %v798 = vsel %vm553, %v473, 0
      %v801 = vsel %vm553, %v474, 0
      %v804 = vsel %vm553, %v475, 0
      %v807 = vsel %vm553, %v476, 0
      %v810 = vsel %vm553, %v477, 0
      %v813 = vsel %vm553, %v478, 0
      %v816 = vsel %vm553, %v479, 0
      %v819 = vsel %vm553, %v480, 0
      %v822 = vsel %vm553, %v481, 0
      %v825 = vsel %vm553, %v482, 0
      %v828 = vsel %vm553, %v483, 0
      %v831 = vsel %vm553, %v484, 0
      %v834 = vsel %vm553, %v485, 0
      %v837 = vsel %vm553, %v486, 0
      %v840 = vsel %vm553, %v487, 0
      %v843 = vsel %vm553, %v488, 0
      %v846 = vsel %vm553, %v489, 0
      %v849 = vsel %vm553, %v490, 0
      %v852 = vsel %vm553, %v491, 0
      %v855 = vsel %vm553, %v492, 0
      %v858 = vsel %vm553, %v493, 0
      %v861 = vsel %vm553, %v494, 0
      %v864 = vsel %vm553, %v495, 0
      %v867 = vsel %vm553, %v496, 0
      %v870 = vsel %vm553, %v497, 0
      %v873 = vsel %vm553, %v498, 0
      %v876 = vsel %vm553, %v499, 0
      %v879 = vsel %vm553, %v524, 0
      %v882 = vsel %vm553, %v525, 0
      %v885 = vsel %vm553, %v526, 0
      %v888 = vsel %vm553, %v527, 0
      %890 = vmatprep.subr.mxu0 %v530
      %891 = vmatpush1.msra.mxu0 %v529
      %892 = vmatprep.subr.mxu0 %v532
      %893 = vmatpush1.msra.mxu0 %v531
      %894 = vmatprep.subr.mxu0 %v534
      %895 = vmatpush1.msra.mxu0 %v533
      %896 = vmatprep.subr.mxu0 %v536
      %897 = vmatpush1.msra.mxu0 %v535
      %898 = vmatprep.subr.mxu0 %v538
      %899 = vmatpush1.msra.mxu0 %v537
      %900 = vmatprep.subr.mxu0 %v540
      %901 = vmatpush1.msra.mxu0 %v539
      %902 = vmatprep.subr.mxu0 %v542
      %903 = vmatpush1.msra.mxu0 %v541
      %904 = vmatprep.subr.mxu0 %v544
      %905 = vmatpush1.msra.mxu0 %v543
      %906 = vmatprep.subr.mxu0 %v546
      %907 = vmatpush1.msra.mxu0 %v545
      %908 = vmatprep.subr.mxu0 %v548
      %909 = vmatpush1.msra.mxu0 %v547
      %910 = vmatprep.subr.mxu0 %v550
      %911 = vmatpush1.msra.mxu0 %v549
      %912 = vmatprep.subr.mxu0 %v552
      %913 = vmatpush1.msra.mxu0 %v551
      %914 = vmatprep.subr.mxu0 0.0
      %915 = vmatpush1.msra.mxu0 0.0
      %916 = vmatprep.subr.mxu0 0.0
      %917 = vmatpush1.msra.mxu0 0.0
      %918 = vmatprep.subr.mxu0 0.0
      %919 = vmatpush1.msra.mxu0 0.0
      %920 = vmatprep.subr.mxu0 0.0
      %921 = vmatpush1.msra.mxu0 0.0
      %922 = vmatprep.subr.mxu0 0.0
      %923 = vmatpush1.msra.mxu0 0.0
      %924 = vmatprep.subr.mxu0 0.0
      %925 = vmatpush1.msra.mxu0 0.0
      %926 = vmatprep.subr.mxu0 0.0
      %927 = vmatpush1.msra.mxu0 0.0
      %928 = vmatprep.subr.mxu0 0.0
      %929 = vmatpush1.msra.mxu0 0.0
      %930 = vmatprep.subr.mxu0 0.0
      %931 = vmatpush1.msra.mxu0 0.0
      %932 = vmatprep.subr.mxu0 0.0
      %933 = vmatpush1.msra.mxu0 0.0
      %934 = vmatprep.subr.mxu0 0.0
      %935 = vmatpush1.msra.mxu0 0.0
      %936 = vmatprep.subr.mxu0 0.0
      %937 = vmatpush1.msra.mxu0 0.0
      %938 = vmatprep.subr.mxu0 0.0
      %939 = vmatpush1.msra.mxu0 0.0
      %940 = vmatprep.subr.mxu0 0.0
      %941 = vmatpush1.msra.mxu0 0.0
      %942 = vmatprep.subr.mxu0 0.0
      %943 = vmatpush1.msra.mxu0 0.0
      %944 = vmatprep.subr.mxu0 0.0
      %945 = vmatpush1.msra.mxu0 0.0
      %946 = vmatprep.subr.mxu0 0.0
      %947 = vmatpush1.msra.mxu0 0.0
      %948 = vmatprep.subr.mxu0 0.0
      %949 = vmatpush1.msra.mxu0 0.0
      %950 = vmatprep.subr.mxu0 0.0
      %951 = vmatpush1.msra.mxu0 0.0
      %952 = vmatprep.subr.mxu0 0.0
      %953 = vmatpush1.msra.mxu0 0.0
      %954 = vmatprep.mubr.f32.mxu0 0.0
      %955 = vmatmul.mubr.f32.gmra.mrb[0].mxu0 %v555
      %v956 = vpop.f32.mrb[0].mxu0
      %v957 = vadd.f32 0.0, %v956
      %v958 = vpop.f32.mrb[0].mxu0
      %v959 = vadd.f32 0.0, %v958
      %960 = vmatprep.mubr.f32.mxu0 0.0
      %961 = vmatmul.mubr.f32.gmra.mrb[0].mxu0 %v558
      %v962 = vpop.f32.mrb[0].mxu0
      %v963 = vadd.f32 0.0, %v962
      %v964 = vpop.f32.mrb[0].mxu0
      %v965 = vadd.f32 0.0, %v964
      %966 = vmatprep.mubr.f32.mxu0 0.0
      %967 = vmatmul.mubr.f32.gmra.mrb[0].mxu0 %v561
      %v968 = vpop.f32.mrb[0].mxu0
      %v969 = vadd.f32 0.0, %v968
      %v970 = vpop.f32.mrb[0].mxu0
      %v971 = vadd.f32 0.0, %v970
      %972 = vmatprep.mubr.f32.mxu0 0.0
      %973 = vmatmul.mubr.f32.gmra.mrb[0].mxu0 %v564
      %v974 = vpop.f32.mrb[0].mxu0
      %v975 = vadd.f32 0.0, %v974
      %v976 = vpop.f32.mrb[0].mxu0
      %v977 = vadd.f32 0.0, %v976
      %978 = vmatprep.mubr.f32.mxu0 0.0
      %979 = vmatmul.mubr.f32.gmra.mrb[0].mxu0 %v567
      %v980 = vpop.f32.mrb[0].mxu0
      %v981 = vadd.f32 0.0, %v980
      %v982 = vpop.f32.mrb[0].mxu0
      %v983 = vadd.f32 0.0, %v982
      %984 = vmatprep.mubr.f32.mxu0 0.0
      %985 = vmatmul.mubr.f32.gmra.mrb[0].mxu0 %v570
      %v986 = vpop.f32.mrb[0].mxu0
      %v987 = vadd.f32 0.0, %v986
      %v988 = vpop.f32.mrb[0].mxu0
      %v989 = vadd.f32 0.0, %v988
      %990 = vmatprep.mubr.f32.mxu0 0.0
      %991 = vmatmul.mubr.f32.gmra.mrb[0].mxu0 %v573
      %v992 = vpop.f32.mrb[0].mxu0
      %v993 = vadd.f32 0.0, %v992
      %v994 = vpop.f32.mrb[0].mxu0
      %v995 = vadd.f32 0.0, %v994
      %996 = vmatprep.mubr.f32.mxu0 0.0
      %997 = vmatmul.mubr.f32.gmra.mrb[0].mxu0 %v576
      %v998 = vpop.f32.mrb[0].mxu0
      %v999 = vadd.f32 0.0, %v998
      %v1000 = vpop.f32.mrb[0].mxu0
      %v1001 = vadd.f32 0.0, %v1000
      %1002 = vmatprep.mubr.f32.mxu0 0.0
      %1003 = vmatmul.mubr.f32.gmra.mrb[0].mxu0 %v579
      %v1004 = vpop.f32.mrb[0].mxu0
      %v1005 = vadd.f32 0.0, %v1004
      %v1006 = vpop.f32.mrb[0].mxu0
      %v1007 = vadd.f32 0.0, %v1006
      %1008 = vmatprep.mubr.f32.mxu0 0.0
      %1009 = vmatmul.mubr.f32.gmra.mrb[0].mxu0 %v582
      %v1010 = vpop.f32.mrb[0].mxu0
      %v1011 = vadd.f32 0.0, %v1010
      %v1012 = vpop.f32.mrb[0].mxu0
      %v1013 = vadd.f32 0.0, %v1012
      %1014 = vmatprep.mubr.f32.mxu0 0.0
      %1015 = vmatmul.mubr.f32.gmra.mrb[0].mxu0 %v585
      %v1016 = vpop.f32.mrb[0].mxu0
      %v1017 = vadd.f32 0.0, %v1016
      %v1018 = vpop.f32.mrb[0].mxu0
      %v1019 = vadd.f32 0.0, %v1018
      %1020 = vmatprep.mubr.f32.mxu0 0.0
      %1021 = vmatmul.mubr.f32.gmra.mrb[0].mxu0 %v588
      %v1022 = vpop.f32.mrb[0].mxu0
      %v1023 = vadd.f32 0.0, %v1022
      %v1024 = vpop.f32.mrb[0].mxu0
      %v1025 = vadd.f32 0.0, %v1024
      %1026 = vmatprep.mubr.f32.mxu0 0.0
      %1027 = vmatmul.mubr.f32.gmra.mrb[0].mxu0 %v591
      %v1028 = vpop.f32.mrb[0].mxu0
      %v1029 = vadd.f32 0.0, %v1028
      %v1030 = vpop.f32.mrb[0].mxu0
      %v1031 = vadd.f32 0.0, %v1030
      %1032 = vmatprep.mubr.f32.mxu0 0.0
      %1033 = vmatmul.mubr.f32.gmra.mrb[0].mxu0 %v594
      %v1034 = vpop.f32.mrb[0].mxu0
      %v1035 = vadd.f32 0.0, %v1034
      %v1036 = vpop.f32.mrb[0].mxu0
      %v1037 = vadd.f32 0.0, %v1036
      %1038 = vmatprep.mubr.f32.mxu0 0.0
      %1039 = vmatmul.mubr.f32.gmra.mrb[0].mxu0 %v597
      %v1040 = vpop.f32.mrb[0].mxu0
      %v1041 = vadd.f32 0.0, %v1040
      %v1042 = vpop.f32.mrb[0].mxu0
      %v1043 = vadd.f32 0.0, %v1042
      %1044 = vmatprep.mubr.f32.mxu0 0.0
      %1045 = vmatmul.mubr.f32.gmra.mrb[0].mxu0 %v600
      %v1046 = vpop.f32.mrb[0].mxu0
      %v1047 = vadd.f32 0.0, %v1046
      %v1048 = vpop.f32.mrb[0].mxu0
      %v1049 = vadd.f32 0.0, %v1048
      %1050 = vmatprep.mubr.f32.mxu0 0.0
      %1051 = vmatmul.mubr.f32.gmra.mrb[0].mxu0 %v603
      %v1052 = vpop.f32.mrb[0].mxu0
      %v1053 = vadd.f32 0.0, %v1052
      %v1054 = vpop.f32.mrb[0].mxu0
      %v1055 = vadd.f32 0.0, %v1054
      %1056 = vmatprep.mubr.f32.mxu0 0.0
      %1057 = vmatmul.mubr.f32.gmra.mrb[0].mxu0 %v606
      %v1058 = vpop.f32.mrb[0].mxu0
      %v1059 = vadd.f32 0.0, %v1058
      %v1060 = vpop.f32.mrb[0].mxu0
      %v1061 = vadd.f32 0.0, %v1060
      %1062 = vmatprep.mubr.f32.mxu0 0.0
      %1063 = vmatmul.mubr.f32.gmra.mrb[0].mxu0 %v609
      %v1064 = vpop.f32.mrb[0].mxu0
      %v1065 = vadd.f32 0.0, %v1064
      %v1066 = vpop.f32.mrb[0].mxu0
      %v1067 = vadd.f32 0.0, %v1066
      %1068 = vmatprep.mubr.f32.mxu0 0.0
      %1069 = vmatmul.mubr.f32.gmra.mrb[0].mxu0 %v612
      %v1070 = vpop.f32.mrb[0].mxu0
      %v1071 = vadd.f32 0.0, %v1070
      %v1072 = vpop.f32.mrb[0].mxu0
      %v1073 = vadd.f32 0.0, %v1072
      %1074 = vmatprep.mubr.f32.mxu0 0.0
      %1075 = vmatmul.mubr.f32.gmra.mrb[0].mxu0 %v615
      %v1076 = vpop.f32.mrb[0].mxu0
      %v1077 = vadd.f32 0.0, %v1076
      %v1078 = vpop.f32.mrb[0].mxu0
      %v1079 = vadd.f32 0.0, %v1078
      %1080 = vmatprep.mubr.f32.mxu0 0.0
      %1081 = vmatmul.mubr.f32.gmra.mrb[0].mxu0 %v618
      %v1082 = vpop.f32.mrb[0].mxu0
      %v1083 = vadd.f32 0.0, %v1082
      %v1084 = vpop.f32.mrb[0].mxu0
      %v1085 = vadd.f32 0.0, %v1084
      %1086 = vmatprep.mubr.f32.mxu0 0.0
      %1087 = vmatmul.mubr.f32.gmra.mrb[0].mxu0 %v621
      %v1088 = vpop.f32.mrb[0].mxu0
      %v1089 = vadd.f32 0.0, %v1088
      %v1090 = vpop.f32.mrb[0].mxu0
      %v1091 = vadd.f32 0.0, %v1090
      %1092 = vmatprep.mubr.f32.mxu0 0.0
      %1093 = vmatmul.mubr.f32.gmra.mrb[0].mxu0 %v624
      %v1094 = vpop.f32.mrb[0].mxu0
      %v1095 = vadd.f32 0.0, %v1094
      %v1096 = vpop.f32.mrb[0].mxu0
      %v1097 = vadd.f32 0.0, %v1096
      %1098 = vmatprep.mubr.f32.mxu0 0.0
      %1099 = vmatmul.mubr.f32.gmra.mrb[0].mxu0 %v627
      %v1100 = vpop.f32.mrb[0].mxu0
      %v1101 = vadd.f32 0.0, %v1100
      %v1102 = vpop.f32.mrb[0].mxu0
      %v1103 = vadd.f32 0.0, %v1102
      %1104 = vmatprep.mubr.f32.mxu0 0.0
      %1105 = vmatmul.mubr.f32.gmra.mrb[0].mxu0 %v630
      %v1106 = vpop.f32.mrb[0].mxu0
      %v1107 = vadd.f32 0.0, %v1106
      %v1108 = vpop.f32.mrb[0].mxu0
      %v1109 = vadd.f32 0.0, %v1108
      %1110 = vmatprep.mubr.f32.mxu0 0.0
      %1111 = vmatmul.mubr.f32.gmra.mrb[0].mxu0 %v633
      %v1112 = vpop.f32.mrb[0].mxu0
      %v1113 = vadd.f32 0.0, %v1112
      %v1114 = vpop.f32.mrb[0].mxu0
      %v1115 = vadd.f32 0.0, %v1114
      %1116 = vmatprep.mubr.f32.mxu0 0.0
      %1117 = vmatmul.mubr.f32.gmra.mrb[0].mxu0 %v636
      %v1118 = vpop.f32.mrb[0].mxu0
      %v1119 = vadd.f32 0.0, %v1118
      %v1120 = vpop.f32.mrb[0].mxu0
      %v1121 = vadd.f32 0.0, %v1120
      %1122 = vmatprep.mubr.f32.mxu0 0.0
      %1123 = vmatmul.mubr.f32.gmra.mrb[0].mxu0 %v639
      %v1124 = vpop.f32.mrb[0].mxu0
      %v1125 = vadd.f32 0.0, %v1124
      %v1126 = vpop.f32.mrb[0].mxu0
      %v1127 = vadd.f32 0.0, %v1126
      %1128 = vmatprep.mubr.f32.mxu0 0.0
      %1129 = vmatmul.mubr.f32.gmra.mrb[0].mxu0 %v642
      %v1130 = vpop.f32.mrb[0].mxu0
      %v1131 = vadd.f32 0.0, %v1130
      %v1132 = vpop.f32.mrb[0].mxu0
      %v1133 = vadd.f32 0.0, %v1132
      %1134 = vmatprep.mubr.f32.mxu0 0.0
      %1135 = vmatmul.mubr.f32.gmra.mrb[0].mxu0 %v645
      %v1136 = vpop.f32.mrb[0].mxu0
      %v1137 = vadd.f32 0.0, %v1136
      %v1138 = vpop.f32.mrb[0].mxu0
      %v1139 = vadd.f32 0.0, %v1138
      %1140 = vmatprep.mubr.f32.mxu0 0.0
      %1141 = vmatmul.mubr.f32.gmra.mrb[0].mxu0 %v648
      %v1142 = vpop.f32.mrb[0].mxu0
      %v1143 = vadd.f32 0.0, %v1142
      %v1144 = vpop.f32.mrb[0].mxu0
      %v1145 = vadd.f32 0.0, %v1144
      %1146 = vmatprep.mubr.f32.mxu0 0.0
      %1147 = vmatmul.mubr.f32.gmra.mrb[0].mxu0 %v651
      %v1148 = vpop.f32.mrb[0].mxu0
      %v1149 = vadd.f32 0.0, %v1148
      %v1150 = vpop.f32.mrb[0].mxu0
      %v1151 = vadd.f32 0.0, %v1150
      %1152 = vmatprep.mubr.f32.mxu0 0.0
      %1153 = vmatmul.mubr.f32.gmra.mrb[0].mxu0 %v654
      %v1154 = vpop.f32.mrb[0].mxu0
      %v1155 = vadd.f32 0.0, %v1154
      %v1156 = vpop.f32.mrb[0].mxu0
      %v1157 = vadd.f32 0.0, %v1156
      %1158 = vmatprep.mubr.f32.mxu0 0.0
      %1159 = vmatmul.mubr.f32.gmra.mrb[0].mxu0 %v657
      %v1160 = vpop.f32.mrb[0].mxu0
      %v1161 = vadd.f32 0.0, %v1160
      %v1162 = vpop.f32.mrb[0].mxu0
      %v1163 = vadd.f32 0.0, %v1162
      %1164 = vmatprep.mubr.f32.mxu0 0.0
      %1165 = vmatmul.mubr.f32.gmra.mrb[0].mxu0 %v660
      %v1166 = vpop.f32.mrb[0].mxu0
      %v1167 = vadd.f32 0.0, %v1166
      %v1168 = vpop.f32.mrb[0].mxu0
      %v1169 = vadd.f32 0.0, %v1168
      %1170 = vmatprep.mubr.f32.mxu0 0.0
      %1171 = vmatmul.mubr.f32.gmra.mrb[0].mxu0 %v663
      %v1172 = vpop.f32.mrb[0].mxu0
      %v1173 = vadd.f32 0.0, %v1172
      %v1174 = vpop.f32.mrb[0].mxu0
      %v1175 = vadd.f32 0.0, %v1174
      %1176 = vmatprep.mubr.f32.mxu0 0.0
      %1177 = vmatmul.mubr.f32.gmra.mrb[0].mxu0 %v666
      %v1178 = vpop.f32.mrb[0].mxu0
      %v1179 = vadd.f32 0.0, %v1178
      %v1180 = vpop.f32.mrb[0].mxu0
      %v1181 = vadd.f32 0.0, %v1180
      %1182 = vmatprep.mubr.f32.mxu0 0.0
      %1183 = vmatmul.mubr.f32.gmra.mrb[0].mxu0 %v669
      %v1184 = vpop.f32.mrb[0].mxu0
      %v1185 = vadd.f32 0.0, %v1184
      %v1186 = vpop.f32.mrb[0].mxu0
      %v1187 = vadd.f32 0.0, %v1186
      %1188 = vmatprep.mubr.f32.mxu0 0.0
      %1189 = vmatmul.mubr.f32.gmra.mrb[0].mxu0 %v672
      %v1190 = vpop.f32.mrb[0].mxu0
      %v1191 = vadd.f32 0.0, %v1190
      %v1192 = vpop.f32.mrb[0].mxu0
      %v1193 = vadd.f32 0.0, %v1192
      %1194 = vmatprep.mubr.f32.mxu0 0.0
      %1195 = vmatmul.mubr.f32.gmra.mrb[0].mxu0 %v675
      %v1196 = vpop.f32.mrb[0].mxu0
      %v1197 = vadd.f32 0.0, %v1196
      %v1198 = vpop.f32.mrb[0].mxu0
      %v1199 = vadd.f32 0.0, %v1198
      %1200 = vmatprep.mubr.f32.mxu0 0.0
      %1201 = vmatmul.mubr.f32.gmra.mrb[0].mxu0 %v678
      %v1202 = vpop.f32.mrb[0].mxu0
      %v1203 = vadd.f32 0.0, %v1202
      %v1204 = vpop.f32.mrb[0].mxu0
      %v1205 = vadd.f32 0.0, %v1204
      %1206 = vmatprep.mubr.f32.mxu0 0.0
      %1207 = vmatmul.mubr.f32.gmra.mrb[0].mxu0 %v681
      %v1208 = vpop.f32.mrb[0].mxu0
      %v1209 = vadd.f32 0.0, %v1208
      %v1210 = vpop.f32.mrb[0].mxu0
      %v1211 = vadd.f32 0.0, %v1210
      %1212 = vmatprep.mubr.f32.mxu0 0.0
      %1213 = vmatmul.mubr.f32.gmra.mrb[0].mxu0 %v684
      %v1214 = vpop.f32.mrb[0].mxu0
      %v1215 = vadd.f32 0.0, %v1214
      %v1216 = vpop.f32.mrb[0].mxu0
      %v1217 = vadd.f32 0.0, %v1216
      %1218 = vmatprep.mubr.f32.mxu0 0.0
      %1219 = vmatmul.mubr.f32.gmra.mrb[0].mxu0 %v687
      %v1220 = vpop.f32.mrb[0].mxu0
      %v1221 = vadd.f32 0.0, %v1220
      %v1222 = vpop.f32.mrb[0].mxu0
      %v1223 = vadd.f32 0.0, %v1222
      %1224 = vmatprep.mubr.f32.mxu0 0.0
      %1225 = vmatmul.mubr.f32.gmra.mrb[0].mxu0 %v690
      %v1226 = vpop.f32.mrb[0].mxu0
      %v1227 = vadd.f32 0.0, %v1226
      %v1228 = vpop.f32.mrb[0].mxu0
      %v1229 = vadd.f32 0.0, %v1228
      %1230 = vmatprep.mubr.f32.mxu0 0.0
      %1231 = vmatmul.mubr.f32.gmra.mrb[0].mxu0 %v693
      %v1232 = vpop.f32.mrb[0].mxu0
      %v1233 = vadd.f32 0.0, %v1232
      %v1234 = vpop.f32.mrb[0].mxu0
      %v1235 = vadd.f32 0.0, %v1234
      %1236 = vmatprep.mubr.f32.mxu0 0.0
      %1237 = vmatmul.mubr.f32.gmra.mrb[0].mxu0 %v696
      %v1238 = vpop.f32.mrb[0].mxu0
      %v1239 = vadd.f32 0.0, %v1238
      %v1240 = vpop.f32.mrb[0].mxu0
      %v1241 = vadd.f32 0.0, %v1240
      %1242 = vmatprep.mubr.f32.mxu0 0.0
      %1243 = vmatmul.mubr.f32.gmra.mrb[0].mxu0 %v699
      %v1244 = vpop.f32.mrb[0].mxu0
      %v1245 = vadd.f32 0.0, %v1244
      %v1246 = vpop.f32.mrb[0].mxu0
      %v1247 = vadd.f32 0.0, %v1246
      %1248 = vmatprep.mubr.f32.mxu0 0.0
      %1249 = vmatmul.mubr.f32.gmra.mrb[0].mxu0 %v702
      %v1250 = vpop.f32.mrb[0].mxu0
      %v1251 = vadd.f32 0.0, %v1250
      %v1252 = vpop.f32.mrb[0].mxu0
      %v1253 = vadd.f32 0.0, %v1252
      %1254 = vmatprep.mubr.f32.mxu0 0.0
      %1255 = vmatmul.mubr.f32.gmra.mrb[0].mxu0 %v705
      %v1256 = vpop.f32.mrb[0].mxu0
      %v1257 = vadd.f32 0.0, %v1256
      %v1258 = vpop.f32.mrb[0].mxu0
      %v1259 = vadd.f32 0.0, %v1258
      %1260 = vmatprep.mubr.f32.mxu0 0.0
      %1261 = vmatmul.mubr.f32.gmra.mrb[0].mxu0 %v708
      %v1262 = vpop.f32.mrb[0].mxu0
      %v1263 = vadd.f32 0.0, %v1262
      %v1264 = vpop.f32.mrb[0].mxu0
      %v1265 = vadd.f32 0.0, %v1264
      %1266 = vmatprep.mubr.f32.mxu0 0.0
      %1267 = vmatmul.mubr.f32.gmra.mrb[0].mxu0 %v711
      %v1268 = vpop.f32.mrb[0].mxu0
      %v1269 = vadd.f32 0.0, %v1268
      %v1270 = vpop.f32.mrb[0].mxu0
      %v1271 = vadd.f32 0.0, %v1270
      %1272 = vmatprep.mubr.f32.mxu0 0.0
      %1273 = vmatmul.mubr.f32.gmra.mrb[0].mxu0 %v714
      %v1274 = vpop.f32.mrb[0].mxu0
      %v1275 = vadd.f32 0.0, %v1274
      %v1276 = vpop.f32.mrb[0].mxu0
      %v1277 = vadd.f32 0.0, %v1276
      %1278 = vmatprep.mubr.f32.mxu0 0.0
      %1279 = vmatmul.mubr.f32.gmra.mrb[0].mxu0 %v717
      %v1280 = vpop.f32.mrb[0].mxu0
      %v1281 = vadd.f32 0.0, %v1280
      %v1282 = vpop.f32.mrb[0].mxu0
      %v1283 = vadd.f32 0.0, %v1282
      %1284 = vmatprep.mubr.f32.mxu0 0.0
      %1285 = vmatmul.mubr.f32.gmra.mrb[0].mxu0 %v720
      %v1286 = vpop.f32.mrb[0].mxu0
      %v1287 = vadd.f32 0.0, %v1286
      %v1288 = vpop.f32.mrb[0].mxu0
      %v1289 = vadd.f32 0.0, %v1288
      %1290 = vmatprep.mubr.f32.mxu0 0.0
      %1291 = vmatmul.mubr.f32.gmra.mrb[0].mxu0 %v723
      %v1292 = vpop.f32.mrb[0].mxu0
      %v1293 = vadd.f32 0.0, %v1292
      %v1294 = vpop.f32.mrb[0].mxu0
      %v1295 = vadd.f32 0.0, %v1294
      %1296 = vmatprep.mubr.f32.mxu0 0.0
      %1297 = vmatmul.mubr.f32.gmra.mrb[0].mxu0 %v726
      %v1298 = vpop.f32.mrb[0].mxu0
      %v1299 = vadd.f32 0.0, %v1298
      %v1300 = vpop.f32.mrb[0].mxu0
      %v1301 = vadd.f32 0.0, %v1300
      %1302 = vmatprep.mubr.f32.mxu0 0.0
      %1303 = vmatmul.mubr.f32.gmra.mrb[0].mxu0 %v729
      %v1304 = vpop.f32.mrb[0].mxu0
      %v1305 = vadd.f32 0.0, %v1304
      %v1306 = vpop.f32.mrb[0].mxu0
      %v1307 = vadd.f32 0.0, %v1306
      %1308 = vmatprep.mubr.f32.mxu0 0.0
      %1309 = vmatmul.mubr.f32.gmra.mrb[0].mxu0 %v732
      %v1310 = vpop.f32.mrb[0].mxu0
      %v1311 = vadd.f32 0.0, %v1310
      %v1312 = vpop.f32.mrb[0].mxu0
      %v1313 = vadd.f32 0.0, %v1312
      %1314 = vmatprep.mubr.f32.mxu0 0.0
      %1315 = vmatmul.mubr.f32.gmra.mrb[0].mxu0 %v735
      %v1316 = vpop.f32.mrb[0].mxu0
      %v1317 = vadd.f32 0.0, %v1316
      %v1318 = vpop.f32.mrb[0].mxu0
      %v1319 = vadd.f32 0.0, %v1318
      %1320 = vmatprep.mubr.f32.mxu0 0.0
      %1321 = vmatmul.mubr.f32.gmra.mrb[0].mxu0 %v738
      %v1322 = vpop.f32.mrb[0].mxu0
      %v1323 = vadd.f32 0.0, %v1322
      %v1324 = vpop.f32.mrb[0].mxu0
      %v1325 = vadd.f32 0.0, %v1324
      %1326 = vmatprep.mubr.f32.mxu0 0.0
      %1327 = vmatmul.mubr.f32.gmra.mrb[0].mxu0 %v741
      %v1328 = vpop.f32.mrb[0].mxu0
      %v1329 = vadd.f32 0.0, %v1328
      %v1330 = vpop.f32.mrb[0].mxu0
      %v1331 = vadd.f32 0.0, %v1330
      %1332 = vmatprep.mubr.f32.mxu0 0.0
      %1333 = vmatmul.mubr.f32.gmra.mrb[0].mxu0 %v744
      %v1334 = vpop.f32.mrb[0].mxu0
      %v1335 = vadd.f32 0.0, %v1334
      %v1336 = vpop.f32.mrb[0].mxu0
      %v1337 = vadd.f32 0.0, %v1336
      %1338 = vmatprep.mubr.f32.mxu0 0.0
      %1339 = vmatmul.mubr.f32.gmra.mrb[0].mxu0 %v747
      %v1340 = vpop.f32.mrb[0].mxu0
      %v1341 = vadd.f32 0.0, %v1340
      %v1342 = vpop.f32.mrb[0].mxu0
      %v1343 = vadd.f32 0.0, %v1342
      %1344 = vmatprep.mubr.f32.mxu0 0.0
      %1345 = vmatmul.mubr.f32.gmra.mrb[0].mxu0 %v750
      %v1346 = vpop.f32.mrb[0].mxu0
      %v1347 = vadd.f32 0.0, %v1346
      %v1348 = vpop.f32.mrb[0].mxu0
      %v1349 = vadd.f32 0.0, %v1348
      %1350 = vmatprep.mubr.f32.mxu0 0.0
      %1351 = vmatmul.mubr.f32.gmra.mrb[0].mxu0 %v753
      %v1352 = vpop.f32.mrb[0].mxu0
      %v1353 = vadd.f32 0.0, %v1352
      %v1354 = vpop.f32.mrb[0].mxu0
      %v1355 = vadd.f32 0.0, %v1354
      %1356 = vmatprep.mubr.f32.mxu0 0.0
      %1357 = vmatmul.mubr.f32.gmra.mrb[0].mxu0 %v756
      %v1358 = vpop.f32.mrb[0].mxu0
      %v1359 = vadd.f32 0.0, %v1358
      %v1360 = vpop.f32.mrb[0].mxu0
      %v1361 = vadd.f32 0.0, %v1360
      %1362 = vmatprep.mubr.f32.mxu0 0.0
      %1363 = vmatmul.mubr.f32.gmra.mrb[0].mxu0 %v759
      %v1364 = vpop.f32.mrb[0].mxu0
      %v1365 = vadd.f32 0.0, %v1364
      %v1366 = vpop.f32.mrb[0].mxu0
      %v1367 = vadd.f32 0.0, %v1366
      %1368 = vmatprep.mubr.f32.mxu0 0.0
      %1369 = vmatmul.mubr.f32.gmra.mrb[0].mxu0 %v762
      %v1370 = vpop.f32.mrb[0].mxu0
      %v1371 = vadd.f32 0.0, %v1370
      %v1372 = vpop.f32.mrb[0].mxu0
      %v1373 = vadd.f32 0.0, %v1372
      %1374 = vmatprep.mubr.f32.mxu0 0.0
      %1375 = vmatmul.mubr.f32.gmra.mrb[0].mxu0 %v765
      %v1376 = vpop.f32.mrb[0].mxu0
      %v1377 = vadd.f32 0.0, %v1376
      %v1378 = vpop.f32.mrb[0].mxu0
      %v1379 = vadd.f32 0.0, %v1378
      %1380 = vmatprep.mubr.f32.mxu0 0.0
      %1381 = vmatmul.mubr.f32.gmra.mrb[0].mxu0 %v768
      %v1382 = vpop.f32.mrb[0].mxu0
      %v1383 = vadd.f32 0.0, %v1382
      %v1384 = vpop.f32.mrb[0].mxu0
      %v1385 = vadd.f32 0.0, %v1384
      %1386 = vmatprep.mubr.f32.mxu0 0.0
      %1387 = vmatmul.mubr.f32.gmra.mrb[0].mxu0 %v771
      %v1388 = vpop.f32.mrb[0].mxu0
      %v1389 = vadd.f32 0.0, %v1388
      %v1390 = vpop.f32.mrb[0].mxu0
      %v1391 = vadd.f32 0.0, %v1390
      %1392 = vmatprep.mubr.f32.mxu0 0.0
      %1393 = vmatmul.mubr.f32.gmra.mrb[0].mxu0 %v774
      %v1394 = vpop.f32.mrb[0].mxu0
      %v1395 = vadd.f32 0.0, %v1394
      %v1396 = vpop.f32.mrb[0].mxu0
      %v1397 = vadd.f32 0.0, %v1396
      %1398 = vmatprep.mubr.f32.mxu0 0.0
      %1399 = vmatmul.mubr.f32.gmra.mrb[0].mxu0 %v777
      %v1400 = vpop.f32.mrb[0].mxu0
      %v1401 = vadd.f32 0.0, %v1400
      %v1402 = vpop.f32.mrb[0].mxu0
      %v1403 = vadd.f32 0.0, %v1402
      %1404 = vmatprep.mubr.f32.mxu0 0.0
      %1405 = vmatmul.mubr.f32.gmra.mrb[0].mxu0 %v780
      %v1406 = vpop.f32.mrb[0].mxu0
      %v1407 = vadd.f32 0.0, %v1406
      %v1408 = vpop.f32.mrb[0].mxu0
      %v1409 = vadd.f32 0.0, %v1408
      %1410 = vmatprep.mubr.f32.mxu0 0.0
      %1411 = vmatmul.mubr.f32.gmra.mrb[0].mxu0 %v783
      %v1412 = vpop.f32.mrb[0].mxu0
      %v1413 = vadd.f32 0.0, %v1412
      %v1414 = vpop.f32.mrb[0].mxu0
      %v1415 = vadd.f32 0.0, %v1414
      %1416 = vmatprep.mubr.f32.mxu0 0.0
      %1417 = vmatmul.mubr.f32.gmra.mrb[0].mxu0 %v786
      %v1418 = vpop.f32.mrb[0].mxu0
      %v1419 = vadd.f32 0.0, %v1418
      %v1420 = vpop.f32.mrb[0].mxu0
      %v1421 = vadd.f32 0.0, %v1420
      %1422 = vmatprep.mubr.f32.mxu0 0.0
      %1423 = vmatmul.mubr.f32.gmra.mrb[0].mxu0 %v789
      %v1424 = vpop.f32.mrb[0].mxu0
      %v1425 = vadd.f32 0.0, %v1424
      %v1426 = vpop.f32.mrb[0].mxu0
      %v1427 = vadd.f32 0.0, %v1426
      %1428 = vmatprep.mubr.f32.mxu0 0.0
      %1429 = vmatmul.mubr.f32.gmra.mrb[0].mxu0 %v792
      %v1430 = vpop.f32.mrb[0].mxu0
      %v1431 = vadd.f32 0.0, %v1430
      %v1432 = vpop.f32.mrb[0].mxu0
      %v1433 = vadd.f32 0.0, %v1432
      %1434 = vmatprep.mubr.f32.mxu0 0.0
      %1435 = vmatmul.mubr.f32.gmra.mrb[0].mxu0 %v795
      %v1436 = vpop.f32.mrb[0].mxu0
      %v1437 = vadd.f32 0.0, %v1436
      %v1438 = vpop.f32.mrb[0].mxu0
      %v1439 = vadd.f32 0.0, %v1438
      %1440 = vmatprep.mubr.f32.mxu0 0.0
      %1441 = vmatmul.mubr.f32.gmra.mrb[0].mxu0 %v798
      %v1442 = vpop.f32.mrb[0].mxu0
      %v1443 = vadd.f32 0.0, %v1442
      %v1444 = vpop.f32.mrb[0].mxu0
      %v1445 = vadd.f32 0.0, %v1444
      %1446 = vmatprep.mubr.f32.mxu0 0.0
      %1447 = vmatmul.mubr.f32.gmra.mrb[0].mxu0 %v801
      %v1448 = vpop.f32.mrb[0].mxu0
      %v1449 = vadd.f32 0.0, %v1448
      %v1450 = vpop.f32.mrb[0].mxu0
      %v1451 = vadd.f32 0.0, %v1450
      %1452 = vmatprep.mubr.f32.mxu0 0.0
      %1453 = vmatmul.mubr.f32.gmra.mrb[0].mxu0 %v804
      %v1454 = vpop.f32.mrb[0].mxu0
      %v1455 = vadd.f32 0.0, %v1454
      %v1456 = vpop.f32.mrb[0].mxu0
      %v1457 = vadd.f32 0.0, %v1456
      %1458 = vmatprep.mubr.f32.mxu0 0.0
      %1459 = vmatmul.mubr.f32.gmra.mrb[0].mxu0 %v807
      %v1460 = vpop.f32.mrb[0].mxu0
      %v1461 = vadd.f32 0.0, %v1460
      %v1462 = vpop.f32.mrb[0].mxu0
      %v1463 = vadd.f32 0.0, %v1462
      %1464 = vmatprep.mubr.f32.mxu0 0.0
      %1465 = vmatmul.mubr.f32.gmra.mrb[0].mxu0 %v810
      %v1466 = vpop.f32.mrb[0].mxu0
      %v1467 = vadd.f32 0.0, %v1466
      %v1468 = vpop.f32.mrb[0].mxu0
      %v1469 = vadd.f32 0.0, %v1468
      %1470 = vmatprep.mubr.f32.mxu0 0.0
      %1471 = vmatmul.mubr.f32.gmra.mrb[0].mxu0 %v813
      %v1472 = vpop.f32.mrb[0].mxu0
      %v1473 = vadd.f32 0.0, %v1472
      %v1474 = vpop.f32.mrb[0].mxu0
      %v1475 = vadd.f32 0.0, %v1474
      %1476 = vmatprep.mubr.f32.mxu0 0.0
      %1477 = vmatmul.mubr.f32.gmra.mrb[0].mxu0 %v816
      %v1478 = vpop.f32.mrb[0].mxu0
      %v1479 = vadd.f32 0.0, %v1478
      %v1480 = vpop.f32.mrb[0].mxu0
      %v1481 = vadd.f32 0.0, %v1480
      %1482 = vmatprep.mubr.f32.mxu0 0.0
      %1483 = vmatmul.mubr.f32.gmra.mrb[0].mxu0 %v819
      %v1484 = vpop.f32.mrb[0].mxu0
      %v1485 = vadd.f32 0.0, %v1484
      %v1486 = vpop.f32.mrb[0].mxu0
      %v1487 = vadd.f32 0.0, %v1486
      %1488 = vmatprep.mubr.f32.mxu0 0.0
      %1489 = vmatmul.mubr.f32.gmra.mrb[0].mxu0 %v822
      %v1490 = vpop.f32.mrb[0].mxu0
      %v1491 = vadd.f32 0.0, %v1490
      %v1492 = vpop.f32.mrb[0].mxu0
      %v1493 = vadd.f32 0.0, %v1492
      %1494 = vmatprep.mubr.f32.mxu0 0.0
      %1495 = vmatmul.mubr.f32.gmra.mrb[0].mxu0 %v825
      %v1496 = vpop.f32.mrb[0].mxu0
      %v1497 = vadd.f32 0.0, %v1496
      %v1498 = vpop.f32.mrb[0].mxu0
      %v1499 = vadd.f32 0.0, %v1498
      %1500 = vmatprep.mubr.f32.mxu0 0.0
      %1501 = vmatmul.mubr.f32.gmra.mrb[0].mxu0 %v828
      %v1502 = vpop.f32.mrb[0].mxu0
      %v1503 = vadd.f32 0.0, %v1502
      %v1504 = vpop.f32.mrb[0].mxu0
      %v1505 = vadd.f32 0.0, %v1504
      %1506 = vmatprep.mubr.f32.mxu0 0.0
      %1507 = vmatmul.mubr.f32.gmra.mrb[0].mxu0 %v831
      %v1508 = vpop.f32.mrb[0].mxu0
      %v1509 = vadd.f32 0.0, %v1508
      %v1510 = vpop.f32.mrb[0].mxu0
      %v1511 = vadd.f32 0.0, %v1510
      %1512 = vmatprep.mubr.f32.mxu0 0.0
      %1513 = vmatmul.mubr.f32.gmra.mrb[0].mxu0 %v834
      %v1514 = vpop.f32.mrb[0].mxu0
      %v1515 = vadd.f32 0.0, %v1514
      %v1516 = vpop.f32.mrb[0].mxu0
      %v1517 = vadd.f32 0.0, %v1516
      %1518 = vmatprep.mubr.f32.mxu0 0.0
      %1519 = vmatmul.mubr.f32.gmra.mrb[0].mxu0 %v837
      %v1520 = vpop.f32.mrb[0].mxu0
      %v1521 = vadd.f32 0.0, %v1520
      %v1522 = vpop.f32.mrb[0].mxu0
      %v1523 = vadd.f32 0.0, %v1522
      %1524 = vmatprep.mubr.f32.mxu0 0.0
      %1525 = vmatmul.mubr.f32.gmra.mrb[0].mxu0 %v840
      %v1526 = vpop.f32.mrb[0].mxu0
      %v1527 = vadd.f32 0.0, %v1526
      %v1528 = vpop.f32.mrb[0].mxu0
      %v1529 = vadd.f32 0.0, %v1528
      %1530 = vmatprep.mubr.f32.mxu0 0.0
      %1531 = vmatmul.mubr.f32.gmra.mrb[0].mxu0 %v843
      %v1532 = vpop.f32.mrb[0].mxu0
      %v1533 = vadd.f32 0.0, %v1532
      %v1534 = vpop.f32.mrb[0].mxu0
      %v1535 = vadd.f32 0.0, %v1534
      %1536 = vmatprep.mubr.f32.mxu0 0.0
      %1537 = vmatmul.mubr.f32.gmra.mrb[0].mxu0 %v846
      %v1538 = vpop.f32.mrb[0].mxu0
      %v1539 = vadd.f32 0.0, %v1538
      %v1540 = vpop.f32.mrb[0].mxu0
      %v1541 = vadd.f32 0.0, %v1540
      %1542 = vmatprep.mubr.f32.mxu0 0.0
      %1543 = vmatmul.mubr.f32.gmra.mrb[0].mxu0 %v849
      %v1544 = vpop.f32.mrb[0].mxu0
      %v1545 = vadd.f32 0.0, %v1544
      %v1546 = vpop.f32.mrb[0].mxu0
      %v1547 = vadd.f32 0.0, %v1546
      %1548 = vmatprep.mubr.f32.mxu0 0.0
      %1549 = vmatmul.mubr.f32.gmra.mrb[0].mxu0 %v852
      %v1550 = vpop.f32.mrb[0].mxu0
      %v1551 = vadd.f32 0.0, %v1550
      %v1552 = vpop.f32.mrb[0].mxu0
      %v1553 = vadd.f32 0.0, %v1552
      %1554 = vmatprep.mubr.f32.mxu0 0.0
      %1555 = vmatmul.mubr.f32.gmra.mrb[0].mxu0 %v855
      %v1556 = vpop.f32.mrb[0].mxu0
      %v1557 = vadd.f32 0.0, %v1556
      %v1558 = vpop.f32.mrb[0].mxu0
      %v1559 = vadd.f32 0.0, %v1558
      %1560 = vmatprep.mubr.f32.mxu0 0.0
      %1561 = vmatmul.mubr.f32.gmra.mrb[0].mxu0 %v858
      %v1562 = vpop.f32.mrb[0].mxu0
      %v1563 = vadd.f32 0.0, %v1562
      %v1564 = vpop.f32.mrb[0].mxu0
      %v1565 = vadd.f32 0.0, %v1564
      %1566 = vmatprep.mubr.f32.mxu0 0.0
      %1567 = vmatmul.mubr.f32.gmra.mrb[0].mxu0 %v861
      %v1568 = vpop.f32.mrb[0].mxu0
      %v1569 = vadd.f32 0.0, %v1568
      %v1570 = vpop.f32.mrb[0].mxu0
      %v1571 = vadd.f32 0.0, %v1570
      %1572 = vmatprep.mubr.f32.mxu0 0.0
      %1573 = vmatmul.mubr.f32.gmra.mrb[0].mxu0 %v864
      %v1574 = vpop.f32.mrb[0].mxu0
      %v1575 = vadd.f32 0.0, %v1574
      %v1576 = vpop.f32.mrb[0].mxu0
      %v1577 = vadd.f32 0.0, %v1576
      %1578 = vmatprep.mubr.f32.mxu0 0.0
      %1579 = vmatmul.mubr.f32.gmra.mrb[0].mxu0 %v867
      %v1580 = vpop.f32.mrb[0].mxu0
      %v1581 = vadd.f32 0.0, %v1580
      %v1582 = vpop.f32.mrb[0].mxu0
      %v1583 = vadd.f32 0.0, %v1582
      %1584 = vmatprep.mubr.f32.mxu0 0.0
      %1585 = vmatmul.mubr.f32.gmra.mrb[0].mxu0 %v870
      %v1586 = vpop.f32.mrb[0].mxu0
      %v1587 = vadd.f32 0.0, %v1586
      %v1588 = vpop.f32.mrb[0].mxu0
      %v1589 = vadd.f32 0.0, %v1588
      %1590 = vmatprep.mubr.f32.mxu0 0.0
      %1591 = vmatmul.mubr.f32.gmra.mrb[0].mxu0 %v873
      %v1592 = vpop.f32.mrb[0].mxu0
      %v1593 = vadd.f32 0.0, %v1592
      %v1594 = vpop.f32.mrb[0].mxu0
      %v1595 = vadd.f32 0.0, %v1594
      %1596 = vmatprep.mubr.f32.mxu0 0.0
      %1597 = vmatmul.mubr.f32.gmra.mrb[0].mxu0 %v876
      %v1598 = vpop.f32.mrb[0].mxu0
      %v1599 = vadd.f32 0.0, %v1598
      %v1600 = vpop.f32.mrb[0].mxu0
      %v1601 = vadd.f32 0.0, %v1600
      %1602 = vmatprep.mubr.f32.mxu0 0.0
      %1603 = vmatmul.mubr.f32.gmra.mrb[0].mxu0 %v879
      %v1604 = vpop.f32.mrb[0].mxu0
      %v1605 = vadd.f32 0.0, %v1604
      %v1606 = vpop.f32.mrb[0].mxu0
      %v1607 = vadd.f32 0.0, %v1606
      %1608 = vmatprep.mubr.f32.mxu0 0.0
      %1609 = vmatmul.mubr.f32.gmra.mrb[0].mxu0 %v882
      %v1610 = vpop.f32.mrb[0].mxu0
      %v1611 = vadd.f32 0.0, %v1610
      %v1612 = vpop.f32.mrb[0].mxu0
      %v1613 = vadd.f32 0.0, %v1612
      %1614 = vmatprep.mubr.f32.mxu0 0.0
      %1615 = vmatmul.mubr.f32.gmra.mrb[0].mxu0 %v885
      %v1616 = vpop.f32.mrb[0].mxu0
      %v1617 = vadd.f32 0.0, %v1616
      %v1618 = vpop.f32.mrb[0].mxu0
      %v1619 = vadd.f32 0.0, %v1618
      %1620 = vmatprep.mubr.f32.mxu0 0.0
      %1621 = vmatmul.mubr.f32.gmra.mrb[0].mxu0 %v888
      %v1622 = vpop.f32.mrb[0].mxu0
      %v1623 = vadd.f32 0.0, %v1622
      %v1624 = vpop.f32.mrb[0].mxu0
      %v1625 = vadd.f32 0.0, %v1624
      %1626 = vdwg.mxu0
      %v1628 = vsel %vm553, %v388, 0
      %v1631 = vsel %vm553, %v389, 0
      %v1634 = vsel %vm553, %v390, 0
      %v1637 = vsel %vm553, %v391, 0
      %1639 = vmatprep.subr.mxu0 %v501
      %1640 = vmatpush1.msra.mxu0 %v500
      %1641 = vmatprep.subr.mxu0 %v503
      %1642 = vmatpush1.msra.mxu0 %v502
      %1643 = vmatprep.subr.mxu0 %v505
      %1644 = vmatpush1.msra.mxu0 %v504
      %1645 = vmatprep.subr.mxu0 %v507
      %1646 = vmatpush1.msra.mxu0 %v506
      %1647 = vmatprep.subr.mxu0 %v509
      %1648 = vmatpush1.msra.mxu0 %v508
      %1649 = vmatprep.subr.mxu0 %v511
      %1650 = vmatpush1.msra.mxu0 %v510
      %1651 = vmatprep.subr.mxu0 %v513
      %1652 = vmatpush1.msra.mxu0 %v512
      %1653 = vmatprep.subr.mxu0 %v515
      %1654 = vmatpush1.msra.mxu0 %v514
      %1655 = vmatprep.subr.mxu0 %v517
      %1656 = vmatpush1.msra.mxu0 %v516
      %1657 = vmatprep.subr.mxu0 %v519
      %1658 = vmatpush1.msra.mxu0 %v518
      %1659 = vmatprep.subr.mxu0 %v521
      %1660 = vmatpush1.msra.mxu0 %v520
      %1661 = vmatprep.subr.mxu0 %v523
      %1662 = vmatpush1.msra.mxu0 %v522
      %1663 = vmatprep.subr.mxu0 0.0
      %1664 = vmatpush1.msra.mxu0 0.0
      %1665 = vmatprep.subr.mxu0 0.0
      %1666 = vmatpush1.msra.mxu0 0.0
      %1667 = vmatprep.subr.mxu0 0.0
      %1668 = vmatpush1.msra.mxu0 0.0
      %1669 = vmatprep.subr.mxu0 0.0
      %1670 = vmatpush1.msra.mxu0 0.0
      %1671 = vmatprep.subr.mxu0 0.0
      %1672 = vmatpush1.msra.mxu0 0.0
      %1673 = vmatprep.subr.mxu0 0.0
      %1674 = vmatpush1.msra.mxu0 0.0
      %1675 = vmatprep.subr.mxu0 0.0
      %1676 = vmatpush1.msra.mxu0 0.0
      %1677 = vmatprep.subr.mxu0 0.0
      %1678 = vmatpush1.msra.mxu0 0.0
      %1679 = vmatprep.subr.mxu0 0.0
      %1680 = vmatpush1.msra.mxu0 0.0
      %1681 = vmatprep.subr.mxu0 0.0
      %1682 = vmatpush1.msra.mxu0 0.0
      %1683 = vmatprep.subr.mxu0 0.0
      %1684 = vmatpush1.msra.mxu0 0.0
      %1685 = vmatprep.subr.mxu0 0.0
      %1686 = vmatpush1.msra.mxu0 0.0
      %1687 = vmatprep.subr.mxu0 0.0
      %1688 = vmatpush1.msra.mxu0 0.0
      %1689 = vmatprep.subr.mxu0 0.0
      %1690 = vmatpush1.msra.mxu0 0.0
      %1691 = vmatprep.subr.mxu0 0.0
      %1692 = vmatpush1.msra.mxu0 0.0
      %1693 = vmatprep.subr.mxu0 0.0
      %1694 = vmatpush1.msra.mxu0 0.0
      %1695 = vmatprep.subr.mxu0 0.0
      %1696 = vmatpush1.msra.mxu0 0.0
      %1697 = vmatprep.subr.mxu0 0.0
      %1698 = vmatpush1.msra.mxu0 0.0
      %1699 = vmatprep.subr.mxu0 0.0
      %1700 = vmatpush1.msra.mxu0 0.0
      %1701 = vmatprep.subr.mxu0 0.0
      %1702 = vmatpush1.msra.mxu0 0.0
      %1703 = vmatprep.mubr.f32.mxu0 0.0
      %1704 = vmatmul.mubr.f32.gmra.mrb[0].mxu0 %v1628
      %v1705 = vpop.f32.mrb[0].mxu0
      %v1706 = vadd.f32 %v957, %v1705
      %v1707 = vpop.f32.mrb[0].mxu0
      %v1708 = vadd.f32 %v959, %v1707
      %1709 = vmatprep.mubr.f32.mxu0 0.0
      %1710 = vmatmul.mubr.f32.gmra.mrb[0].mxu0 %v1631
      %v1711 = vpop.f32.mrb[0].mxu0
      %v1712 = vadd.f32 %v963, %v1711
      %v1713 = vpop.f32.mrb[0].mxu0
      %v1714 = vadd.f32 %v965, %v1713
      %1715 = vmatprep.mubr.f32.mxu0 0.0
      %1716 = vmatmul.mubr.f32.gmra.mrb[0].mxu0 %v1634
      %v1717 = vpop.f32.mrb[0].mxu0
      %v1718 = vadd.f32 %v969, %v1717
      %v1719 = vpop.f32.mrb[0].mxu0
      %v1720 = vadd.f32 %v971, %v1719
      %1721 = vmatprep.mubr.f32.mxu0 0.0
      %1722 = vmatmul.mubr.f32.gmra.mrb[0].mxu0 %v1637
      %v1723 = vpop.f32.mrb[0].mxu0
      %v1724 = vadd.f32 %v975, %v1723
      %v1725 = vpop.f32.mrb[0].mxu0
      %v1726 = vadd.f32 %v977, %v1725
      %1727 = vmatprep.mubr.f32.mxu0 0.0
      %1728 = vmatmul.mubr.f32.gmra.mrb[0].mxu0 %v555
      %v1729 = vpop.f32.mrb[0].mxu0
      %v1730 = vadd.f32 %v981, %v1729
      %v1731 = vpop.f32.mrb[0].mxu0
      %v1732 = vadd.f32 %v983, %v1731
      %1733 = vmatprep.mubr.f32.mxu0 0.0
      %1734 = vmatmul.mubr.f32.gmra.mrb[0].mxu0 %v558
      %v1735 = vpop.f32.mrb[0].mxu0
      %v1736 = vadd.f32 %v987, %v1735
      %v1737 = vpop.f32.mrb[0].mxu0
      %v1738 = vadd.f32 %v989, %v1737
      %1739 = vmatprep.mubr.f32.mxu0 0.0
      %1740 = vmatmul.mubr.f32.gmra.mrb[0].mxu0 %v561
      %v1741 = vpop.f32.mrb[0].mxu0
      %v1742 = vadd.f32 %v993, %v1741
      %v1743 = vpop.f32.mrb[0].mxu0
      %v1744 = vadd.f32 %v995, %v1743
      %1745 = vmatprep.mubr.f32.mxu0 0.0
      %1746 = vmatmul.mubr.f32.gmra.mrb[0].mxu0 %v564
      %v1747 = vpop.f32.mrb[0].mxu0
      %v1748 = vadd.f32 %v999, %v1747
      %v1749 = vpop.f32.mrb[0].mxu0
      %v1750 = vadd.f32 %v1001, %v1749
      %1751 = vmatprep.mubr.f32.mxu0 0.0
      %1752 = vmatmul.mubr.f32.gmra.mrb[0].mxu0 %v567
      %v1753 = vpop.f32.mrb[0].mxu0
      %v1754 = vadd.f32 %v1005, %v1753
      %v1755 = vpop.f32.mrb[0].mxu0
      %v1756 = vadd.f32 %v1007, %v1755
      %1757 = vmatprep.mubr.f32.mxu0 0.0
      %1758 = vmatmul.mubr.f32.gmra.mrb[0].mxu0 %v570
      %v1759 = vpop.f32.mrb[0].mxu0
      %v1760 = vadd.f32 %v1011, %v1759
      %v1761 = vpop.f32.mrb[0].mxu0
      %v1762 = vadd.f32 %v1013, %v1761
      %1763 = vmatprep.mubr.f32.mxu0 0.0
      %1764 = vmatmul.mubr.f32.gmra.mrb[0].mxu0 %v573
      %v1765 = vpop.f32.mrb[0].mxu0
      %v1766 = vadd.f32 %v1017, %v1765
      %v1767 = vpop.f32.mrb[0].mxu0
      %v1768 = vadd.f32 %v1019, %v1767
      %1769 = vmatprep.mubr.f32.mxu0 0.0
      %1770 = vmatmul.mubr.f32.gmra.mrb[0].mxu0 %v576
      %v1771 = vpop.f32.mrb[0].mxu0
      %v1772 = vadd.f32 %v1023, %v1771
      %v1773 = vpop.f32.mrb[0].mxu0
      %v1774 = vadd.f32 %v1025, %v1773
      %1775 = vmatprep.mubr.f32.mxu0 0.0
      %1776 = vmatmul.mubr.f32.gmra.mrb[0].mxu0 %v579
      %v1777 = vpop.f32.mrb[0].mxu0
      %v1778 = vadd.f32 %v1029, %v1777
      %v1779 = vpop.f32.mrb[0].mxu0
      %v1780 = vadd.f32 %v1031, %v1779
      %1781 = vmatprep.mubr.f32.mxu0 0.0
      %1782 = vmatmul.mubr.f32.gmra.mrb[0].mxu0 %v582
      %v1783 = vpop.f32.mrb[0].mxu0
      %v1784 = vadd.f32 %v1035, %v1783
      %v1785 = vpop.f32.mrb[0].mxu0
      %v1786 = vadd.f32 %v1037, %v1785
      %1787 = vmatprep.mubr.f32.mxu0 0.0
      %1788 = vmatmul.mubr.f32.gmra.mrb[0].mxu0 %v585
      %v1789 = vpop.f32.mrb[0].mxu0
      %v1790 = vadd.f32 %v1041, %v1789
      %v1791 = vpop.f32.mrb[0].mxu0
      %v1792 = vadd.f32 %v1043, %v1791
      %1793 = vmatprep.mubr.f32.mxu0 0.0
      %1794 = vmatmul.mubr.f32.gmra.mrb[0].mxu0 %v588
      %v1795 = vpop.f32.mrb[0].mxu0
      %v1796 = vadd.f32 %v1047, %v1795
      %v1797 = vpop.f32.mrb[0].mxu0
      %v1798 = vadd.f32 %v1049, %v1797
      %1799 = vmatprep.mubr.f32.mxu0 0.0
      %1800 = vmatmul.mubr.f32.gmra.mrb[0].mxu0 %v591
      %v1801 = vpop.f32.mrb[0].mxu0
      %v1802 = vadd.f32 %v1053, %v1801
      %v1803 = vpop.f32.mrb[0].mxu0
      %v1804 = vadd.f32 %v1055, %v1803
      %1805 = vmatprep.mubr.f32.mxu0 0.0
      %1806 = vmatmul.mubr.f32.gmra.mrb[0].mxu0 %v594
      %v1807 = vpop.f32.mrb[0].mxu0
      %v1808 = vadd.f32 %v1059, %v1807
      %v1809 = vpop.f32.mrb[0].mxu0
      %v1810 = vadd.f32 %v1061, %v1809
      %1811 = vmatprep.mubr.f32.mxu0 0.0
      %1812 = vmatmul.mubr.f32.gmra.mrb[0].mxu0 %v597
      %v1813 = vpop.f32.mrb[0].mxu0
      %v1814 = vadd.f32 %v1065, %v1813
      %v1815 = vpop.f32.mrb[0].mxu0
      %v1816 = vadd.f32 %v1067, %v1815
      %1817 = vmatprep.mubr.f32.mxu0 0.0
      %1818 = vmatmul.mubr.f32.gmra.mrb[0].mxu0 %v600
      %v1819 = vpop.f32.mrb[0].mxu0
      %v1820 = vadd.f32 %v1071, %v1819
      %v1821 = vpop.f32.mrb[0].mxu0
      %v1822 = vadd.f32 %v1073, %v1821
      %1823 = vmatprep.mubr.f32.mxu0 0.0
      %1824 = vmatmul.mubr.f32.gmra.mrb[0].mxu0 %v603
      %v1825 = vpop.f32.mrb[0].mxu0
      %v1826 = vadd.f32 %v1077, %v1825
      %v1827 = vpop.f32.mrb[0].mxu0
      %v1828 = vadd.f32 %v1079, %v1827
      %1829 = vmatprep.mubr.f32.mxu0 0.0
      %1830 = vmatmul.mubr.f32.gmra.mrb[0].mxu0 %v606
      %v1831 = vpop.f32.mrb[0].mxu0
      %v1832 = vadd.f32 %v1083, %v1831
      %v1833 = vpop.f32.mrb[0].mxu0
      %v1834 = vadd.f32 %v1085, %v1833
      %1835 = vmatprep.mubr.f32.mxu0 0.0
      %1836 = vmatmul.mubr.f32.gmra.mrb[0].mxu0 %v609
      %v1837 = vpop.f32.mrb[0].mxu0
      %v1838 = vadd.f32 %v1089, %v1837
      %v1839 = vpop.f32.mrb[0].mxu0
      %v1840 = vadd.f32 %v1091, %v1839
      %1841 = vmatprep.mubr.f32.mxu0 0.0
      %1842 = vmatmul.mubr.f32.gmra.mrb[0].mxu0 %v612
      %v1843 = vpop.f32.mrb[0].mxu0
      %v1844 = vadd.f32 %v1095, %v1843
      %v1845 = vpop.f32.mrb[0].mxu0
      %v1846 = vadd.f32 %v1097, %v1845
      %1847 = vmatprep.mubr.f32.mxu0 0.0
      %1848 = vmatmul.mubr.f32.gmra.mrb[0].mxu0 %v615
      %v1849 = vpop.f32.mrb[0].mxu0
      %v1850 = vadd.f32 %v1101, %v1849
      %v1851 = vpop.f32.mrb[0].mxu0
      %v1852 = vadd.f32 %v1103, %v1851
      %1853 = vmatprep.mubr.f32.mxu0 0.0
      %1854 = vmatmul.mubr.f32.gmra.mrb[0].mxu0 %v618
      %v1855 = vpop.f32.mrb[0].mxu0
      %v1856 = vadd.f32 %v1107, %v1855
      %v1857 = vpop.f32.mrb[0].mxu0
      %v1858 = vadd.f32 %v1109, %v1857
      %1859 = vmatprep.mubr.f32.mxu0 0.0
      %1860 = vmatmul.mubr.f32.gmra.mrb[0].mxu0 %v621
      %v1861 = vpop.f32.mrb[0].mxu0
      %v1862 = vadd.f32 %v1113, %v1861
      %v1863 = vpop.f32.mrb[0].mxu0
      %v1864 = vadd.f32 %v1115, %v1863
      %1865 = vmatprep.mubr.f32.mxu0 0.0
      %1866 = vmatmul.mubr.f32.gmra.mrb[0].mxu0 %v624
      %v1867 = vpop.f32.mrb[0].mxu0
      %v1868 = vadd.f32 %v1119, %v1867
      %v1869 = vpop.f32.mrb[0].mxu0
      %v1870 = vadd.f32 %v1121, %v1869
      %1871 = vmatprep.mubr.f32.mxu0 0.0
      %1872 = vmatmul.mubr.f32.gmra.mrb[0].mxu0 %v627
      %v1873 = vpop.f32.mrb[0].mxu0
      %v1874 = vadd.f32 %v1125, %v1873
      %v1875 = vpop.f32.mrb[0].mxu0
      %v1876 = vadd.f32 %v1127, %v1875
      %1877 = vmatprep.mubr.f32.mxu0 0.0
      %1878 = vmatmul.mubr.f32.gmra.mrb[0].mxu0 %v630
      %v1879 = vpop.f32.mrb[0].mxu0
      %v1880 = vadd.f32 %v1131, %v1879
      %v1881 = vpop.f32.mrb[0].mxu0
      %v1882 = vadd.f32 %v1133, %v1881
      %1883 = vmatprep.mubr.f32.mxu0 0.0
      %1884 = vmatmul.mubr.f32.gmra.mrb[0].mxu0 %v633
      %v1885 = vpop.f32.mrb[0].mxu0
      %v1886 = vadd.f32 %v1137, %v1885
      %v1887 = vpop.f32.mrb[0].mxu0
      %v1888 = vadd.f32 %v1139, %v1887
      %1889 = vmatprep.mubr.f32.mxu0 0.0
      %1890 = vmatmul.mubr.f32.gmra.mrb[0].mxu0 %v636
      %v1891 = vpop.f32.mrb[0].mxu0
      %v1892 = vadd.f32 %v1143, %v1891
      %v1893 = vpop.f32.mrb[0].mxu0
      %v1894 = vadd.f32 %v1145, %v1893
      %1895 = vmatprep.mubr.f32.mxu0 0.0
      %1896 = vmatmul.mubr.f32.gmra.mrb[0].mxu0 %v639
      %v1897 = vpop.f32.mrb[0].mxu0
      %v1898 = vadd.f32 %v1149, %v1897
      %v1899 = vpop.f32.mrb[0].mxu0
      %v1900 = vadd.f32 %v1151, %v1899
      %1901 = vmatprep.mubr.f32.mxu0 0.0
      %1902 = vmatmul.mubr.f32.gmra.mrb[0].mxu0 %v642
      %v1903 = vpop.f32.mrb[0].mxu0
      %v1904 = vadd.f32 %v1155, %v1903
      %v1905 = vpop.f32.mrb[0].mxu0
      %v1906 = vadd.f32 %v1157, %v1905
      %1907 = vmatprep.mubr.f32.mxu0 0.0
      %1908 = vmatmul.mubr.f32.gmra.mrb[0].mxu0 %v645
      %v1909 = vpop.f32.mrb[0].mxu0
      %v1910 = vadd.f32 %v1161, %v1909
      %v1911 = vpop.f32.mrb[0].mxu0
      %v1912 = vadd.f32 %v1163, %v1911
      %1913 = vmatprep.mubr.f32.mxu0 0.0
      %1914 = vmatmul.mubr.f32.gmra.mrb[0].mxu0 %v648
      %v1915 = vpop.f32.mrb[0].mxu0
      %v1916 = vadd.f32 %v1167, %v1915
      %v1917 = vpop.f32.mrb[0].mxu0
      %v1918 = vadd.f32 %v1169, %v1917
      %1919 = vmatprep.mubr.f32.mxu0 0.0
      %1920 = vmatmul.mubr.f32.gmra.mrb[0].mxu0 %v651
      %v1921 = vpop.f32.mrb[0].mxu0
      %v1922 = vadd.f32 %v1173, %v1921
      %v1923 = vpop.f32.mrb[0].mxu0
      %v1924 = vadd.f32 %v1175, %v1923
      %1925 = vmatprep.mubr.f32.mxu0 0.0
      %1926 = vmatmul.mubr.f32.gmra.mrb[0].mxu0 %v654
      %v1927 = vpop.f32.mrb[0].mxu0
      %v1928 = vadd.f32 %v1179, %v1927
      %v1929 = vpop.f32.mrb[0].mxu0
      %v1930 = vadd.f32 %v1181, %v1929
      %1931 = vmatprep.mubr.f32.mxu0 0.0
      %1932 = vmatmul.mubr.f32.gmra.mrb[0].mxu0 %v657
      %v1933 = vpop.f32.mrb[0].mxu0
      %v1934 = vadd.f32 %v1185, %v1933
      %v1935 = vpop.f32.mrb[0].mxu0
      %v1936 = vadd.f32 %v1187, %v1935
      %1937 = vmatprep.mubr.f32.mxu0 0.0
      %1938 = vmatmul.mubr.f32.gmra.mrb[0].mxu0 %v660
      %v1939 = vpop.f32.mrb[0].mxu0
      %v1940 = vadd.f32 %v1191, %v1939
      %v1941 = vpop.f32.mrb[0].mxu0
      %v1942 = vadd.f32 %v1193, %v1941
      %1943 = vmatprep.mubr.f32.mxu0 0.0
      %1944 = vmatmul.mubr.f32.gmra.mrb[0].mxu0 %v663
      %v1945 = vpop.f32.mrb[0].mxu0
      %v1946 = vadd.f32 %v1197, %v1945
      %v1947 = vpop.f32.mrb[0].mxu0
      %v1948 = vadd.f32 %v1199, %v1947
      %1949 = vmatprep.mubr.f32.mxu0 0.0
      %1950 = vmatmul.mubr.f32.gmra.mrb[0].mxu0 %v666
      %v1951 = vpop.f32.mrb[0].mxu0
      %v1952 = vadd.f32 %v1203, %v1951
      %v1953 = vpop.f32.mrb[0].mxu0
      %v1954 = vadd.f32 %v1205, %v1953
      %1955 = vmatprep.mubr.f32.mxu0 0.0
      %1956 = vmatmul.mubr.f32.gmra.mrb[0].mxu0 %v669
      %v1957 = vpop.f32.mrb[0].mxu0
      %v1958 = vadd.f32 %v1209, %v1957
      %v1959 = vpop.f32.mrb[0].mxu0
      %v1960 = vadd.f32 %v1211, %v1959
      %1961 = vmatprep.mubr.f32.mxu0 0.0
      %1962 = vmatmul.mubr.f32.gmra.mrb[0].mxu0 %v672
      %v1963 = vpop.f32.mrb[0].mxu0
      %v1964 = vadd.f32 %v1215, %v1963
      %v1965 = vpop.f32.mrb[0].mxu0
      %v1966 = vadd.f32 %v1217, %v1965
      %1967 = vmatprep.mubr.f32.mxu0 0.0
      %1968 = vmatmul.mubr.f32.gmra.mrb[0].mxu0 %v675
      %v1969 = vpop.f32.mrb[0].mxu0
      %v1970 = vadd.f32 %v1221, %v1969
      %v1971 = vpop.f32.mrb[0].mxu0
      %v1972 = vadd.f32 %v1223, %v1971
      %1973 = vmatprep.mubr.f32.mxu0 0.0
      %1974 = vmatmul.mubr.f32.gmra.mrb[0].mxu0 %v678
      %v1975 = vpop.f32.mrb[0].mxu0
      %v1976 = vadd.f32 %v1227, %v1975
      %v1977 = vpop.f32.mrb[0].mxu0
      %v1978 = vadd.f32 %v1229, %v1977
      %1979 = vmatprep.mubr.f32.mxu0 0.0
      %1980 = vmatmul.mubr.f32.gmra.mrb[0].mxu0 %v681
      %v1981 = vpop.f32.mrb[0].mxu0
      %v1982 = vadd.f32 %v1233, %v1981
      %v1983 = vpop.f32.mrb[0].mxu0
      %v1984 = vadd.f32 %v1235, %v1983
      %1985 = vmatprep.mubr.f32.mxu0 0.0
      %1986 = vmatmul.mubr.f32.gmra.mrb[0].mxu0 %v684
      %v1987 = vpop.f32.mrb[0].mxu0
      %v1988 = vadd.f32 %v1239, %v1987
      %v1989 = vpop.f32.mrb[0].mxu0
      %v1990 = vadd.f32 %v1241, %v1989
      %1991 = vmatprep.mubr.f32.mxu0 0.0
      %1992 = vmatmul.mubr.f32.gmra.mrb[0].mxu0 %v687
      %v1993 = vpop.f32.mrb[0].mxu0
      %v1994 = vadd.f32 %v1245, %v1993
      %v1995 = vpop.f32.mrb[0].mxu0
      %v1996 = vadd.f32 %v1247, %v1995
      %1997 = vmatprep.mubr.f32.mxu0 0.0
      %1998 = vmatmul.mubr.f32.gmra.mrb[0].mxu0 %v690
      %v1999 = vpop.f32.mrb[0].mxu0
      %v2000 = vadd.f32 %v1251, %v1999
      %v2001 = vpop.f32.mrb[0].mxu0
      %v2002 = vadd.f32 %v1253, %v2001
      %2003 = vmatprep.mubr.f32.mxu0 0.0
      %2004 = vmatmul.mubr.f32.gmra.mrb[0].mxu0 %v693
      %v2005 = vpop.f32.mrb[0].mxu0
      %v2006 = vadd.f32 %v1257, %v2005
      %v2007 = vpop.f32.mrb[0].mxu0
      %v2008 = vadd.f32 %v1259, %v2007
      %2009 = vmatprep.mubr.f32.mxu0 0.0
      %2010 = vmatmul.mubr.f32.gmra.mrb[0].mxu0 %v696
      %v2011 = vpop.f32.mrb[0].mxu0
      %v2012 = vadd.f32 %v1263, %v2011
      %v2013 = vpop.f32.mrb[0].mxu0
      %v2014 = vadd.f32 %v1265, %v2013
      %2015 = vmatprep.mubr.f32.mxu0 0.0
      %2016 = vmatmul.mubr.f32.gmra.mrb[0].mxu0 %v699
      %v2017 = vpop.f32.mrb[0].mxu0
      %v2018 = vadd.f32 %v1269, %v2017
      %v2019 = vpop.f32.mrb[0].mxu0
      %v2020 = vadd.f32 %v1271, %v2019
      %2021 = vmatprep.mubr.f32.mxu0 0.0
      %2022 = vmatmul.mubr.f32.gmra.mrb[0].mxu0 %v702
      %v2023 = vpop.f32.mrb[0].mxu0
      %v2024 = vadd.f32 %v1275, %v2023
      %v2025 = vpop.f32.mrb[0].mxu0
      %v2026 = vadd.f32 %v1277, %v2025
      %2027 = vmatprep.mubr.f32.mxu0 0.0
      %2028 = vmatmul.mubr.f32.gmra.mrb[0].mxu0 %v705
      %v2029 = vpop.f32.mrb[0].mxu0
      %v2030 = vadd.f32 %v1281, %v2029
      %v2031 = vpop.f32.mrb[0].mxu0
      %v2032 = vadd.f32 %v1283, %v2031
      %2033 = vmatprep.mubr.f32.mxu0 0.0
      %2034 = vmatmul.mubr.f32.gmra.mrb[0].mxu0 %v708
      %v2035 = vpop.f32.mrb[0].mxu0
      %v2036 = vadd.f32 %v1287, %v2035
      %v2037 = vpop.f32.mrb[0].mxu0
      %v2038 = vadd.f32 %v1289, %v2037
      %2039 = vmatprep.mubr.f32.mxu0 0.0
      %2040 = vmatmul.mubr.f32.gmra.mrb[0].mxu0 %v711
      %v2041 = vpop.f32.mrb[0].mxu0
      %v2042 = vadd.f32 %v1293, %v2041
      %v2043 = vpop.f32.mrb[0].mxu0
      %v2044 = vadd.f32 %v1295, %v2043
      %2045 = vmatprep.mubr.f32.mxu0 0.0
      %2046 = vmatmul.mubr.f32.gmra.mrb[0].mxu0 %v714
      %v2047 = vpop.f32.mrb[0].mxu0
      %v2048 = vadd.f32 %v1299, %v2047
      %v2049 = vpop.f32.mrb[0].mxu0
      %v2050 = vadd.f32 %v1301, %v2049
      %2051 = vmatprep.mubr.f32.mxu0 0.0
      %2052 = vmatmul.mubr.f32.gmra.mrb[0].mxu0 %v717
      %v2053 = vpop.f32.mrb[0].mxu0
      %v2054 = vadd.f32 %v1305, %v2053
      %v2055 = vpop.f32.mrb[0].mxu0
      %v2056 = vadd.f32 %v1307, %v2055
      %2057 = vmatprep.mubr.f32.mxu0 0.0
      %2058 = vmatmul.mubr.f32.gmra.mrb[0].mxu0 %v720
      %v2059 = vpop.f32.mrb[0].mxu0
      %v2060 = vadd.f32 %v1311, %v2059
      %v2061 = vpop.f32.mrb[0].mxu0
      %v2062 = vadd.f32 %v1313, %v2061
      %2063 = vmatprep.mubr.f32.mxu0 0.0
      %2064 = vmatmul.mubr.f32.gmra.mrb[0].mxu0 %v723
      %v2065 = vpop.f32.mrb[0].mxu0
      %v2066 = vadd.f32 %v1317, %v2065
      %v2067 = vpop.f32.mrb[0].mxu0
      %v2068 = vadd.f32 %v1319, %v2067
      %2069 = vmatprep.mubr.f32.mxu0 0.0
      %2070 = vmatmul.mubr.f32.gmra.mrb[0].mxu0 %v726
      %v2071 = vpop.f32.mrb[0].mxu0
      %v2072 = vadd.f32 %v1323, %v2071
      %v2073 = vpop.f32.mrb[0].mxu0
      %v2074 = vadd.f32 %v1325, %v2073
      %2075 = vmatprep.mubr.f32.mxu0 0.0
      %2076 = vmatmul.mubr.f32.gmra.mrb[0].mxu0 %v729
      %v2077 = vpop.f32.mrb[0].mxu0
      %v2078 = vadd.f32 %v1329, %v2077
      %v2079 = vpop.f32.mrb[0].mxu0
      %v2080 = vadd.f32 %v1331, %v2079
      %2081 = vmatprep.mubr.f32.mxu0 0.0
      %2082 = vmatmul.mubr.f32.gmra.mrb[0].mxu0 %v732
      %v2083 = vpop.f32.mrb[0].mxu0
      %v2084 = vadd.f32 %v1335, %v2083
      %v2085 = vpop.f32.mrb[0].mxu0
      %v2086 = vadd.f32 %v1337, %v2085
      %2087 = vmatprep.mubr.f32.mxu0 0.0
      %2088 = vmatmul.mubr.f32.gmra.mrb[0].mxu0 %v735
      %v2089 = vpop.f32.mrb[0].mxu0
      %v2090 = vadd.f32 %v1341, %v2089
      %v2091 = vpop.f32.mrb[0].mxu0
      %v2092 = vadd.f32 %v1343, %v2091
      %2093 = vmatprep.mubr.f32.mxu0 0.0
      %2094 = vmatmul.mubr.f32.gmra.mrb[0].mxu0 %v738
      %v2095 = vpop.f32.mrb[0].mxu0
      %v2096 = vadd.f32 %v1347, %v2095
      %v2097 = vpop.f32.mrb[0].mxu0
      %v2098 = vadd.f32 %v1349, %v2097
      %2099 = vmatprep.mubr.f32.mxu0 0.0
      %2100 = vmatmul.mubr.f32.gmra.mrb[0].mxu0 %v741
      %v2101 = vpop.f32.mrb[0].mxu0
      %v2102 = vadd.f32 %v1353, %v2101
      %v2103 = vpop.f32.mrb[0].mxu0
      %v2104 = vadd.f32 %v1355, %v2103
      %2105 = vmatprep.mubr.f32.mxu0 0.0
      %2106 = vmatmul.mubr.f32.gmra.mrb[0].mxu0 %v744
      %v2107 = vpop.f32.mrb[0].mxu0
      %v2108 = vadd.f32 %v1359, %v2107
      %v2109 = vpop.f32.mrb[0].mxu0
      %v2110 = vadd.f32 %v1361, %v2109
      %2111 = vmatprep.mubr.f32.mxu0 0.0
      %2112 = vmatmul.mubr.f32.gmra.mrb[0].mxu0 %v747
      %v2113 = vpop.f32.mrb[0].mxu0
      %v2114 = vadd.f32 %v1365, %v2113
      %v2115 = vpop.f32.mrb[0].mxu0
      %v2116 = vadd.f32 %v1367, %v2115
      %2117 = vmatprep.mubr.f32.mxu0 0.0
      %2118 = vmatmul.mubr.f32.gmra.mrb[0].mxu0 %v750
      %v2119 = vpop.f32.mrb[0].mxu0
      %v2120 = vadd.f32 %v1371, %v2119
      %v2121 = vpop.f32.mrb[0].mxu0
      %v2122 = vadd.f32 %v1373, %v2121
      %2123 = vmatprep.mubr.f32.mxu0 0.0
      %2124 = vmatmul.mubr.f32.gmra.mrb[0].mxu0 %v753
      %v2125 = vpop.f32.mrb[0].mxu0
      %v2126 = vadd.f32 %v1377, %v2125
      %v2127 = vpop.f32.mrb[0].mxu0
      %v2128 = vadd.f32 %v1379, %v2127
      %2129 = vmatprep.mubr.f32.mxu0 0.0
      %2130 = vmatmul.mubr.f32.gmra.mrb[0].mxu0 %v756
      %v2131 = vpop.f32.mrb[0].mxu0
      %v2132 = vadd.f32 %v1383, %v2131
      %v2133 = vpop.f32.mrb[0].mxu0
      %v2134 = vadd.f32 %v1385, %v2133
      %2135 = vmatprep.mubr.f32.mxu0 0.0
      %2136 = vmatmul.mubr.f32.gmra.mrb[0].mxu0 %v759
      %v2137 = vpop.f32.mrb[0].mxu0
      %v2138 = vadd.f32 %v1389, %v2137
      %v2139 = vpop.f32.mrb[0].mxu0
      %v2140 = vadd.f32 %v1391, %v2139
      %2141 = vmatprep.mubr.f32.mxu0 0.0
      %2142 = vmatmul.mubr.f32.gmra.mrb[0].mxu0 %v762
      %v2143 = vpop.f32.mrb[0].mxu0
      %v2144 = vadd.f32 %v1395, %v2143
      %v2145 = vpop.f32.mrb[0].mxu0
      %v2146 = vadd.f32 %v1397, %v2145
      %2147 = vmatprep.mubr.f32.mxu0 0.0
      %2148 = vmatmul.mubr.f32.gmra.mrb[0].mxu0 %v765
      %v2149 = vpop.f32.mrb[0].mxu0
      %v2150 = vadd.f32 %v1401, %v2149
      %v2151 = vpop.f32.mrb[0].mxu0
      %v2152 = vadd.f32 %v1403, %v2151
      %2153 = vmatprep.mubr.f32.mxu0 0.0
      %2154 = vmatmul.mubr.f32.gmra.mrb[0].mxu0 %v768
      %v2155 = vpop.f32.mrb[0].mxu0
      %v2156 = vadd.f32 %v1407, %v2155
      %v2157 = vpop.f32.mrb[0].mxu0
      %v2158 = vadd.f32 %v1409, %v2157
      %2159 = vmatprep.mubr.f32.mxu0 0.0
      %2160 = vmatmul.mubr.f32.gmra.mrb[0].mxu0 %v771
      %v2161 = vpop.f32.mrb[0].mxu0
      %v2162 = vadd.f32 %v1413, %v2161
      %v2163 = vpop.f32.mrb[0].mxu0
      %v2164 = vadd.f32 %v1415, %v2163
      %2165 = vmatprep.mubr.f32.mxu0 0.0
      %2166 = vmatmul.mubr.f32.gmra.mrb[0].mxu0 %v774
      %v2167 = vpop.f32.mrb[0].mxu0
      %v2168 = vadd.f32 %v1419, %v2167
      %v2169 = vpop.f32.mrb[0].mxu0
      %v2170 = vadd.f32 %v1421, %v2169
      %2171 = vmatprep.mubr.f32.mxu0 0.0
      %2172 = vmatmul.mubr.f32.gmra.mrb[0].mxu0 %v777
      %v2173 = vpop.f32.mrb[0].mxu0
      %v2174 = vadd.f32 %v1425, %v2173
      %v2175 = vpop.f32.mrb[0].mxu0
      %v2176 = vadd.f32 %v1427, %v2175
      %2177 = vmatprep.mubr.f32.mxu0 0.0
      %2178 = vmatmul.mubr.f32.gmra.mrb[0].mxu0 %v780
      %v2179 = vpop.f32.mrb[0].mxu0
      %v2180 = vadd.f32 %v1431, %v2179
      %v2181 = vpop.f32.mrb[0].mxu0
      %v2182 = vadd.f32 %v1433, %v2181
      %2183 = vmatprep.mubr.f32.mxu0 0.0
      %2184 = vmatmul.mubr.f32.gmra.mrb[0].mxu0 %v783
      %v2185 = vpop.f32.mrb[0].mxu0
      %v2186 = vadd.f32 %v1437, %v2185
      %v2187 = vpop.f32.mrb[0].mxu0
      %v2188 = vadd.f32 %v1439, %v2187
      %2189 = vmatprep.mubr.f32.mxu0 0.0
      %2190 = vmatmul.mubr.f32.gmra.mrb[0].mxu0 %v786
      %v2191 = vpop.f32.mrb[0].mxu0
      %v2192 = vadd.f32 %v1443, %v2191
      %v2193 = vpop.f32.mrb[0].mxu0
      %v2194 = vadd.f32 %v1445, %v2193
      %2195 = vmatprep.mubr.f32.mxu0 0.0
      %2196 = vmatmul.mubr.f32.gmra.mrb[0].mxu0 %v789
      %v2197 = vpop.f32.mrb[0].mxu0
      %v2198 = vadd.f32 %v1449, %v2197
      %v2199 = vpop.f32.mrb[0].mxu0
      %v2200 = vadd.f32 %v1451, %v2199
      %2201 = vmatprep.mubr.f32.mxu0 0.0
      %2202 = vmatmul.mubr.f32.gmra.mrb[0].mxu0 %v792
      %v2203 = vpop.f32.mrb[0].mxu0
      %v2204 = vadd.f32 %v1455, %v2203
      %v2205 = vpop.f32.mrb[0].mxu0
      %v2206 = vadd.f32 %v1457, %v2205
      %2207 = vmatprep.mubr.f32.mxu0 0.0
      %2208 = vmatmul.mubr.f32.gmra.mrb[0].mxu0 %v795
      %v2209 = vpop.f32.mrb[0].mxu0
      %v2210 = vadd.f32 %v1461, %v2209
      %v2211 = vpop.f32.mrb[0].mxu0
      %v2212 = vadd.f32 %v1463, %v2211
      %2213 = vmatprep.mubr.f32.mxu0 0.0
      %2214 = vmatmul.mubr.f32.gmra.mrb[0].mxu0 %v798
      %v2215 = vpop.f32.mrb[0].mxu0
      %v2216 = vadd.f32 %v1467, %v2215
      %v2217 = vpop.f32.mrb[0].mxu0
      %v2218 = vadd.f32 %v1469, %v2217
      %2219 = vmatprep.mubr.f32.mxu0 0.0
      %2220 = vmatmul.mubr.f32.gmra.mrb[0].mxu0 %v801
      %v2221 = vpop.f32.mrb[0].mxu0
      %v2222 = vadd.f32 %v1473, %v2221
      %v2223 = vpop.f32.mrb[0].mxu0
      %v2224 = vadd.f32 %v1475, %v2223
      %2225 = vmatprep.mubr.f32.mxu0 0.0
      %2226 = vmatmul.mubr.f32.gmra.mrb[0].mxu0 %v804
      %v2227 = vpop.f32.mrb[0].mxu0
      %v2228 = vadd.f32 %v1479, %v2227
      %v2229 = vpop.f32.mrb[0].mxu0
      %v2230 = vadd.f32 %v1481, %v2229
      %2231 = vmatprep.mubr.f32.mxu0 0.0
      %2232 = vmatmul.mubr.f32.gmra.mrb[0].mxu0 %v807
      %v2233 = vpop.f32.mrb[0].mxu0
      %v2234 = vadd.f32 %v1485, %v2233
      %v2235 = vpop.f32.mrb[0].mxu0
      %v2236 = vadd.f32 %v1487, %v2235
      %2237 = vmatprep.mubr.f32.mxu0 0.0
      %2238 = vmatmul.mubr.f32.gmra.mrb[0].mxu0 %v810
      %v2239 = vpop.f32.mrb[0].mxu0
      %v2240 = vadd.f32 %v1491, %v2239
      %v2241 = vpop.f32.mrb[0].mxu0
      %v2242 = vadd.f32 %v1493, %v2241
      %2243 = vmatprep.mubr.f32.mxu0 0.0
      %2244 = vmatmul.mubr.f32.gmra.mrb[0].mxu0 %v813
      %v2245 = vpop.f32.mrb[0].mxu0
      %v2246 = vadd.f32 %v1497, %v2245
      %v2247 = vpop.f32.mrb[0].mxu0
      %v2248 = vadd.f32 %v1499, %v2247
      %2249 = vmatprep.mubr.f32.mxu0 0.0
      %2250 = vmatmul.mubr.f32.gmra.mrb[0].mxu0 %v816
      %v2251 = vpop.f32.mrb[0].mxu0
      %v2252 = vadd.f32 %v1503, %v2251
      %v2253 = vpop.f32.mrb[0].mxu0
      %v2254 = vadd.f32 %v1505, %v2253
      %2255 = vmatprep.mubr.f32.mxu0 0.0
      %2256 = vmatmul.mubr.f32.gmra.mrb[0].mxu0 %v819
      %v2257 = vpop.f32.mrb[0].mxu0
      %v2258 = vadd.f32 %v1509, %v2257
      %v2259 = vpop.f32.mrb[0].mxu0
      %v2260 = vadd.f32 %v1511, %v2259
      %2261 = vmatprep.mubr.f32.mxu0 0.0
      %2262 = vmatmul.mubr.f32.gmra.mrb[0].mxu0 %v822
      %v2263 = vpop.f32.mrb[0].mxu0
      %v2264 = vadd.f32 %v1515, %v2263
      %v2265 = vpop.f32.mrb[0].mxu0
      %v2266 = vadd.f32 %v1517, %v2265
      %2267 = vmatprep.mubr.f32.mxu0 0.0
      %2268 = vmatmul.mubr.f32.gmra.mrb[0].mxu0 %v825
      %v2269 = vpop.f32.mrb[0].mxu0
      %v2270 = vadd.f32 %v1521, %v2269
      %v2271 = vpop.f32.mrb[0].mxu0
      %v2272 = vadd.f32 %v1523, %v2271
      %2273 = vmatprep.mubr.f32.mxu0 0.0
      %2274 = vmatmul.mubr.f32.gmra.mrb[0].mxu0 %v828
      %v2275 = vpop.f32.mrb[0].mxu0
      %v2276 = vadd.f32 %v1527, %v2275
      %v2277 = vpop.f32.mrb[0].mxu0
      %v2278 = vadd.f32 %v1529, %v2277
      %2279 = vmatprep.mubr.f32.mxu0 0.0
      %2280 = vmatmul.mubr.f32.gmra.mrb[0].mxu0 %v831
      %v2281 = vpop.f32.mrb[0].mxu0
      %v2282 = vadd.f32 %v1533, %v2281
      %v2283 = vpop.f32.mrb[0].mxu0
      %v2284 = vadd.f32 %v1535, %v2283
      %2285 = vmatprep.mubr.f32.mxu0 0.0
      %2286 = vmatmul.mubr.f32.gmra.mrb[0].mxu0 %v834
      %v2287 = vpop.f32.mrb[0].mxu0
      %v2288 = vadd.f32 %v1539, %v2287
      %v2289 = vpop.f32.mrb[0].mxu0
      %v2290 = vadd.f32 %v1541, %v2289
      %2291 = vmatprep.mubr.f32.mxu0 0.0
      %2292 = vmatmul.mubr.f32.gmra.mrb[0].mxu0 %v837
      %v2293 = vpop.f32.mrb[0].mxu0
      %v2294 = vadd.f32 %v1545, %v2293
      %v2295 = vpop.f32.mrb[0].mxu0
      %v2296 = vadd.f32 %v1547, %v2295
      %2297 = vmatprep.mubr.f32.mxu0 0.0
      %2298 = vmatmul.mubr.f32.gmra.mrb[0].mxu0 %v840
      %v2299 = vpop.f32.mrb[0].mxu0
      %v2300 = vadd.f32 %v1551, %v2299
      %v2301 = vpop.f32.mrb[0].mxu0
      %v2302 = vadd.f32 %v1553, %v2301
      %2303 = vmatprep.mubr.f32.mxu0 0.0
      %2304 = vmatmul.mubr.f32.gmra.mrb[0].mxu0 %v843
      %v2305 = vpop.f32.mrb[0].mxu0
      %v2306 = vadd.f32 %v1557, %v2305
      %v2307 = vpop.f32.mrb[0].mxu0
      %v2308 = vadd.f32 %v1559, %v2307
      %2309 = vmatprep.mubr.f32.mxu0 0.0
      %2310 = vmatmul.mubr.f32.gmra.mrb[0].mxu0 %v846
      %v2311 = vpop.f32.mrb[0].mxu0
      %v2312 = vadd.f32 %v1563, %v2311
      %v2313 = vpop.f32.mrb[0].mxu0
      %v2314 = vadd.f32 %v1565, %v2313
      %2315 = vmatprep.mubr.f32.mxu0 0.0
      %2316 = vmatmul.mubr.f32.gmra.mrb[0].mxu0 %v849
      %v2317 = vpop.f32.mrb[0].mxu0
      %v2318 = vadd.f32 %v1569, %v2317
      %v2319 = vpop.f32.mrb[0].mxu0
      %v2320 = vadd.f32 %v1571, %v2319
      %2321 = vmatprep.mubr.f32.mxu0 0.0
      %2322 = vmatmul.mubr.f32.gmra.mrb[0].mxu0 %v852
      %v2323 = vpop.f32.mrb[0].mxu0
      %v2324 = vadd.f32 %v1575, %v2323
      %v2325 = vpop.f32.mrb[0].mxu0
      %v2326 = vadd.f32 %v1577, %v2325
      %2327 = vmatprep.mubr.f32.mxu0 0.0
      %2328 = vmatmul.mubr.f32.gmra.mrb[0].mxu0 %v855
      %v2329 = vpop.f32.mrb[0].mxu0
      %v2330 = vadd.f32 %v1581, %v2329
      %v2331 = vpop.f32.mrb[0].mxu0
      %v2332 = vadd.f32 %v1583, %v2331
      %2333 = vmatprep.mubr.f32.mxu0 0.0
      %2334 = vmatmul.mubr.f32.gmra.mrb[0].mxu0 %v858
      %v2335 = vpop.f32.mrb[0].mxu0
      %v2336 = vadd.f32 %v1587, %v2335
      %v2337 = vpop.f32.mrb[0].mxu0
      %v2338 = vadd.f32 %v1589, %v2337
      %2339 = vmatprep.mubr.f32.mxu0 0.0
      %2340 = vmatmul.mubr.f32.gmra.mrb[0].mxu0 %v861
      %v2341 = vpop.f32.mrb[0].mxu0
      %v2342 = vadd.f32 %v1593, %v2341
      %v2343 = vpop.f32.mrb[0].mxu0
      %v2344 = vadd.f32 %v1595, %v2343
      %2345 = vmatprep.mubr.f32.mxu0 0.0
      %2346 = vmatmul.mubr.f32.gmra.mrb[0].mxu0 %v864
      %v2347 = vpop.f32.mrb[0].mxu0
      %v2348 = vadd.f32 %v1599, %v2347
      %v2349 = vpop.f32.mrb[0].mxu0
      %v2350 = vadd.f32 %v1601, %v2349
      %2351 = vmatprep.mubr.f32.mxu0 0.0
      %2352 = vmatmul.mubr.f32.gmra.mrb[0].mxu0 %v867
      %v2353 = vpop.f32.mrb[0].mxu0
      %v2354 = vadd.f32 %v1605, %v2353
      %v2355 = vpop.f32.mrb[0].mxu0
      %v2356 = vadd.f32 %v1607, %v2355
      %2357 = vmatprep.mubr.f32.mxu0 0.0
      %2358 = vmatmul.mubr.f32.gmra.mrb[0].mxu0 %v870
      %v2359 = vpop.f32.mrb[0].mxu0
      %v2360 = vadd.f32 %v1611, %v2359
      %v2361 = vpop.f32.mrb[0].mxu0
      %v2362 = vadd.f32 %v1613, %v2361
      %2363 = vmatprep.mubr.f32.mxu0 0.0
      %2364 = vmatmul.mubr.f32.gmra.mrb[0].mxu0 %v873
      %v2365 = vpop.f32.mrb[0].mxu0
      %v2366 = vadd.f32 %v1617, %v2365
      %v2367 = vpop.f32.mrb[0].mxu0
      %v2368 = vadd.f32 %v1619, %v2367
      %2369 = vmatprep.mubr.f32.mxu0 0.0
      %2370 = vmatmul.mubr.f32.gmra.mrb[0].mxu0 %v876
      %v2371 = vpop.f32.mrb[0].mxu0
      %v2372 = vadd.f32 %v1623, %v2371
      %v2373 = vpop.f32.mrb[0].mxu0
      %v2374 = vadd.f32 %v1625, %v2373
      %2375 = vdwg.mxu0
      %v2376 = vld [vmem:[%s381 + $0x40] sm:$0xff]
      %v2377 = vld [vmem:[%s381 + $0x48] sm:$0xff]
      %v2378 = vld [vmem:[%s381 + $0x50] sm:$0xff]
      %v2379 = vld [vmem:[%s381 + $0x58] sm:$0xff]
      %v2380 = vld [vmem:[%s381 + $0x60] sm:$0xff]
      %v2381 = vld [vmem:[%s381 + $0x68] sm:$0xff]
      %v2382 = vld [vmem:[%s381 + $0x70] sm:$0xff]
      %v2383 = vld [vmem:[%s381 + $0x78] sm:$0xff]
      %v2384 = vld [vmem:[%s381 + $0x80] sm:$0xff]
      %v2385 = vld [vmem:[%s381 + $0x88] sm:$0xff]
      %v2386 = vld [vmem:[%s381 + $0x90] sm:$0xff]
      %v2387 = vld [vmem:[%s381 + $0x98] sm:$0xff]
      %v2388 = vld [vmem:[%s381 + $0xa0] sm:$0xff]
      %v2389 = vld [vmem:[%s381 + $0xa8] sm:$0xff]
      %v2390 = vld [vmem:[%s381 + $0xb0] sm:$0xff]
      %v2391 = vld [vmem:[%s381 + $0xb8] sm:$0xff]
      %v2392 = vld [vmem:[%s381 + $0xc0] sm:$0xff]
      %v2393 = vld [vmem:[%s381 + $0xc8] sm:$0xff]
      %v2394 = vld [vmem:[%s381 + $0xd0] sm:$0xff]
      %v2395 = vld [vmem:[%s381 + $0xd8] sm:$0xff]
      %v2396 = vld [vmem:[%s381 + $0xe0] sm:$0xff]
      %v2397 = vld [vmem:[%s381 + $0xe8] sm:$0xff]
      %v2398 = vld [vmem:[%s381 + $0xf0] sm:$0xff]
      %v2399 = vld [vmem:[%s381 + $0xf8] sm:$0xff]
      %v2400 = vld [vmem:[%s381 + $0x100] sm:$0xff]
      %v2401 = vld [vmem:[%s381 + $0x108] sm:$0xff]
      %v2402 = vld [vmem:[%s381 + $0x110] sm:$0xff]
      %v2403 = vld [vmem:[%s381 + $0x118] sm:$0xff]
      %v2404 = vld [vmem:[%s381 + $0x120] sm:$0xff]
      %v2405 = vld [vmem:[%s381 + $0x128] sm:$0xff]
      %v2406 = vld [vmem:[%s381 + $0x130] sm:$0xff]
      %v2407 = vld [vmem:[%s381 + $0x138] sm:$0xff]
      %v2408 = vld [vmem:[%s381 + $0x140] sm:$0xff]
      %v2409 = vld [vmem:[%s381 + $0x148] sm:$0xff]
      %v2410 = vld [vmem:[%s381 + $0x150] sm:$0xff]
      %v2411 = vld [vmem:[%s381 + $0x158] sm:$0xff]
      %v2412 = vld [vmem:[%s381 + $0x160] sm:$0xff]
      %v2413 = vld [vmem:[%s381 + $0x168] sm:$0xff]
      %v2414 = vld [vmem:[%s381 + $0x170] sm:$0xff]
      %v2415 = vld [vmem:[%s381 + $0x178] sm:$0xff]
      %v2416 = vld [vmem:[%s381 + $0x180] sm:$0xff]
      %v2417 = vld [vmem:[%s381 + $0x188] sm:$0xff]
      %v2418 = vld [vmem:[%s381 + $0x190] sm:$0xff]
      %v2419 = vld [vmem:[%s381 + $0x198] sm:$0xff]
      %v2420 = vld [vmem:[%s381 + $0x1a0] sm:$0xff]
      %v2421 = vld [vmem:[%s381 + $0x1a8] sm:$0xff]
      %v2422 = vld [vmem:[%s381 + $0x1b0] sm:$0xff]
      %v2423 = vld [vmem:[%s381 + $0x1b8] sm:$0xff]
      %v2424 = vld [vmem:[%s381 + $0x1c0] sm:$0xff]
      %v2425 = vld [vmem:[%s381 + $0x1c8] sm:$0xff]
      %v2426 = vld [vmem:[%s381 + $0x1d0] sm:$0xff]
      %v2427 = vld [vmem:[%s381 + $0x1d8] sm:$0xff]
      %v2428 = vld [vmem:[%s381 + $0x1e0] sm:$0xff]
      %v2429 = vld [vmem:[%s381 + $0x1e8] sm:$0xff]
      %v2430 = vld [vmem:[%s381 + $0x1f0] sm:$0xff]
      %v2431 = vld [vmem:[%s381 + $0x1f8] sm:$0xff]
      %v2432 = vld [vmem:[%s381 + $0x200] sm:$0xff]
      %v2433 = vld [vmem:[%s381 + $0x208] sm:$0xff]
      %v2434 = vld [vmem:[%s381 + $0x210] sm:$0xff]
      %v2435 = vld [vmem:[%s381 + $0x218] sm:$0xff]
      %v2436 = vld [vmem:[%s381 + $0x220] sm:$0xff]
      %v2437 = vld [vmem:[%s381 + $0x228] sm:$0xff]
      %v2438 = vld [vmem:[%s381 + $0x230] sm:$0xff]
      %v2439 = vld [vmem:[%s381 + $0x238] sm:$0xff]
      %v2440 = vld [vmem:[%s381 + $0x240] sm:$0xff]
      %v2441 = vld [vmem:[%s381 + $0x248] sm:$0xff]
      %v2442 = vld [vmem:[%s381 + $0x250] sm:$0xff]
      %v2443 = vld [vmem:[%s381 + $0x258] sm:$0xff]
      %v2444 = vld [vmem:[%s381 + $0x260] sm:$0xff]
      %v2445 = vld [vmem:[%s381 + $0x268] sm:$0xff]
      %v2446 = vld [vmem:[%s381 + $0x270] sm:$0xff]
      %v2447 = vld [vmem:[%s381 + $0x278] sm:$0xff]
      %v2448 = vld [vmem:[%s381 + $0x280] sm:$0xff]
      %v2449 = vld [vmem:[%s381 + $0x288] sm:$0xff]
      %v2450 = vld [vmem:[%s381 + $0x290] sm:$0xff]
      %v2451 = vld [vmem:[%s381 + $0x298] sm:$0xff]
      %v2452 = vld [vmem:[%s381 + $0x2a0] sm:$0xff]
      %v2453 = vld [vmem:[%s381 + $0x2a8] sm:$0xff]
      %v2454 = vld [vmem:[%s381 + $0x2b0] sm:$0xff]
      %v2455 = vld [vmem:[%s381 + $0x2b8] sm:$0xff]
      %v2456 = vld [vmem:[%s381 + $0x2c0] sm:$0xff]
      %v2457 = vld [vmem:[%s381 + $0x2c8] sm:$0xff]
      %v2458 = vld [vmem:[%s381 + $0x2d0] sm:$0xff]
      %v2459 = vld [vmem:[%s381 + $0x2d8] sm:$0xff]
      %v2460 = vld [vmem:[%s381 + $0x2e0] sm:$0xff]
      %v2461 = vld [vmem:[%s381 + $0x2e8] sm:$0xff]
      %v2462 = vld [vmem:[%s381 + $0x2f0] sm:$0xff]
      %v2463 = vld [vmem:[%s381 + $0x2f8] sm:$0xff]
      %v2464 = vld [vmem:[%s381 + $0x300] sm:$0xff]
      %v2465 = vld [vmem:[%s381 + $0x308] sm:$0xff]
      %v2466 = vld [vmem:[%s381 + $0x310] sm:$0xff]
      %v2467 = vld [vmem:[%s381 + $0x318] sm:$0xff]
      %v2468 = vld [vmem:[%s381 + $0x320] sm:$0xff]
      %v2469 = vld [vmem:[%s381 + $0x328] sm:$0xff]
      %v2470 = vld [vmem:[%s381 + $0x330] sm:$0xff]
      %v2471 = vld [vmem:[%s381 + $0x338] sm:$0xff]
      %v2472 = vld [vmem:[%s381 + $0x340] sm:$0xff]
      %v2473 = vld [vmem:[%s381 + $0x348] sm:$0xff]
      %v2474 = vld [vmem:[%s381 + $0x350] sm:$0xff]
      %v2475 = vld [vmem:[%s381 + $0x358] sm:$0xff]
      %v2476 = vld [vmem:[%s381 + $0x360] sm:$0xff]
      %v2477 = vld [vmem:[%s381 + $0x368] sm:$0xff]
      %v2478 = vld [vmem:[%s381 + $0x370] sm:$0xff]
      %v2479 = vld [vmem:[%s381 + $0x378] sm:$0xff]
      %v2480 = vld [vmem:[%s381 + $0x380] sm:$0xff]
      %v2481 = vld [vmem:[%s381 + $0x388] sm:$0xff]
      %v2482 = vld [vmem:[%s381 + $0x390] sm:$0xff]
      %v2483 = vld [vmem:[%s381 + $0x398] sm:$0xff]
      %v2484 = vld [vmem:[%s381 + $0x3a0] sm:$0xff]
      %v2485 = vld [vmem:[%s381 + $0x3a8] sm:$0xff]
      %v2486 = vld [vmem:[%s381 + $0x3b0] sm:$0xff]
      %v2487 = vld [vmem:[%s381 + $0x3b8] sm:$0xff]
      %s2488 = scalar_lea.vmem %s1, 384
      %v2489 = vld [vmem:[%s2488] sm:$0xff]
      %v2490 = vld [vmem:[%s2488 + $0x8] sm:$0xff]
      %v2491 = vld [vmem:[%s2488 + $0x10] sm:$0xff]
      %v2492 = vld [vmem:[%s2488 + $0x18] sm:$0xff]
      %v2493 = vld [vmem:[%s2488 + $0x20] sm:$0xff]
      %v2494 = vld [vmem:[%s2488 + $0x28] sm:$0xff]
      %v2495 = vld [vmem:[%s2488 + $0x30] sm:$0xff]
      %v2496 = vld [vmem:[%s2488 + $0x38] sm:$0xff]
      %v2497 = vld [vmem:[%s2488 + $0x40] sm:$0xff]
      %v2498 = vld [vmem:[%s2488 + $0x48] sm:$0xff]
      %v2499 = vld [vmem:[%s2488 + $0x50] sm:$0xff]
      %v2500 = vld [vmem:[%s2488 + $0x58] sm:$0xff]
      %v2501 = vld [vmem:[%s2488 + $0x60] sm:$0xff]
      %v2502 = vld [vmem:[%s2488 + $0x68] sm:$0xff]
      %v2503 = vld [vmem:[%s2488 + $0x70] sm:$0xff]
      %v2504 = vld [vmem:[%s2488 + $0x78] sm:$0xff]
      %v2505 = vld [vmem:[%s2488 + $0x80] sm:$0xff]
      %v2506 = vld [vmem:[%s2488 + $0x88] sm:$0xff]
      %v2507 = vld [vmem:[%s2488 + $0x90] sm:$0xff]
      %v2508 = vld [vmem:[%s2488 + $0x98] sm:$0xff]
      %v2509 = vld [vmem:[%s2488 + $0xa0] sm:$0xff]
      %v2510 = vld [vmem:[%s2488 + $0xa8] sm:$0xff]
      %v2511 = vld [vmem:[%s2488 + $0xb0] sm:$0xff]
      %v2512 = vld [vmem:[%s2488 + $0xb8] sm:$0xff]
      %v2514 = vsel %vm553, %v2376, 0
      %v2517 = vsel %vm553, %v2377, 0
      %v2520 = vsel %vm553, %v2378, 0
      %v2523 = vsel %vm553, %v2379, 0
      %v2526 = vsel %vm553, %v2380, 0
      %v2529 = vsel %vm553, %v2381, 0
      %v2532 = vsel %vm553, %v2382, 0
      %v2535 = vsel %vm553, %v2383, 0
      %v2538 = vsel %vm553, %v2384, 0
      %v2541 = vsel %vm553, %v2385, 0
      %v2544 = vsel %vm553, %v2386, 0
      %v2547 = vsel %vm553, %v2387, 0
      %v2550 = vsel %vm553, %v2388, 0
      %v2553 = vsel %vm553, %v2389, 0
      %v2556 = vsel %vm553, %v2390, 0
      %v2559 = vsel %vm553, %v2391, 0
      %v2562 = vsel %vm553, %v2392, 0
      %v2565 = vsel %vm553, %v2393, 0
      %v2568 = vsel %vm553, %v2394, 0
      %v2571 = vsel %vm553, %v2395, 0
      %v2574 = vsel %vm553, %v2396, 0
      %v2577 = vsel %vm553, %v2397, 0
      %v2580 = vsel %vm553, %v2398, 0
      %v2583 = vsel %vm553, %v2399, 0
      %v2586 = vsel %vm553, %v2400, 0
      %v2589 = vsel %vm553, %v2401, 0
      %v2592 = vsel %vm553, %v2402, 0
      %v2595 = vsel %vm553, %v2403, 0
      %v2598 = vsel %vm553, %v2404, 0
      %v2601 = vsel %vm553, %v2405, 0
      %v2604 = vsel %vm553, %v2406, 0
      %v2607 = vsel %vm553, %v2407, 0
      %v2610 = vsel %vm553, %v2408, 0
      %v2613 = vsel %vm553, %v2409, 0
      %v2616 = vsel %vm553, %v2410, 0
      %v2619 = vsel %vm553, %v2411, 0
      %v2622 = vsel %vm553, %v2412, 0
      %v2625 = vsel %vm553, %v2413, 0
      %v2628 = vsel %vm553, %v2414, 0
      %v2631 = vsel %vm553, %v2415, 0
      %v2634 = vsel %vm553, %v2416, 0
      %v2637 = vsel %vm553, %v2417, 0
      %v2640 = vsel %vm553, %v2418, 0
      %v2643 = vsel %vm553, %v2419, 0
      %v2646 = vsel %vm553, %v2420, 0
      %v2649 = vsel %vm553, %v2421, 0
      %v2652 = vsel %vm553, %v2422, 0
      %v2655 = vsel %vm553, %v2423, 0
      %v2658 = vsel %vm553, %v2424, 0
      %v2661 = vsel %vm553, %v2425, 0
      %v2664 = vsel %vm553, %v2426, 0
      %v2667 = vsel %vm553, %v2427, 0
      %v2670 = vsel %vm553, %v2428, 0
      %v2673 = vsel %vm553, %v2429, 0
      %v2676 = vsel %vm553, %v2430, 0
      %v2679 = vsel %vm553, %v2431, 0
      %v2682 = vsel %vm553, %v2432, 0
      %v2685 = vsel %vm553, %v2433, 0
      %v2688 = vsel %vm553, %v2434, 0
      %v2691 = vsel %vm553, %v2435, 0
      %v2694 = vsel %vm553, %v2436, 0
      %v2697 = vsel %vm553, %v2437, 0
      %v2700 = vsel %vm553, %v2438, 0
      %v2703 = vsel %vm553, %v2439, 0
      %v2706 = vsel %vm553, %v2440, 0
      %v2709 = vsel %vm553, %v2441, 0
      %v2712 = vsel %vm553, %v2442, 0
      %v2715 = vsel %vm553, %v2443, 0
      %v2718 = vsel %vm553, %v2444, 0
      %v2721 = vsel %vm553, %v2445, 0
      %v2724 = vsel %vm553, %v2446, 0
      %v2727 = vsel %vm553, %v2447, 0
      %v2730 = vsel %vm553, %v2448, 0
      %v2733 = vsel %vm553, %v2449, 0
      %v2736 = vsel %vm553, %v2450, 0
      %v2739 = vsel %vm553, %v2451, 0
      %v2742 = vsel %vm553, %v2452, 0
      %v2745 = vsel %vm553, %v2453, 0
      %v2748 = vsel %vm553, %v2454, 0
      %v2751 = vsel %vm553, %v2455, 0
      %v2754 = vsel %vm553, %v2456, 0
      %v2757 = vsel %vm553, %v2457, 0
      %v2760 = vsel %vm553, %v2458, 0
      %v2763 = vsel %vm553, %v2459, 0
      %v2766 = vsel %vm553, %v2460, 0
      %v2769 = vsel %vm553, %v2461, 0
      %v2772 = vsel %vm553, %v2462, 0
      %v2775 = vsel %vm553, %v2463, 0
      %v2778 = vsel %vm553, %v2464, 0
      %v2781 = vsel %vm553, %v2465, 0
      %v2784 = vsel %vm553, %v2466, 0
      %v2787 = vsel %vm553, %v2467, 0
      %v2790 = vsel %vm553, %v2468, 0
      %v2793 = vsel %vm553, %v2469, 0
      %v2796 = vsel %vm553, %v2470, 0
      %v2799 = vsel %vm553, %v2471, 0
      %v2802 = vsel %vm553, %v2472, 0
      %v2805 = vsel %vm553, %v2473, 0
      %v2808 = vsel %vm553, %v2474, 0
      %v2811 = vsel %vm553, %v2475, 0
      %v2814 = vsel %vm553, %v2476, 0
      %v2817 = vsel %vm553, %v2477, 0
      %v2820 = vsel %vm553, %v2478, 0
      %v2823 = vsel %vm553, %v2479, 0
      %v2826 = vsel %vm553, %v2480, 0
      %v2829 = vsel %vm553, %v2481, 0
      %v2832 = vsel %vm553, %v2482, 0
      %v2835 = vsel %vm553, %v2483, 0
      %v2838 = vsel %vm553, %v2484, 0
      %v2841 = vsel %vm553, %v2485, 0
      %v2844 = vsel %vm553, %v2486, 0
      %v2847 = vsel %vm553, %v2487, 0
      %2849 = vmatprep.subr.mxu0 %v2490
      %2850 = vmatpush1.msra.mxu0 %v2489
      %2851 = vmatprep.subr.mxu0 %v2492
      %2852 = vmatpush1.msra.mxu0 %v2491
      %2853 = vmatprep.subr.mxu0 %v2494
      %2854 = vmatpush1.msra.mxu0 %v2493
      %2855 = vmatprep.subr.mxu0 %v2496
      %2856 = vmatpush1.msra.mxu0 %v2495
      %2857 = vmatprep.subr.mxu0 %v2498
      %2858 = vmatpush1.msra.mxu0 %v2497
      %2859 = vmatprep.subr.mxu0 %v2500
      %2860 = vmatpush1.msra.mxu0 %v2499
      %2861 = vmatprep.subr.mxu0 %v2502
      %2862 = vmatpush1.msra.mxu0 %v2501
      %2863 = vmatprep.subr.mxu0 %v2504
      %2864 = vmatpush1.msra.mxu0 %v2503
      %2865 = vmatprep.subr.mxu0 %v2506
      %2866 = vmatpush1.msra.mxu0 %v2505
      %2867 = vmatprep.subr.mxu0 %v2508
      %2868 = vmatpush1.msra.mxu0 %v2507
      %2869 = vmatprep.subr.mxu0 %v2510
      %2870 = vmatpush1.msra.mxu0 %v2509
      %2871 = vmatprep.subr.mxu0 %v2512
      %2872 = vmatpush1.msra.mxu0 %v2511
      %2873 = vmatprep.subr.mxu0 0.0
      %2874 = vmatpush1.msra.mxu0 0.0
      %2875 = vmatprep.subr.mxu0 0.0
      %2876 = vmatpush1.msra.mxu0 0.0
      %2877 = vmatprep.subr.mxu0 0.0
      %2878 = vmatpush1.msra.mxu0 0.0
      %2879 = vmatprep.subr.mxu0 0.0
      %2880 = vmatpush1.msra.mxu0 0.0
      %2881 = vmatprep.subr.mxu0 0.0
      %2882 = vmatpush1.msra.mxu0 0.0
      %2883 = vmatprep.subr.mxu0 0.0
      %2884 = vmatpush1.msra.mxu0 0.0
      %2885 = vmatprep.subr.mxu0 0.0
      %2886 = vmatpush1.msra.mxu0 0.0
      %2887 = vmatprep.subr.mxu0 0.0
      %2888 = vmatpush1.msra.mxu0 0.0
      %2889 = vmatprep.subr.mxu0 0.0
      %2890 = vmatpush1.msra.mxu0 0.0
      %2891 = vmatprep.subr.mxu0 0.0
      %2892 = vmatpush1.msra.mxu0 0.0
      %2893 = vmatprep.subr.mxu0 0.0
      %2894 = vmatpush1.msra.mxu0 0.0
      %2895 = vmatprep.subr.mxu0 0.0
      %2896 = vmatpush1.msra.mxu0 0.0
      %2897 = vmatprep.subr.mxu0 0.0
      %2898 = vmatpush1.msra.mxu0 0.0
      %2899 = vmatprep.subr.mxu0 0.0
      %2900 = vmatpush1.msra.mxu0 0.0
      %2901 = vmatprep.subr.mxu0 0.0
      %2902 = vmatpush1.msra.mxu0 0.0
      %2903 = vmatprep.subr.mxu0 0.0
      %2904 = vmatpush1.msra.mxu0 0.0
      %2905 = vmatprep.subr.mxu0 0.0
      %2906 = vmatpush1.msra.mxu0 0.0
      %2907 = vmatprep.subr.mxu0 0.0
      %2908 = vmatpush1.msra.mxu0 0.0
      %2909 = vmatprep.subr.mxu0 0.0
      %2910 = vmatpush1.msra.mxu0 0.0
      %2911 = vmatprep.subr.mxu0 0.0
      %2912 = vmatpush1.msra.mxu0 0.0
      %2913 = vmatprep.mubr.f32.mxu0 0.0
      %2914 = vmatmul.mubr.f32.gmra.mrb[0].mxu0 %v2514
      %v2915 = vpop.f32.mrb[0].mxu0
      %v2916 = vadd.f32 0.0, %v2915
      %v2917 = vpop.f32.mrb[0].mxu0
      %v2918 = vadd.f32 0.0, %v2917
      %2919 = vmatprep.mubr.f32.mxu0 0.0
      %2920 = vmatmul.mubr.f32.gmra.mrb[0].mxu0 %v2517
      %v2921 = vpop.f32.mrb[0].mxu0
      %v2922 = vadd.f32 0.0, %v2921
      %v2923 = vpop.f32.mrb[0].mxu0
      %v2924 = vadd.f32 0.0, %v2923
      %2925 = vmatprep.mubr.f32.mxu0 0.0
      %2926 = vmatmul.mubr.f32.gmra.mrb[0].mxu0 %v2520
      %v2927 = vpop.f32.mrb[0].mxu0
      %v2928 = vadd.f32 0.0, %v2927
      %v2929 = vpop.f32.mrb[0].mxu0
      %v2930 = vadd.f32 0.0, %v2929
      %2931 = vmatprep.mubr.f32.mxu0 0.0
      %2932 = vmatmul.mubr.f32.gmra.mrb[0].mxu0 %v2523
      %v2933 = vpop.f32.mrb[0].mxu0
      %v2934 = vadd.f32 0.0, %v2933
      %v2935 = vpop.f32.mrb[0].mxu0
      %v2936 = vadd.f32 0.0, %v2935
      %2937 = vmatprep.mubr.f32.mxu0 0.0
      %2938 = vmatmul.mubr.f32.gmra.mrb[0].mxu0 %v2526
      %v2939 = vpop.f32.mrb[0].mxu0
      %v2940 = vadd.f32 0.0, %v2939
      %v2941 = vpop.f32.mrb[0].mxu0
      %v2942 = vadd.f32 0.0, %v2941
      %2943 = vmatprep.mubr.f32.mxu0 0.0
      %2944 = vmatmul.mubr.f32.gmra.mrb[0].mxu0 %v2529
      %v2945 = vpop.f32.mrb[0].mxu0
      %v2946 = vadd.f32 0.0, %v2945
      %v2947 = vpop.f32.mrb[0].mxu0
      %v2948 = vadd.f32 0.0, %v2947
      %2949 = vmatprep.mubr.f32.mxu0 0.0
      %2950 = vmatmul.mubr.f32.gmra.mrb[0].mxu0 %v2532
      %v2951 = vpop.f32.mrb[0].mxu0
      %v2952 = vadd.f32 0.0, %v2951
      %v2953 = vpop.f32.mrb[0].mxu0
      %v2954 = vadd.f32 0.0, %v2953
      %2955 = vmatprep.mubr.f32.mxu0 0.0
      %2956 = vmatmul.mubr.f32.gmra.mrb[0].mxu0 %v2535
      %v2957 = vpop.f32.mrb[0].mxu0
      %v2958 = vadd.f32 0.0, %v2957
      %v2959 = vpop.f32.mrb[0].mxu0
      %v2960 = vadd.f32 0.0, %v2959
      %2961 = vmatprep.mubr.f32.mxu0 0.0
      %2962 = vmatmul.mubr.f32.gmra.mrb[0].mxu0 %v2538
      %v2963 = vpop.f32.mrb[0].mxu0
      %v2964 = vadd.f32 0.0, %v2963
      %v2965 = vpop.f32.mrb[0].mxu0
      %v2966 = vadd.f32 0.0, %v2965
      %2967 = vmatprep.mubr.f32.mxu0 0.0
      %2968 = vmatmul.mubr.f32.gmra.mrb[0].mxu0 %v2541
      %v2969 = vpop.f32.mrb[0].mxu0
      %v2970 = vadd.f32 0.0, %v2969
      %v2971 = vpop.f32.mrb[0].mxu0
      %v2972 = vadd.f32 0.0, %v2971
      %2973 = vmatprep.mubr.f32.mxu0 0.0
      %2974 = vmatmul.mubr.f32.gmra.mrb[0].mxu0 %v2544
      %v2975 = vpop.f32.mrb[0].mxu0
      %v2976 = vadd.f32 0.0, %v2975
      %v2977 = vpop.f32.mrb[0].mxu0
      %v2978 = vadd.f32 0.0, %v2977
      %2979 = vmatprep.mubr.f32.mxu0 0.0
      %2980 = vmatmul.mubr.f32.gmra.mrb[0].mxu0 %v2547
      %v2981 = vpop.f32.mrb[0].mxu0
      %v2982 = vadd.f32 0.0, %v2981
      %v2983 = vpop.f32.mrb[0].mxu0
      %v2984 = vadd.f32 0.0, %v2983
      %2985 = vmatprep.mubr.f32.mxu0 0.0
      %2986 = vmatmul.mubr.f32.gmra.mrb[0].mxu0 %v2550
      %v2987 = vpop.f32.mrb[0].mxu0
      %v2988 = vadd.f32 0.0, %v2987
      %v2989 = vpop.f32.mrb[0].mxu0
      %v2990 = vadd.f32 0.0, %v2989
      %2991 = vmatprep.mubr.f32.mxu0 0.0
      %2992 = vmatmul.mubr.f32.gmra.mrb[0].mxu0 %v2553
      %v2993 = vpop.f32.mrb[0].mxu0
      %v2994 = vadd.f32 0.0, %v2993
      %v2995 = vpop.f32.mrb[0].mxu0
      %v2996 = vadd.f32 0.0, %v2995
      %2997 = vmatprep.mubr.f32.mxu0 0.0
      %2998 = vmatmul.mubr.f32.gmra.mrb[0].mxu0 %v2556
      %v2999 = vpop.f32.mrb[0].mxu0
      %v3000 = vadd.f32 0.0, %v2999
      %v3001 = vpop.f32.mrb[0].mxu0
      %v3002 = vadd.f32 0.0, %v3001
      %3003 = vmatprep.mubr.f32.mxu0 0.0
      %3004 = vmatmul.mubr.f32.gmra.mrb[0].mxu0 %v2559
      %v3005 = vpop.f32.mrb[0].mxu0
      %v3006 = vadd.f32 0.0, %v3005
      %v3007 = vpop.f32.mrb[0].mxu0
      %v3008 = vadd.f32 0.0, %v3007
      %3009 = vmatprep.mubr.f32.mxu0 0.0
      %3010 = vmatmul.mubr.f32.gmra.mrb[0].mxu0 %v2562
      %v3011 = vpop.f32.mrb[0].mxu0
      %v3012 = vadd.f32 0.0, %v3011
      %v3013 = vpop.f32.mrb[0].mxu0
      %v3014 = vadd.f32 0.0, %v3013
      %3015 = vmatprep.mubr.f32.mxu0 0.0
      %3016 = vmatmul.mubr.f32.gmra.mrb[0].mxu0 %v2565
      %v3017 = vpop.f32.mrb[0].mxu0
      %v3018 = vadd.f32 0.0, %v3017
      %v3019 = vpop.f32.mrb[0].mxu0
      %v3020 = vadd.f32 0.0, %v3019
      %3021 = vmatprep.mubr.f32.mxu0 0.0
      %3022 = vmatmul.mubr.f32.gmra.mrb[0].mxu0 %v2568
      %v3023 = vpop.f32.mrb[0].mxu0
      %v3024 = vadd.f32 0.0, %v3023
      %v3025 = vpop.f32.mrb[0].mxu0
      %v3026 = vadd.f32 0.0, %v3025
      %3027 = vmatprep.mubr.f32.mxu0 0.0
      %3028 = vmatmul.mubr.f32.gmra.mrb[0].mxu0 %v2571
      %v3029 = vpop.f32.mrb[0].mxu0
      %v3030 = vadd.f32 0.0, %v3029
      %v3031 = vpop.f32.mrb[0].mxu0
      %v3032 = vadd.f32 0.0, %v3031
      %3033 = vmatprep.mubr.f32.mxu0 0.0
      %3034 = vmatmul.mubr.f32.gmra.mrb[0].mxu0 %v2574
      %v3035 = vpop.f32.mrb[0].mxu0
      %v3036 = vadd.f32 0.0, %v3035
      %v3037 = vpop.f32.mrb[0].mxu0
      %v3038 = vadd.f32 0.0, %v3037
      %3039 = vmatprep.mubr.f32.mxu0 0.0
      %3040 = vmatmul.mubr.f32.gmra.mrb[0].mxu0 %v2577
      %v3041 = vpop.f32.mrb[0].mxu0
      %v3042 = vadd.f32 0.0, %v3041
      %v3043 = vpop.f32.mrb[0].mxu0
      %v3044 = vadd.f32 0.0, %v3043
      %3045 = vmatprep.mubr.f32.mxu0 0.0
      %3046 = vmatmul.mubr.f32.gmra.mrb[0].mxu0 %v2580
      %v3047 = vpop.f32.mrb[0].mxu0
      %v3048 = vadd.f32 0.0, %v3047
      %v3049 = vpop.f32.mrb[0].mxu0
      %v3050 = vadd.f32 0.0, %v3049
      %3051 = vmatprep.mubr.f32.mxu0 0.0
      %3052 = vmatmul.mubr.f32.gmra.mrb[0].mxu0 %v2583
      %v3053 = vpop.f32.mrb[0].mxu0
      %v3054 = vadd.f32 0.0, %v3053
      %v3055 = vpop.f32.mrb[0].mxu0
      %v3056 = vadd.f32 0.0, %v3055
      %3057 = vmatprep.mubr.f32.mxu0 0.0
      %3058 = vmatmul.mubr.f32.gmra.mrb[0].mxu0 %v2586
      %v3059 = vpop.f32.mrb[0].mxu0
      %v3060 = vadd.f32 0.0, %v3059
      %v3061 = vpop.f32.mrb[0].mxu0
      %v3062 = vadd.f32 0.0, %v3061
      %3063 = vmatprep.mubr.f32.mxu0 0.0
      %3064 = vmatmul.mubr.f32.gmra.mrb[0].mxu0 %v2589
      %v3065 = vpop.f32.mrb[0].mxu0
      %v3066 = vadd.f32 0.0, %v3065
      %v3067 = vpop.f32.mrb[0].mxu0
      %v3068 = vadd.f32 0.0, %v3067
      %3069 = vmatprep.mubr.f32.mxu0 0.0
      %3070 = vmatmul.mubr.f32.gmra.mrb[0].mxu0 %v2592
      %v3071 = vpop.f32.mrb[0].mxu0
      %v3072 = vadd.f32 0.0, %v3071
      %v3073 = vpop.f32.mrb[0].mxu0
      %v3074 = vadd.f32 0.0, %v3073
      %3075 = vmatprep.mubr.f32.mxu0 0.0
      %3076 = vmatmul.mubr.f32.gmra.mrb[0].mxu0 %v2595
      %v3077 = vpop.f32.mrb[0].mxu0
      %v3078 = vadd.f32 0.0, %v3077
      %v3079 = vpop.f32.mrb[0].mxu0
      %v3080 = vadd.f32 0.0, %v3079
      %3081 = vmatprep.mubr.f32.mxu0 0.0
      %3082 = vmatmul.mubr.f32.gmra.mrb[0].mxu0 %v2598
      %v3083 = vpop.f32.mrb[0].mxu0
      %v3084 = vadd.f32 0.0, %v3083
      %v3085 = vpop.f32.mrb[0].mxu0
      %v3086 = vadd.f32 0.0, %v3085
      %3087 = vmatprep.mubr.f32.mxu0 0.0
      %3088 = vmatmul.mubr.f32.gmra.mrb[0].mxu0 %v2601
      %v3089 = vpop.f32.mrb[0].mxu0
      %v3090 = vadd.f32 0.0, %v3089
      %v3091 = vpop.f32.mrb[0].mxu0
      %v3092 = vadd.f32 0.0, %v3091
      %3093 = vmatprep.mubr.f32.mxu0 0.0
      %3094 = vmatmul.mubr.f32.gmra.mrb[0].mxu0 %v2604
      %v3095 = vpop.f32.mrb[0].mxu0
      %v3096 = vadd.f32 0.0, %v3095
      %v3097 = vpop.f32.mrb[0].mxu0
      %v3098 = vadd.f32 0.0, %v3097
      %3099 = vmatprep.mubr.f32.mxu0 0.0
      %3100 = vmatmul.mubr.f32.gmra.mrb[0].mxu0 %v2607
      %v3101 = vpop.f32.mrb[0].mxu0
      %v3102 = vadd.f32 0.0, %v3101
      %v3103 = vpop.f32.mrb[0].mxu0
      %v3104 = vadd.f32 0.0, %v3103
      %3105 = vmatprep.mubr.f32.mxu0 0.0
      %3106 = vmatmul.mubr.f32.gmra.mrb[0].mxu0 %v2610
      %v3107 = vpop.f32.mrb[0].mxu0
      %v3108 = vadd.f32 0.0, %v3107
      %v3109 = vpop.f32.mrb[0].mxu0
      %v3110 = vadd.f32 0.0, %v3109
      %3111 = vmatprep.mubr.f32.mxu0 0.0
      %3112 = vmatmul.mubr.f32.gmra.mrb[0].mxu0 %v2613
      %v3113 = vpop.f32.mrb[0].mxu0
      %v3114 = vadd.f32 0.0, %v3113
      %v3115 = vpop.f32.mrb[0].mxu0
      %v3116 = vadd.f32 0.0, %v3115
      %3117 = vmatprep.mubr.f32.mxu0 0.0
      %3118 = vmatmul.mubr.f32.gmra.mrb[0].mxu0 %v2616
      %v3119 = vpop.f32.mrb[0].mxu0
      %v3120 = vadd.f32 0.0, %v3119
      %v3121 = vpop.f32.mrb[0].mxu0
      %v3122 = vadd.f32 0.0, %v3121
      %3123 = vmatprep.mubr.f32.mxu0 0.0
      %3124 = vmatmul.mubr.f32.gmra.mrb[0].mxu0 %v2619
      %v3125 = vpop.f32.mrb[0].mxu0
      %v3126 = vadd.f32 0.0, %v3125
      %v3127 = vpop.f32.mrb[0].mxu0
      %v3128 = vadd.f32 0.0, %v3127
      %3129 = vmatprep.mubr.f32.mxu0 0.0
      %3130 = vmatmul.mubr.f32.gmra.mrb[0].mxu0 %v2622
      %v3131 = vpop.f32.mrb[0].mxu0
      %v3132 = vadd.f32 0.0, %v3131
      %v3133 = vpop.f32.mrb[0].mxu0
      %v3134 = vadd.f32 0.0, %v3133
      %3135 = vmatprep.mubr.f32.mxu0 0.0
      %3136 = vmatmul.mubr.f32.gmra.mrb[0].mxu0 %v2625
      %v3137 = vpop.f32.mrb[0].mxu0
      %v3138 = vadd.f32 0.0, %v3137
      %v3139 = vpop.f32.mrb[0].mxu0
      %v3140 = vadd.f32 0.0, %v3139
      %3141 = vmatprep.mubr.f32.mxu0 0.0
      %3142 = vmatmul.mubr.f32.gmra.mrb[0].mxu0 %v2628
      %v3143 = vpop.f32.mrb[0].mxu0
      %v3144 = vadd.f32 0.0, %v3143
      %v3145 = vpop.f32.mrb[0].mxu0
      %v3146 = vadd.f32 0.0, %v3145
      %3147 = vmatprep.mubr.f32.mxu0 0.0
      %3148 = vmatmul.mubr.f32.gmra.mrb[0].mxu0 %v2631
      %v3149 = vpop.f32.mrb[0].mxu0
      %v3150 = vadd.f32 0.0, %v3149
      %v3151 = vpop.f32.mrb[0].mxu0
      %v3152 = vadd.f32 0.0, %v3151
      %3153 = vmatprep.mubr.f32.mxu0 0.0
      %3154 = vmatmul.mubr.f32.gmra.mrb[0].mxu0 %v2634
      %v3155 = vpop.f32.mrb[0].mxu0
      %v3156 = vadd.f32 0.0, %v3155
      %v3157 = vpop.f32.mrb[0].mxu0
      %v3158 = vadd.f32 0.0, %v3157
      %3159 = vmatprep.mubr.f32.mxu0 0.0
      %3160 = vmatmul.mubr.f32.gmra.mrb[0].mxu0 %v2637
      %v3161 = vpop.f32.mrb[0].mxu0
      %v3162 = vadd.f32 0.0, %v3161
      %v3163 = vpop.f32.mrb[0].mxu0
      %v3164 = vadd.f32 0.0, %v3163
      %3165 = vmatprep.mubr.f32.mxu0 0.0
      %3166 = vmatmul.mubr.f32.gmra.mrb[0].mxu0 %v2640
      %v3167 = vpop.f32.mrb[0].mxu0
      %v3168 = vadd.f32 0.0, %v3167
      %v3169 = vpop.f32.mrb[0].mxu0
      %v3170 = vadd.f32 0.0, %v3169
      %3171 = vmatprep.mubr.f32.mxu0 0.0
      %3172 = vmatmul.mubr.f32.gmra.mrb[0].mxu0 %v2643
      %v3173 = vpop.f32.mrb[0].mxu0
      %v3174 = vadd.f32 0.0, %v3173
      %v3175 = vpop.f32.mrb[0].mxu0
      %v3176 = vadd.f32 0.0, %v3175
      %3177 = vmatprep.mubr.f32.mxu0 0.0
      %3178 = vmatmul.mubr.f32.gmra.mrb[0].mxu0 %v2646
      %v3179 = vpop.f32.mrb[0].mxu0
      %v3180 = vadd.f32 0.0, %v3179
      %v3181 = vpop.f32.mrb[0].mxu0
      %v3182 = vadd.f32 0.0, %v3181
      %3183 = vmatprep.mubr.f32.mxu0 0.0
      %3184 = vmatmul.mubr.f32.gmra.mrb[0].mxu0 %v2649
      %v3185 = vpop.f32.mrb[0].mxu0
      %v3186 = vadd.f32 0.0, %v3185
      %v3187 = vpop.f32.mrb[0].mxu0
      %v3188 = vadd.f32 0.0, %v3187
      %3189 = vmatprep.mubr.f32.mxu0 0.0
      %3190 = vmatmul.mubr.f32.gmra.mrb[0].mxu0 %v2652
      %v3191 = vpop.f32.mrb[0].mxu0
      %v3192 = vadd.f32 0.0, %v3191
      %v3193 = vpop.f32.mrb[0].mxu0
      %v3194 = vadd.f32 0.0, %v3193
      %3195 = vmatprep.mubr.f32.mxu0 0.0
      %3196 = vmatmul.mubr.f32.gmra.mrb[0].mxu0 %v2655
      %v3197 = vpop.f32.mrb[0].mxu0
      %v3198 = vadd.f32 0.0, %v3197
      %v3199 = vpop.f32.mrb[0].mxu0
      %v3200 = vadd.f32 0.0, %v3199
      %3201 = vmatprep.mubr.f32.mxu0 0.0
      %3202 = vmatmul.mubr.f32.gmra.mrb[0].mxu0 %v2658
      %v3203 = vpop.f32.mrb[0].mxu0
      %v3204 = vadd.f32 0.0, %v3203
      %v3205 = vpop.f32.mrb[0].mxu0
      %v3206 = vadd.f32 0.0, %v3205
      %3207 = vmatprep.mubr.f32.mxu0 0.0
      %3208 = vmatmul.mubr.f32.gmra.mrb[0].mxu0 %v2661
      %v3209 = vpop.f32.mrb[0].mxu0
      %v3210 = vadd.f32 0.0, %v3209
      %v3211 = vpop.f32.mrb[0].mxu0
      %v3212 = vadd.f32 0.0, %v3211
      %3213 = vmatprep.mubr.f32.mxu0 0.0
      %3214 = vmatmul.mubr.f32.gmra.mrb[0].mxu0 %v2664
      %v3215 = vpop.f32.mrb[0].mxu0
      %v3216 = vadd.f32 0.0, %v3215
      %v3217 = vpop.f32.mrb[0].mxu0
      %v3218 = vadd.f32 0.0, %v3217
      %3219 = vmatprep.mubr.f32.mxu0 0.0
      %3220 = vmatmul.mubr.f32.gmra.mrb[0].mxu0 %v2667
      %v3221 = vpop.f32.mrb[0].mxu0
      %v3222 = vadd.f32 0.0, %v3221
      %v3223 = vpop.f32.mrb[0].mxu0
      %v3224 = vadd.f32 0.0, %v3223
      %3225 = vmatprep.mubr.f32.mxu0 0.0
      %3226 = vmatmul.mubr.f32.gmra.mrb[0].mxu0 %v2670
      %v3227 = vpop.f32.mrb[0].mxu0
      %v3228 = vadd.f32 0.0, %v3227
      %v3229 = vpop.f32.mrb[0].mxu0
      %v3230 = vadd.f32 0.0, %v3229
      %3231 = vmatprep.mubr.f32.mxu0 0.0
      %3232 = vmatmul.mubr.f32.gmra.mrb[0].mxu0 %v2673
      %v3233 = vpop.f32.mrb[0].mxu0
      %v3234 = vadd.f32 0.0, %v3233
      %v3235 = vpop.f32.mrb[0].mxu0
      %v3236 = vadd.f32 0.0, %v3235
      %3237 = vmatprep.mubr.f32.mxu0 0.0
      %3238 = vmatmul.mubr.f32.gmra.mrb[0].mxu0 %v2676
      %v3239 = vpop.f32.mrb[0].mxu0
      %v3240 = vadd.f32 0.0, %v3239
      %v3241 = vpop.f32.mrb[0].mxu0
      %v3242 = vadd.f32 0.0, %v3241
      %3243 = vmatprep.mubr.f32.mxu0 0.0
      %3244 = vmatmul.mubr.f32.gmra.mrb[0].mxu0 %v2679
      %v3245 = vpop.f32.mrb[0].mxu0
      %v3246 = vadd.f32 0.0, %v3245
      %v3247 = vpop.f32.mrb[0].mxu0
      %v3248 = vadd.f32 0.0, %v3247
      %3249 = vmatprep.mubr.f32.mxu0 0.0
      %3250 = vmatmul.mubr.f32.gmra.mrb[0].mxu0 %v2682
      %v3251 = vpop.f32.mrb[0].mxu0
      %v3252 = vadd.f32 0.0, %v3251
      %v3253 = vpop.f32.mrb[0].mxu0
      %v3254 = vadd.f32 0.0, %v3253
      %3255 = vmatprep.mubr.f32.mxu0 0.0
      %3256 = vmatmul.mubr.f32.gmra.mrb[0].mxu0 %v2685
      %v3257 = vpop.f32.mrb[0].mxu0
      %v3258 = vadd.f32 0.0, %v3257
      %v3259 = vpop.f32.mrb[0].mxu0
      %v3260 = vadd.f32 0.0, %v3259
      %3261 = vmatprep.mubr.f32.mxu0 0.0
      %3262 = vmatmul.mubr.f32.gmra.mrb[0].mxu0 %v2688
      %v3263 = vpop.f32.mrb[0].mxu0
      %v3264 = vadd.f32 0.0, %v3263
      %v3265 = vpop.f32.mrb[0].mxu0
      %v3266 = vadd.f32 0.0, %v3265
      %3267 = vmatprep.mubr.f32.mxu0 0.0
      %3268 = vmatmul.mubr.f32.gmra.mrb[0].mxu0 %v2691
      %v3269 = vpop.f32.mrb[0].mxu0
      %v3270 = vadd.f32 0.0, %v3269
      %v3271 = vpop.f32.mrb[0].mxu0
      %v3272 = vadd.f32 0.0, %v3271
      %3273 = vmatprep.mubr.f32.mxu0 0.0
      %3274 = vmatmul.mubr.f32.gmra.mrb[0].mxu0 %v2694
      %v3275 = vpop.f32.mrb[0].mxu0
      %v3276 = vadd.f32 0.0, %v3275
      %v3277 = vpop.f32.mrb[0].mxu0
      %v3278 = vadd.f32 0.0, %v3277
      %3279 = vmatprep.mubr.f32.mxu0 0.0
      %3280 = vmatmul.mubr.f32.gmra.mrb[0].mxu0 %v2697
      %v3281 = vpop.f32.mrb[0].mxu0
      %v3282 = vadd.f32 0.0, %v3281
      %v3283 = vpop.f32.mrb[0].mxu0
      %v3284 = vadd.f32 0.0, %v3283
      %3285 = vmatprep.mubr.f32.mxu0 0.0
      %3286 = vmatmul.mubr.f32.gmra.mrb[0].mxu0 %v2700
      %v3287 = vpop.f32.mrb[0].mxu0
      %v3288 = vadd.f32 0.0, %v3287
      %v3289 = vpop.f32.mrb[0].mxu0
      %v3290 = vadd.f32 0.0, %v3289
      %3291 = vmatprep.mubr.f32.mxu0 0.0
      %3292 = vmatmul.mubr.f32.gmra.mrb[0].mxu0 %v2703
      %v3293 = vpop.f32.mrb[0].mxu0
      %v3294 = vadd.f32 0.0, %v3293
      %v3295 = vpop.f32.mrb[0].mxu0
      %v3296 = vadd.f32 0.0, %v3295
      %3297 = vmatprep.mubr.f32.mxu0 0.0
      %3298 = vmatmul.mubr.f32.gmra.mrb[0].mxu0 %v2706
      %v3299 = vpop.f32.mrb[0].mxu0
      %v3300 = vadd.f32 0.0, %v3299
      %v3301 = vpop.f32.mrb[0].mxu0
      %v3302 = vadd.f32 0.0, %v3301
      %3303 = vmatprep.mubr.f32.mxu0 0.0
      %3304 = vmatmul.mubr.f32.gmra.mrb[0].mxu0 %v2709
      %v3305 = vpop.f32.mrb[0].mxu0
      %v3306 = vadd.f32 0.0, %v3305
      %v3307 = vpop.f32.mrb[0].mxu0
      %v3308 = vadd.f32 0.0, %v3307
      %3309 = vmatprep.mubr.f32.mxu0 0.0
      %3310 = vmatmul.mubr.f32.gmra.mrb[0].mxu0 %v2712
      %v3311 = vpop.f32.mrb[0].mxu0
      %v3312 = vadd.f32 0.0, %v3311
      %v3313 = vpop.f32.mrb[0].mxu0
      %v3314 = vadd.f32 0.0, %v3313
      %3315 = vmatprep.mubr.f32.mxu0 0.0
      %3316 = vmatmul.mubr.f32.gmra.mrb[0].mxu0 %v2715
      %v3317 = vpop.f32.mrb[0].mxu0
      %v3318 = vadd.f32 0.0, %v3317
      %v3319 = vpop.f32.mrb[0].mxu0
      %v3320 = vadd.f32 0.0, %v3319
      %3321 = vmatprep.mubr.f32.mxu0 0.0
      %3322 = vmatmul.mubr.f32.gmra.mrb[0].mxu0 %v2718
      %v3323 = vpop.f32.mrb[0].mxu0
      %v3324 = vadd.f32 0.0, %v3323
      %v3325 = vpop.f32.mrb[0].mxu0
      %v3326 = vadd.f32 0.0, %v3325
      %3327 = vmatprep.mubr.f32.mxu0 0.0
      %3328 = vmatmul.mubr.f32.gmra.mrb[0].mxu0 %v2721
      %v3329 = vpop.f32.mrb[0].mxu0
      %v3330 = vadd.f32 0.0, %v3329
      %v3331 = vpop.f32.mrb[0].mxu0
      %v3332 = vadd.f32 0.0, %v3331
      %3333 = vmatprep.mubr.f32.mxu0 0.0
      %3334 = vmatmul.mubr.f32.gmra.mrb[0].mxu0 %v2724
      %v3335 = vpop.f32.mrb[0].mxu0
      %v3336 = vadd.f32 0.0, %v3335
      %v3337 = vpop.f32.mrb[0].mxu0
      %v3338 = vadd.f32 0.0, %v3337
      %3339 = vmatprep.mubr.f32.mxu0 0.0
      %3340 = vmatmul.mubr.f32.gmra.mrb[0].mxu0 %v2727
      %v3341 = vpop.f32.mrb[0].mxu0
      %v3342 = vadd.f32 0.0, %v3341
      %v3343 = vpop.f32.mrb[0].mxu0
      %v3344 = vadd.f32 0.0, %v3343
      %3345 = vmatprep.mubr.f32.mxu0 0.0
      %3346 = vmatmul.mubr.f32.gmra.mrb[0].mxu0 %v2730
      %v3347 = vpop.f32.mrb[0].mxu0
      %v3348 = vadd.f32 0.0, %v3347
      %v3349 = vpop.f32.mrb[0].mxu0
      %v3350 = vadd.f32 0.0, %v3349
      %3351 = vmatprep.mubr.f32.mxu0 0.0
      %3352 = vmatmul.mubr.f32.gmra.mrb[0].mxu0 %v2733
      %v3353 = vpop.f32.mrb[0].mxu0
      %v3354 = vadd.f32 0.0, %v3353
      %v3355 = vpop.f32.mrb[0].mxu0
      %v3356 = vadd.f32 0.0, %v3355
      %3357 = vmatprep.mubr.f32.mxu0 0.0
      %3358 = vmatmul.mubr.f32.gmra.mrb[0].mxu0 %v2736
      %v3359 = vpop.f32.mrb[0].mxu0
      %v3360 = vadd.f32 0.0, %v3359
      %v3361 = vpop.f32.mrb[0].mxu0
      %v3362 = vadd.f32 0.0, %v3361
      %3363 = vmatprep.mubr.f32.mxu0 0.0
      %3364 = vmatmul.mubr.f32.gmra.mrb[0].mxu0 %v2739
      %v3365 = vpop.f32.mrb[0].mxu0
      %v3366 = vadd.f32 0.0, %v3365
      %v3367 = vpop.f32.mrb[0].mxu0
      %v3368 = vadd.f32 0.0, %v3367
      %3369 = vmatprep.mubr.f32.mxu0 0.0
      %3370 = vmatmul.mubr.f32.gmra.mrb[0].mxu0 %v2742
      %v3371 = vpop.f32.mrb[0].mxu0
      %v3372 = vadd.f32 0.0, %v3371
      %v3373 = vpop.f32.mrb[0].mxu0
      %v3374 = vadd.f32 0.0, %v3373
      %3375 = vmatprep.mubr.f32.mxu0 0.0
      %3376 = vmatmul.mubr.f32.gmra.mrb[0].mxu0 %v2745
      %v3377 = vpop.f32.mrb[0].mxu0
      %v3378 = vadd.f32 0.0, %v3377
      %v3379 = vpop.f32.mrb[0].mxu0
      %v3380 = vadd.f32 0.0, %v3379
      %3381 = vmatprep.mubr.f32.mxu0 0.0
      %3382 = vmatmul.mubr.f32.gmra.mrb[0].mxu0 %v2748
      %v3383 = vpop.f32.mrb[0].mxu0
      %v3384 = vadd.f32 0.0, %v3383
      %v3385 = vpop.f32.mrb[0].mxu0
      %v3386 = vadd.f32 0.0, %v3385
      %3387 = vmatprep.mubr.f32.mxu0 0.0
      %3388 = vmatmul.mubr.f32.gmra.mrb[0].mxu0 %v2751
      %v3389 = vpop.f32.mrb[0].mxu0
      %v3390 = vadd.f32 0.0, %v3389
      %v3391 = vpop.f32.mrb[0].mxu0
      %v3392 = vadd.f32 0.0, %v3391
      %3393 = vmatprep.mubr.f32.mxu0 0.0
      %3394 = vmatmul.mubr.f32.gmra.mrb[0].mxu0 %v2754
      %v3395 = vpop.f32.mrb[0].mxu0
      %v3396 = vadd.f32 0.0, %v3395
      %v3397 = vpop.f32.mrb[0].mxu0
      %v3398 = vadd.f32 0.0, %v3397
      %3399 = vmatprep.mubr.f32.mxu0 0.0
      %3400 = vmatmul.mubr.f32.gmra.mrb[0].mxu0 %v2757
      %v3401 = vpop.f32.mrb[0].mxu0
      %v3402 = vadd.f32 0.0, %v3401
      %v3403 = vpop.f32.mrb[0].mxu0
      %v3404 = vadd.f32 0.0, %v3403
      %3405 = vmatprep.mubr.f32.mxu0 0.0
      %3406 = vmatmul.mubr.f32.gmra.mrb[0].mxu0 %v2760
      %v3407 = vpop.f32.mrb[0].mxu0
      %v3408 = vadd.f32 0.0, %v3407
      %v3409 = vpop.f32.mrb[0].mxu0
      %v3410 = vadd.f32 0.0, %v3409
      %3411 = vmatprep.mubr.f32.mxu0 0.0
      %3412 = vmatmul.mubr.f32.gmra.mrb[0].mxu0 %v2763
      %v3413 = vpop.f32.mrb[0].mxu0
      %v3414 = vadd.f32 0.0, %v3413
      %v3415 = vpop.f32.mrb[0].mxu0
      %v3416 = vadd.f32 0.0, %v3415
      %3417 = vmatprep.mubr.f32.mxu0 0.0
      %3418 = vmatmul.mubr.f32.gmra.mrb[0].mxu0 %v2766
      %v3419 = vpop.f32.mrb[0].mxu0
      %v3420 = vadd.f32 0.0, %v3419
      %v3421 = vpop.f32.mrb[0].mxu0
      %v3422 = vadd.f32 0.0, %v3421
      %3423 = vmatprep.mubr.f32.mxu0 0.0
      %3424 = vmatmul.mubr.f32.gmra.mrb[0].mxu0 %v2769
      %v3425 = vpop.f32.mrb[0].mxu0
      %v3426 = vadd.f32 0.0, %v3425
      %v3427 = vpop.f32.mrb[0].mxu0
      %v3428 = vadd.f32 0.0, %v3427
      %3429 = vmatprep.mubr.f32.mxu0 0.0
      %3430 = vmatmul.mubr.f32.gmra.mrb[0].mxu0 %v2772
      %v3431 = vpop.f32.mrb[0].mxu0
      %v3432 = vadd.f32 0.0, %v3431
      %v3433 = vpop.f32.mrb[0].mxu0
      %v3434 = vadd.f32 0.0, %v3433
      %3435 = vmatprep.mubr.f32.mxu0 0.0
      %3436 = vmatmul.mubr.f32.gmra.mrb[0].mxu0 %v2775
      %v3437 = vpop.f32.mrb[0].mxu0
      %v3438 = vadd.f32 0.0, %v3437
      %v3439 = vpop.f32.mrb[0].mxu0
      %v3440 = vadd.f32 0.0, %v3439
      %3441 = vmatprep.mubr.f32.mxu0 0.0
      %3442 = vmatmul.mubr.f32.gmra.mrb[0].mxu0 %v2778
      %v3443 = vpop.f32.mrb[0].mxu0
      %v3444 = vadd.f32 0.0, %v3443
      %v3445 = vpop.f32.mrb[0].mxu0
      %v3446 = vadd.f32 0.0, %v3445
      %3447 = vmatprep.mubr.f32.mxu0 0.0
      %3448 = vmatmul.mubr.f32.gmra.mrb[0].mxu0 %v2781
      %v3449 = vpop.f32.mrb[0].mxu0
      %v3450 = vadd.f32 0.0, %v3449
      %v3451 = vpop.f32.mrb[0].mxu0
      %v3452 = vadd.f32 0.0, %v3451
      %3453 = vmatprep.mubr.f32.mxu0 0.0
      %3454 = vmatmul.mubr.f32.gmra.mrb[0].mxu0 %v2784
      %v3455 = vpop.f32.mrb[0].mxu0
      %v3456 = vadd.f32 0.0, %v3455
      %v3457 = vpop.f32.mrb[0].mxu0
      %v3458 = vadd.f32 0.0, %v3457
      %3459 = vmatprep.mubr.f32.mxu0 0.0
      %3460 = vmatmul.mubr.f32.gmra.mrb[0].mxu0 %v2787
      %v3461 = vpop.f32.mrb[0].mxu0
      %v3462 = vadd.f32 0.0, %v3461
      %v3463 = vpop.f32.mrb[0].mxu0
      %v3464 = vadd.f32 0.0, %v3463
      %3465 = vmatprep.mubr.f32.mxu0 0.0
      %3466 = vmatmul.mubr.f32.gmra.mrb[0].mxu0 %v2790
      %v3467 = vpop.f32.mrb[0].mxu0
      %v3468 = vadd.f32 0.0, %v3467
      %v3469 = vpop.f32.mrb[0].mxu0
      %v3470 = vadd.f32 0.0, %v3469
      %3471 = vmatprep.mubr.f32.mxu0 0.0
      %3472 = vmatmul.mubr.f32.gmra.mrb[0].mxu0 %v2793
      %v3473 = vpop.f32.mrb[0].mxu0
      %v3474 = vadd.f32 0.0, %v3473
      %v3475 = vpop.f32.mrb[0].mxu0
      %v3476 = vadd.f32 0.0, %v3475
      %3477 = vmatprep.mubr.f32.mxu0 0.0
      %3478 = vmatmul.mubr.f32.gmra.mrb[0].mxu0 %v2796
      %v3479 = vpop.f32.mrb[0].mxu0
      %v3480 = vadd.f32 0.0, %v3479
      %v3481 = vpop.f32.mrb[0].mxu0
      %v3482 = vadd.f32 0.0, %v3481
      %3483 = vmatprep.mubr.f32.mxu0 0.0
      %3484 = vmatmul.mubr.f32.gmra.mrb[0].mxu0 %v2799
      %v3485 = vpop.f32.mrb[0].mxu0
      %v3486 = vadd.f32 0.0, %v3485
      %v3487 = vpop.f32.mrb[0].mxu0
      %v3488 = vadd.f32 0.0, %v3487
      %3489 = vmatprep.mubr.f32.mxu0 0.0
      %3490 = vmatmul.mubr.f32.gmra.mrb[0].mxu0 %v2802
      %v3491 = vpop.f32.mrb[0].mxu0
      %v3492 = vadd.f32 0.0, %v3491
      %v3493 = vpop.f32.mrb[0].mxu0
      %v3494 = vadd.f32 0.0, %v3493
      %3495 = vmatprep.mubr.f32.mxu0 0.0
      %3496 = vmatmul.mubr.f32.gmra.mrb[0].mxu0 %v2805
      %v3497 = vpop.f32.mrb[0].mxu0
      %v3498 = vadd.f32 0.0, %v3497
      %v3499 = vpop.f32.mrb[0].mxu0
      %v3500 = vadd.f32 0.0, %v3499
      %3501 = vmatprep.mubr.f32.mxu0 0.0
      %3502 = vmatmul.mubr.f32.gmra.mrb[0].mxu0 %v2808
      %v3503 = vpop.f32.mrb[0].mxu0
      %v3504 = vadd.f32 0.0, %v3503
      %v3505 = vpop.f32.mrb[0].mxu0
      %v3506 = vadd.f32 0.0, %v3505
      %3507 = vmatprep.mubr.f32.mxu0 0.0
      %3508 = vmatmul.mubr.f32.gmra.mrb[0].mxu0 %v2811
      %v3509 = vpop.f32.mrb[0].mxu0
      %v3510 = vadd.f32 0.0, %v3509
      %v3511 = vpop.f32.mrb[0].mxu0
      %v3512 = vadd.f32 0.0, %v3511
      %3513 = vmatprep.mubr.f32.mxu0 0.0
      %3514 = vmatmul.mubr.f32.gmra.mrb[0].mxu0 %v2814
      %v3515 = vpop.f32.mrb[0].mxu0
      %v3516 = vadd.f32 0.0, %v3515
      %v3517 = vpop.f32.mrb[0].mxu0
      %v3518 = vadd.f32 0.0, %v3517
      %3519 = vmatprep.mubr.f32.mxu0 0.0
      %3520 = vmatmul.mubr.f32.gmra.mrb[0].mxu0 %v2817
      %v3521 = vpop.f32.mrb[0].mxu0
      %v3522 = vadd.f32 0.0, %v3521
      %v3523 = vpop.f32.mrb[0].mxu0
      %v3524 = vadd.f32 0.0, %v3523
      %3525 = vmatprep.mubr.f32.mxu0 0.0
      %3526 = vmatmul.mubr.f32.gmra.mrb[0].mxu0 %v2820
      %v3527 = vpop.f32.mrb[0].mxu0
      %v3528 = vadd.f32 0.0, %v3527
      %v3529 = vpop.f32.mrb[0].mxu0
      %v3530 = vadd.f32 0.0, %v3529
      %3531 = vmatprep.mubr.f32.mxu0 0.0
      %3532 = vmatmul.mubr.f32.gmra.mrb[0].mxu0 %v2823
      %v3533 = vpop.f32.mrb[0].mxu0
      %v3534 = vadd.f32 0.0, %v3533
      %v3535 = vpop.f32.mrb[0].mxu0
      %v3536 = vadd.f32 0.0, %v3535
      %3537 = vmatprep.mubr.f32.mxu0 0.0
      %3538 = vmatmul.mubr.f32.gmra.mrb[0].mxu0 %v2826
      %v3539 = vpop.f32.mrb[0].mxu0
      %v3540 = vadd.f32 0.0, %v3539
      %v3541 = vpop.f32.mrb[0].mxu0
      %v3542 = vadd.f32 0.0, %v3541
      %3543 = vmatprep.mubr.f32.mxu0 0.0
      %3544 = vmatmul.mubr.f32.gmra.mrb[0].mxu0 %v2829
      %v3545 = vpop.f32.mrb[0].mxu0
      %v3546 = vadd.f32 0.0, %v3545
      %v3547 = vpop.f32.mrb[0].mxu0
      %v3548 = vadd.f32 0.0, %v3547
      %3549 = vmatprep.mubr.f32.mxu0 0.0
      %3550 = vmatmul.mubr.f32.gmra.mrb[0].mxu0 %v2832
      %v3551 = vpop.f32.mrb[0].mxu0
      %v3552 = vadd.f32 0.0, %v3551
      %v3553 = vpop.f32.mrb[0].mxu0
      %v3554 = vadd.f32 0.0, %v3553
      %3555 = vmatprep.mubr.f32.mxu0 0.0
      %3556 = vmatmul.mubr.f32.gmra.mrb[0].mxu0 %v2835
      %v3557 = vpop.f32.mrb[0].mxu0
      %v3558 = vadd.f32 0.0, %v3557
      %v3559 = vpop.f32.mrb[0].mxu0
      %v3560 = vadd.f32 0.0, %v3559
      %3561 = vmatprep.mubr.f32.mxu0 0.0
      %3562 = vmatmul.mubr.f32.gmra.mrb[0].mxu0 %v2838
      %v3563 = vpop.f32.mrb[0].mxu0
      %v3564 = vadd.f32 0.0, %v3563
      %v3565 = vpop.f32.mrb[0].mxu0
      %v3566 = vadd.f32 0.0, %v3565
      %3567 = vmatprep.mubr.f32.mxu0 0.0
      %3568 = vmatmul.mubr.f32.gmra.mrb[0].mxu0 %v2841
      %v3569 = vpop.f32.mrb[0].mxu0
      %v3570 = vadd.f32 0.0, %v3569
      %v3571 = vpop.f32.mrb[0].mxu0
      %v3572 = vadd.f32 0.0, %v3571
      %3573 = vmatprep.mubr.f32.mxu0 0.0
      %3574 = vmatmul.mubr.f32.gmra.mrb[0].mxu0 %v2844
      %v3575 = vpop.f32.mrb[0].mxu0
      %v3576 = vadd.f32 0.0, %v3575
      %v3577 = vpop.f32.mrb[0].mxu0
      %v3578 = vadd.f32 0.0, %v3577
      %3579 = vmatprep.mubr.f32.mxu0 0.0
      %3580 = vmatmul.mubr.f32.gmra.mrb[0].mxu0 %v2847
      %v3581 = vpop.f32.mrb[0].mxu0
      %v3582 = vadd.f32 0.0, %v3581
      %v3583 = vpop.f32.mrb[0].mxu0
      %v3584 = vadd.f32 0.0, %v3583
      %3585 = vdwg.mxu0
      %v3586 = vadd.f32 %v1706, %v2916
      %v3587 = vadd.f32 %v1708, %v2918
      %v3588 = vadd.f32 %v1712, %v2922
      %v3589 = vadd.f32 %v1714, %v2924
      %v3590 = vadd.f32 %v1718, %v2928
      %v3591 = vadd.f32 %v1720, %v2930
      %v3592 = vadd.f32 %v1724, %v2934
      %v3593 = vadd.f32 %v1726, %v2936
      %v3594 = vadd.f32 %v1730, %v2940
      %v3595 = vadd.f32 %v1732, %v2942
      %v3596 = vadd.f32 %v1736, %v2946
      %v3597 = vadd.f32 %v1738, %v2948
      %v3598 = vadd.f32 %v1742, %v2952
      %v3599 = vadd.f32 %v1744, %v2954
      %v3600 = vadd.f32 %v1748, %v2958
      %v3601 = vadd.f32 %v1750, %v2960
      %v3602 = vadd.f32 %v1754, %v2964
      %v3603 = vadd.f32 %v1756, %v2966
      %v3604 = vadd.f32 %v1760, %v2970
      %v3605 = vadd.f32 %v1762, %v2972
      %v3606 = vadd.f32 %v1766, %v2976
      %v3607 = vadd.f32 %v1768, %v2978
      %v3608 = vadd.f32 %v1772, %v2982
      %v3609 = vadd.f32 %v1774, %v2984
      %v3610 = vadd.f32 %v1778, %v2988
      %v3611 = vadd.f32 %v1780, %v2990
      %v3612 = vadd.f32 %v1784, %v2994
      %v3613 = vadd.f32 %v1786, %v2996
      %v3614 = vadd.f32 %v1790, %v3000
      %v3615 = vadd.f32 %v1792, %v3002
      %v3616 = vadd.f32 %v1796, %v3006
      %v3617 = vadd.f32 %v1798, %v3008
      %v3618 = vadd.f32 %v1802, %v3012
      %v3619 = vadd.f32 %v1804, %v3014
      %v3620 = vadd.f32 %v1808, %v3018
      %v3621 = vadd.f32 %v1810, %v3020
      %v3622 = vadd.f32 %v1814, %v3024
      %v3623 = vadd.f32 %v1816, %v3026
      %v3624 = vadd.f32 %v1820, %v3030
      %v3625 = vadd.f32 %v1822, %v3032
      %v3626 = vadd.f32 %v1826, %v3036
      %v3627 = vadd.f32 %v1828, %v3038
      %v3628 = vadd.f32 %v1832, %v3042
      %v3629 = vadd.f32 %v1834, %v3044
      %v3630 = vadd.f32 %v1838, %v3048
      %v3631 = vadd.f32 %v1840, %v3050
      %v3632 = vadd.f32 %v1844, %v3054
      %v3633 = vadd.f32 %v1846, %v3056
      %v3634 = vadd.f32 %v1850, %v3060
      %v3635 = vadd.f32 %v1852, %v3062
      %v3636 = vadd.f32 %v1856, %v3066
      %v3637 = vadd.f32 %v1858, %v3068
      %v3638 = vadd.f32 %v1862, %v3072
      %v3639 = vadd.f32 %v1864, %v3074
      %v3640 = vadd.f32 %v1868, %v3078
      %v3641 = vadd.f32 %v1870, %v3080
      %v3642 = vadd.f32 %v1874, %v3084
      %v3643 = vadd.f32 %v1876, %v3086
      %v3644 = vadd.f32 %v1880, %v3090
      %v3645 = vadd.f32 %v1882, %v3092
      %v3646 = vadd.f32 %v1886, %v3096
      %v3647 = vadd.f32 %v1888, %v3098
      %v3648 = vadd.f32 %v1892, %v3102
      %v3649 = vadd.f32 %v1894, %v3104
      %v3650 = vadd.f32 %v1898, %v3108
      %v3651 = vadd.f32 %v1900, %v3110
      %v3652 = vadd.f32 %v1904, %v3114
      %v3653 = vadd.f32 %v1906, %v3116
      %v3654 = vadd.f32 %v1910, %v3120
      %v3655 = vadd.f32 %v1912, %v3122
      %v3656 = vadd.f32 %v1916, %v3126
      %v3657 = vadd.f32 %v1918, %v3128
      %v3658 = vadd.f32 %v1922, %v3132
      %v3659 = vadd.f32 %v1924, %v3134
      %v3660 = vadd.f32 %v1928, %v3138
      %v3661 = vadd.f32 %v1930, %v3140
      %v3662 = vadd.f32 %v1934, %v3144
      %v3663 = vadd.f32 %v1936, %v3146
      %v3664 = vadd.f32 %v1940, %v3150
      %v3665 = vadd.f32 %v1942, %v3152
      %v3666 = vadd.f32 %v1946, %v3156
      %v3667 = vadd.f32 %v1948, %v3158
      %v3668 = vadd.f32 %v1952, %v3162
      %v3669 = vadd.f32 %v1954, %v3164
      %v3670 = vadd.f32 %v1958, %v3168
      %v3671 = vadd.f32 %v1960, %v3170
      %v3672 = vadd.f32 %v1964, %v3174
      %v3673 = vadd.f32 %v1966, %v3176
      %v3674 = vadd.f32 %v1970, %v3180
      %v3675 = vadd.f32 %v1972, %v3182
      %v3676 = vadd.f32 %v1976, %v3186
      %v3677 = vadd.f32 %v1978, %v3188
      %v3678 = vadd.f32 %v1982, %v3192
      %v3679 = vadd.f32 %v1984, %v3194
      %v3680 = vadd.f32 %v1988, %v3198
      %v3681 = vadd.f32 %v1990, %v3200
      %v3682 = vadd.f32 %v1994, %v3204
      %v3683 = vadd.f32 %v1996, %v3206
      %v3684 = vadd.f32 %v2000, %v3210
      %v3685 = vadd.f32 %v2002, %v3212
      %v3686 = vadd.f32 %v2006, %v3216
      %v3687 = vadd.f32 %v2008, %v3218
      %v3688 = vadd.f32 %v2012, %v3222
      %v3689 = vadd.f32 %v2014, %v3224
      %v3690 = vadd.f32 %v2018, %v3228
      %v3691 = vadd.f32 %v2020, %v3230
      %v3692 = vadd.f32 %v2024, %v3234
      %v3693 = vadd.f32 %v2026, %v3236
      %v3694 = vadd.f32 %v2030, %v3240
      %v3695 = vadd.f32 %v2032, %v3242
      %v3696 = vadd.f32 %v2036, %v3246
      %v3697 = vadd.f32 %v2038, %v3248
      %v3698 = vadd.f32 %v2042, %v3252
      %v3699 = vadd.f32 %v2044, %v3254
      %v3700 = vadd.f32 %v2048, %v3258
      %v3701 = vadd.f32 %v2050, %v3260
      %v3702 = vadd.f32 %v2054, %v3264
      %v3703 = vadd.f32 %v2056, %v3266
      %v3704 = vadd.f32 %v2060, %v3270
      %v3705 = vadd.f32 %v2062, %v3272
      %v3706 = vadd.f32 %v2066, %v3276
      %v3707 = vadd.f32 %v2068, %v3278
      %v3708 = vadd.f32 %v2072, %v3282
      %v3709 = vadd.f32 %v2074, %v3284
      %v3710 = vadd.f32 %v2078, %v3288
      %v3711 = vadd.f32 %v2080, %v3290
      %v3712 = vadd.f32 %v2084, %v3294
      %v3713 = vadd.f32 %v2086, %v3296
      %v3714 = vadd.f32 %v2090, %v3300
      %v3715 = vadd.f32 %v2092, %v3302
      %v3716 = vadd.f32 %v2096, %v3306
      %v3717 = vadd.f32 %v2098, %v3308
      %v3718 = vadd.f32 %v2102, %v3312
      %v3719 = vadd.f32 %v2104, %v3314
      %v3720 = vadd.f32 %v2108, %v3318
      %v3721 = vadd.f32 %v2110, %v3320
      %v3722 = vadd.f32 %v2114, %v3324
      %v3723 = vadd.f32 %v2116, %v3326
      %v3724 = vadd.f32 %v2120, %v3330
      %v3725 = vadd.f32 %v2122, %v3332
      %v3726 = vadd.f32 %v2126, %v3336
      %v3727 = vadd.f32 %v2128, %v3338
      %v3728 = vadd.f32 %v2132, %v3342
      %v3729 = vadd.f32 %v2134, %v3344
      %v3730 = vadd.f32 %v2138, %v3348
      %v3731 = vadd.f32 %v2140, %v3350
      %v3732 = vadd.f32 %v2144, %v3354
      %v3733 = vadd.f32 %v2146, %v3356
      %v3734 = vadd.f32 %v2150, %v3360
      %v3735 = vadd.f32 %v2152, %v3362
      %v3736 = vadd.f32 %v2156, %v3366
      %v3737 = vadd.f32 %v2158, %v3368
      %v3738 = vadd.f32 %v2162, %v3372
      %v3739 = vadd.f32 %v2164, %v3374
      %v3740 = vadd.f32 %v2168, %v3378
      %v3741 = vadd.f32 %v2170, %v3380
      %v3742 = vadd.f32 %v2174, %v3384
      %v3743 = vadd.f32 %v2176, %v3386
      %v3744 = vadd.f32 %v2180, %v3390
      %v3745 = vadd.f32 %v2182, %v3392
      %v3746 = vadd.f32 %v2186, %v3396
      %v3747 = vadd.f32 %v2188, %v3398
      %v3748 = vadd.f32 %v2192, %v3402
      %v3749 = vadd.f32 %v2194, %v3404
      %v3750 = vadd.f32 %v2198, %v3408
      %v3751 = vadd.f32 %v2200, %v3410
      %v3752 = vadd.f32 %v2204, %v3414
      %v3753 = vadd.f32 %v2206, %v3416
      %v3754 = vadd.f32 %v2210, %v3420
      %v3755 = vadd.f32 %v2212, %v3422
      %v3756 = vadd.f32 %v2216, %v3426
      %v3757 = vadd.f32 %v2218, %v3428
      %v3758 = vadd.f32 %v2222, %v3432
      %v3759 = vadd.f32 %v2224, %v3434
      %v3760 = vadd.f32 %v2228, %v3438
      %v3761 = vadd.f32 %v2230, %v3440
      %v3762 = vadd.f32 %v2234, %v3444
      %v3763 = vadd.f32 %v2236, %v3446
      %v3764 = vadd.f32 %v2240, %v3450
      %v3765 = vadd.f32 %v2242, %v3452
      %v3766 = vadd.f32 %v2246, %v3456
      %v3767 = vadd.f32 %v2248, %v3458
      %v3768 = vadd.f32 %v2252, %v3462
      %v3769 = vadd.f32 %v2254, %v3464
      %v3770 = vadd.f32 %v2258, %v3468
      %v3771 = vadd.f32 %v2260, %v3470
      %v3772 = vadd.f32 %v2264, %v3474
      %v3773 = vadd.f32 %v2266, %v3476
      %v3774 = vadd.f32 %v2270, %v3480
      %v3775 = vadd.f32 %v2272, %v3482
      %v3776 = vadd.f32 %v2276, %v3486
      %v3777 = vadd.f32 %v2278, %v3488
      %v3778 = vadd.f32 %v2282, %v3492
      %v3779 = vadd.f32 %v2284, %v3494
      %v3780 = vadd.f32 %v2288, %v3498
      %v3781 = vadd.f32 %v2290, %v3500
      %v3782 = vadd.f32 %v2294, %v3504
      %v3783 = vadd.f32 %v2296, %v3506
      %v3784 = vadd.f32 %v2300, %v3510
      %v3785 = vadd.f32 %v2302, %v3512
      %v3786 = vadd.f32 %v2306, %v3516
      %v3787 = vadd.f32 %v2308, %v3518
      %v3788 = vadd.f32 %v2312, %v3522
      %v3789 = vadd.f32 %v2314, %v3524
      %v3790 = vadd.f32 %v2318, %v3528
      %v3791 = vadd.f32 %v2320, %v3530
      %v3792 = vadd.f32 %v2324, %v3534
      %v3793 = vadd.f32 %v2326, %v3536
      %v3794 = vadd.f32 %v2330, %v3540
      %v3795 = vadd.f32 %v2332, %v3542
      %v3796 = vadd.f32 %v2336, %v3546
      %v3797 = vadd.f32 %v2338, %v3548
      %v3798 = vadd.f32 %v2342, %v3552
      %v3799 = vadd.f32 %v2344, %v3554
      %v3800 = vadd.f32 %v2348, %v3558
      %v3801 = vadd.f32 %v2350, %v3560
      %v3802 = vadd.f32 %v2354, %v3564
      %v3803 = vadd.f32 %v2356, %v3566
      %v3804 = vadd.f32 %v2360, %v3570
      %v3805 = vadd.f32 %v2362, %v3572
      %v3806 = vadd.f32 %v2366, %v3576
      %v3807 = vadd.f32 %v2368, %v3578
      %v3808 = vadd.f32 %v2372, %v3582
      %v3809 = vadd.f32 %v2374, %v3584
      %v3810 = vld [vmem:[%s381 + $0x60] sm:$0xff]
      %v3811 = vld [vmem:[%s381 + $0x68] sm:$0xff]
      %v3812 = vld [vmem:[%s381 + $0x70] sm:$0xff]
      %v3813 = vld [vmem:[%s381 + $0x78] sm:$0xff]
      %v3814 = vld [vmem:[%s381 + $0x80] sm:$0xff]
      %v3815 = vld [vmem:[%s381 + $0x88] sm:$0xff]
      %v3816 = vld [vmem:[%s381 + $0x90] sm:$0xff]
      %v3817 = vld [vmem:[%s381 + $0x98] sm:$0xff]
      %v3818 = vld [vmem:[%s381 + $0xa0] sm:$0xff]
      %v3819 = vld [vmem:[%s381 + $0xa8] sm:$0xff]
      %v3820 = vld [vmem:[%s381 + $0xb0] sm:$0xff]
      %v3821 = vld [vmem:[%s381 + $0xb8] sm:$0xff]
      %v3822 = vld [vmem:[%s381 + $0xc0] sm:$0xff]
      %v3823 = vld [vmem:[%s381 + $0xc8] sm:$0xff]
      %v3824 = vld [vmem:[%s381 + $0xd0] sm:$0xff]
      %v3825 = vld [vmem:[%s381 + $0xd8] sm:$0xff]
      %v3826 = vld [vmem:[%s381 + $0xe0] sm:$0xff]
      %v3827 = vld [vmem:[%s381 + $0xe8] sm:$0xff]
      %v3828 = vld [vmem:[%s381 + $0xf0] sm:$0xff]
      %v3829 = vld [vmem:[%s381 + $0xf8] sm:$0xff]
      %v3830 = vld [vmem:[%s381 + $0x100] sm:$0xff]
      %v3831 = vld [vmem:[%s381 + $0x108] sm:$0xff]
      %v3832 = vld [vmem:[%s381 + $0x110] sm:$0xff]
      %v3833 = vld [vmem:[%s381 + $0x118] sm:$0xff]
      %v3834 = vld [vmem:[%s381 + $0x120] sm:$0xff]
      %v3835 = vld [vmem:[%s381 + $0x128] sm:$0xff]
      %v3836 = vld [vmem:[%s381 + $0x130] sm:$0xff]
      %v3837 = vld [vmem:[%s381 + $0x138] sm:$0xff]
      %v3838 = vld [vmem:[%s381 + $0x140] sm:$0xff]
      %v3839 = vld [vmem:[%s381 + $0x148] sm:$0xff]
      %v3840 = vld [vmem:[%s381 + $0x150] sm:$0xff]
      %v3841 = vld [vmem:[%s381 + $0x158] sm:$0xff]
      %v3842 = vld [vmem:[%s381 + $0x160] sm:$0xff]
      %v3843 = vld [vmem:[%s381 + $0x168] sm:$0xff]
      %v3844 = vld [vmem:[%s381 + $0x170] sm:$0xff]
      %v3845 = vld [vmem:[%s381 + $0x178] sm:$0xff]
      %v3846 = vld [vmem:[%s381 + $0x180] sm:$0xff]
      %v3847 = vld [vmem:[%s381 + $0x188] sm:$0xff]
      %v3848 = vld [vmem:[%s381 + $0x190] sm:$0xff]
      %v3849 = vld [vmem:[%s381 + $0x198] sm:$0xff]
      %v3850 = vld [vmem:[%s381 + $0x1a0] sm:$0xff]
      %v3851 = vld [vmem:[%s381 + $0x1a8] sm:$0xff]
      %v3852 = vld [vmem:[%s381 + $0x1b0] sm:$0xff]
      %v3853 = vld [vmem:[%s381 + $0x1b8] sm:$0xff]
      %v3854 = vld [vmem:[%s381 + $0x1c0] sm:$0xff]
      %v3855 = vld [vmem:[%s381 + $0x1c8] sm:$0xff]
      %v3856 = vld [vmem:[%s381 + $0x1d0] sm:$0xff]
      %v3857 = vld [vmem:[%s381 + $0x1d8] sm:$0xff]
      %v3858 = vld [vmem:[%s381 + $0x1e0] sm:$0xff]
      %v3859 = vld [vmem:[%s381 + $0x1e8] sm:$0xff]
      %v3860 = vld [vmem:[%s381 + $0x1f0] sm:$0xff]
      %v3861 = vld [vmem:[%s381 + $0x1f8] sm:$0xff]
      %v3862 = vld [vmem:[%s381 + $0x200] sm:$0xff]
      %v3863 = vld [vmem:[%s381 + $0x208] sm:$0xff]
      %v3864 = vld [vmem:[%s381 + $0x210] sm:$0xff]
      %v3865 = vld [vmem:[%s381 + $0x218] sm:$0xff]
      %v3866 = vld [vmem:[%s381 + $0x220] sm:$0xff]
      %v3867 = vld [vmem:[%s381 + $0x228] sm:$0xff]
      %v3868 = vld [vmem:[%s381 + $0x230] sm:$0xff]
      %v3869 = vld [vmem:[%s381 + $0x238] sm:$0xff]
      %v3870 = vld [vmem:[%s381 + $0x240] sm:$0xff]
      %v3871 = vld [vmem:[%s381 + $0x248] sm:$0xff]
      %v3872 = vld [vmem:[%s381 + $0x250] sm:$0xff]
      %v3873 = vld [vmem:[%s381 + $0x258] sm:$0xff]
      %v3874 = vld [vmem:[%s381 + $0x260] sm:$0xff]
      %v3875 = vld [vmem:[%s381 + $0x268] sm:$0xff]
      %v3876 = vld [vmem:[%s381 + $0x270] sm:$0xff]
      %v3877 = vld [vmem:[%s381 + $0x278] sm:$0xff]
      %v3878 = vld [vmem:[%s381 + $0x280] sm:$0xff]
      %v3879 = vld [vmem:[%s381 + $0x288] sm:$0xff]
      %v3880 = vld [vmem:[%s381 + $0x290] sm:$0xff]
      %v3881 = vld [vmem:[%s381 + $0x298] sm:$0xff]
      %v3882 = vld [vmem:[%s381 + $0x2a0] sm:$0xff]
      %v3883 = vld [vmem:[%s381 + $0x2a8] sm:$0xff]
      %v3884 = vld [vmem:[%s381 + $0x2b0] sm:$0xff]
      %v3885 = vld [vmem:[%s381 + $0x2b8] sm:$0xff]
      %v3886 = vld [vmem:[%s381 + $0x2c0] sm:$0xff]
      %v3887 = vld [vmem:[%s381 + $0x2c8] sm:$0xff]
      %v3888 = vld [vmem:[%s381 + $0x2d0] sm:$0xff]
      %v3889 = vld [vmem:[%s381 + $0x2d8] sm:$0xff]
      %v3890 = vld [vmem:[%s381 + $0x2e0] sm:$0xff]
      %v3891 = vld [vmem:[%s381 + $0x2e8] sm:$0xff]
      %v3892 = vld [vmem:[%s381 + $0x2f0] sm:$0xff]
      %v3893 = vld [vmem:[%s381 + $0x2f8] sm:$0xff]
      %v3894 = vld [vmem:[%s381 + $0x300] sm:$0xff]
      %v3895 = vld [vmem:[%s381 + $0x308] sm:$0xff]
      %v3896 = vld [vmem:[%s381 + $0x310] sm:$0xff]
      %v3897 = vld [vmem:[%s381 + $0x318] sm:$0xff]
      %v3898 = vld [vmem:[%s381 + $0x320] sm:$0xff]
      %v3899 = vld [vmem:[%s381 + $0x328] sm:$0xff]
      %v3900 = vld [vmem:[%s381 + $0x330] sm:$0xff]
      %v3901 = vld [vmem:[%s381 + $0x338] sm:$0xff]
      %v3902 = vld [vmem:[%s381 + $0x340] sm:$0xff]
      %v3903 = vld [vmem:[%s381 + $0x348] sm:$0xff]
      %v3904 = vld [vmem:[%s381 + $0x350] sm:$0xff]
      %v3905 = vld [vmem:[%s381 + $0x358] sm:$0xff]
      %v3906 = vld [vmem:[%s381 + $0x360] sm:$0xff]
      %v3907 = vld [vmem:[%s381 + $0x368] sm:$0xff]
      %v3908 = vld [vmem:[%s381 + $0x370] sm:$0xff]
      %v3909 = vld [vmem:[%s381 + $0x378] sm:$0xff]
      %v3910 = vld [vmem:[%s381 + $0x380] sm:$0xff]
      %v3911 = vld [vmem:[%s381 + $0x388] sm:$0xff]
      %v3912 = vld [vmem:[%s381 + $0x390] sm:$0xff]
      %v3913 = vld [vmem:[%s381 + $0x398] sm:$0xff]
      %v3914 = vld [vmem:[%s381 + $0x3a0] sm:$0xff]
      %v3915 = vld [vmem:[%s381 + $0x3a8] sm:$0xff]
      %v3916 = vld [vmem:[%s381 + $0x3b0] sm:$0xff]
      %v3917 = vld [vmem:[%s381 + $0x3b8] sm:$0xff]
      %v3918 = vld [vmem:[%s381 + $0x3c0] sm:$0xff]
      %v3919 = vld [vmem:[%s381 + $0x3c8] sm:$0xff]
      %v3920 = vld [vmem:[%s381 + $0x3d0] sm:$0xff]
      %v3921 = vld [vmem:[%s381 + $0x3d8] sm:$0xff]
      %s3922 = scalar_lea.vmem %s1, 576
      %v3923 = vld [vmem:[%s3922] sm:$0xff]
      %v3924 = vld [vmem:[%s3922 + $0x8] sm:$0xff]
      %v3925 = vld [vmem:[%s3922 + $0x10] sm:$0xff]
      %v3926 = vld [vmem:[%s3922 + $0x18] sm:$0xff]
      %v3927 = vld [vmem:[%s3922 + $0x20] sm:$0xff]
      %v3928 = vld [vmem:[%s3922 + $0x28] sm:$0xff]
      %v3929 = vld [vmem:[%s3922 + $0x30] sm:$0xff]
      %v3930 = vld [vmem:[%s3922 + $0x38] sm:$0xff]
      %v3931 = vld [vmem:[%s3922 + $0x40] sm:$0xff]
      %v3932 = vld [vmem:[%s3922 + $0x48] sm:$0xff]
      %v3933 = vld [vmem:[%s3922 + $0x50] sm:$0xff]
      %v3934 = vld [vmem:[%s3922 + $0x58] sm:$0xff]
      %v3935 = vld [vmem:[%s3922 + $0x60] sm:$0xff]
      %v3936 = vld [vmem:[%s3922 + $0x68] sm:$0xff]
      %v3937 = vld [vmem:[%s3922 + $0x70] sm:$0xff]
      %v3938 = vld [vmem:[%s3922 + $0x78] sm:$0xff]
      %v3939 = vld [vmem:[%s3922 + $0x80] sm:$0xff]
      %v3940 = vld [vmem:[%s3922 + $0x88] sm:$0xff]
      %v3941 = vld [vmem:[%s3922 + $0x90] sm:$0xff]
      %v3942 = vld [vmem:[%s3922 + $0x98] sm:$0xff]
      %v3943 = vld [vmem:[%s3922 + $0xa0] sm:$0xff]
      %v3944 = vld [vmem:[%s3922 + $0xa8] sm:$0xff]
      %v3945 = vld [vmem:[%s3922 + $0xb0] sm:$0xff]
      %v3946 = vld [vmem:[%s3922 + $0xb8] sm:$0xff]
      %v3948 = vsel %vm553, %v3810, 0
      %v3951 = vsel %vm553, %v3811, 0
      %v3954 = vsel %vm553, %v3812, 0
      %v3957 = vsel %vm553, %v3813, 0
      %v3960 = vsel %vm553, %v3814, 0
      %v3963 = vsel %vm553, %v3815, 0
      %v3966 = vsel %vm553, %v3816, 0
      %v3969 = vsel %vm553, %v3817, 0
      %v3972 = vsel %vm553, %v3818, 0
      %v3975 = vsel %vm553, %v3819, 0
      %v3978 = vsel %vm553, %v3820, 0
      %v3981 = vsel %vm553, %v3821, 0
      %v3984 = vsel %vm553, %v3822, 0
      %v3987 = vsel %vm553, %v3823, 0
      %v3990 = vsel %vm553, %v3824, 0
      %v3993 = vsel %vm553, %v3825, 0
      %v3996 = vsel %vm553, %v3826, 0
      %v3999 = vsel %vm553, %v3827, 0
      %v4002 = vsel %vm553, %v3828, 0
      %v4005 = vsel %vm553, %v3829, 0
      %v4008 = vsel %vm553, %v3830, 0
      %v4011 = vsel %vm553, %v3831, 0
      %v4014 = vsel %vm553, %v3832, 0
      %v4017 = vsel %vm553, %v3833, 0
      %v4020 = vsel %vm553, %v3834, 0
      %v4023 = vsel %vm553, %v3835, 0
      %v4026 = vsel %vm553, %v3836, 0
      %v4029 = vsel %vm553, %v3837, 0
      %v4032 = vsel %vm553, %v3838, 0
      %v4035 = vsel %vm553, %v3839, 0
      %v4038 = vsel %vm553, %v3840, 0
      %v4041 = vsel %vm553, %v3841, 0
      %v4044 = vsel %vm553, %v3842, 0
      %v4047 = vsel %vm553, %v3843, 0
      %v4050 = vsel %vm553, %v3844, 0
      %v4053 = vsel %vm553, %v3845, 0
      %v4056 = vsel %vm553, %v3846, 0
      %v4059 = vsel %vm553, %v3847, 0
      %v4062 = vsel %vm553, %v3848, 0
      %v4065 = vsel %vm553, %v3849, 0
      %v4068 = vsel %vm553, %v3850, 0
      %v4071 = vsel %vm553, %v3851, 0
      %v4074 = vsel %vm553, %v3852, 0
      %v4077 = vsel %vm553, %v3853, 0
      %v4080 = vsel %vm553, %v3854, 0
      %v4083 = vsel %vm553, %v3855, 0
      %v4086 = vsel %vm553, %v3856, 0
      %v4089 = vsel %vm553, %v3857, 0
      %v4092 = vsel %vm553, %v3858, 0
      %v4095 = vsel %vm553, %v3859, 0
      %v4098 = vsel %vm553, %v3860, 0
      %v4101 = vsel %vm553, %v3861, 0
      %v4104 = vsel %vm553, %v3862, 0
      %v4107 = vsel %vm553, %v3863, 0
      %v4110 = vsel %vm553, %v3864, 0
      %v4113 = vsel %vm553, %v3865, 0
      %v4116 = vsel %vm553, %v3866, 0
      %v4119 = vsel %vm553, %v3867, 0
      %v4122 = vsel %vm553, %v3868, 0
      %v4125 = vsel %vm553, %v3869, 0
      %v4128 = vsel %vm553, %v3870, 0
      %v4131 = vsel %vm553, %v3871, 0
      %v4134 = vsel %vm553, %v3872, 0
      %v4137 = vsel %vm553, %v3873, 0
      %v4140 = vsel %vm553, %v3874, 0
      %v4143 = vsel %vm553, %v3875, 0
      %v4146 = vsel %vm553, %v3876, 0
      %v4149 = vsel %vm553, %v3877, 0
      %v4152 = vsel %vm553, %v3878, 0
      %v4155 = vsel %vm553, %v3879, 0
      %v4158 = vsel %vm553, %v3880, 0
      %v4161 = vsel %vm553, %v3881, 0
      %v4164 = vsel %vm553, %v3882, 0
      %v4167 = vsel %vm553, %v3883, 0
      %v4170 = vsel %vm553, %v3884, 0
      %v4173 = vsel %vm553, %v3885, 0
      %v4176 = vsel %vm553, %v3886, 0
      %v4179 = vsel %vm553, %v3887, 0
      %v4182 = vsel %vm553, %v3888, 0
      %v4185 = vsel %vm553, %v3889, 0
      %v4188 = vsel %vm553, %v3890, 0
      %v4191 = vsel %vm553, %v3891, 0
      %v4194 = vsel %vm553, %v3892, 0
      %v4197 = vsel %vm553, %v3893, 0
      %v4200 = vsel %vm553, %v3894, 0
      %v4203 = vsel %vm553, %v3895, 0
      %v4206 = vsel %vm553, %v3896, 0
      %v4209 = vsel %vm553, %v3897, 0
      %v4212 = vsel %vm553, %v3898, 0
      %v4215 = vsel %vm553, %v3899, 0
      %v4218 = vsel %vm553, %v3900, 0
      %v4221 = vsel %vm553, %v3901, 0
      %v4224 = vsel %vm553, %v3902, 0
      %v4227 = vsel %vm553, %v3903, 0
      %v4230 = vsel %vm553, %v3904, 0
      %v4233 = vsel %vm553, %v3905, 0
      %v4236 = vsel %vm553, %v3906, 0
      %v4239 = vsel %vm553, %v3907, 0
      %v4242 = vsel %vm553, %v3908, 0
      %v4245 = vsel %vm553, %v3909, 0
      %v4248 = vsel %vm553, %v3910, 0
      %v4251 = vsel %vm553, %v3911, 0
      %v4254 = vsel %vm553, %v3912, 0
      %v4257 = vsel %vm553, %v3913, 0
      %v4260 = vsel %vm553, %v3914, 0
      %v4263 = vsel %vm553, %v3915, 0
      %v4266 = vsel %vm553, %v3916, 0
      %v4269 = vsel %vm553, %v3917, 0
      %v4272 = vsel %vm553, %v3918, 0
      %v4275 = vsel %vm553, %v3919, 0
      %v4278 = vsel %vm553, %v3920, 0
      %v4281 = vsel %vm553, %v3921, 0
      %4283 = vmatprep.subr.mxu0 %v3924
      %4284 = vmatpush1.msra.mxu0 %v3923
      %4285 = vmatprep.subr.mxu0 %v3926
      %4286 = vmatpush1.msra.mxu0 %v3925
      %4287 = vmatprep.subr.mxu0 %v3928
      %4288 = vmatpush1.msra.mxu0 %v3927
      %4289 = vmatprep.subr.mxu0 %v3930
      %4290 = vmatpush1.msra.mxu0 %v3929
      %4291 = vmatprep.subr.mxu0 %v3932
      %4292 = vmatpush1.msra.mxu0 %v3931
      %4293 = vmatprep.subr.mxu0 %v3934
      %4294 = vmatpush1.msra.mxu0 %v3933
      %4295 = vmatprep.subr.mxu0 %v3936
      %4296 = vmatpush1.msra.mxu0 %v3935
      %4297 = vmatprep.subr.mxu0 %v3938
      %4298 = vmatpush1.msra.mxu0 %v3937
      %4299 = vmatprep.subr.mxu0 %v3940
      %4300 = vmatpush1.msra.mxu0 %v3939
      %4301 = vmatprep.subr.mxu0 %v3942
      %4302 = vmatpush1.msra.mxu0 %v3941
      %4303 = vmatprep.subr.mxu0 %v3944
      %4304 = vmatpush1.msra.mxu0 %v3943
      %4305 = vmatprep.subr.mxu0 %v3946
      %4306 = vmatpush1.msra.mxu0 %v3945
      %4307 = vmatprep.subr.mxu0 0.0
      %4308 = vmatpush1.msra.mxu0 0.0
      %4309 = vmatprep.subr.mxu0 0.0
      %4310 = vmatpush1.msra.mxu0 0.0
      %4311 = vmatprep.subr.mxu0 0.0
      %4312 = vmatpush1.msra.mxu0 0.0
      %4313 = vmatprep.subr.mxu0 0.0
      %4314 = vmatpush1.msra.mxu0 0.0
      %4315 = vmatprep.subr.mxu0 0.0
      %4316 = vmatpush1.msra.mxu0 0.0
      %4317 = vmatprep.subr.mxu0 0.0
      %4318 = vmatpush1.msra.mxu0 0.0
      %4319 = vmatprep.subr.mxu0 0.0
      %4320 = vmatpush1.msra.mxu0 0.0
      %4321 = vmatprep.subr.mxu0 0.0
      %4322 = vmatpush1.msra.mxu0 0.0
      %4323 = vmatprep.subr.mxu0 0.0
      %4324 = vmatpush1.msra.mxu0 0.0
      %4325 = vmatprep.subr.mxu0 0.0
      %4326 = vmatpush1.msra.mxu0 0.0
      %4327 = vmatprep.subr.mxu0 0.0
      %4328 = vmatpush1.msra.mxu0 0.0
      %4329 = vmatprep.subr.mxu0 0.0
      %4330 = vmatpush1.msra.mxu0 0.0
      %4331 = vmatprep.subr.mxu0 0.0
      %4332 = vmatpush1.msra.mxu0 0.0
      %4333 = vmatprep.subr.mxu0 0.0
      %4334 = vmatpush1.msra.mxu0 0.0
      %4335 = vmatprep.subr.mxu0 0.0
      %4336 = vmatpush1.msra.mxu0 0.0
      %4337 = vmatprep.subr.mxu0 0.0
      %4338 = vmatpush1.msra.mxu0 0.0
      %4339 = vmatprep.subr.mxu0 0.0
      %4340 = vmatpush1.msra.mxu0 0.0
      %4341 = vmatprep.subr.mxu0 0.0
      %4342 = vmatpush1.msra.mxu0 0.0
      %4343 = vmatprep.subr.mxu0 0.0
      %4344 = vmatpush1.msra.mxu0 0.0
      %4345 = vmatprep.subr.mxu0 0.0
      %4346 = vmatpush1.msra.mxu0 0.0
      %4347 = vmatprep.mubr.f32.mxu0 0.0
      %4348 = vmatmul.mubr.f32.gmra.mrb[0].mxu0 %v3948
      %v4349 = vpop.f32.mrb[0].mxu0
      %v4350 = vadd.f32 0.0, %v4349
      %v4351 = vpop.f32.mrb[0].mxu0
      %v4352 = vadd.f32 0.0, %v4351
      %4353 = vmatprep.mubr.f32.mxu0 0.0
      %4354 = vmatmul.mubr.f32.gmra.mrb[0].mxu0 %v3951
      %v4355 = vpop.f32.mrb[0].mxu0
      %v4356 = vadd.f32 0.0, %v4355
      %v4357 = vpop.f32.mrb[0].mxu0
      %v4358 = vadd.f32 0.0, %v4357
      %4359 = vmatprep.mubr.f32.mxu0 0.0
      %4360 = vmatmul.mubr.f32.gmra.mrb[0].mxu0 %v3954
      %v4361 = vpop.f32.mrb[0].mxu0
      %v4362 = vadd.f32 0.0, %v4361
      %v4363 = vpop.f32.mrb[0].mxu0
      %v4364 = vadd.f32 0.0, %v4363
      %4365 = vmatprep.mubr.f32.mxu0 0.0
      %4366 = vmatmul.mubr.f32.gmra.mrb[0].mxu0 %v3957
      %v4367 = vpop.f32.mrb[0].mxu0
      %v4368 = vadd.f32 0.0, %v4367
      %v4369 = vpop.f32.mrb[0].mxu0
      %v4370 = vadd.f32 0.0, %v4369
      %4371 = vmatprep.mubr.f32.mxu0 0.0
      %4372 = vmatmul.mubr.f32.gmra.mrb[0].mxu0 %v3960
      %v4373 = vpop.f32.mrb[0].mxu0
      %v4374 = vadd.f32 0.0, %v4373
      %v4375 = vpop.f32.mrb[0].mxu0
      %v4376 = vadd.f32 0.0, %v4375
      %4377 = vmatprep.mubr.f32.mxu0 0.0
      %4378 = vmatmul.mubr.f32.gmra.mrb[0].mxu0 %v3963
      %v4379 = vpop.f32.mrb[0].mxu0
      %v4380 = vadd.f32 0.0, %v4379
      %v4381 = vpop.f32.mrb[0].mxu0
      %v4382 = vadd.f32 0.0, %v4381
      %4383 = vmatprep.mubr.f32.mxu0 0.0
      %4384 = vmatmul.mubr.f32.gmra.mrb[0].mxu0 %v3966
      %v4385 = vpop.f32.mrb[0].mxu0
      %v4386 = vadd.f32 0.0, %v4385
      %v4387 = vpop.f32.mrb[0].mxu0
      %v4388 = vadd.f32 0.0, %v4387
      %4389 = vmatprep.mubr.f32.mxu0 0.0
      %4390 = vmatmul.mubr.f32.gmra.mrb[0].mxu0 %v3969
      %v4391 = vpop.f32.mrb[0].mxu0
      %v4392 = vadd.f32 0.0, %v4391
      %v4393 = vpop.f32.mrb[0].mxu0
      %v4394 = vadd.f32 0.0, %v4393
      %4395 = vmatprep.mubr.f32.mxu0 0.0
      %4396 = vmatmul.mubr.f32.gmra.mrb[0].mxu0 %v3972
      %v4397 = vpop.f32.mrb[0].mxu0
      %v4398 = vadd.f32 0.0, %v4397
      %v4399 = vpop.f32.mrb[0].mxu0
      %v4400 = vadd.f32 0.0, %v4399
      %4401 = vmatprep.mubr.f32.mxu0 0.0
      %4402 = vmatmul.mubr.f32.gmra.mrb[0].mxu0 %v3975
      %v4403 = vpop.f32.mrb[0].mxu0
      %v4404 = vadd.f32 0.0, %v4403
      %v4405 = vpop.f32.mrb[0].mxu0
      %v4406 = vadd.f32 0.0, %v4405
      %4407 = vmatprep.mubr.f32.mxu0 0.0
      %4408 = vmatmul.mubr.f32.gmra.mrb[0].mxu0 %v3978
      %v4409 = vpop.f32.mrb[0].mxu0
      %v4410 = vadd.f32 0.0, %v4409
      %v4411 = vpop.f32.mrb[0].mxu0
      %v4412 = vadd.f32 0.0, %v4411
      %4413 = vmatprep.mubr.f32.mxu0 0.0
      %4414 = vmatmul.mubr.f32.gmra.mrb[0].mxu0 %v3981
      %v4415 = vpop.f32.mrb[0].mxu0
      %v4416 = vadd.f32 0.0, %v4415
      %v4417 = vpop.f32.mrb[0].mxu0
      %v4418 = vadd.f32 0.0, %v4417
      %4419 = vmatprep.mubr.f32.mxu0 0.0
      %4420 = vmatmul.mubr.f32.gmra.mrb[0].mxu0 %v3984
      %v4421 = vpop.f32.mrb[0].mxu0
      %v4422 = vadd.f32 0.0, %v4421
      %v4423 = vpop.f32.mrb[0].mxu0
      %v4424 = vadd.f32 0.0, %v4423
      %4425 = vmatprep.mubr.f32.mxu0 0.0
      %4426 = vmatmul.mubr.f32.gmra.mrb[0].mxu0 %v3987
      %v4427 = vpop.f32.mrb[0].mxu0
      %v4428 = vadd.f32 0.0, %v4427
      %v4429 = vpop.f32.mrb[0].mxu0
      %v4430 = vadd.f32 0.0, %v4429
      %4431 = vmatprep.mubr.f32.mxu0 0.0
      %4432 = vmatmul.mubr.f32.gmra.mrb[0].mxu0 %v3990
      %v4433 = vpop.f32.mrb[0].mxu0
      %v4434 = vadd.f32 0.0, %v4433
      %v4435 = vpop.f32.mrb[0].mxu0
      %v4436 = vadd.f32 0.0, %v4435
      %4437 = vmatprep.mubr.f32.mxu0 0.0
      %4438 = vmatmul.mubr.f32.gmra.mrb[0].mxu0 %v3993
      %v4439 = vpop.f32.mrb[0].mxu0
      %v4440 = vadd.f32 0.0, %v4439
      %v4441 = vpop.f32.mrb[0].mxu0
      %v4442 = vadd.f32 0.0, %v4441
      %4443 = vmatprep.mubr.f32.mxu0 0.0
      %4444 = vmatmul.mubr.f32.gmra.mrb[0].mxu0 %v3996
      %v4445 = vpop.f32.mrb[0].mxu0
      %v4446 = vadd.f32 0.0, %v4445
      %v4447 = vpop.f32.mrb[0].mxu0
      %v4448 = vadd.f32 0.0, %v4447
      %4449 = vmatprep.mubr.f32.mxu0 0.0
      %4450 = vmatmul.mubr.f32.gmra.mrb[0].mxu0 %v3999
      %v4451 = vpop.f32.mrb[0].mxu0
      %v4452 = vadd.f32 0.0, %v4451
      %v4453 = vpop.f32.mrb[0].mxu0
      %v4454 = vadd.f32 0.0, %v4453
      %4455 = vmatprep.mubr.f32.mxu0 0.0
      %4456 = vmatmul.mubr.f32.gmra.mrb[0].mxu0 %v4002
      %v4457 = vpop.f32.mrb[0].mxu0
      %v4458 = vadd.f32 0.0, %v4457
      %v4459 = vpop.f32.mrb[0].mxu0
      %v4460 = vadd.f32 0.0, %v4459
      %4461 = vmatprep.mubr.f32.mxu0 0.0
      %4462 = vmatmul.mubr.f32.gmra.mrb[0].mxu0 %v4005
      %v4463 = vpop.f32.mrb[0].mxu0
      %v4464 = vadd.f32 0.0, %v4463
      %v4465 = vpop.f32.mrb[0].mxu0
      %v4466 = vadd.f32 0.0, %v4465
      %4467 = vmatprep.mubr.f32.mxu0 0.0
      %4468 = vmatmul.mubr.f32.gmra.mrb[0].mxu0 %v4008
      %v4469 = vpop.f32.mrb[0].mxu0
      %v4470 = vadd.f32 0.0, %v4469
      %v4471 = vpop.f32.mrb[0].mxu0
      %v4472 = vadd.f32 0.0, %v4471
      %4473 = vmatprep.mubr.f32.mxu0 0.0
      %4474 = vmatmul.mubr.f32.gmra.mrb[0].mxu0 %v4011
      %v4475 = vpop.f32.mrb[0].mxu0
      %v4476 = vadd.f32 0.0, %v4475
      %v4477 = vpop.f32.mrb[0].mxu0
      %v4478 = vadd.f32 0.0, %v4477
      %4479 = vmatprep.mubr.f32.mxu0 0.0
      %4480 = vmatmul.mubr.f32.gmra.mrb[0].mxu0 %v4014
      %v4481 = vpop.f32.mrb[0].mxu0
      %v4482 = vadd.f32 0.0, %v4481
      %v4483 = vpop.f32.mrb[0].mxu0
      %v4484 = vadd.f32 0.0, %v4483
      %4485 = vmatprep.mubr.f32.mxu0 0.0
      %4486 = vmatmul.mubr.f32.gmra.mrb[0].mxu0 %v4017
      %v4487 = vpop.f32.mrb[0].mxu0
      %v4488 = vadd.f32 0.0, %v4487
      %v4489 = vpop.f32.mrb[0].mxu0
      %v4490 = vadd.f32 0.0, %v4489
      %4491 = vmatprep.mubr.f32.mxu0 0.0
      %4492 = vmatmul.mubr.f32.gmra.mrb[0].mxu0 %v4020
      %v4493 = vpop.f32.mrb[0].mxu0
      %v4494 = vadd.f32 0.0, %v4493
      %v4495 = vpop.f32.mrb[0].mxu0
      %v4496 = vadd.f32 0.0, %v4495
      %4497 = vmatprep.mubr.f32.mxu0 0.0
      %4498 = vmatmul.mubr.f32.gmra.mrb[0].mxu0 %v4023
      %v4499 = vpop.f32.mrb[0].mxu0
      %v4500 = vadd.f32 0.0, %v4499
      %v4501 = vpop.f32.mrb[0].mxu0
      %v4502 = vadd.f32 0.0, %v4501
      %4503 = vmatprep.mubr.f32.mxu0 0.0
      %4504 = vmatmul.mubr.f32.gmra.mrb[0].mxu0 %v4026
      %v4505 = vpop.f32.mrb[0].mxu0
      %v4506 = vadd.f32 0.0, %v4505
      %v4507 = vpop.f32.mrb[0].mxu0
      %v4508 = vadd.f32 0.0, %v4507
      %4509 = vmatprep.mubr.f32.mxu0 0.0
      %4510 = vmatmul.mubr.f32.gmra.mrb[0].mxu0 %v4029
      %v4511 = vpop.f32.mrb[0].mxu0
      %v4512 = vadd.f32 0.0, %v4511
      %v4513 = vpop.f32.mrb[0].mxu0
      %v4514 = vadd.f32 0.0, %v4513
      %4515 = vmatprep.mubr.f32.mxu0 0.0
      %4516 = vmatmul.mubr.f32.gmra.mrb[0].mxu0 %v4032
      %v4517 = vpop.f32.mrb[0].mxu0
      %v4518 = vadd.f32 0.0, %v4517
      %v4519 = vpop.f32.mrb[0].mxu0
      %v4520 = vadd.f32 0.0, %v4519
      %4521 = vmatprep.mubr.f32.mxu0 0.0
      %4522 = vmatmul.mubr.f32.gmra.mrb[0].mxu0 %v4035
      %v4523 = vpop.f32.mrb[0].mxu0
      %v4524 = vadd.f32 0.0, %v4523
      %v4525 = vpop.f32.mrb[0].mxu0
      %v4526 = vadd.f32 0.0, %v4525
      %4527 = vmatprep.mubr.f32.mxu0 0.0
      %4528 = vmatmul.mubr.f32.gmra.mrb[0].mxu0 %v4038
      %v4529 = vpop.f32.mrb[0].mxu0
      %v4530 = vadd.f32 0.0, %v4529
      %v4531 = vpop.f32.mrb[0].mxu0
      %v4532 = vadd.f32 0.0, %v4531
      %4533 = vmatprep.mubr.f32.mxu0 0.0
      %4534 = vmatmul.mubr.f32.gmra.mrb[0].mxu0 %v4041
      %v4535 = vpop.f32.mrb[0].mxu0
      %v4536 = vadd.f32 0.0, %v4535
      %v4537 = vpop.f32.mrb[0].mxu0
      %v4538 = vadd.f32 0.0, %v4537
      %4539 = vmatprep.mubr.f32.mxu0 0.0
      %4540 = vmatmul.mubr.f32.gmra.mrb[0].mxu0 %v4044
      %v4541 = vpop.f32.mrb[0].mxu0
      %v4542 = vadd.f32 0.0, %v4541
      %v4543 = vpop.f32.mrb[0].mxu0
      %v4544 = vadd.f32 0.0, %v4543
      %4545 = vmatprep.mubr.f32.mxu0 0.0
      %4546 = vmatmul.mubr.f32.gmra.mrb[0].mxu0 %v4047
      %v4547 = vpop.f32.mrb[0].mxu0
      %v4548 = vadd.f32 0.0, %v4547
      %v4549 = vpop.f32.mrb[0].mxu0
      %v4550 = vadd.f32 0.0, %v4549
      %4551 = vmatprep.mubr.f32.mxu0 0.0
      %4552 = vmatmul.mubr.f32.gmra.mrb[0].mxu0 %v4050
      %v4553 = vpop.f32.mrb[0].mxu0
      %v4554 = vadd.f32 0.0, %v4553
      %v4555 = vpop.f32.mrb[0].mxu0
      %v4556 = vadd.f32 0.0, %v4555
      %4557 = vmatprep.mubr.f32.mxu0 0.0
      %4558 = vmatmul.mubr.f32.gmra.mrb[0].mxu0 %v4053
      %v4559 = vpop.f32.mrb[0].mxu0
      %v4560 = vadd.f32 0.0, %v4559
      %v4561 = vpop.f32.mrb[0].mxu0
      %v4562 = vadd.f32 0.0, %v4561
      %4563 = vmatprep.mubr.f32.mxu0 0.0
      %4564 = vmatmul.mubr.f32.gmra.mrb[0].mxu0 %v4056
      %v4565 = vpop.f32.mrb[0].mxu0
      %v4566 = vadd.f32 0.0, %v4565
      %v4567 = vpop.f32.mrb[0].mxu0
      %v4568 = vadd.f32 0.0, %v4567
      %4569 = vmatprep.mubr.f32.mxu0 0.0
      %4570 = vmatmul.mubr.f32.gmra.mrb[0].mxu0 %v4059
      %v4571 = vpop.f32.mrb[0].mxu0
      %v4572 = vadd.f32 0.0, %v4571
      %v4573 = vpop.f32.mrb[0].mxu0
      %v4574 = vadd.f32 0.0, %v4573
      %4575 = vmatprep.mubr.f32.mxu0 0.0
      %4576 = vmatmul.mubr.f32.gmra.mrb[0].mxu0 %v4062
      %v4577 = vpop.f32.mrb[0].mxu0
      %v4578 = vadd.f32 0.0, %v4577
      %v4579 = vpop.f32.mrb[0].mxu0
      %v4580 = vadd.f32 0.0, %v4579
      %4581 = vmatprep.mubr.f32.mxu0 0.0
      %4582 = vmatmul.mubr.f32.gmra.mrb[0].mxu0 %v4065
      %v4583 = vpop.f32.mrb[0].mxu0
      %v4584 = vadd.f32 0.0, %v4583
      %v4585 = vpop.f32.mrb[0].mxu0
      %v4586 = vadd.f32 0.0, %v4585
      %4587 = vmatprep.mubr.f32.mxu0 0.0
      %4588 = vmatmul.mubr.f32.gmra.mrb[0].mxu0 %v4068
      %v4589 = vpop.f32.mrb[0].mxu0
      %v4590 = vadd.f32 0.0, %v4589
      %v4591 = vpop.f32.mrb[0].mxu0
      %v4592 = vadd.f32 0.0, %v4591
      %4593 = vmatprep.mubr.f32.mxu0 0.0
      %4594 = vmatmul.mubr.f32.gmra.mrb[0].mxu0 %v4071
      %v4595 = vpop.f32.mrb[0].mxu0
      %v4596 = vadd.f32 0.0, %v4595
      %v4597 = vpop.f32.mrb[0].mxu0
      %v4598 = vadd.f32 0.0, %v4597
      %4599 = vmatprep.mubr.f32.mxu0 0.0
      %4600 = vmatmul.mubr.f32.gmra.mrb[0].mxu0 %v4074
      %v4601 = vpop.f32.mrb[0].mxu0
      %v4602 = vadd.f32 0.0, %v4601
      %v4603 = vpop.f32.mrb[0].mxu0
      %v4604 = vadd.f32 0.0, %v4603
      %4605 = vmatprep.mubr.f32.mxu0 0.0
      %4606 = vmatmul.mubr.f32.gmra.mrb[0].mxu0 %v4077
      %v4607 = vpop.f32.mrb[0].mxu0
      %v4608 = vadd.f32 0.0, %v4607
      %v4609 = vpop.f32.mrb[0].mxu0
      %v4610 = vadd.f32 0.0, %v4609
      %4611 = vmatprep.mubr.f32.mxu0 0.0
      %4612 = vmatmul.mubr.f32.gmra.mrb[0].mxu0 %v4080
      %v4613 = vpop.f32.mrb[0].mxu0
      %v4614 = vadd.f32 0.0, %v4613
      %v4615 = vpop.f32.mrb[0].mxu0
      %v4616 = vadd.f32 0.0, %v4615
      %4617 = vmatprep.mubr.f32.mxu0 0.0
      %4618 = vmatmul.mubr.f32.gmra.mrb[0].mxu0 %v4083
      %v4619 = vpop.f32.mrb[0].mxu0
      %v4620 = vadd.f32 0.0, %v4619
      %v4621 = vpop.f32.mrb[0].mxu0
      %v4622 = vadd.f32 0.0, %v4621
      %4623 = vmatprep.mubr.f32.mxu0 0.0
      %4624 = vmatmul.mubr.f32.gmra.mrb[0].mxu0 %v4086
      %v4625 = vpop.f32.mrb[0].mxu0
      %v4626 = vadd.f32 0.0, %v4625
      %v4627 = vpop.f32.mrb[0].mxu0
      %v4628 = vadd.f32 0.0, %v4627
      %4629 = vmatprep.mubr.f32.mxu0 0.0
      %4630 = vmatmul.mubr.f32.gmra.mrb[0].mxu0 %v4089
      %v4631 = vpop.f32.mrb[0].mxu0
      %v4632 = vadd.f32 0.0, %v4631
      %v4633 = vpop.f32.mrb[0].mxu0
      %v4634 = vadd.f32 0.0, %v4633
      %4635 = vmatprep.mubr.f32.mxu0 0.0
      %4636 = vmatmul.mubr.f32.gmra.mrb[0].mxu0 %v4092
      %v4637 = vpop.f32.mrb[0].mxu0
      %v4638 = vadd.f32 0.0, %v4637
      %v4639 = vpop.f32.mrb[0].mxu0
      %v4640 = vadd.f32 0.0, %v4639
      %4641 = vmatprep.mubr.f32.mxu0 0.0
      %4642 = vmatmul.mubr.f32.gmra.mrb[0].mxu0 %v4095
      %v4643 = vpop.f32.mrb[0].mxu0
      %v4644 = vadd.f32 0.0, %v4643
      %v4645 = vpop.f32.mrb[0].mxu0
      %v4646 = vadd.f32 0.0, %v4645
      %4647 = vmatprep.mubr.f32.mxu0 0.0
      %4648 = vmatmul.mubr.f32.gmra.mrb[0].mxu0 %v4098
      %v4649 = vpop.f32.mrb[0].mxu0
      %v4650 = vadd.f32 0.0, %v4649
      %v4651 = vpop.f32.mrb[0].mxu0
      %v4652 = vadd.f32 0.0, %v4651
      %4653 = vmatprep.mubr.f32.mxu0 0.0
      %4654 = vmatmul.mubr.f32.gmra.mrb[0].mxu0 %v4101
      %v4655 = vpop.f32.mrb[0].mxu0
      %v4656 = vadd.f32 0.0, %v4655
      %v4657 = vpop.f32.mrb[0].mxu0
      %v4658 = vadd.f32 0.0, %v4657
      %4659 = vmatprep.mubr.f32.mxu0 0.0
      %4660 = vmatmul.mubr.f32.gmra.mrb[0].mxu0 %v4104
      %v4661 = vpop.f32.mrb[0].mxu0
      %v4662 = vadd.f32 0.0, %v4661
      %v4663 = vpop.f32.mrb[0].mxu0
      %v4664 = vadd.f32 0.0, %v4663
      %4665 = vmatprep.mubr.f32.mxu0 0.0
      %4666 = vmatmul.mubr.f32.gmra.mrb[0].mxu0 %v4107
      %v4667 = vpop.f32.mrb[0].mxu0
      %v4668 = vadd.f32 0.0, %v4667
      %v4669 = vpop.f32.mrb[0].mxu0
      %v4670 = vadd.f32 0.0, %v4669
      %4671 = vmatprep.mubr.f32.mxu0 0.0
      %4672 = vmatmul.mubr.f32.gmra.mrb[0].mxu0 %v4110
      %v4673 = vpop.f32.mrb[0].mxu0
      %v4674 = vadd.f32 0.0, %v4673
      %v4675 = vpop.f32.mrb[0].mxu0
      %v4676 = vadd.f32 0.0, %v4675
      %4677 = vmatprep.mubr.f32.mxu0 0.0
      %4678 = vmatmul.mubr.f32.gmra.mrb[0].mxu0 %v4113
      %v4679 = vpop.f32.mrb[0].mxu0
      %v4680 = vadd.f32 0.0, %v4679
      %v4681 = vpop.f32.mrb[0].mxu0
      %v4682 = vadd.f32 0.0, %v4681
      %4683 = vmatprep.mubr.f32.mxu0 0.0
      %4684 = vmatmul.mubr.f32.gmra.mrb[0].mxu0 %v4116
      %v4685 = vpop.f32.mrb[0].mxu0
      %v4686 = vadd.f32 0.0, %v4685
      %v4687 = vpop.f32.mrb[0].mxu0
      %v4688 = vadd.f32 0.0, %v4687
      %4689 = vmatprep.mubr.f32.mxu0 0.0
      %4690 = vmatmul.mubr.f32.gmra.mrb[0].mxu0 %v4119
      %v4691 = vpop.f32.mrb[0].mxu0
      %v4692 = vadd.f32 0.0, %v4691
      %v4693 = vpop.f32.mrb[0].mxu0
      %v4694 = vadd.f32 0.0, %v4693
      %4695 = vmatprep.mubr.f32.mxu0 0.0
      %4696 = vmatmul.mubr.f32.gmra.mrb[0].mxu0 %v4122
      %v4697 = vpop.f32.mrb[0].mxu0
      %v4698 = vadd.f32 0.0, %v4697
      %v4699 = vpop.f32.mrb[0].mxu0
      %v4700 = vadd.f32 0.0, %v4699
      %4701 = vmatprep.mubr.f32.mxu0 0.0
      %4702 = vmatmul.mubr.f32.gmra.mrb[0].mxu0 %v4125
      %v4703 = vpop.f32.mrb[0].mxu0
      %v4704 = vadd.f32 0.0, %v4703
      %v4705 = vpop.f32.mrb[0].mxu0
      %v4706 = vadd.f32 0.0, %v4705
      %4707 = vmatprep.mubr.f32.mxu0 0.0
      %4708 = vmatmul.mubr.f32.gmra.mrb[0].mxu0 %v4128
      %v4709 = vpop.f32.mrb[0].mxu0
      %v4710 = vadd.f32 0.0, %v4709
      %v4711 = vpop.f32.mrb[0].mxu0
      %v4712 = vadd.f32 0.0, %v4711
      %4713 = vmatprep.mubr.f32.mxu0 0.0
      %4714 = vmatmul.mubr.f32.gmra.mrb[0].mxu0 %v4131
      %v4715 = vpop.f32.mrb[0].mxu0
      %v4716 = vadd.f32 0.0, %v4715
      %v4717 = vpop.f32.mrb[0].mxu0
      %v4718 = vadd.f32 0.0, %v4717
      %4719 = vmatprep.mubr.f32.mxu0 0.0
      %4720 = vmatmul.mubr.f32.gmra.mrb[0].mxu0 %v4134
      %v4721 = vpop.f32.mrb[0].mxu0
      %v4722 = vadd.f32 0.0, %v4721
      %v4723 = vpop.f32.mrb[0].mxu0
      %v4724 = vadd.f32 0.0, %v4723
      %4725 = vmatprep.mubr.f32.mxu0 0.0
      %4726 = vmatmul.mubr.f32.gmra.mrb[0].mxu0 %v4137
      %v4727 = vpop.f32.mrb[0].mxu0
      %v4728 = vadd.f32 0.0, %v4727
      %v4729 = vpop.f32.mrb[0].mxu0
      %v4730 = vadd.f32 0.0, %v4729
      %4731 = vmatprep.mubr.f32.mxu0 0.0
      %4732 = vmatmul.mubr.f32.gmra.mrb[0].mxu0 %v4140
      %v4733 = vpop.f32.mrb[0].mxu0
      %v4734 = vadd.f32 0.0, %v4733
      %v4735 = vpop.f32.mrb[0].mxu0
      %v4736 = vadd.f32 0.0, %v4735
      %4737 = vmatprep.mubr.f32.mxu0 0.0
      %4738 = vmatmul.mubr.f32.gmra.mrb[0].mxu0 %v4143
      %v4739 = vpop.f32.mrb[0].mxu0
      %v4740 = vadd.f32 0.0, %v4739
      %v4741 = vpop.f32.mrb[0].mxu0
      %v4742 = vadd.f32 0.0, %v4741
      %4743 = vmatprep.mubr.f32.mxu0 0.0
      %4744 = vmatmul.mubr.f32.gmra.mrb[0].mxu0 %v4146
      %v4745 = vpop.f32.mrb[0].mxu0
      %v4746 = vadd.f32 0.0, %v4745
      %v4747 = vpop.f32.mrb[0].mxu0
      %v4748 = vadd.f32 0.0, %v4747
      %4749 = vmatprep.mubr.f32.mxu0 0.0
      %4750 = vmatmul.mubr.f32.gmra.mrb[0].mxu0 %v4149
      %v4751 = vpop.f32.mrb[0].mxu0
      %v4752 = vadd.f32 0.0, %v4751
      %v4753 = vpop.f32.mrb[0].mxu0
      %v4754 = vadd.f32 0.0, %v4753
      %4755 = vmatprep.mubr.f32.mxu0 0.0
      %4756 = vmatmul.mubr.f32.gmra.mrb[0].mxu0 %v4152
      %v4757 = vpop.f32.mrb[0].mxu0
      %v4758 = vadd.f32 0.0, %v4757
      %v4759 = vpop.f32.mrb[0].mxu0
      %v4760 = vadd.f32 0.0, %v4759
      %4761 = vmatprep.mubr.f32.mxu0 0.0
      %4762 = vmatmul.mubr.f32.gmra.mrb[0].mxu0 %v4155
      %v4763 = vpop.f32.mrb[0].mxu0
      %v4764 = vadd.f32 0.0, %v4763
      %v4765 = vpop.f32.mrb[0].mxu0
      %v4766 = vadd.f32 0.0, %v4765
      %4767 = vmatprep.mubr.f32.mxu0 0.0
      %4768 = vmatmul.mubr.f32.gmra.mrb[0].mxu0 %v4158
      %v4769 = vpop.f32.mrb[0].mxu0
      %v4770 = vadd.f32 0.0, %v4769
      %v4771 = vpop.f32.mrb[0].mxu0
      %v4772 = vadd.f32 0.0, %v4771
      %4773 = vmatprep.mubr.f32.mxu0 0.0
      %4774 = vmatmul.mubr.f32.gmra.mrb[0].mxu0 %v4161
      %v4775 = vpop.f32.mrb[0].mxu0
      %v4776 = vadd.f32 0.0, %v4775
      %v4777 = vpop.f32.mrb[0].mxu0
      %v4778 = vadd.f32 0.0, %v4777
      %4779 = vmatprep.mubr.f32.mxu0 0.0
      %4780 = vmatmul.mubr.f32.gmra.mrb[0].mxu0 %v4164
      %v4781 = vpop.f32.mrb[0].mxu0
      %v4782 = vadd.f32 0.0, %v4781
      %v4783 = vpop.f32.mrb[0].mxu0
      %v4784 = vadd.f32 0.0, %v4783
      %4785 = vmatprep.mubr.f32.mxu0 0.0
      %4786 = vmatmul.mubr.f32.gmra.mrb[0].mxu0 %v4167
      %v4787 = vpop.f32.mrb[0].mxu0
      %v4788 = vadd.f32 0.0, %v4787
      %v4789 = vpop.f32.mrb[0].mxu0
      %v4790 = vadd.f32 0.0, %v4789
      %4791 = vmatprep.mubr.f32.mxu0 0.0
      %4792 = vmatmul.mubr.f32.gmra.mrb[0].mxu0 %v4170
      %v4793 = vpop.f32.mrb[0].mxu0
      %v4794 = vadd.f32 0.0, %v4793
      %v4795 = vpop.f32.mrb[0].mxu0
      %v4796 = vadd.f32 0.0, %v4795
      %4797 = vmatprep.mubr.f32.mxu0 0.0
      %4798 = vmatmul.mubr.f32.gmra.mrb[0].mxu0 %v4173
      %v4799 = vpop.f32.mrb[0].mxu0
      %v4800 = vadd.f32 0.0, %v4799
      %v4801 = vpop.f32.mrb[0].mxu0
      %v4802 = vadd.f32 0.0, %v4801
      %4803 = vmatprep.mubr.f32.mxu0 0.0
      %4804 = vmatmul.mubr.f32.gmra.mrb[0].mxu0 %v4176
      %v4805 = vpop.f32.mrb[0].mxu0
      %v4806 = vadd.f32 0.0, %v4805
      %v4807 = vpop.f32.mrb[0].mxu0
      %v4808 = vadd.f32 0.0, %v4807
      %4809 = vmatprep.mubr.f32.mxu0 0.0
      %4810 = vmatmul.mubr.f32.gmra.mrb[0].mxu0 %v4179
      %v4811 = vpop.f32.mrb[0].mxu0
      %v4812 = vadd.f32 0.0, %v4811
      %v4813 = vpop.f32.mrb[0].mxu0
      %v4814 = vadd.f32 0.0, %v4813
      %4815 = vmatprep.mubr.f32.mxu0 0.0
      %4816 = vmatmul.mubr.f32.gmra.mrb[0].mxu0 %v4182
      %v4817 = vpop.f32.mrb[0].mxu0
      %v4818 = vadd.f32 0.0, %v4817
      %v4819 = vpop.f32.mrb[0].mxu0
      %v4820 = vadd.f32 0.0, %v4819
      %4821 = vmatprep.mubr.f32.mxu0 0.0
      %4822 = vmatmul.mubr.f32.gmra.mrb[0].mxu0 %v4185
      %v4823 = vpop.f32.mrb[0].mxu0
      %v4824 = vadd.f32 0.0, %v4823
      %v4825 = vpop.f32.mrb[0].mxu0
      %v4826 = vadd.f32 0.0, %v4825
      %4827 = vmatprep.mubr.f32.mxu0 0.0
      %4828 = vmatmul.mubr.f32.gmra.mrb[0].mxu0 %v4188
      %v4829 = vpop.f32.mrb[0].mxu0
      %v4830 = vadd.f32 0.0, %v4829
      %v4831 = vpop.f32.mrb[0].mxu0
      %v4832 = vadd.f32 0.0, %v4831
      %4833 = vmatprep.mubr.f32.mxu0 0.0
      %4834 = vmatmul.mubr.f32.gmra.mrb[0].mxu0 %v4191
      %v4835 = vpop.f32.mrb[0].mxu0
      %v4836 = vadd.f32 0.0, %v4835
      %v4837 = vpop.f32.mrb[0].mxu0
      %v4838 = vadd.f32 0.0, %v4837
      %4839 = vmatprep.mubr.f32.mxu0 0.0
      %4840 = vmatmul.mubr.f32.gmra.mrb[0].mxu0 %v4194
      %v4841 = vpop.f32.mrb[0].mxu0
      %v4842 = vadd.f32 0.0, %v4841
      %v4843 = vpop.f32.mrb[0].mxu0
      %v4844 = vadd.f32 0.0, %v4843
      %4845 = vmatprep.mubr.f32.mxu0 0.0
      %4846 = vmatmul.mubr.f32.gmra.mrb[0].mxu0 %v4197
      %v4847 = vpop.f32.mrb[0].mxu0
      %v4848 = vadd.f32 0.0, %v4847
      %v4849 = vpop.f32.mrb[0].mxu0
      %v4850 = vadd.f32 0.0, %v4849
      %4851 = vmatprep.mubr.f32.mxu0 0.0
      %4852 = vmatmul.mubr.f32.gmra.mrb[0].mxu0 %v4200
      %v4853 = vpop.f32.mrb[0].mxu0
      %v4854 = vadd.f32 0.0, %v4853
      %v4855 = vpop.f32.mrb[0].mxu0
      %v4856 = vadd.f32 0.0, %v4855
      %4857 = vmatprep.mubr.f32.mxu0 0.0
      %4858 = vmatmul.mubr.f32.gmra.mrb[0].mxu0 %v4203
      %v4859 = vpop.f32.mrb[0].mxu0
      %v4860 = vadd.f32 0.0, %v4859
      %v4861 = vpop.f32.mrb[0].mxu0
      %v4862 = vadd.f32 0.0, %v4861
      %4863 = vmatprep.mubr.f32.mxu0 0.0
      %4864 = vmatmul.mubr.f32.gmra.mrb[0].mxu0 %v4206
      %v4865 = vpop.f32.mrb[0].mxu0
      %v4866 = vadd.f32 0.0, %v4865
      %v4867 = vpop.f32.mrb[0].mxu0
      %v4868 = vadd.f32 0.0, %v4867
      %4869 = vmatprep.mubr.f32.mxu0 0.0
      %4870 = vmatmul.mubr.f32.gmra.mrb[0].mxu0 %v4209
      %v4871 = vpop.f32.mrb[0].mxu0
      %v4872 = vadd.f32 0.0, %v4871
      %v4873 = vpop.f32.mrb[0].mxu0
      %v4874 = vadd.f32 0.0, %v4873
      %4875 = vmatprep.mubr.f32.mxu0 0.0
      %4876 = vmatmul.mubr.f32.gmra.mrb[0].mxu0 %v4212
      %v4877 = vpop.f32.mrb[0].mxu0
      %v4878 = vadd.f32 0.0, %v4877
      %v4879 = vpop.f32.mrb[0].mxu0
      %v4880 = vadd.f32 0.0, %v4879
      %4881 = vmatprep.mubr.f32.mxu0 0.0
      %4882 = vmatmul.mubr.f32.gmra.mrb[0].mxu0 %v4215
      %v4883 = vpop.f32.mrb[0].mxu0
      %v4884 = vadd.f32 0.0, %v4883
      %v4885 = vpop.f32.mrb[0].mxu0
      %v4886 = vadd.f32 0.0, %v4885
      %4887 = vmatprep.mubr.f32.mxu0 0.0
      %4888 = vmatmul.mubr.f32.gmra.mrb[0].mxu0 %v4218
      %v4889 = vpop.f32.mrb[0].mxu0
      %v4890 = vadd.f32 0.0, %v4889
      %v4891 = vpop.f32.mrb[0].mxu0
      %v4892 = vadd.f32 0.0, %v4891
      %4893 = vmatprep.mubr.f32.mxu0 0.0
      %4894 = vmatmul.mubr.f32.gmra.mrb[0].mxu0 %v4221
      %v4895 = vpop.f32.mrb[0].mxu0
      %v4896 = vadd.f32 0.0, %v4895
      %v4897 = vpop.f32.mrb[0].mxu0
      %v4898 = vadd.f32 0.0, %v4897
      %4899 = vmatprep.mubr.f32.mxu0 0.0
      %4900 = vmatmul.mubr.f32.gmra.mrb[0].mxu0 %v4224
      %v4901 = vpop.f32.mrb[0].mxu0
      %v4902 = vadd.f32 0.0, %v4901
      %v4903 = vpop.f32.mrb[0].mxu0
      %v4904 = vadd.f32 0.0, %v4903
      %4905 = vmatprep.mubr.f32.mxu0 0.0
      %4906 = vmatmul.mubr.f32.gmra.mrb[0].mxu0 %v4227
      %v4907 = vpop.f32.mrb[0].mxu0
      %v4908 = vadd.f32 0.0, %v4907
      %v4909 = vpop.f32.mrb[0].mxu0
      %v4910 = vadd.f32 0.0, %v4909
      %4911 = vmatprep.mubr.f32.mxu0 0.0
      %4912 = vmatmul.mubr.f32.gmra.mrb[0].mxu0 %v4230
      %v4913 = vpop.f32.mrb[0].mxu0
      %v4914 = vadd.f32 0.0, %v4913
      %v4915 = vpop.f32.mrb[0].mxu0
      %v4916 = vadd.f32 0.0, %v4915
      %4917 = vmatprep.mubr.f32.mxu0 0.0
      %4918 = vmatmul.mubr.f32.gmra.mrb[0].mxu0 %v4233
      %v4919 = vpop.f32.mrb[0].mxu0
      %v4920 = vadd.f32 0.0, %v4919
      %v4921 = vpop.f32.mrb[0].mxu0
      %v4922 = vadd.f32 0.0, %v4921
      %4923 = vmatprep.mubr.f32.mxu0 0.0
      %4924 = vmatmul.mubr.f32.gmra.mrb[0].mxu0 %v4236
      %v4925 = vpop.f32.mrb[0].mxu0
      %v4926 = vadd.f32 0.0, %v4925
      %v4927 = vpop.f32.mrb[0].mxu0
      %v4928 = vadd.f32 0.0, %v4927
      %4929 = vmatprep.mubr.f32.mxu0 0.0
      %4930 = vmatmul.mubr.f32.gmra.mrb[0].mxu0 %v4239
      %v4931 = vpop.f32.mrb[0].mxu0
      %v4932 = vadd.f32 0.0, %v4931
      %v4933 = vpop.f32.mrb[0].mxu0
      %v4934 = vadd.f32 0.0, %v4933
      %4935 = vmatprep.mubr.f32.mxu0 0.0
      %4936 = vmatmul.mubr.f32.gmra.mrb[0].mxu0 %v4242
      %v4937 = vpop.f32.mrb[0].mxu0
      %v4938 = vadd.f32 0.0, %v4937
      %v4939 = vpop.f32.mrb[0].mxu0
      %v4940 = vadd.f32 0.0, %v4939
      %4941 = vmatprep.mubr.f32.mxu0 0.0
      %4942 = vmatmul.mubr.f32.gmra.mrb[0].mxu0 %v4245
      %v4943 = vpop.f32.mrb[0].mxu0
      %v4944 = vadd.f32 0.0, %v4943
      %v4945 = vpop.f32.mrb[0].mxu0
      %v4946 = vadd.f32 0.0, %v4945
      %4947 = vmatprep.mubr.f32.mxu0 0.0
      %4948 = vmatmul.mubr.f32.gmra.mrb[0].mxu0 %v4248
      %v4949 = vpop.f32.mrb[0].mxu0
      %v4950 = vadd.f32 0.0, %v4949
      %v4951 = vpop.f32.mrb[0].mxu0
      %v4952 = vadd.f32 0.0, %v4951
      %4953 = vmatprep.mubr.f32.mxu0 0.0
      %4954 = vmatmul.mubr.f32.gmra.mrb[0].mxu0 %v4251
      %v4955 = vpop.f32.mrb[0].mxu0
      %v4956 = vadd.f32 0.0, %v4955
      %v4957 = vpop.f32.mrb[0].mxu0
      %v4958 = vadd.f32 0.0, %v4957
      %4959 = vmatprep.mubr.f32.mxu0 0.0
      %4960 = vmatmul.mubr.f32.gmra.mrb[0].mxu0 %v4254
      %v4961 = vpop.f32.mrb[0].mxu0
      %v4962 = vadd.f32 0.0, %v4961
      %v4963 = vpop.f32.mrb[0].mxu0
      %v4964 = vadd.f32 0.0, %v4963
      %4965 = vmatprep.mubr.f32.mxu0 0.0
      %4966 = vmatmul.mubr.f32.gmra.mrb[0].mxu0 %v4257
      %v4967 = vpop.f32.mrb[0].mxu0
      %v4968 = vadd.f32 0.0, %v4967
      %v4969 = vpop.f32.mrb[0].mxu0
      %v4970 = vadd.f32 0.0, %v4969
      %4971 = vmatprep.mubr.f32.mxu0 0.0
      %4972 = vmatmul.mubr.f32.gmra.mrb[0].mxu0 %v4260
      %v4973 = vpop.f32.mrb[0].mxu0
      %v4974 = vadd.f32 0.0, %v4973
      %v4975 = vpop.f32.mrb[0].mxu0
      %v4976 = vadd.f32 0.0, %v4975
      %4977 = vmatprep.mubr.f32.mxu0 0.0
      %4978 = vmatmul.mubr.f32.gmra.mrb[0].mxu0 %v4263
      %v4979 = vpop.f32.mrb[0].mxu0
      %v4980 = vadd.f32 0.0, %v4979
      %v4981 = vpop.f32.mrb[0].mxu0
      %v4982 = vadd.f32 0.0, %v4981
      %4983 = vmatprep.mubr.f32.mxu0 0.0
      %4984 = vmatmul.mubr.f32.gmra.mrb[0].mxu0 %v4266
      %v4985 = vpop.f32.mrb[0].mxu0
      %v4986 = vadd.f32 0.0, %v4985
      %v4987 = vpop.f32.mrb[0].mxu0
      %v4988 = vadd.f32 0.0, %v4987
      %4989 = vmatprep.mubr.f32.mxu0 0.0
      %4990 = vmatmul.mubr.f32.gmra.mrb[0].mxu0 %v4269
      %v4991 = vpop.f32.mrb[0].mxu0
      %v4992 = vadd.f32 0.0, %v4991
      %v4993 = vpop.f32.mrb[0].mxu0
      %v4994 = vadd.f32 0.0, %v4993
      %4995 = vmatprep.mubr.f32.mxu0 0.0
      %4996 = vmatmul.mubr.f32.gmra.mrb[0].mxu0 %v4272
      %v4997 = vpop.f32.mrb[0].mxu0
      %v4998 = vadd.f32 0.0, %v4997
      %v4999 = vpop.f32.mrb[0].mxu0
      %v5000 = vadd.f32 0.0, %v4999
      %5001 = vmatprep.mubr.f32.mxu0 0.0
      %5002 = vmatmul.mubr.f32.gmra.mrb[0].mxu0 %v4275
      %v5003 = vpop.f32.mrb[0].mxu0
      %v5004 = vadd.f32 0.0, %v5003
      %v5005 = vpop.f32.mrb[0].mxu0
      %v5006 = vadd.f32 0.0, %v5005
      %5007 = vmatprep.mubr.f32.mxu0 0.0
      %5008 = vmatmul.mubr.f32.gmra.mrb[0].mxu0 %v4278
      %v5009 = vpop.f32.mrb[0].mxu0
      %v5010 = vadd.f32 0.0, %v5009
      %v5011 = vpop.f32.mrb[0].mxu0
      %v5012 = vadd.f32 0.0, %v5011
      %5013 = vmatprep.mubr.f32.mxu0 0.0
      %5014 = vmatmul.mubr.f32.gmra.mrb[0].mxu0 %v4281
      %v5015 = vpop.f32.mrb[0].mxu0
      %v5016 = vadd.f32 0.0, %v5015
      %v5017 = vpop.f32.mrb[0].mxu0
      %v5018 = vadd.f32 0.0, %v5017
      %5019 = vdwg.mxu0
      %v5020 = vadd.f32 %v3586, %v4350
      %v5021 = vadd.f32 %v3587, %v4352
      %v5022 = vadd.f32 %v3588, %v4356
      %v5023 = vadd.f32 %v3589, %v4358
      %v5024 = vadd.f32 %v3590, %v4362
      %v5025 = vadd.f32 %v3591, %v4364
      %v5026 = vadd.f32 %v3592, %v4368
      %v5027 = vadd.f32 %v3593, %v4370
      %v5028 = vadd.f32 %v3594, %v4374
      %v5029 = vadd.f32 %v3595, %v4376
      %v5030 = vadd.f32 %v3596, %v4380
      %v5031 = vadd.f32 %v3597, %v4382
      %v5032 = vadd.f32 %v3598, %v4386
      %v5033 = vadd.f32 %v3599, %v4388
      %v5034 = vadd.f32 %v3600, %v4392
      %v5035 = vadd.f32 %v3601, %v4394
      %v5036 = vadd.f32 %v3602, %v4398
      %v5037 = vadd.f32 %v3603, %v4400
      %v5038 = vadd.f32 %v3604, %v4404
      %v5039 = vadd.f32 %v3605, %v4406
      %v5040 = vadd.f32 %v3606, %v4410
      %v5041 = vadd.f32 %v3607, %v4412
      %v5042 = vadd.f32 %v3608, %v4416
      %v5043 = vadd.f32 %v3609, %v4418
      %v5044 = vadd.f32 %v3610, %v4422
      %v5045 = vadd.f32 %v3611, %v4424
      %v5046 = vadd.f32 %v3612, %v4428
      %v5047 = vadd.f32 %v3613, %v4430
      %v5048 = vadd.f32 %v3614, %v4434
      %v5049 = vadd.f32 %v3615, %v4436
      %v5050 = vadd.f32 %v3616, %v4440
      %v5051 = vadd.f32 %v3617, %v4442
      %v5052 = vadd.f32 %v3618, %v4446
      %v5053 = vadd.f32 %v3619, %v4448
      %v5054 = vadd.f32 %v3620, %v4452
      %v5055 = vadd.f32 %v3621, %v4454
      %v5056 = vadd.f32 %v3622, %v4458
      %v5057 = vadd.f32 %v3623, %v4460
      %v5058 = vadd.f32 %v3624, %v4464
      %v5059 = vadd.f32 %v3625, %v4466
      %v5060 = vadd.f32 %v3626, %v4470
      %v5061 = vadd.f32 %v3627, %v4472
      %v5062 = vadd.f32 %v3628, %v4476
      %v5063 = vadd.f32 %v3629, %v4478
      %v5064 = vadd.f32 %v3630, %v4482
      %v5065 = vadd.f32 %v3631, %v4484
      %v5066 = vadd.f32 %v3632, %v4488
      %v5067 = vadd.f32 %v3633, %v4490
      %v5068 = vadd.f32 %v3634, %v4494
      %v5069 = vadd.f32 %v3635, %v4496
      %v5070 = vadd.f32 %v3636, %v4500
      %v5071 = vadd.f32 %v3637, %v4502
      %v5072 = vadd.f32 %v3638, %v4506
      %v5073 = vadd.f32 %v3639, %v4508
      %v5074 = vadd.f32 %v3640, %v4512
      %v5075 = vadd.f32 %v3641, %v4514
      %v5076 = vadd.f32 %v3642, %v4518
      %v5077 = vadd.f32 %v3643, %v4520
      %v5078 = vadd.f32 %v3644, %v4524
      %v5079 = vadd.f32 %v3645, %v4526
      %v5080 = vadd.f32 %v3646, %v4530
      %v5081 = vadd.f32 %v3647, %v4532
      %v5082 = vadd.f32 %v3648, %v4536
      %v5083 = vadd.f32 %v3649, %v4538
      %v5084 = vadd.f32 %v3650, %v4542
      %v5085 = vadd.f32 %v3651, %v4544
      %v5086 = vadd.f32 %v3652, %v4548
      %v5087 = vadd.f32 %v3653, %v4550
      %v5088 = vadd.f32 %v3654, %v4554
      %v5089 = vadd.f32 %v3655, %v4556
      %v5090 = vadd.f32 %v3656, %v4560
      %v5091 = vadd.f32 %v3657, %v4562
      %v5092 = vadd.f32 %v3658, %v4566
      %v5093 = vadd.f32 %v3659, %v4568
      %v5094 = vadd.f32 %v3660, %v4572
      %v5095 = vadd.f32 %v3661, %v4574
      %v5096 = vadd.f32 %v3662, %v4578
      %v5097 = vadd.f32 %v3663, %v4580
      %v5098 = vadd.f32 %v3664, %v4584
      %v5099 = vadd.f32 %v3665, %v4586
      %v5100 = vadd.f32 %v3666, %v4590
      %v5101 = vadd.f32 %v3667, %v4592
      %v5102 = vadd.f32 %v3668, %v4596
      %v5103 = vadd.f32 %v3669, %v4598
      %v5104 = vadd.f32 %v3670, %v4602
      %v5105 = vadd.f32 %v3671, %v4604
      %v5106 = vadd.f32 %v3672, %v4608
      %v5107 = vadd.f32 %v3673, %v4610
      %v5108 = vadd.f32 %v3674, %v4614
      %v5109 = vadd.f32 %v3675, %v4616
      %v5110 = vadd.f32 %v3676, %v4620
      %v5111 = vadd.f32 %v3677, %v4622
      %v5112 = vadd.f32 %v3678, %v4626
      %v5113 = vadd.f32 %v3679, %v4628
      %v5114 = vadd.f32 %v3680, %v4632
      %v5115 = vadd.f32 %v3681, %v4634
      %v5116 = vadd.f32 %v3682, %v4638
      %v5117 = vadd.f32 %v3683, %v4640
      %v5118 = vadd.f32 %v3684, %v4644
      %v5119 = vadd.f32 %v3685, %v4646
      %v5120 = vadd.f32 %v3686, %v4650
      %v5121 = vadd.f32 %v3687, %v4652
      %v5122 = vadd.f32 %v3688, %v4656
      %v5123 = vadd.f32 %v3689, %v4658
      %v5124 = vadd.f32 %v3690, %v4662
      %v5125 = vadd.f32 %v3691, %v4664
      %v5126 = vadd.f32 %v3692, %v4668
      %v5127 = vadd.f32 %v3693, %v4670
      %v5128 = vadd.f32 %v3694, %v4674
      %v5129 = vadd.f32 %v3695, %v4676
      %v5130 = vadd.f32 %v3696, %v4680
      %v5131 = vadd.f32 %v3697, %v4682
      %v5132 = vadd.f32 %v3698, %v4686
      %v5133 = vadd.f32 %v3699, %v4688
      %v5134 = vadd.f32 %v3700, %v4692
      %v5135 = vadd.f32 %v3701, %v4694
      %v5136 = vadd.f32 %v3702, %v4698
      %v5137 = vadd.f32 %v3703, %v4700
      %v5138 = vadd.f32 %v3704, %v4704
      %v5139 = vadd.f32 %v3705, %v4706
      %v5140 = vadd.f32 %v3706, %v4710
      %v5141 = vadd.f32 %v3707, %v4712
      %v5142 = vadd.f32 %v3708, %v4716
      %v5143 = vadd.f32 %v3709, %v4718
      %v5144 = vadd.f32 %v3710, %v4722
      %v5145 = vadd.f32 %v3711, %v4724
      %v5146 = vadd.f32 %v3712, %v4728
      %v5147 = vadd.f32 %v3713, %v4730
      %v5148 = vadd.f32 %v3714, %v4734
      %v5149 = vadd.f32 %v3715, %v4736
      %v5150 = vadd.f32 %v3716, %v4740
      %v5151 = vadd.f32 %v3717, %v4742
      %v5152 = vadd.f32 %v3718, %v4746
      %v5153 = vadd.f32 %v3719, %v4748
      %v5154 = vadd.f32 %v3720, %v4752
      %v5155 = vadd.f32 %v3721, %v4754
      %v5156 = vadd.f32 %v3722, %v4758
      %v5157 = vadd.f32 %v3723, %v4760
      %v5158 = vadd.f32 %v3724, %v4764
      %v5159 = vadd.f32 %v3725, %v4766
      %v5160 = vadd.f32 %v3726, %v4770
      %v5161 = vadd.f32 %v3727, %v4772
      %v5162 = vadd.f32 %v3728, %v4776
      %v5163 = vadd.f32 %v3729, %v4778
      %v5164 = vadd.f32 %v3730, %v4782
      %v5165 = vadd.f32 %v3731, %v4784
      %v5166 = vadd.f32 %v3732, %v4788
      %v5167 = vadd.f32 %v3733, %v4790
      %v5168 = vadd.f32 %v3734, %v4794
      %v5169 = vadd.f32 %v3735, %v4796
      %v5170 = vadd.f32 %v3736, %v4800
      %v5171 = vadd.f32 %v3737, %v4802
      %v5172 = vadd.f32 %v3738, %v4806
      %v5173 = vadd.f32 %v3739, %v4808
      %v5174 = vadd.f32 %v3740, %v4812
      %v5175 = vadd.f32 %v3741, %v4814
      %v5176 = vadd.f32 %v3742, %v4818
      %v5177 = vadd.f32 %v3743, %v4820
      %v5178 = vadd.f32 %v3744, %v4824
      %v5179 = vadd.f32 %v3745, %v4826
      %v5180 = vadd.f32 %v3746, %v4830
      %v5181 = vadd.f32 %v3747, %v4832
      %v5182 = vadd.f32 %v3748, %v4836
      %v5183 = vadd.f32 %v3749, %v4838
      %v5184 = vadd.f32 %v3750, %v4842
      %v5185 = vadd.f32 %v3751, %v4844
      %v5186 = vadd.f32 %v3752, %v4848
      %v5187 = vadd.f32 %v3753, %v4850
      %v5188 = vadd.f32 %v3754, %v4854
      %v5189 = vadd.f32 %v3755, %v4856
      %v5190 = vadd.f32 %v3756, %v4860
      %v5191 = vadd.f32 %v3757, %v4862
      %v5192 = vadd.f32 %v3758, %v4866
      %v5193 = vadd.f32 %v3759, %v4868
      %v5194 = vadd.f32 %v3760, %v4872
      %v5195 = vadd.f32 %v3761, %v4874
      %v5196 = vadd.f32 %v3762, %v4878
      %v5197 = vadd.f32 %v3763, %v4880
      %v5198 = vadd.f32 %v3764, %v4884
      %v5199 = vadd.f32 %v3765, %v4886
      %v5200 = vadd.f32 %v3766, %v4890
      %v5201 = vadd.f32 %v3767, %v4892
      %v5202 = vadd.f32 %v3768, %v4896
      %v5203 = vadd.f32 %v3769, %v4898
      %v5204 = vadd.f32 %v3770, %v4902
      %v5205 = vadd.f32 %v3771, %v4904
      %v5206 = vadd.f32 %v3772, %v4908
      %v5207 = vadd.f32 %v3773, %v4910
      %v5208 = vadd.f32 %v3774, %v4914
      %v5209 = vadd.f32 %v3775, %v4916
      %v5210 = vadd.f32 %v3776, %v4920
      %v5211 = vadd.f32 %v3777, %v4922
      %v5212 = vadd.f32 %v3778, %v4926
      %v5213 = vadd.f32 %v3779, %v4928
      %v5214 = vadd.f32 %v3780, %v4932
      %v5215 = vadd.f32 %v3781, %v4934
      %v5216 = vadd.f32 %v3782, %v4938
      %v5217 = vadd.f32 %v3783, %v4940
      %v5218 = vadd.f32 %v3784, %v4944
      %v5219 = vadd.f32 %v3785, %v4946
      %v5220 = vadd.f32 %v3786, %v4950
      %v5221 = vadd.f32 %v3787, %v4952
      %v5222 = vadd.f32 %v3788, %v4956
      %v5223 = vadd.f32 %v3789, %v4958
      %v5224 = vadd.f32 %v3790, %v4962
      %v5225 = vadd.f32 %v3791, %v4964
      %v5226 = vadd.f32 %v3792, %v4968
      %v5227 = vadd.f32 %v3793, %v4970
      %v5228 = vadd.f32 %v3794, %v4974
      %v5229 = vadd.f32 %v3795, %v4976
      %v5230 = vadd.f32 %v3796, %v4980
      %v5231 = vadd.f32 %v3797, %v4982
      %v5232 = vadd.f32 %v3798, %v4986
      %v5233 = vadd.f32 %v3799, %v4988
      %v5234 = vadd.f32 %v3800, %v4992
      %v5235 = vadd.f32 %v3801, %v4994
      %v5236 = vadd.f32 %v3802, %v4998
      %v5237 = vadd.f32 %v3803, %v5000
      %v5238 = vadd.f32 %v3804, %v5004
      %v5239 = vadd.f32 %v3805, %v5006
      %v5240 = vadd.f32 %v3806, %v5010
      %v5241 = vadd.f32 %v3807, %v5012
      %v5242 = vadd.f32 %v3808, %v5016
      %v5243 = vadd.f32 %v3809, %v5018
      %v5244 = vld [vmem:[%s381 + $0x80] sm:$0xff]
      %v5245 = vld [vmem:[%s381 + $0x88] sm:$0xff]
      %v5246 = vld [vmem:[%s381 + $0x90] sm:$0xff]
      %v5247 = vld [vmem:[%s381 + $0x98] sm:$0xff]
      %v5248 = vld [vmem:[%s381 + $0xa0] sm:$0xff]
      %v5249 = vld [vmem:[%s381 + $0xa8] sm:$0xff]
      %v5250 = vld [vmem:[%s381 + $0xb0] sm:$0xff]
      %v5251 = vld [vmem:[%s381 + $0xb8] sm:$0xff]
      %v5252 = vld [vmem:[%s381 + $0xc0] sm:$0xff]
      %v5253 = vld [vmem:[%s381 + $0xc8] sm:$0xff]
      %v5254 = vld [vmem:[%s381 + $0xd0] sm:$0xff]
      %v5255 = vld [vmem:[%s381 + $0xd8] sm:$0xff]
      %v5256 = vld [vmem:[%s381 + $0xe0] sm:$0xff]
      %v5257 = vld [vmem:[%s381 + $0xe8] sm:$0xff]
      %v5258 = vld [vmem:[%s381 + $0xf0] sm:$0xff]
      %v5259 = vld [vmem:[%s381 + $0xf8] sm:$0xff]
      %v5260 = vld [vmem:[%s381 + $0x100] sm:$0xff]
      %v5261 = vld [vmem:[%s381 + $0x108] sm:$0xff]
      %v5262 = vld [vmem:[%s381 + $0x110] sm:$0xff]
      %v5263 = vld [vmem:[%s381 + $0x118] sm:$0xff]
      %v5264 = vld [vmem:[%s381 + $0x120] sm:$0xff]
      %v5265 = vld [vmem:[%s381 + $0x128] sm:$0xff]
      %v5266 = vld [vmem:[%s381 + $0x130] sm:$0xff]
      %v5267 = vld [vmem:[%s381 + $0x138] sm:$0xff]
      %v5268 = vld [vmem:[%s381 + $0x140] sm:$0xff]
      %v5269 = vld [vmem:[%s381 + $0x148] sm:$0xff]
      %v5270 = vld [vmem:[%s381 + $0x150] sm:$0xff]
      %v5271 = vld [vmem:[%s381 + $0x158] sm:$0xff]
      %v5272 = vld [vmem:[%s381 + $0x160] sm:$0xff]
      %v5273 = vld [vmem:[%s381 + $0x168] sm:$0xff]
      %v5274 = vld [vmem:[%s381 + $0x170] sm:$0xff]
      %v5275 = vld [vmem:[%s381 + $0x178] sm:$0xff]
      %v5276 = vld [vmem:[%s381 + $0x180] sm:$0xff]
      %v5277 = vld [vmem:[%s381 + $0x188] sm:$0xff]
      %v5278 = vld [vmem:[%s381 + $0x190] sm:$0xff]
      %v5279 = vld [vmem:[%s381 + $0x198] sm:$0xff]
      %v5280 = vld [vmem:[%s381 + $0x1a0] sm:$0xff]
      %v5281 = vld [vmem:[%s381 + $0x1a8] sm:$0xff]
      %v5282 = vld [vmem:[%s381 + $0x1b0] sm:$0xff]
      %v5283 = vld [vmem:[%s381 + $0x1b8] sm:$0xff]
      %v5284 = vld [vmem:[%s381 + $0x1c0] sm:$0xff]
      %v5285 = vld [vmem:[%s381 + $0x1c8] sm:$0xff]
      %v5286 = vld [vmem:[%s381 + $0x1d0] sm:$0xff]
      %v5287 = vld [vmem:[%s381 + $0x1d8] sm:$0xff]
      %v5288 = vld [vmem:[%s381 + $0x1e0] sm:$0xff]
      %v5289 = vld [vmem:[%s381 + $0x1e8] sm:$0xff]
      %v5290 = vld [vmem:[%s381 + $0x1f0] sm:$0xff]
      %v5291 = vld [vmem:[%s381 + $0x1f8] sm:$0xff]
      %v5292 = vld [vmem:[%s381 + $0x200] sm:$0xff]
      %v5293 = vld [vmem:[%s381 + $0x208] sm:$0xff]
      %v5294 = vld [vmem:[%s381 + $0x210] sm:$0xff]
      %v5295 = vld [vmem:[%s381 + $0x218] sm:$0xff]
      %v5296 = vld [vmem:[%s381 + $0x220] sm:$0xff]
      %v5297 = vld [vmem:[%s381 + $0x228] sm:$0xff]
      %v5298 = vld [vmem:[%s381 + $0x230] sm:$0xff]
      %v5299 = vld [vmem:[%s381 + $0x238] sm:$0xff]
      %v5300 = vld [vmem:[%s381 + $0x240] sm:$0xff]
      %v5301 = vld [vmem:[%s381 + $0x248] sm:$0xff]
      %v5302 = vld [vmem:[%s381 + $0x250] sm:$0xff]
      %v5303 = vld [vmem:[%s381 + $0x258] sm:$0xff]
      %v5304 = vld [vmem:[%s381 + $0x260] sm:$0xff]
      %v5305 = vld [vmem:[%s381 + $0x268] sm:$0xff]
      %v5306 = vld [vmem:[%s381 + $0x270] sm:$0xff]
      %v5307 = vld [vmem:[%s381 + $0x278] sm:$0xff]
      %v5308 = vld [vmem:[%s381 + $0x280] sm:$0xff]
      %v5309 = vld [vmem:[%s381 + $0x288] sm:$0xff]
      %v5310 = vld [vmem:[%s381 + $0x290] sm:$0xff]
      %v5311 = vld [vmem:[%s381 + $0x298] sm:$0xff]
      %v5312 = vld [vmem:[%s381 + $0x2a0] sm:$0xff]
      %v5313 = vld [vmem:[%s381 + $0x2a8] sm:$0xff]
      %v5314 = vld [vmem:[%s381 + $0x2b0] sm:$0xff]
      %v5315 = vld [vmem:[%s381 + $0x2b8] sm:$0xff]
      %v5316 = vld [vmem:[%s381 + $0x2c0] sm:$0xff]
      %v5317 = vld [vmem:[%s381 + $0x2c8] sm:$0xff]
      %v5318 = vld [vmem:[%s381 + $0x2d0] sm:$0xff]
      %v5319 = vld [vmem:[%s381 + $0x2d8] sm:$0xff]
      %v5320 = vld [vmem:[%s381 + $0x2e0] sm:$0xff]
      %v5321 = vld [vmem:[%s381 + $0x2e8] sm:$0xff]
      %v5322 = vld [vmem:[%s381 + $0x2f0] sm:$0xff]
      %v5323 = vld [vmem:[%s381 + $0x2f8] sm:$0xff]
      %v5324 = vld [vmem:[%s381 + $0x300] sm:$0xff]
      %v5325 = vld [vmem:[%s381 + $0x308] sm:$0xff]
      %v5326 = vld [vmem:[%s381 + $0x310] sm:$0xff]
      %v5327 = vld [vmem:[%s381 + $0x318] sm:$0xff]
      %v5328 = vld [vmem:[%s381 + $0x320] sm:$0xff]
      %v5329 = vld [vmem:[%s381 + $0x328] sm:$0xff]
      %v5330 = vld [vmem:[%s381 + $0x330] sm:$0xff]
      %v5331 = vld [vmem:[%s381 + $0x338] sm:$0xff]
      %v5332 = vld [vmem:[%s381 + $0x340] sm:$0xff]
      %v5333 = vld [vmem:[%s381 + $0x348] sm:$0xff]
      %v5334 = vld [vmem:[%s381 + $0x350] sm:$0xff]
      %v5335 = vld [vmem:[%s381 + $0x358] sm:$0xff]
      %v5336 = vld [vmem:[%s381 + $0x360] sm:$0xff]
      %v5337 = vld [vmem:[%s381 + $0x368] sm:$0xff]
      %v5338 = vld [vmem:[%s381 + $0x370] sm:$0xff]
      %v5339 = vld [vmem:[%s381 + $0x378] sm:$0xff]
      %v5340 = vld [vmem:[%s381 + $0x380] sm:$0xff]
      %v5341 = vld [vmem:[%s381 + $0x388] sm:$0xff]
      %v5342 = vld [vmem:[%s381 + $0x390] sm:$0xff]
      %v5343 = vld [vmem:[%s381 + $0x398] sm:$0xff]
      %v5344 = vld [vmem:[%s381 + $0x3a0] sm:$0xff]
      %v5345 = vld [vmem:[%s381 + $0x3a8] sm:$0xff]
      %v5346 = vld [vmem:[%s381 + $0x3b0] sm:$0xff]
      %v5347 = vld [vmem:[%s381 + $0x3b8] sm:$0xff]
      %v5348 = vld [vmem:[%s381 + $0x3c0] sm:$0xff]
      %v5349 = vld [vmem:[%s381 + $0x3c8] sm:$0xff]
      %v5350 = vld [vmem:[%s381 + $0x3d0] sm:$0xff]
      %v5351 = vld [vmem:[%s381 + $0x3d8] sm:$0xff]
      %v5352 = vld [vmem:[%s381 + $0x3e0] sm:$0xff]
      %v5353 = vld [vmem:[%s381 + $0x3e8] sm:$0xff]
      %v5354 = vld [vmem:[%s381 + $0x3f0] sm:$0xff]
      %v5355 = vld [vmem:[%s381 + $0x3f8] sm:$0xff]
      %s5356 = scalar_lea.vmem %s1, 768
      %v5357 = vld [vmem:[%s5356] sm:$0xff]
      %v5358 = vld [vmem:[%s5356 + $0x8] sm:$0xff]
      %v5359 = vld [vmem:[%s5356 + $0x10] sm:$0xff]
      %v5360 = vld [vmem:[%s5356 + $0x18] sm:$0xff]
      %v5361 = vld [vmem:[%s5356 + $0x20] sm:$0xff]
      %v5362 = vld [vmem:[%s5356 + $0x28] sm:$0xff]
      %v5363 = vld [vmem:[%s5356 + $0x30] sm:$0xff]
      %v5364 = vld [vmem:[%s5356 + $0x38] sm:$0xff]
      %v5365 = vld [vmem:[%s5356 + $0x40] sm:$0xff]
      %v5366 = vld [vmem:[%s5356 + $0x48] sm:$0xff]
      %v5367 = vld [vmem:[%s5356 + $0x50] sm:$0xff]
      %v5368 = vld [vmem:[%s5356 + $0x58] sm:$0xff]
      %v5369 = vld [vmem:[%s5356 + $0x60] sm:$0xff]
      %v5370 = vld [vmem:[%s5356 + $0x68] sm:$0xff]
      %v5371 = vld [vmem:[%s5356 + $0x70] sm:$0xff]
      %v5372 = vld [vmem:[%s5356 + $0x78] sm:$0xff]
      %v5373 = vld [vmem:[%s5356 + $0x80] sm:$0xff]
      %v5374 = vld [vmem:[%s5356 + $0x88] sm:$0xff]
      %v5375 = vld [vmem:[%s5356 + $0x90] sm:$0xff]
      %v5376 = vld [vmem:[%s5356 + $0x98] sm:$0xff]
      %v5377 = vld [vmem:[%s5356 + $0xa0] sm:$0xff]
      %v5378 = vld [vmem:[%s5356 + $0xa8] sm:$0xff]
      %v5379 = vld [vmem:[%s5356 + $0xb0] sm:$0xff]
      %v5380 = vld [vmem:[%s5356 + $0xb8] sm:$0xff]
      %v5382 = vsel %vm553, %v5244, 0
      %v5385 = vsel %vm553, %v5245, 0
      %v5388 = vsel %vm553, %v5246, 0
      %v5391 = vsel %vm553, %v5247, 0
      %v5394 = vsel %vm553, %v5248, 0
      %v5397 = vsel %vm553, %v5249, 0
      %v5400 = vsel %vm553, %v5250, 0
      %v5403 = vsel %vm553, %v5251, 0
      %v5406 = vsel %vm553, %v5252, 0
      %v5409 = vsel %vm553, %v5253, 0
      %v5412 = vsel %vm553, %v5254, 0
      %v5415 = vsel %vm553, %v5255, 0
      %v5418 = vsel %vm553, %v5256, 0
      %v5421 = vsel %vm553, %v5257, 0
      %v5424 = vsel %vm553, %v5258, 0
      %v5427 = vsel %vm553, %v5259, 0
      %v5430 = vsel %vm553, %v5260, 0
      %v5433 = vsel %vm553, %v5261, 0
      %v5436 = vsel %vm553, %v5262, 0
      %v5439 = vsel %vm553, %v5263, 0
      %v5442 = vsel %vm553, %v5264, 0
      %v5445 = vsel %vm553, %v5265, 0
      %v5448 = vsel %vm553, %v5266, 0
      %v5451 = vsel %vm553, %v5267, 0
      %v5454 = vsel %vm553, %v5268, 0
      %v5457 = vsel %vm553, %v5269, 0
      %v5460 = vsel %vm553, %v5270, 0
      %v5463 = vsel %vm553, %v5271, 0
      %v5466 = vsel %vm553, %v5272, 0
      %v5469 = vsel %vm553, %v5273, 0
      %v5472 = vsel %vm553, %v5274, 0
      %v5475 = vsel %vm553, %v5275, 0
      %v5478 = vsel %vm553, %v5276, 0
      %v5481 = vsel %vm553, %v5277, 0
      %v5484 = vsel %vm553, %v5278, 0
      %v5487 = vsel %vm553, %v5279, 0
      %v5490 = vsel %vm553, %v5280, 0
      %v5493 = vsel %vm553, %v5281, 0
      %v5496 = vsel %vm553, %v5282, 0
      %v5499 = vsel %vm553, %v5283, 0
      %v5502 = vsel %vm553, %v5284, 0
      %v5505 = vsel %vm553, %v5285, 0
      %v5508 = vsel %vm553, %v5286, 0
      %v5511 = vsel %vm553, %v5287, 0
      %v5514 = vsel %vm553, %v5288, 0
      %v5517 = vsel %vm553, %v5289, 0
      %v5520 = vsel %vm553, %v5290, 0
      %v5523 = vsel %vm553, %v5291, 0
      %v5526 = vsel %vm553, %v5292, 0
      %v5529 = vsel %vm553, %v5293, 0
      %v5532 = vsel %vm553, %v5294, 0
      %v5535 = vsel %vm553, %v5295, 0
      %v5538 = vsel %vm553, %v5296, 0
      %v5541 = vsel %vm553, %v5297, 0
      %v5544 = vsel %vm553, %v5298, 0
      %v5547 = vsel %vm553, %v5299, 0
      %v5550 = vsel %vm553, %v5300, 0
      %v5553 = vsel %vm553, %v5301, 0
      %v5556 = vsel %vm553, %v5302, 0
      %v5559 = vsel %vm553, %v5303, 0
      %v5562 = vsel %vm553, %v5304, 0
      %v5565 = vsel %vm553, %v5305, 0
      %v5568 = vsel %vm553, %v5306, 0
      %v5571 = vsel %vm553, %v5307, 0
      %v5574 = vsel %vm553, %v5308, 0
      %v5577 = vsel %vm553, %v5309, 0
      %v5580 = vsel %vm553, %v5310, 0
      %v5583 = vsel %vm553, %v5311, 0
      %v5586 = vsel %vm553, %v5312, 0
      %v5589 = vsel %vm553, %v5313, 0
      %v5592 = vsel %vm553, %v5314, 0
      %v5595 = vsel %vm553, %v5315, 0
      %v5598 = vsel %vm553, %v5316, 0
      %v5601 = vsel %vm553, %v5317, 0
      %v5604 = vsel %vm553, %v5318, 0
      %v5607 = vsel %vm553, %v5319, 0
      %v5610 = vsel %vm553, %v5320, 0
      %v5613 = vsel %vm553, %v5321, 0
      %v5616 = vsel %vm553, %v5322, 0
      %v5619 = vsel %vm553, %v5323, 0
      %v5622 = vsel %vm553, %v5324, 0
      %v5625 = vsel %vm553, %v5325, 0
      %v5628 = vsel %vm553, %v5326, 0
      %v5631 = vsel %vm553, %v5327, 0
      %v5634 = vsel %vm553, %v5328, 0
      %v5637 = vsel %vm553, %v5329, 0
      %v5640 = vsel %vm553, %v5330, 0
      %v5643 = vsel %vm553, %v5331, 0
      %v5646 = vsel %vm553, %v5332, 0
      %v5649 = vsel %vm553, %v5333, 0
      %v5652 = vsel %vm553, %v5334, 0
      %v5655 = vsel %vm553, %v5335, 0
      %v5658 = vsel %vm553, %v5336, 0
      %v5661 = vsel %vm553, %v5337, 0
      %v5664 = vsel %vm553, %v5338, 0
      %v5667 = vsel %vm553, %v5339, 0
      %v5670 = vsel %vm553, %v5340, 0
      %v5673 = vsel %vm553, %v5341, 0
      %v5676 = vsel %vm553, %v5342, 0
      %v5679 = vsel %vm553, %v5343, 0
      %v5682 = vsel %vm553, %v5344, 0
      %v5685 = vsel %vm553, %v5345, 0
      %v5688 = vsel %vm553, %v5346, 0
      %v5691 = vsel %vm553, %v5347, 0
      %v5694 = vsel %vm553, %v5348, 0
      %v5697 = vsel %vm553, %v5349, 0
      %v5700 = vsel %vm553, %v5350, 0
      %v5703 = vsel %vm553, %v5351, 0
      %v5706 = vsel %vm553, %v5352, 0
      %v5709 = vsel %vm553, %v5353, 0
      %v5712 = vsel %vm553, %v5354, 0
      %v5715 = vsel %vm553, %v5355, 0
      %5717 = vmatprep.subr.mxu0 %v5358
      %5718 = vmatpush1.msra.mxu0 %v5357
      %5719 = vmatprep.subr.mxu0 %v5360
      %5720 = vmatpush1.msra.mxu0 %v5359
      %5721 = vmatprep.subr.mxu0 %v5362
      %5722 = vmatpush1.msra.mxu0 %v5361
      %5723 = vmatprep.subr.mxu0 %v5364
      %5724 = vmatpush1.msra.mxu0 %v5363
      %5725 = vmatprep.subr.mxu0 %v5366
      %5726 = vmatpush1.msra.mxu0 %v5365
      %5727 = vmatprep.subr.mxu0 %v5368
      %5728 = vmatpush1.msra.mxu0 %v5367
      %5729 = vmatprep.subr.mxu0 %v5370
      %5730 = vmatpush1.msra.mxu0 %v5369
      %5731 = vmatprep.subr.mxu0 %v5372
      %5732 = vmatpush1.msra.mxu0 %v5371
      %5733 = vmatprep.subr.mxu0 %v5374
      %5734 = vmatpush1.msra.mxu0 %v5373
      %5735 = vmatprep.subr.mxu0 %v5376
      %5736 = vmatpush1.msra.mxu0 %v5375
      %5737 = vmatprep.subr.mxu0 %v5378
      %5738 = vmatpush1.msra.mxu0 %v5377
      %5739 = vmatprep.subr.mxu0 %v5380
      %5740 = vmatpush1.msra.mxu0 %v5379
      %5741 = vmatprep.subr.mxu0 0.0
      %5742 = vmatpush1.msra.mxu0 0.0
      %5743 = vmatprep.subr.mxu0 0.0
      %5744 = vmatpush1.msra.mxu0 0.0
      %5745 = vmatprep.subr.mxu0 0.0
      %5746 = vmatpush1.msra.mxu0 0.0
      %5747 = vmatprep.subr.mxu0 0.0
      %5748 = vmatpush1.msra.mxu0 0.0
      %5749 = vmatprep.subr.mxu0 0.0
      %5750 = vmatpush1.msra.mxu0 0.0
      %5751 = vmatprep.subr.mxu0 0.0
      %5752 = vmatpush1.msra.mxu0 0.0
      %5753 = vmatprep.subr.mxu0 0.0
      %5754 = vmatpush1.msra.mxu0 0.0
      %5755 = vmatprep.subr.mxu0 0.0
      %5756 = vmatpush1.msra.mxu0 0.0
      %5757 = vmatprep.subr.mxu0 0.0
      %5758 = vmatpush1.msra.mxu0 0.0
      %5759 = vmatprep.subr.mxu0 0.0
      %5760 = vmatpush1.msra.mxu0 0.0
      %5761 = vmatprep.subr.mxu0 0.0
      %5762 = vmatpush1.msra.mxu0 0.0
      %5763 = vmatprep.subr.mxu0 0.0
      %5764 = vmatpush1.msra.mxu0 0.0
      %5765 = vmatprep.subr.mxu0 0.0
      %5766 = vmatpush1.msra.mxu0 0.0
      %5767 = vmatprep.subr.mxu0 0.0
      %5768 = vmatpush1.msra.mxu0 0.0
      %5769 = vmatprep.subr.mxu0 0.0
      %5770 = vmatpush1.msra.mxu0 0.0
      %5771 = vmatprep.subr.mxu0 0.0
      %5772 = vmatpush1.msra.mxu0 0.0
      %5773 = vmatprep.subr.mxu0 0.0
      %5774 = vmatpush1.msra.mxu0 0.0
      %5775 = vmatprep.subr.mxu0 0.0
      %5776 = vmatpush1.msra.mxu0 0.0
      %5777 = vmatprep.subr.mxu0 0.0
      %5778 = vmatpush1.msra.mxu0 0.0
      %5779 = vmatprep.subr.mxu0 0.0
      %5780 = vmatpush1.msra.mxu0 0.0
      %5781 = vmatprep.mubr.f32.mxu0 0.0
      %5782 = vmatmul.mubr.f32.gmra.mrb[0].mxu0 %v5382
      %v5783 = vpop.f32.mrb[0].mxu0
      %v5784 = vadd.f32 0.0, %v5783
      %v5785 = vpop.f32.mrb[0].mxu0
      %v5786 = vadd.f32 0.0, %v5785
      %5787 = vmatprep.mubr.f32.mxu0 0.0
      %5788 = vmatmul.mubr.f32.gmra.mrb[0].mxu0 %v5385
      %v5789 = vpop.f32.mrb[0].mxu0
      %v5790 = vadd.f32 0.0, %v5789
      %v5791 = vpop.f32.mrb[0].mxu0
      %v5792 = vadd.f32 0.0, %v5791
      %5793 = vmatprep.mubr.f32.mxu0 0.0
      %5794 = vmatmul.mubr.f32.gmra.mrb[0].mxu0 %v5388
      %v5795 = vpop.f32.mrb[0].mxu0
      %v5796 = vadd.f32 0.0, %v5795
      %v5797 = vpop.f32.mrb[0].mxu0
      %v5798 = vadd.f32 0.0, %v5797
      %5799 = vmatprep.mubr.f32.mxu0 0.0
      %5800 = vmatmul.mubr.f32.gmra.mrb[0].mxu0 %v5391
      %v5801 = vpop.f32.mrb[0].mxu0
      %v5802 = vadd.f32 0.0, %v5801
      %v5803 = vpop.f32.mrb[0].mxu0
      %v5804 = vadd.f32 0.0, %v5803
      %5805 = vmatprep.mubr.f32.mxu0 0.0
      %5806 = vmatmul.mubr.f32.gmra.mrb[0].mxu0 %v5394
      %v5807 = vpop.f32.mrb[0].mxu0
      %v5808 = vadd.f32 0.0, %v5807
      %v5809 = vpop.f32.mrb[0].mxu0
      %v5810 = vadd.f32 0.0, %v5809
      %5811 = vmatprep.mubr.f32.mxu0 0.0
      %5812 = vmatmul.mubr.f32.gmra.mrb[0].mxu0 %v5397
      %v5813 = vpop.f32.mrb[0].mxu0
      %v5814 = vadd.f32 0.0, %v5813
      %v5815 = vpop.f32.mrb[0].mxu0
      %v5816 = vadd.f32 0.0, %v5815
      %5817 = vmatprep.mubr.f32.mxu0 0.0
      %5818 = vmatmul.mubr.f32.gmra.mrb[0].mxu0 %v5400
      %v5819 = vpop.f32.mrb[0].mxu0
      %v5820 = vadd.f32 0.0, %v5819
      %v5821 = vpop.f32.mrb[0].mxu0
      %v5822 = vadd.f32 0.0, %v5821
      %5823 = vmatprep.mubr.f32.mxu0 0.0
      %5824 = vmatmul.mubr.f32.gmra.mrb[0].mxu0 %v5403
      %v5825 = vpop.f32.mrb[0].mxu0
      %v5826 = vadd.f32 0.0, %v5825
      %v5827 = vpop.f32.mrb[0].mxu0
      %v5828 = vadd.f32 0.0, %v5827
      %5829 = vmatprep.mubr.f32.mxu0 0.0
      %5830 = vmatmul.mubr.f32.gmra.mrb[0].mxu0 %v5406
      %v5831 = vpop.f32.mrb[0].mxu0
      %v5832 = vadd.f32 0.0, %v5831
      %v5833 = vpop.f32.mrb[0].mxu0
      %v5834 = vadd.f32 0.0, %v5833
      %5835 = vmatprep.mubr.f32.mxu0 0.0
      %5836 = vmatmul.mubr.f32.gmra.mrb[0].mxu0 %v5409
      %v5837 = vpop.f32.mrb[0].mxu0
      %v5838 = vadd.f32 0.0, %v5837
      %v5839 = vpop.f32.mrb[0].mxu0
      %v5840 = vadd.f32 0.0, %v5839
      %5841 = vmatprep.mubr.f32.mxu0 0.0
      %5842 = vmatmul.mubr.f32.gmra.mrb[0].mxu0 %v5412
      %v5843 = vpop.f32.mrb[0].mxu0
      %v5844 = vadd.f32 0.0, %v5843
      %v5845 = vpop.f32.mrb[0].mxu0
      %v5846 = vadd.f32 0.0, %v5845
      %5847 = vmatprep.mubr.f32.mxu0 0.0
      %5848 = vmatmul.mubr.f32.gmra.mrb[0].mxu0 %v5415
      %v5849 = vpop.f32.mrb[0].mxu0
      %v5850 = vadd.f32 0.0, %v5849
      %v5851 = vpop.f32.mrb[0].mxu0
      %v5852 = vadd.f32 0.0, %v5851
      %5853 = vmatprep.mubr.f32.mxu0 0.0
      %5854 = vmatmul.mubr.f32.gmra.mrb[0].mxu0 %v5418
      %v5855 = vpop.f32.mrb[0].mxu0
      %v5856 = vadd.f32 0.0, %v5855
      %v5857 = vpop.f32.mrb[0].mxu0
      %v5858 = vadd.f32 0.0, %v5857
      %5859 = vmatprep.mubr.f32.mxu0 0.0
      %5860 = vmatmul.mubr.f32.gmra.mrb[0].mxu0 %v5421
      %v5861 = vpop.f32.mrb[0].mxu0
      %v5862 = vadd.f32 0.0, %v5861
      %v5863 = vpop.f32.mrb[0].mxu0
      %v5864 = vadd.f32 0.0, %v5863
      %5865 = vmatprep.mubr.f32.mxu0 0.0
      %5866 = vmatmul.mubr.f32.gmra.mrb[0].mxu0 %v5424
      %v5867 = vpop.f32.mrb[0].mxu0
      %v5868 = vadd.f32 0.0, %v5867
      %v5869 = vpop.f32.mrb[0].mxu0
      %v5870 = vadd.f32 0.0, %v5869
      %5871 = vmatprep.mubr.f32.mxu0 0.0
      %5872 = vmatmul.mubr.f32.gmra.mrb[0].mxu0 %v5427
      %v5873 = vpop.f32.mrb[0].mxu0
      %v5874 = vadd.f32 0.0, %v5873
      %v5875 = vpop.f32.mrb[0].mxu0
      %v5876 = vadd.f32 0.0, %v5875
      %5877 = vmatprep.mubr.f32.mxu0 0.0
      %5878 = vmatmul.mubr.f32.gmra.mrb[0].mxu0 %v5430
      %v5879 = vpop.f32.mrb[0].mxu0
      %v5880 = vadd.f32 0.0, %v5879
      %v5881 = vpop.f32.mrb[0].mxu0
      %v5882 = vadd.f32 0.0, %v5881
      %5883 = vmatprep.mubr.f32.mxu0 0.0
      %5884 = vmatmul.mubr.f32.gmra.mrb[0].mxu0 %v5433
      %v5885 = vpop.f32.mrb[0].mxu0
      %v5886 = vadd.f32 0.0, %v5885
      %v5887 = vpop.f32.mrb[0].mxu0
      %v5888 = vadd.f32 0.0, %v5887
      %5889 = vmatprep.mubr.f32.mxu0 0.0
      %5890 = vmatmul.mubr.f32.gmra.mrb[0].mxu0 %v5436
      %v5891 = vpop.f32.mrb[0].mxu0
      %v5892 = vadd.f32 0.0, %v5891
      %v5893 = vpop.f32.mrb[0].mxu0
      %v5894 = vadd.f32 0.0, %v5893
      %5895 = vmatprep.mubr.f32.mxu0 0.0
      %5896 = vmatmul.mubr.f32.gmra.mrb[0].mxu0 %v5439
      %v5897 = vpop.f32.mrb[0].mxu0
      %v5898 = vadd.f32 0.0, %v5897
      %v5899 = vpop.f32.mrb[0].mxu0
      %v5900 = vadd.f32 0.0, %v5899
      %5901 = vmatprep.mubr.f32.mxu0 0.0
      %5902 = vmatmul.mubr.f32.gmra.mrb[0].mxu0 %v5442
      %v5903 = vpop.f32.mrb[0].mxu0
      %v5904 = vadd.f32 0.0, %v5903
      %v5905 = vpop.f32.mrb[0].mxu0
      %v5906 = vadd.f32 0.0, %v5905
      %5907 = vmatprep.mubr.f32.mxu0 0.0
      %5908 = vmatmul.mubr.f32.gmra.mrb[0].mxu0 %v5445
      %v5909 = vpop.f32.mrb[0].mxu0
      %v5910 = vadd.f32 0.0, %v5909
      %v5911 = vpop.f32.mrb[0].mxu0
      %v5912 = vadd.f32 0.0, %v5911
      %5913 = vmatprep.mubr.f32.mxu0 0.0
      %5914 = vmatmul.mubr.f32.gmra.mrb[0].mxu0 %v5448
      %v5915 = vpop.f32.mrb[0].mxu0
      %v5916 = vadd.f32 0.0, %v5915
      %v5917 = vpop.f32.mrb[0].mxu0
      %v5918 = vadd.f32 0.0, %v5917
      %5919 = vmatprep.mubr.f32.mxu0 0.0
      %5920 = vmatmul.mubr.f32.gmra.mrb[0].mxu0 %v5451
      %v5921 = vpop.f32.mrb[0].mxu0
      %v5922 = vadd.f32 0.0, %v5921
      %v5923 = vpop.f32.mrb[0].mxu0
      %v5924 = vadd.f32 0.0, %v5923
      %5925 = vmatprep.mubr.f32.mxu0 0.0
      %5926 = vmatmul.mubr.f32.gmra.mrb[0].mxu0 %v5454
      %v5927 = vpop.f32.mrb[0].mxu0
      %v5928 = vadd.f32 0.0, %v5927
      %v5929 = vpop.f32.mrb[0].mxu0
      %v5930 = vadd.f32 0.0, %v5929
      %5931 = vmatprep.mubr.f32.mxu0 0.0
      %5932 = vmatmul.mubr.f32.gmra.mrb[0].mxu0 %v5457
      %v5933 = vpop.f32.mrb[0].mxu0
      %v5934 = vadd.f32 0.0, %v5933
      %v5935 = vpop.f32.mrb[0].mxu0
      %v5936 = vadd.f32 0.0, %v5935
      %5937 = vmatprep.mubr.f32.mxu0 0.0
      %5938 = vmatmul.mubr.f32.gmra.mrb[0].mxu0 %v5460
      %v5939 = vpop.f32.mrb[0].mxu0
      %v5940 = vadd.f32 0.0, %v5939
      %v5941 = vpop.f32.mrb[0].mxu0
      %v5942 = vadd.f32 0.0, %v5941
      %5943 = vmatprep.mubr.f32.mxu0 0.0
      %5944 = vmatmul.mubr.f32.gmra.mrb[0].mxu0 %v5463
      %v5945 = vpop.f32.mrb[0].mxu0
      %v5946 = vadd.f32 0.0, %v5945
      %v5947 = vpop.f32.mrb[0].mxu0
      %v5948 = vadd.f32 0.0, %v5947
      %5949 = vmatprep.mubr.f32.mxu0 0.0
      %5950 = vmatmul.mubr.f32.gmra.mrb[0].mxu0 %v5466
      %v5951 = vpop.f32.mrb[0].mxu0
      %v5952 = vadd.f32 0.0, %v5951
      %v5953 = vpop.f32.mrb[0].mxu0
      %v5954 = vadd.f32 0.0, %v5953
      %5955 = vmatprep.mubr.f32.mxu0 0.0
      %5956 = vmatmul.mubr.f32.gmra.mrb[0].mxu0 %v5469
      %v5957 = vpop.f32.mrb[0].mxu0
      %v5958 = vadd.f32 0.0, %v5957
      %v5959 = vpop.f32.mrb[0].mxu0
      %v5960 = vadd.f32 0.0, %v5959
      %5961 = vmatprep.mubr.f32.mxu0 0.0
      %5962 = vmatmul.mubr.f32.gmra.mrb[0].mxu0 %v5472
      %v5963 = vpop.f32.mrb[0].mxu0
      %v5964 = vadd.f32 0.0, %v5963
      %v5965 = vpop.f32.mrb[0].mxu0
      %v5966 = vadd.f32 0.0, %v5965
      %5967 = vmatprep.mubr.f32.mxu0 0.0
      %5968 = vmatmul.mubr.f32.gmra.mrb[0].mxu0 %v5475
      %v5969 = vpop.f32.mrb[0].mxu0
      %v5970 = vadd.f32 0.0, %v5969
      %v5971 = vpop.f32.mrb[0].mxu0
      %v5972 = vadd.f32 0.0, %v5971
      %5973 = vmatprep.mubr.f32.mxu0 0.0
      %5974 = vmatmul.mubr.f32.gmra.mrb[0].mxu0 %v5478
      %v5975 = vpop.f32.mrb[0].mxu0
      %v5976 = vadd.f32 0.0, %v5975
      %v5977 = vpop.f32.mrb[0].mxu0
      %v5978 = vadd.f32 0.0, %v5977
      %5979 = vmatprep.mubr.f32.mxu0 0.0
      %5980 = vmatmul.mubr.f32.gmra.mrb[0].mxu0 %v5481
      %v5981 = vpop.f32.mrb[0].mxu0
      %v5982 = vadd.f32 0.0, %v5981
      %v5983 = vpop.f32.mrb[0].mxu0
      %v5984 = vadd.f32 0.0, %v5983
      %5985 = vmatprep.mubr.f32.mxu0 0.0
      %5986 = vmatmul.mubr.f32.gmra.mrb[0].mxu0 %v5484
      %v5987 = vpop.f32.mrb[0].mxu0
      %v5988 = vadd.f32 0.0, %v5987
      %v5989 = vpop.f32.mrb[0].mxu0
      %v5990 = vadd.f32 0.0, %v5989
      %5991 = vmatprep.mubr.f32.mxu0 0.0
      %5992 = vmatmul.mubr.f32.gmra.mrb[0].mxu0 %v5487
      %v5993 = vpop.f32.mrb[0].mxu0
      %v5994 = vadd.f32 0.0, %v5993
      %v5995 = vpop.f32.mrb[0].mxu0
      %v5996 = vadd.f32 0.0, %v5995
      %5997 = vmatprep.mubr.f32.mxu0 0.0
      %5998 = vmatmul.mubr.f32.gmra.mrb[0].mxu0 %v5490
      %v5999 = vpop.f32.mrb[0].mxu0
      %v6000 = vadd.f32 0.0, %v5999
      %v6001 = vpop.f32.mrb[0].mxu0
      %v6002 = vadd.f32 0.0, %v6001
      %6003 = vmatprep.mubr.f32.mxu0 0.0
      %6004 = vmatmul.mubr.f32.gmra.mrb[0].mxu0 %v5493
      %v6005 = vpop.f32.mrb[0].mxu0
      %v6006 = vadd.f32 0.0, %v6005
      %v6007 = vpop.f32.mrb[0].mxu0
      %v6008 = vadd.f32 0.0, %v6007
      %6009 = vmatprep.mubr.f32.mxu0 0.0
      %6010 = vmatmul.mubr.f32.gmra.mrb[0].mxu0 %v5496
      %v6011 = vpop.f32.mrb[0].mxu0
      %v6012 = vadd.f32 0.0, %v6011
      %v6013 = vpop.f32.mrb[0].mxu0
      %v6014 = vadd.f32 0.0, %v6013
      %6015 = vmatprep.mubr.f32.mxu0 0.0
      %6016 = vmatmul.mubr.f32.gmra.mrb[0].mxu0 %v5499
      %v6017 = vpop.f32.mrb[0].mxu0
      %v6018 = vadd.f32 0.0, %v6017
      %v6019 = vpop.f32.mrb[0].mxu0
      %v6020 = vadd.f32 0.0, %v6019
      %6021 = vmatprep.mubr.f32.mxu0 0.0
      %6022 = vmatmul.mubr.f32.gmra.mrb[0].mxu0 %v5502
      %v6023 = vpop.f32.mrb[0].mxu0
      %v6024 = vadd.f32 0.0, %v6023
      %v6025 = vpop.f32.mrb[0].mxu0
      %v6026 = vadd.f32 0.0, %v6025
      %6027 = vmatprep.mubr.f32.mxu0 0.0
      %6028 = vmatmul.mubr.f32.gmra.mrb[0].mxu0 %v5505
      %v6029 = vpop.f32.mrb[0].mxu0
      %v6030 = vadd.f32 0.0, %v6029
      %v6031 = vpop.f32.mrb[0].mxu0
      %v6032 = vadd.f32 0.0, %v6031
      %6033 = vmatprep.mubr.f32.mxu0 0.0
      %6034 = vmatmul.mubr.f32.gmra.mrb[0].mxu0 %v5508
      %v6035 = vpop.f32.mrb[0].mxu0
      %v6036 = vadd.f32 0.0, %v6035
      %v6037 = vpop.f32.mrb[0].mxu0
      %v6038 = vadd.f32 0.0, %v6037
      %6039 = vmatprep.mubr.f32.mxu0 0.0
      %6040 = vmatmul.mubr.f32.gmra.mrb[0].mxu0 %v5511
      %v6041 = vpop.f32.mrb[0].mxu0
      %v6042 = vadd.f32 0.0, %v6041
      %v6043 = vpop.f32.mrb[0].mxu0
      %v6044 = vadd.f32 0.0, %v6043
      %6045 = vmatprep.mubr.f32.mxu0 0.0
      %6046 = vmatmul.mubr.f32.gmra.mrb[0].mxu0 %v5514
      %v6047 = vpop.f32.mrb[0].mxu0
      %v6048 = vadd.f32 0.0, %v6047
      %v6049 = vpop.f32.mrb[0].mxu0
      %v6050 = vadd.f32 0.0, %v6049
      %6051 = vmatprep.mubr.f32.mxu0 0.0
      %6052 = vmatmul.mubr.f32.gmra.mrb[0].mxu0 %v5517
      %v6053 = vpop.f32.mrb[0].mxu0
      %v6054 = vadd.f32 0.0, %v6053
      %v6055 = vpop.f32.mrb[0].mxu0
      %v6056 = vadd.f32 0.0, %v6055
      %6057 = vmatprep.mubr.f32.mxu0 0.0
      %6058 = vmatmul.mubr.f32.gmra.mrb[0].mxu0 %v5520
      %v6059 = vpop.f32.mrb[0].mxu0
      %v6060 = vadd.f32 0.0, %v6059
      %v6061 = vpop.f32.mrb[0].mxu0
      %v6062 = vadd.f32 0.0, %v6061
      %6063 = vmatprep.mubr.f32.mxu0 0.0
      %6064 = vmatmul.mubr.f32.gmra.mrb[0].mxu0 %v5523
      %v6065 = vpop.f32.mrb[0].mxu0
      %v6066 = vadd.f32 0.0, %v6065
      %v6067 = vpop.f32.mrb[0].mxu0
      %v6068 = vadd.f32 0.0, %v6067
      %6069 = vmatprep.mubr.f32.mxu0 0.0
      %6070 = vmatmul.mubr.f32.gmra.mrb[0].mxu0 %v5526
      %v6071 = vpop.f32.mrb[0].mxu0
      %v6072 = vadd.f32 0.0, %v6071
      %v6073 = vpop.f32.mrb[0].mxu0
      %v6074 = vadd.f32 0.0, %v6073
      %6075 = vmatprep.mubr.f32.mxu0 0.0
      %6076 = vmatmul.mubr.f32.gmra.mrb[0].mxu0 %v5529
      %v6077 = vpop.f32.mrb[0].mxu0
      %v6078 = vadd.f32 0.0, %v6077
      %v6079 = vpop.f32.mrb[0].mxu0
      %v6080 = vadd.f32 0.0, %v6079
      %6081 = vmatprep.mubr.f32.mxu0 0.0
      %6082 = vmatmul.mubr.f32.gmra.mrb[0].mxu0 %v5532
      %v6083 = vpop.f32.mrb[0].mxu0
      %v6084 = vadd.f32 0.0, %v6083
      %v6085 = vpop.f32.mrb[0].mxu0
      %v6086 = vadd.f32 0.0, %v6085
      %6087 = vmatprep.mubr.f32.mxu0 0.0
      %6088 = vmatmul.mubr.f32.gmra.mrb[0].mxu0 %v5535
      %v6089 = vpop.f32.mrb[0].mxu0
      %v6090 = vadd.f32 0.0, %v6089
      %v6091 = vpop.f32.mrb[0].mxu0
      %v6092 = vadd.f32 0.0, %v6091
      %6093 = vmatprep.mubr.f32.mxu0 0.0
      %6094 = vmatmul.mubr.f32.gmra.mrb[0].mxu0 %v5538
      %v6095 = vpop.f32.mrb[0].mxu0
      %v6096 = vadd.f32 0.0, %v6095
      %v6097 = vpop.f32.mrb[0].mxu0
      %v6098 = vadd.f32 0.0, %v6097
      %6099 = vmatprep.mubr.f32.mxu0 0.0
      %6100 = vmatmul.mubr.f32.gmra.mrb[0].mxu0 %v5541
      %v6101 = vpop.f32.mrb[0].mxu0
      %v6102 = vadd.f32 0.0, %v6101
      %v6103 = vpop.f32.mrb[0].mxu0
      %v6104 = vadd.f32 0.0, %v6103
      %6105 = vmatprep.mubr.f32.mxu0 0.0
      %6106 = vmatmul.mubr.f32.gmra.mrb[0].mxu0 %v5544
      %v6107 = vpop.f32.mrb[0].mxu0
      %v6108 = vadd.f32 0.0, %v6107
      %v6109 = vpop.f32.mrb[0].mxu0
      %v6110 = vadd.f32 0.0, %v6109
      %6111 = vmatprep.mubr.f32.mxu0 0.0
      %6112 = vmatmul.mubr.f32.gmra.mrb[0].mxu0 %v5547
      %v6113 = vpop.f32.mrb[0].mxu0
      %v6114 = vadd.f32 0.0, %v6113
      %v6115 = vpop.f32.mrb[0].mxu0
      %v6116 = vadd.f32 0.0, %v6115
      %6117 = vmatprep.mubr.f32.mxu0 0.0
      %6118 = vmatmul.mubr.f32.gmra.mrb[0].mxu0 %v5550
      %v6119 = vpop.f32.mrb[0].mxu0
      %v6120 = vadd.f32 0.0, %v6119
      %v6121 = vpop.f32.mrb[0].mxu0
      %v6122 = vadd.f32 0.0, %v6121
      %6123 = vmatprep.mubr.f32.mxu0 0.0
      %6124 = vmatmul.mubr.f32.gmra.mrb[0].mxu0 %v5553
      %v6125 = vpop.f32.mrb[0].mxu0
      %v6126 = vadd.f32 0.0, %v6125
      %v6127 = vpop.f32.mrb[0].mxu0
      %v6128 = vadd.f32 0.0, %v6127
      %6129 = vmatprep.mubr.f32.mxu0 0.0
      %6130 = vmatmul.mubr.f32.gmra.mrb[0].mxu0 %v5556
      %v6131 = vpop.f32.mrb[0].mxu0
      %v6132 = vadd.f32 0.0, %v6131
      %v6133 = vpop.f32.mrb[0].mxu0
      %v6134 = vadd.f32 0.0, %v6133
      %6135 = vmatprep.mubr.f32.mxu0 0.0
      %6136 = vmatmul.mubr.f32.gmra.mrb[0].mxu0 %v5559
      %v6137 = vpop.f32.mrb[0].mxu0
      %v6138 = vadd.f32 0.0, %v6137
      %v6139 = vpop.f32.mrb[0].mxu0
      %v6140 = vadd.f32 0.0, %v6139
      %6141 = vmatprep.mubr.f32.mxu0 0.0
      %6142 = vmatmul.mubr.f32.gmra.mrb[0].mxu0 %v5562
      %v6143 = vpop.f32.mrb[0].mxu0
      %v6144 = vadd.f32 0.0, %v6143
      %v6145 = vpop.f32.mrb[0].mxu0
      %v6146 = vadd.f32 0.0, %v6145
      %6147 = vmatprep.mubr.f32.mxu0 0.0
      %6148 = vmatmul.mubr.f32.gmra.mrb[0].mxu0 %v5565
      %v6149 = vpop.f32.mrb[0].mxu0
      %v6150 = vadd.f32 0.0, %v6149
      %v6151 = vpop.f32.mrb[0].mxu0
      %v6152 = vadd.f32 0.0, %v6151
      %6153 = vmatprep.mubr.f32.mxu0 0.0
      %6154 = vmatmul.mubr.f32.gmra.mrb[0].mxu0 %v5568
      %v6155 = vpop.f32.mrb[0].mxu0
      %v6156 = vadd.f32 0.0, %v6155
      %v6157 = vpop.f32.mrb[0].mxu0
      %v6158 = vadd.f32 0.0, %v6157
      %6159 = vmatprep.mubr.f32.mxu0 0.0
      %6160 = vmatmul.mubr.f32.gmra.mrb[0].mxu0 %v5571
      %v6161 = vpop.f32.mrb[0].mxu0
      %v6162 = vadd.f32 0.0, %v6161
      %v6163 = vpop.f32.mrb[0].mxu0
      %v6164 = vadd.f32 0.0, %v6163
      %6165 = vmatprep.mubr.f32.mxu0 0.0
      %6166 = vmatmul.mubr.f32.gmra.mrb[0].mxu0 %v5574
      %v6167 = vpop.f32.mrb[0].mxu0
      %v6168 = vadd.f32 0.0, %v6167
      %v6169 = vpop.f32.mrb[0].mxu0
      %v6170 = vadd.f32 0.0, %v6169
      %6171 = vmatprep.mubr.f32.mxu0 0.0
      %6172 = vmatmul.mubr.f32.gmra.mrb[0].mxu0 %v5577
      %v6173 = vpop.f32.mrb[0].mxu0
      %v6174 = vadd.f32 0.0, %v6173
      %v6175 = vpop.f32.mrb[0].mxu0
      %v6176 = vadd.f32 0.0, %v6175
      %6177 = vmatprep.mubr.f32.mxu0 0.0
      %6178 = vmatmul.mubr.f32.gmra.mrb[0].mxu0 %v5580
      %v6179 = vpop.f32.mrb[0].mxu0
      %v6180 = vadd.f32 0.0, %v6179
      %v6181 = vpop.f32.mrb[0].mxu0
      %v6182 = vadd.f32 0.0, %v6181
      %6183 = vmatprep.mubr.f32.mxu0 0.0
      %6184 = vmatmul.mubr.f32.gmra.mrb[0].mxu0 %v5583
      %v6185 = vpop.f32.mrb[0].mxu0
      %v6186 = vadd.f32 0.0, %v6185
      %v6187 = vpop.f32.mrb[0].mxu0
      %v6188 = vadd.f32 0.0, %v6187
      %6189 = vmatprep.mubr.f32.mxu0 0.0
      %6190 = vmatmul.mubr.f32.gmra.mrb[0].mxu0 %v5586
      %v6191 = vpop.f32.mrb[0].mxu0
      %v6192 = vadd.f32 0.0, %v6191
      %v6193 = vpop.f32.mrb[0].mxu0
      %v6194 = vadd.f32 0.0, %v6193
      %6195 = vmatprep.mubr.f32.mxu0 0.0
      %6196 = vmatmul.mubr.f32.gmra.mrb[0].mxu0 %v5589
      %v6197 = vpop.f32.mrb[0].mxu0
      %v6198 = vadd.f32 0.0, %v6197
      %v6199 = vpop.f32.mrb[0].mxu0
      %v6200 = vadd.f32 0.0, %v6199
      %6201 = vmatprep.mubr.f32.mxu0 0.0
      %6202 = vmatmul.mubr.f32.gmra.mrb[0].mxu0 %v5592
      %v6203 = vpop.f32.mrb[0].mxu0
      %v6204 = vadd.f32 0.0, %v6203
      %v6205 = vpop.f32.mrb[0].mxu0
      %v6206 = vadd.f32 0.0, %v6205
      %6207 = vmatprep.mubr.f32.mxu0 0.0
      %6208 = vmatmul.mubr.f32.gmra.mrb[0].mxu0 %v5595
      %v6209 = vpop.f32.mrb[0].mxu0
      %v6210 = vadd.f32 0.0, %v6209
      %v6211 = vpop.f32.mrb[0].mxu0
      %v6212 = vadd.f32 0.0, %v6211
      %6213 = vmatprep.mubr.f32.mxu0 0.0
      %6214 = vmatmul.mubr.f32.gmra.mrb[0].mxu0 %v5598
      %v6215 = vpop.f32.mrb[0].mxu0
      %v6216 = vadd.f32 0.0, %v6215
      %v6217 = vpop.f32.mrb[0].mxu0
      %v6218 = vadd.f32 0.0, %v6217
      %6219 = vmatprep.mubr.f32.mxu0 0.0
      %6220 = vmatmul.mubr.f32.gmra.mrb[0].mxu0 %v5601
      %v6221 = vpop.f32.mrb[0].mxu0
      %v6222 = vadd.f32 0.0, %v6221
      %v6223 = vpop.f32.mrb[0].mxu0
      %v6224 = vadd.f32 0.0, %v6223
      %6225 = vmatprep.mubr.f32.mxu0 0.0
      %6226 = vmatmul.mubr.f32.gmra.mrb[0].mxu0 %v5604
      %v6227 = vpop.f32.mrb[0].mxu0
      %v6228 = vadd.f32 0.0, %v6227
      %v6229 = vpop.f32.mrb[0].mxu0
      %v6230 = vadd.f32 0.0, %v6229
      %6231 = vmatprep.mubr.f32.mxu0 0.0
      %6232 = vmatmul.mubr.f32.gmra.mrb[0].mxu0 %v5607
      %v6233 = vpop.f32.mrb[0].mxu0
      %v6234 = vadd.f32 0.0, %v6233
      %v6235 = vpop.f32.mrb[0].mxu0
      %v6236 = vadd.f32 0.0, %v6235
      %6237 = vmatprep.mubr.f32.mxu0 0.0
      %6238 = vmatmul.mubr.f32.gmra.mrb[0].mxu0 %v5610
      %v6239 = vpop.f32.mrb[0].mxu0
      %v6240 = vadd.f32 0.0, %v6239
      %v6241 = vpop.f32.mrb[0].mxu0
      %v6242 = vadd.f32 0.0, %v6241
      %6243 = vmatprep.mubr.f32.mxu0 0.0
      %6244 = vmatmul.mubr.f32.gmra.mrb[0].mxu0 %v5613
      %v6245 = vpop.f32.mrb[0].mxu0
      %v6246 = vadd.f32 0.0, %v6245
      %v6247 = vpop.f32.mrb[0].mxu0
      %v6248 = vadd.f32 0.0, %v6247
      %6249 = vmatprep.mubr.f32.mxu0 0.0
      %6250 = vmatmul.mubr.f32.gmra.mrb[0].mxu0 %v5616
      %v6251 = vpop.f32.mrb[0].mxu0
      %v6252 = vadd.f32 0.0, %v6251
      %v6253 = vpop.f32.mrb[0].mxu0
      %v6254 = vadd.f32 0.0, %v6253
      %6255 = vmatprep.mubr.f32.mxu0 0.0
      %6256 = vmatmul.mubr.f32.gmra.mrb[0].mxu0 %v5619
      %v6257 = vpop.f32.mrb[0].mxu0
      %v6258 = vadd.f32 0.0, %v6257
      %v6259 = vpop.f32.mrb[0].mxu0
      %v6260 = vadd.f32 0.0, %v6259
      %6261 = vmatprep.mubr.f32.mxu0 0.0
      %6262 = vmatmul.mubr.f32.gmra.mrb[0].mxu0 %v5622
      %v6263 = vpop.f32.mrb[0].mxu0
      %v6264 = vadd.f32 0.0, %v6263
      %v6265 = vpop.f32.mrb[0].mxu0
      %v6266 = vadd.f32 0.0, %v6265
      %6267 = vmatprep.mubr.f32.mxu0 0.0
      %6268 = vmatmul.mubr.f32.gmra.mrb[0].mxu0 %v5625
      %v6269 = vpop.f32.mrb[0].mxu0
      %v6270 = vadd.f32 0.0, %v6269
      %v6271 = vpop.f32.mrb[0].mxu0
      %v6272 = vadd.f32 0.0, %v6271
      %6273 = vmatprep.mubr.f32.mxu0 0.0
      %6274 = vmatmul.mubr.f32.gmra.mrb[0].mxu0 %v5628
      %v6275 = vpop.f32.mrb[0].mxu0
      %v6276 = vadd.f32 0.0, %v6275
      %v6277 = vpop.f32.mrb[0].mxu0
      %v6278 = vadd.f32 0.0, %v6277
      %6279 = vmatprep.mubr.f32.mxu0 0.0
      %6280 = vmatmul.mubr.f32.gmra.mrb[0].mxu0 %v5631
      %v6281 = vpop.f32.mrb[0].mxu0
      %v6282 = vadd.f32 0.0, %v6281
      %v6283 = vpop.f32.mrb[0].mxu0
      %v6284 = vadd.f32 0.0, %v6283
      %6285 = vmatprep.mubr.f32.mxu0 0.0
      %6286 = vmatmul.mubr.f32.gmra.mrb[0].mxu0 %v5634
      %v6287 = vpop.f32.mrb[0].mxu0
      %v6288 = vadd.f32 0.0, %v6287
      %v6289 = vpop.f32.mrb[0].mxu0
      %v6290 = vadd.f32 0.0, %v6289
      %6291 = vmatprep.mubr.f32.mxu0 0.0
      %6292 = vmatmul.mubr.f32.gmra.mrb[0].mxu0 %v5637
      %v6293 = vpop.f32.mrb[0].mxu0
      %v6294 = vadd.f32 0.0, %v6293
      %v6295 = vpop.f32.mrb[0].mxu0
      %v6296 = vadd.f32 0.0, %v6295
      %6297 = vmatprep.mubr.f32.mxu0 0.0
      %6298 = vmatmul.mubr.f32.gmra.mrb[0].mxu0 %v5640
      %v6299 = vpop.f32.mrb[0].mxu0
      %v6300 = vadd.f32 0.0, %v6299
      %v6301 = vpop.f32.mrb[0].mxu0
      %v6302 = vadd.f32 0.0, %v6301
      %6303 = vmatprep.mubr.f32.mxu0 0.0
      %6304 = vmatmul.mubr.f32.gmra.mrb[0].mxu0 %v5643
      %v6305 = vpop.f32.mrb[0].mxu0
      %v6306 = vadd.f32 0.0, %v6305
      %v6307 = vpop.f32.mrb[0].mxu0
      %v6308 = vadd.f32 0.0, %v6307
      %6309 = vmatprep.mubr.f32.mxu0 0.0
      %6310 = vmatmul.mubr.f32.gmra.mrb[0].mxu0 %v5646
      %v6311 = vpop.f32.mrb[0].mxu0
      %v6312 = vadd.f32 0.0, %v6311
      %v6313 = vpop.f32.mrb[0].mxu0
      %v6314 = vadd.f32 0.0, %v6313
      %6315 = vmatprep.mubr.f32.mxu0 0.0
      %6316 = vmatmul.mubr.f32.gmra.mrb[0].mxu0 %v5649
      %v6317 = vpop.f32.mrb[0].mxu0
      %v6318 = vadd.f32 0.0, %v6317
      %v6319 = vpop.f32.mrb[0].mxu0
      %v6320 = vadd.f32 0.0, %v6319
      %6321 = vmatprep.mubr.f32.mxu0 0.0
      %6322 = vmatmul.mubr.f32.gmra.mrb[0].mxu0 %v5652
      %v6323 = vpop.f32.mrb[0].mxu0
      %v6324 = vadd.f32 0.0, %v6323
      %v6325 = vpop.f32.mrb[0].mxu0
      %v6326 = vadd.f32 0.0, %v6325
      %6327 = vmatprep.mubr.f32.mxu0 0.0
      %6328 = vmatmul.mubr.f32.gmra.mrb[0].mxu0 %v5655
      %v6329 = vpop.f32.mrb[0].mxu0
      %v6330 = vadd.f32 0.0, %v6329
      %v6331 = vpop.f32.mrb[0].mxu0
      %v6332 = vadd.f32 0.0, %v6331
      %6333 = vmatprep.mubr.f32.mxu0 0.0
      %6334 = vmatmul.mubr.f32.gmra.mrb[0].mxu0 %v5658
      %v6335 = vpop.f32.mrb[0].mxu0
      %v6336 = vadd.f32 0.0, %v6335
      %v6337 = vpop.f32.mrb[0].mxu0
      %v6338 = vadd.f32 0.0, %v6337
      %6339 = vmatprep.mubr.f32.mxu0 0.0
      %6340 = vmatmul.mubr.f32.gmra.mrb[0].mxu0 %v5661
      %v6341 = vpop.f32.mrb[0].mxu0
      %v6342 = vadd.f32 0.0, %v6341
      %v6343 = vpop.f32.mrb[0].mxu0
      %v6344 = vadd.f32 0.0, %v6343
      %6345 = vmatprep.mubr.f32.mxu0 0.0
      %6346 = vmatmul.mubr.f32.gmra.mrb[0].mxu0 %v5664
      %v6347 = vpop.f32.mrb[0].mxu0
      %v6348 = vadd.f32 0.0, %v6347
      %v6349 = vpop.f32.mrb[0].mxu0
      %v6350 = vadd.f32 0.0, %v6349
      %6351 = vmatprep.mubr.f32.mxu0 0.0
      %6352 = vmatmul.mubr.f32.gmra.mrb[0].mxu0 %v5667
      %v6353 = vpop.f32.mrb[0].mxu0
      %v6354 = vadd.f32 0.0, %v6353
      %v6355 = vpop.f32.mrb[0].mxu0
      %v6356 = vadd.f32 0.0, %v6355
      %6357 = vmatprep.mubr.f32.mxu0 0.0
      %6358 = vmatmul.mubr.f32.gmra.mrb[0].mxu0 %v5670
      %v6359 = vpop.f32.mrb[0].mxu0
      %v6360 = vadd.f32 0.0, %v6359
      %v6361 = vpop.f32.mrb[0].mxu0
      %v6362 = vadd.f32 0.0, %v6361
      %6363 = vmatprep.mubr.f32.mxu0 0.0
      %6364 = vmatmul.mubr.f32.gmra.mrb[0].mxu0 %v5673
      %v6365 = vpop.f32.mrb[0].mxu0
      %v6366 = vadd.f32 0.0, %v6365
      %v6367 = vpop.f32.mrb[0].mxu0
      %v6368 = vadd.f32 0.0, %v6367
      %6369 = vmatprep.mubr.f32.mxu0 0.0
      %6370 = vmatmul.mubr.f32.gmra.mrb[0].mxu0 %v5676
      %v6371 = vpop.f32.mrb[0].mxu0
      %v6372 = vadd.f32 0.0, %v6371
      %v6373 = vpop.f32.mrb[0].mxu0
      %v6374 = vadd.f32 0.0, %v6373
      %6375 = vmatprep.mubr.f32.mxu0 0.0
      %6376 = vmatmul.mubr.f32.gmra.mrb[0].mxu0 %v5679
      %v6377 = vpop.f32.mrb[0].mxu0
      %v6378 = vadd.f32 0.0, %v6377
      %v6379 = vpop.f32.mrb[0].mxu0
      %v6380 = vadd.f32 0.0, %v6379
      %6381 = vmatprep.mubr.f32.mxu0 0.0
      %6382 = vmatmul.mubr.f32.gmra.mrb[0].mxu0 %v5682
      %v6383 = vpop.f32.mrb[0].mxu0
      %v6384 = vadd.f32 0.0, %v6383
      %v6385 = vpop.f32.mrb[0].mxu0
      %v6386 = vadd.f32 0.0, %v6385
      %6387 = vmatprep.mubr.f32.mxu0 0.0
      %6388 = vmatmul.mubr.f32.gmra.mrb[0].mxu0 %v5685
      %v6389 = vpop.f32.mrb[0].mxu0
      %v6390 = vadd.f32 0.0, %v6389
      %v6391 = vpop.f32.mrb[0].mxu0
      %v6392 = vadd.f32 0.0, %v6391
      %6393 = vmatprep.mubr.f32.mxu0 0.0
      %6394 = vmatmul.mubr.f32.gmra.mrb[0].mxu0 %v5688
      %v6395 = vpop.f32.mrb[0].mxu0
      %v6396 = vadd.f32 0.0, %v6395
      %v6397 = vpop.f32.mrb[0].mxu0
      %v6398 = vadd.f32 0.0, %v6397
      %6399 = vmatprep.mubr.f32.mxu0 0.0
      %6400 = vmatmul.mubr.f32.gmra.mrb[0].mxu0 %v5691
      %v6401 = vpop.f32.mrb[0].mxu0
      %v6402 = vadd.f32 0.0, %v6401
      %v6403 = vpop.f32.mrb[0].mxu0
      %v6404 = vadd.f32 0.0, %v6403
      %6405 = vmatprep.mubr.f32.mxu0 0.0
      %6406 = vmatmul.mubr.f32.gmra.mrb[0].mxu0 %v5694
      %v6407 = vpop.f32.mrb[0].mxu0
      %v6408 = vadd.f32 0.0, %v6407
      %v6409 = vpop.f32.mrb[0].mxu0
      %v6410 = vadd.f32 0.0, %v6409
      %6411 = vmatprep.mubr.f32.mxu0 0.0
      %6412 = vmatmul.mubr.f32.gmra.mrb[0].mxu0 %v5697
      %v6413 = vpop.f32.mrb[0].mxu0
      %v6414 = vadd.f32 0.0, %v6413
      %v6415 = vpop.f32.mrb[0].mxu0
      %v6416 = vadd.f32 0.0, %v6415
      %6417 = vmatprep.mubr.f32.mxu0 0.0
      %6418 = vmatmul.mubr.f32.gmra.mrb[0].mxu0 %v5700
      %v6419 = vpop.f32.mrb[0].mxu0
      %v6420 = vadd.f32 0.0, %v6419
      %v6421 = vpop.f32.mrb[0].mxu0
      %v6422 = vadd.f32 0.0, %v6421
      %6423 = vmatprep.mubr.f32.mxu0 0.0
      %6424 = vmatmul.mubr.f32.gmra.mrb[0].mxu0 %v5703
      %v6425 = vpop.f32.mrb[0].mxu0
      %v6426 = vadd.f32 0.0, %v6425
      %v6427 = vpop.f32.mrb[0].mxu0
      %v6428 = vadd.f32 0.0, %v6427
      %6429 = vmatprep.mubr.f32.mxu0 0.0
      %6430 = vmatmul.mubr.f32.gmra.mrb[0].mxu0 %v5706
      %v6431 = vpop.f32.mrb[0].mxu0
      %v6432 = vadd.f32 0.0, %v6431
      %v6433 = vpop.f32.mrb[0].mxu0
      %v6434 = vadd.f32 0.0, %v6433
      %6435 = vmatprep.mubr.f32.mxu0 0.0
      %6436 = vmatmul.mubr.f32.gmra.mrb[0].mxu0 %v5709
      %v6437 = vpop.f32.mrb[0].mxu0
      %v6438 = vadd.f32 0.0, %v6437
      %v6439 = vpop.f32.mrb[0].mxu0
      %v6440 = vadd.f32 0.0, %v6439
      %6441 = vmatprep.mubr.f32.mxu0 0.0
      %6442 = vmatmul.mubr.f32.gmra.mrb[0].mxu0 %v5712
      %v6443 = vpop.f32.mrb[0].mxu0
      %v6444 = vadd.f32 0.0, %v6443
      %v6445 = vpop.f32.mrb[0].mxu0
      %v6446 = vadd.f32 0.0, %v6445
      %6447 = vmatprep.mubr.f32.mxu0 0.0
      %6448 = vmatmul.mubr.f32.gmra.mrb[0].mxu0 %v5715
      %v6449 = vpop.f32.mrb[0].mxu0
      %v6450 = vadd.f32 0.0, %v6449
      %v6451 = vpop.f32.mrb[0].mxu0
      %v6452 = vadd.f32 0.0, %v6451
      %6453 = vdwg.mxu0
      %v6454 = vadd.f32 %v5020, %v5784
      %v6455 = vadd.f32 %v5021, %v5786
      %v6456 = vadd.f32 %v5022, %v5790
      %v6457 = vadd.f32 %v5023, %v5792
      %v6458 = vadd.f32 %v5024, %v5796
      %v6459 = vadd.f32 %v5025, %v5798
      %v6460 = vadd.f32 %v5026, %v5802
      %v6461 = vadd.f32 %v5027, %v5804
      %v6462 = vadd.f32 %v5028, %v5808
      %v6463 = vadd.f32 %v5029, %v5810
      %v6464 = vadd.f32 %v5030, %v5814
      %v6465 = vadd.f32 %v5031, %v5816
      %v6466 = vadd.f32 %v5032, %v5820
      %v6467 = vadd.f32 %v5033, %v5822
      %v6468 = vadd.f32 %v5034, %v5826
      %v6469 = vadd.f32 %v5035, %v5828
      %v6470 = vadd.f32 %v5036, %v5832
      %v6471 = vadd.f32 %v5037, %v5834
      %v6472 = vadd.f32 %v5038, %v5838
      %v6473 = vadd.f32 %v5039, %v5840
      %v6474 = vadd.f32 %v5040, %v5844
      %v6475 = vadd.f32 %v5041, %v5846
      %v6476 = vadd.f32 %v5042, %v5850
      %v6477 = vadd.f32 %v5043, %v5852
      %v6478 = vadd.f32 %v5044, %v5856
      %v6479 = vadd.f32 %v5045, %v5858
      %v6480 = vadd.f32 %v5046, %v5862
      %v6481 = vadd.f32 %v5047, %v5864
      %v6482 = vadd.f32 %v5048, %v5868
      %v6483 = vadd.f32 %v5049, %v5870
      %v6484 = vadd.f32 %v5050, %v5874
      %v6485 = vadd.f32 %v5051, %v5876
      %v6486 = vadd.f32 %v5052, %v5880
      %v6487 = vadd.f32 %v5053, %v5882
      %v6488 = vadd.f32 %v5054, %v5886
      %v6489 = vadd.f32 %v5055, %v5888
      %v6490 = vadd.f32 %v5056, %v5892
      %v6491 = vadd.f32 %v5057, %v5894
      %v6492 = vadd.f32 %v5058, %v5898
      %v6493 = vadd.f32 %v5059, %v5900
      %v6494 = vadd.f32 %v5060, %v5904
      %v6495 = vadd.f32 %v5061, %v5906
      %v6496 = vadd.f32 %v5062, %v5910
      %v6497 = vadd.f32 %v5063, %v5912
      %v6498 = vadd.f32 %v5064, %v5916
      %v6499 = vadd.f32 %v5065, %v5918
      %v6500 = vadd.f32 %v5066, %v5922
      %v6501 = vadd.f32 %v5067, %v5924
      %v6502 = vadd.f32 %v5068, %v5928
      %v6503 = vadd.f32 %v5069, %v5930
      %v6504 = vadd.f32 %v5070, %v5934
      %v6505 = vadd.f32 %v5071, %v5936
      %v6506 = vadd.f32 %v5072, %v5940
      %v6507 = vadd.f32 %v5073, %v5942
      %v6508 = vadd.f32 %v5074, %v5946
      %v6509 = vadd.f32 %v5075, %v5948
      %v6510 = vadd.f32 %v5076, %v5952
      %v6511 = vadd.f32 %v5077, %v5954
      %v6512 = vadd.f32 %v5078, %v5958
      %v6513 = vadd.f32 %v5079, %v5960
      %v6514 = vadd.f32 %v5080, %v5964
      %v6515 = vadd.f32 %v5081, %v5966
      %v6516 = vadd.f32 %v5082, %v5970
      %v6517 = vadd.f32 %v5083, %v5972
      %v6518 = vadd.f32 %v5084, %v5976
      %v6519 = vadd.f32 %v5085, %v5978
      %v6520 = vadd.f32 %v5086, %v5982
      %v6521 = vadd.f32 %v5087, %v5984
      %v6522 = vadd.f32 %v5088, %v5988
      %v6523 = vadd.f32 %v5089, %v5990
      %v6524 = vadd.f32 %v5090, %v5994
      %v6525 = vadd.f32 %v5091, %v5996
      %v6526 = vadd.f32 %v5092, %v6000
      %v6527 = vadd.f32 %v5093, %v6002
      %v6528 = vadd.f32 %v5094, %v6006
      %v6529 = vadd.f32 %v5095, %v6008
      %v6530 = vadd.f32 %v5096, %v6012
      %v6531 = vadd.f32 %v5097, %v6014
      %v6532 = vadd.f32 %v5098, %v6018
      %v6533 = vadd.f32 %v5099, %v6020
      %v6534 = vadd.f32 %v5100, %v6024
      %v6535 = vadd.f32 %v5101, %v6026
      %v6536 = vadd.f32 %v5102, %v6030
      %v6537 = vadd.f32 %v5103, %v6032
      %v6538 = vadd.f32 %v5104, %v6036
      %v6539 = vadd.f32 %v5105, %v6038
      %v6540 = vadd.f32 %v5106, %v6042
      %v6541 = vadd.f32 %v5107, %v6044
      %v6542 = vadd.f32 %v5108, %v6048
      %v6543 = vadd.f32 %v5109, %v6050
      %v6544 = vadd.f32 %v5110, %v6054
      %v6545 = vadd.f32 %v5111, %v6056
      %v6546 = vadd.f32 %v5112, %v6060
      %v6547 = vadd.f32 %v5113, %v6062
      %v6548 = vadd.f32 %v5114, %v6066
      %v6549 = vadd.f32 %v5115, %v6068
      %v6550 = vadd.f32 %v5116, %v6072
      %v6551 = vadd.f32 %v5117, %v6074
      %v6552 = vadd.f32 %v5118, %v6078
      %v6553 = vadd.f32 %v5119, %v6080
      %v6554 = vadd.f32 %v5120, %v6084
      %v6555 = vadd.f32 %v5121, %v6086
      %v6556 = vadd.f32 %v5122, %v6090
      %v6557 = vadd.f32 %v5123, %v6092
      %v6558 = vadd.f32 %v5124, %v6096
      %v6559 = vadd.f32 %v5125, %v6098
      %v6560 = vadd.f32 %v5126, %v6102
      %v6561 = vadd.f32 %v5127, %v6104
      %v6562 = vadd.f32 %v5128, %v6108
      %v6563 = vadd.f32 %v5129, %v6110
      %v6564 = vadd.f32 %v5130, %v6114
      %v6565 = vadd.f32 %v5131, %v6116
      %v6566 = vadd.f32 %v5132, %v6120
      %v6567 = vadd.f32 %v5133, %v6122
      %v6568 = vadd.f32 %v5134, %v6126
      %v6569 = vadd.f32 %v5135, %v6128
      %v6570 = vadd.f32 %v5136, %v6132
      %v6571 = vadd.f32 %v5137, %v6134
      %v6572 = vadd.f32 %v5138, %v6138
      %v6573 = vadd.f32 %v5139, %v6140
      %v6574 = vadd.f32 %v5140, %v6144
      %v6575 = vadd.f32 %v5141, %v6146
      %v6576 = vadd.f32 %v5142, %v6150
      %v6577 = vadd.f32 %v5143, %v6152
      %v6578 = vadd.f32 %v5144, %v6156
      %v6579 = vadd.f32 %v5145, %v6158
      %v6580 = vadd.f32 %v5146, %v6162
      %v6581 = vadd.f32 %v5147, %v6164
      %v6582 = vadd.f32 %v5148, %v6168
      %v6583 = vadd.f32 %v5149, %v6170
      %v6584 = vadd.f32 %v5150, %v6174
      %v6585 = vadd.f32 %v5151, %v6176
      %v6586 = vadd.f32 %v5152, %v6180
      %v6587 = vadd.f32 %v5153, %v6182
      %v6588 = vadd.f32 %v5154, %v6186
      %v6589 = vadd.f32 %v5155, %v6188
      %v6590 = vadd.f32 %v5156, %v6192
      %v6591 = vadd.f32 %v5157, %v6194
      %v6592 = vadd.f32 %v5158, %v6198
      %v6593 = vadd.f32 %v5159, %v6200
      %v6594 = vadd.f32 %v5160, %v6204
      %v6595 = vadd.f32 %v5161, %v6206
      %v6596 = vadd.f32 %v5162, %v6210
      %v6597 = vadd.f32 %v5163, %v6212
      %v6598 = vadd.f32 %v5164, %v6216
      %v6599 = vadd.f32 %v5165, %v6218
      %v6600 = vadd.f32 %v5166, %v6222
      %v6601 = vadd.f32 %v5167, %v6224
      %v6602 = vadd.f32 %v5168, %v6228
      %v6603 = vadd.f32 %v5169, %v6230
      %v6604 = vadd.f32 %v5170, %v6234
      %v6605 = vadd.f32 %v5171, %v6236
      %v6606 = vadd.f32 %v5172, %v6240
      %v6607 = vadd.f32 %v5173, %v6242
      %v6608 = vadd.f32 %v5174, %v6246
      %v6609 = vadd.f32 %v5175, %v6248
      %v6610 = vadd.f32 %v5176, %v6252
      %v6611 = vadd.f32 %v5177, %v6254
      %v6612 = vadd.f32 %v5178, %v6258
      %v6613 = vadd.f32 %v5179, %v6260
      %v6614 = vadd.f32 %v5180, %v6264
      %v6615 = vadd.f32 %v5181, %v6266
      %v6616 = vadd.f32 %v5182, %v6270
      %v6617 = vadd.f32 %v5183, %v6272
      %v6618 = vadd.f32 %v5184, %v6276
      %v6619 = vadd.f32 %v5185, %v6278
      %v6620 = vadd.f32 %v5186, %v6282
      %v6621 = vadd.f32 %v5187, %v6284
      %v6622 = vadd.f32 %v5188, %v6288
      %v6623 = vadd.f32 %v5189, %v6290
      %v6624 = vadd.f32 %v5190, %v6294
      %v6625 = vadd.f32 %v5191, %v6296
      %v6626 = vadd.f32 %v5192, %v6300
      %v6627 = vadd.f32 %v5193, %v6302
      %v6628 = vadd.f32 %v5194, %v6306
      %v6629 = vadd.f32 %v5195, %v6308
      %v6630 = vadd.f32 %v5196, %v6312
      %v6631 = vadd.f32 %v5197, %v6314
      %v6632 = vadd.f32 %v5198, %v6318
      %v6633 = vadd.f32 %v5199, %v6320
      %v6634 = vadd.f32 %v5200, %v6324
      %v6635 = vadd.f32 %v5201, %v6326
      %v6636 = vadd.f32 %v5202, %v6330
      %v6637 = vadd.f32 %v5203, %v6332
      %v6638 = vadd.f32 %v5204, %v6336
      %v6639 = vadd.f32 %v5205, %v6338
      %v6640 = vadd.f32 %v5206, %v6342
      %v6641 = vadd.f32 %v5207, %v6344
      %v6642 = vadd.f32 %v5208, %v6348
      %v6643 = vadd.f32 %v5209, %v6350
      %v6644 = vadd.f32 %v5210, %v6354
      %v6645 = vadd.f32 %v5211, %v6356
      %v6646 = vadd.f32 %v5212, %v6360
      %v6647 = vadd.f32 %v5213, %v6362
      %v6648 = vadd.f32 %v5214, %v6366
      %v6649 = vadd.f32 %v5215, %v6368
      %v6650 = vadd.f32 %v5216, %v6372
      %v6651 = vadd.f32 %v5217, %v6374
      %v6652 = vadd.f32 %v5218, %v6378
      %v6653 = vadd.f32 %v5219, %v6380
      %v6654 = vadd.f32 %v5220, %v6384
      %v6655 = vadd.f32 %v5221, %v6386
      %v6656 = vadd.f32 %v5222, %v6390
      %v6657 = vadd.f32 %v5223, %v6392
      %v6658 = vadd.f32 %v5224, %v6396
      %v6659 = vadd.f32 %v5225, %v6398
      %v6660 = vadd.f32 %v5226, %v6402
      %v6661 = vadd.f32 %v5227, %v6404
      %v6662 = vadd.f32 %v5228, %v6408
      %v6663 = vadd.f32 %v5229, %v6410
      %v6664 = vadd.f32 %v5230, %v6414
      %v6665 = vadd.f32 %v5231, %v6416
      %v6666 = vadd.f32 %v5232, %v6420
      %v6667 = vadd.f32 %v5233, %v6422
      %v6668 = vadd.f32 %v5234, %v6426
      %v6669 = vadd.f32 %v5235, %v6428
      %v6670 = vadd.f32 %v5236, %v6432
      %v6671 = vadd.f32 %v5237, %v6434
      %v6672 = vadd.f32 %v5238, %v6438
      %v6673 = vadd.f32 %v5239, %v6440
      %v6674 = vadd.f32 %v5240, %v6444
      %v6675 = vadd.f32 %v5241, %v6446
      %v6676 = vadd.f32 %v5242, %v6450
      %v6677 = vadd.f32 %v5243, %v6452
      %v6678 = vmax.f32 %v6454, %v6455
      %v6679 = vmax.f32 %v6456, %v6457
      %v6680 = vmax.f32 %v6458, %v6459
      %v6681 = vmax.f32 %v6460, %v6461
      %v6682 = vmax.f32 %v6462, %v6463
      %v6683 = vmax.f32 %v6464, %v6465
      %v6684 = vmax.f32 %v6466, %v6467
      %v6685 = vmax.f32 %v6468, %v6469
      %v6686 = vmax.f32 %v6678, %v6682
      %v6687 = vmax.f32 %v6679, %v6683
      %v6688 = vmax.f32 %v6680, %v6684
      %v6689 = vmax.f32 %v6681, %v6685
      %v6690 = vld [vmem:[%s2] sm:$0x1]
      %v6692 = vlaneseq
      %v6693 = vshrl.u32 %v6692, 7
      %v6694 = vsub.s32 0, %v6693
      %v6695 = vrot.slane %v6690, %v6694
      %v6697 = vadd.f32 %v6686, %v6695
      %v6698 = vadd.f32 %v6687, %v6695
      %v6699 = vadd.f32 %v6688, %v6695
      %v6700 = vadd.f32 %v6689, %v6695
      %v6701 = vmax.f32 %v6697, 0.0
      %v6702 = vmax.f32 %v6698, 0.0
      %v6703 = vmax.f32 %v6699, 0.0
      %v6704 = vmax.f32 %v6700, 0.0
      %6705 = vst [vmem:[#allocation2] sm:$0xff] %v6701
      %6706 = vst [vmem:[#allocation2 + $0x8] sm:$0xff] %v6702
      %6707 = vst [vmem:[#allocation2 + $0x10] sm:$0xff] %v6703
      %6708 = vst [vmem:[#allocation2 + $0x18] sm:$0xff] %v6704
      %v6709 = vmax.f32 %v6470, %v6471
      %v6710 = vmax.f32 %v6472, %v6473
      %v6711 = vmax.f32 %v6474, %v6475
      %v6712 = vmax.f32 %v6476, %v6477
      %v6713 = vmax.f32 %v6478, %v6479
      %v6714 = vmax.f32 %v6480, %v6481
      %v6715 = vmax.f32 %v6482, %v6483
      %v6716 = vmax.f32 %v6484, %v6485
      %v6717 = vmax.f32 %v6709, %v6713
      %v6718 = vmax.f32 %v6710, %v6714
      %v6719 = vmax.f32 %v6711, %v6715
      %v6720 = vmax.f32 %v6712, %v6716
      %v6721 = vld [vmem:[%s2] sm:$0x1]
      %v6723 = vlaneseq
      %v6724 = vshrl.u32 %v6723, 7
      %v6725 = vsub.s32 0, %v6724
      %v6726 = vrot.slane %v6721, %v6725
      %v6728 = vadd.f32 %v6717, %v6726
      %v6729 = vadd.f32 %v6718, %v6726
      %v6730 = vadd.f32 %v6719, %v6726
      %v6731 = vadd.f32 %v6720, %v6726
      %v6732 = vmax.f32 %v6728, 0.0
      %v6733 = vmax.f32 %v6729, 0.0
      %v6734 = vmax.f32 %v6730, 0.0
      %v6735 = vmax.f32 %v6731, 0.0
      %6736 = vst [vmem:[#allocation2 + $0x20] sm:$0xff] %v6732
      %6737 = vst [vmem:[#allocation2 + $0x28] sm:$0xff] %v6733
      %6738 = vst [vmem:[#allocation2 + $0x30] sm:$0xff] %v6734
      %6739 = vst [vmem:[#allocation2 + $0x38] sm:$0xff] %v6735
      %v6740 = vmax.f32 %v6486, %v6487
      %v6741 = vmax.f32 %v6488, %v6489
      %v6742 = vmax.f32 %v6490, %v6491
      %v6743 = vmax.f32 %v6492, %v6493
      %v6744 = vmax.f32 %v6494, %v6495
      %v6745 = vmax.f32 %v6496, %v6497
      %v6746 = vmax.f32 %v6498, %v6499
      %v6747 = vmax.f32 %v6500, %v6501
      %v6748 = vmax.f32 %v6740, %v6744
      %v6749 = vmax.f32 %v6741, %v6745
      %v6750 = vmax.f32 %v6742, %v6746
      %v6751 = vmax.f32 %v6743, %v6747
      %v6752 = vld [vmem:[%s2] sm:$0x1]
      %v6754 = vlaneseq
      %v6755 = vshrl.u32 %v6754, 7
      %v6756 = vsub.s32 0, %v6755
      %v6757 = vrot.slane %v6752, %v6756
      %v6759 = vadd.f32 %v6748, %v6757
      %v6760 = vadd.f32 %v6749, %v6757
      %v6761 = vadd.f32 %v6750, %v6757
      %v6762 = vadd.f32 %v6751, %v6757
      %v6763 = vmax.f32 %v6759, 0.0
      %v6764 = vmax.f32 %v6760, 0.0
      %v6765 = vmax.f32 %v6761, 0.0
      %v6766 = vmax.f32 %v6762, 0.0
      %6767 = vst [vmem:[#allocation2 + $0x40] sm:$0xff] %v6763
      %6768 = vst [vmem:[#allocation2 + $0x48] sm:$0xff] %v6764
      %6769 = vst [vmem:[#allocation2 + $0x50] sm:$0xff] %v6765
      %6770 = vst [vmem:[#allocation2 + $0x58] sm:$0xff] %v6766
      %v6771 = vmax.f32 %v6502, %v6503
      %v6772 = vmax.f32 %v6504, %v6505
      %v6773 = vmax.f32 %v6506, %v6507
      %v6774 = vmax.f32 %v6508, %v6509
      %v6775 = vmax.f32 %v6510, %v6511
      %v6776 = vmax.f32 %v6512, %v6513
      %v6777 = vmax.f32 %v6514, %v6515
      %v6778 = vmax.f32 %v6516, %v6517
      %v6779 = vmax.f32 %v6771, %v6775
      %v6780 = vmax.f32 %v6772, %v6776
      %v6781 = vmax.f32 %v6773, %v6777
      %v6782 = vmax.f32 %v6774, %v6778
      %v6783 = vld [vmem:[%s2] sm:$0x1]
      %v6785 = vlaneseq
      %v6786 = vshrl.u32 %v6785, 7
      %v6787 = vsub.s32 0, %v6786
      %v6788 = vrot.slane %v6783, %v6787
      %v6790 = vadd.f32 %v6779, %v6788
      %v6791 = vadd.f32 %v6780, %v6788
      %v6792 = vadd.f32 %v6781, %v6788
      %v6793 = vadd.f32 %v6782, %v6788
      %v6794 = vmax.f32 %v6790, 0.0
      %v6795 = vmax.f32 %v6791, 0.0
      %v6796 = vmax.f32 %v6792, 0.0
      %v6797 = vmax.f32 %v6793, 0.0
      %6798 = vst [vmem:[#allocation2 + $0x60] sm:$0xff] %v6794
      %6799 = vst [vmem:[#allocation2 + $0x68] sm:$0xff] %v6795
      %6800 = vst [vmem:[#allocation2 + $0x70] sm:$0xff] %v6796
      %6801 = vst [vmem:[#allocation2 + $0x78] sm:$0xff] %v6797
      %v6802 = vmax.f32 %v6518, %v6519
      %v6803 = vmax.f32 %v6520, %v6521
      %v6804 = vmax.f32 %v6522, %v6523
      %v6805 = vmax.f32 %v6524, %v6525
      %v6806 = vmax.f32 %v6526, %v6527
      %v6807 = vmax.f32 %v6528, %v6529
      %v6808 = vmax.f32 %v6530, %v6531
      %v6809 = vmax.f32 %v6532, %v6533
      %v6810 = vmax.f32 %v6802, %v6806
      %v6811 = vmax.f32 %v6803, %v6807
      %v6812 = vmax.f32 %v6804, %v6808
      %v6813 = vmax.f32 %v6805, %v6809
      %v6814 = vld [vmem:[%s2] sm:$0x1]
      %v6816 = vlaneseq
      %v6817 = vshrl.u32 %v6816, 7
      %v6818 = vsub.s32 0, %v6817
      %v6819 = vrot.slane %v6814, %v6818
      %v6821 = vadd.f32 %v6810, %v6819
      %v6822 = vadd.f32 %v6811, %v6819
      %v6823 = vadd.f32 %v6812, %v6819
      %v6824 = vadd.f32 %v6813, %v6819
      %v6825 = vmax.f32 %v6821, 0.0
      %v6826 = vmax.f32 %v6822, 0.0
      %v6827 = vmax.f32 %v6823, 0.0
      %v6828 = vmax.f32 %v6824, 0.0
      %6829 = vst [vmem:[#allocation2 + $0x80] sm:$0xff] %v6825
      %6830 = vst [vmem:[#allocation2 + $0x88] sm:$0xff] %v6826
      %6831 = vst [vmem:[#allocation2 + $0x90] sm:$0xff] %v6827
      %6832 = vst [vmem:[#allocation2 + $0x98] sm:$0xff] %v6828
      %v6833 = vmax.f32 %v6534, %v6535
      %v6834 = vmax.f32 %v6536, %v6537
      %v6835 = vmax.f32 %v6538, %v6539
      %v6836 = vmax.f32 %v6540, %v6541
      %v6837 = vmax.f32 %v6542, %v6543
      %v6838 = vmax.f32 %v6544, %v6545
      %v6839 = vmax.f32 %v6546, %v6547
      %v6840 = vmax.f32 %v6548, %v6549
      %v6841 = vmax.f32 %v6833, %v6837
      %v6842 = vmax.f32 %v6834, %v6838
      %v6843 = vmax.f32 %v6835, %v6839
      %v6844 = vmax.f32 %v6836, %v6840
      %v6845 = vld [vmem:[%s2] sm:$0x1]
      %v6847 = vlaneseq
      %v6848 = vshrl.u32 %v6847, 7
      %v6849 = vsub.s32 0, %v6848
      %v6850 = vrot.slane %v6845, %v6849
      %v6852 = vadd.f32 %v6841, %v6850
      %v6853 = vadd.f32 %v6842, %v6850
      %v6854 = vadd.f32 %v6843, %v6850
      %v6855 = vadd.f32 %v6844, %v6850
      %v6856 = vmax.f32 %v6852, 0.0
      %v6857 = vmax.f32 %v6853, 0.0
      %v6858 = vmax.f32 %v6854, 0.0
      %v6859 = vmax.f32 %v6855, 0.0
      %6860 = vst [vmem:[#allocation2 + $0xa0] sm:$0xff] %v6856
      %6861 = vst [vmem:[#allocation2 + $0xa8] sm:$0xff] %v6857
      %6862 = vst [vmem:[#allocation2 + $0xb0] sm:$0xff] %v6858
      %6863 = vst [vmem:[#allocation2 + $0xb8] sm:$0xff] %v6859
      %v6864 = vmax.f32 %v6550, %v6551
      %v6865 = vmax.f32 %v6552, %v6553
      %v6866 = vmax.f32 %v6554, %v6555
      %v6867 = vmax.f32 %v6556, %v6557
      %v6868 = vmax.f32 %v6558, %v6559
      %v6869 = vmax.f32 %v6560, %v6561
      %v6870 = vmax.f32 %v6562, %v6563
      %v6871 = vmax.f32 %v6564, %v6565
      %v6872 = vmax.f32 %v6864, %v6868
      %v6873 = vmax.f32 %v6865, %v6869
      %v6874 = vmax.f32 %v6866, %v6870
      %v6875 = vmax.f32 %v6867, %v6871
      %v6876 = vld [vmem:[%s2] sm:$0x1]
      %v6878 = vlaneseq
      %v6879 = vshrl.u32 %v6878, 7
      %v6880 = vsub.s32 0, %v6879
      %v6881 = vrot.slane %v6876, %v6880
      %v6883 = vadd.f32 %v6872, %v6881
      %v6884 = vadd.f32 %v6873, %v6881
      %v6885 = vadd.f32 %v6874, %v6881
      %v6886 = vadd.f32 %v6875, %v6881
      %v6887 = vmax.f32 %v6883, 0.0
      %v6888 = vmax.f32 %v6884, 0.0
      %v6889 = vmax.f32 %v6885, 0.0
      %v6890 = vmax.f32 %v6886, 0.0
      %6891 = vst [vmem:[#allocation2 + $0xc0] sm:$0xff] %v6887
      %6892 = vst [vmem:[#allocation2 + $0xc8] sm:$0xff] %v6888
      %6893 = vst [vmem:[#allocation2 + $0xd0] sm:$0xff] %v6889
      %6894 = vst [vmem:[#allocation2 + $0xd8] sm:$0xff] %v6890
      %v6895 = vmax.f32 %v6566, %v6567
      %v6896 = vmax.f32 %v6568, %v6569
      %v6897 = vmax.f32 %v6570, %v6571
      %v6898 = vmax.f32 %v6572, %v6573
      %v6899 = vmax.f32 %v6574, %v6575
      %v6900 = vmax.f32 %v6576, %v6577
      %v6901 = vmax.f32 %v6578, %v6579
      %v6902 = vmax.f32 %v6580, %v6581
      %v6903 = vmax.f32 %v6895, %v6899
      %v6904 = vmax.f32 %v6896, %v6900
      %v6905 = vmax.f32 %v6897, %v6901
      %v6906 = vmax.f32 %v6898, %v6902
      %v6907 = vld [vmem:[%s2] sm:$0x1]
      %v6909 = vlaneseq
      %v6910 = vshrl.u32 %v6909, 7
      %v6911 = vsub.s32 0, %v6910
      %v6912 = vrot.slane %v6907, %v6911
      %v6914 = vadd.f32 %v6903, %v6912
      %v6915 = vadd.f32 %v6904, %v6912
      %v6916 = vadd.f32 %v6905, %v6912
      %v6917 = vadd.f32 %v6906, %v6912
      %v6918 = vmax.f32 %v6914, 0.0
      %v6919 = vmax.f32 %v6915, 0.0
      %v6920 = vmax.f32 %v6916, 0.0
      %v6921 = vmax.f32 %v6917, 0.0
      %6922 = vst [vmem:[#allocation2 + $0xe0] sm:$0xff] %v6918
      %6923 = vst [vmem:[#allocation2 + $0xe8] sm:$0xff] %v6919
      %6924 = vst [vmem:[#allocation2 + $0xf0] sm:$0xff] %v6920
      %6925 = vst [vmem:[#allocation2 + $0xf8] sm:$0xff] %v6921
      %v6926 = vmax.f32 %v6582, %v6583
      %v6927 = vmax.f32 %v6584, %v6585
      %v6928 = vmax.f32 %v6586, %v6587
      %v6929 = vmax.f32 %v6588, %v6589
      %v6930 = vmax.f32 %v6590, %v6591
      %v6931 = vmax.f32 %v6592, %v6593
      %v6932 = vmax.f32 %v6594, %v6595
      %v6933 = vmax.f32 %v6596, %v6597
      %v6934 = vmax.f32 %v6926, %v6930
      %v6935 = vmax.f32 %v6927, %v6931
      %v6936 = vmax.f32 %v6928, %v6932
      %v6937 = vmax.f32 %v6929, %v6933
      %v6938 = vld [vmem:[%s2] sm:$0x1]
      %v6940 = vlaneseq
      %v6941 = vshrl.u32 %v6940, 7
      %v6942 = vsub.s32 0, %v6941
      %v6943 = vrot.slane %v6938, %v6942
      %v6945 = vadd.f32 %v6934, %v6943
      %v6946 = vadd.f32 %v6935, %v6943
      %v6947 = vadd.f32 %v6936, %v6943
      %v6948 = vadd.f32 %v6937, %v6943
      %v6949 = vmax.f32 %v6945, 0.0
      %v6950 = vmax.f32 %v6946, 0.0
      %v6951 = vmax.f32 %v6947, 0.0
      %v6952 = vmax.f32 %v6948, 0.0
      %6953 = vst [vmem:[#allocation2 + $0x100] sm:$0xff] %v6949
      %6954 = vst [vmem:[#allocation2 + $0x108] sm:$0xff] %v6950
      %6955 = vst [vmem:[#allocation2 + $0x110] sm:$0xff] %v6951
      %6956 = vst [vmem:[#allocation2 + $0x118] sm:$0xff] %v6952
      %v6957 = vmax.f32 %v6598, %v6599
      %v6958 = vmax.f32 %v6600, %v6601
      %v6959 = vmax.f32 %v6602, %v6603
      %v6960 = vmax.f32 %v6604, %v6605
      %v6961 = vmax.f32 %v6606, %v6607
      %v6962 = vmax.f32 %v6608, %v6609
      %v6963 = vmax.f32 %v6610, %v6611
      %v6964 = vmax.f32 %v6612, %v6613
      %v6965 = vmax.f32 %v6957, %v6961
      %v6966 = vmax.f32 %v6958, %v6962
      %v6967 = vmax.f32 %v6959, %v6963
      %v6968 = vmax.f32 %v6960, %v6964
      %v6969 = vld [vmem:[%s2] sm:$0x1]
      %v6971 = vlaneseq
      %v6972 = vshrl.u32 %v6971, 7
      %v6973 = vsub.s32 0, %v6972
      %v6974 = vrot.slane %v6969, %v6973
      %v6976 = vadd.f32 %v6965, %v6974
      %v6977 = vadd.f32 %v6966, %v6974
      %v6978 = vadd.f32 %v6967, %v6974
      %v6979 = vadd.f32 %v6968, %v6974
      %v6980 = vmax.f32 %v6976, 0.0
      %v6981 = vmax.f32 %v6977, 0.0
      %v6982 = vmax.f32 %v6978, 0.0
      %v6983 = vmax.f32 %v6979, 0.0
      %6984 = vst [vmem:[#allocation2 + $0x120] sm:$0xff] %v6980
      %6985 = vst [vmem:[#allocation2 + $0x128] sm:$0xff] %v6981
      %6986 = vst [vmem:[#allocation2 + $0x130] sm:$0xff] %v6982
      %6987 = vst [vmem:[#allocation2 + $0x138] sm:$0xff] %v6983
      %v6988 = vmax.f32 %v6614, %v6615
      %v6989 = vmax.f32 %v6616, %v6617
      %v6990 = vmax.f32 %v6618, %v6619
      %v6991 = vmax.f32 %v6620, %v6621
      %v6992 = vmax.f32 %v6622, %v6623
      %v6993 = vmax.f32 %v6624, %v6625
      %v6994 = vmax.f32 %v6626, %v6627
      %v6995 = vmax.f32 %v6628, %v6629
      %v6996 = vmax.f32 %v6988, %v6992
      %v6997 = vmax.f32 %v6989, %v6993
      %v6998 = vmax.f32 %v6990, %v6994
      %v6999 = vmax.f32 %v6991, %v6995
      %v7000 = vld [vmem:[%s2] sm:$0x1]
      %v7002 = vlaneseq
      %v7003 = vshrl.u32 %v7002, 7
      %v7004 = vsub.s32 0, %v7003
      %v7005 = vrot.slane %v7000, %v7004
      %v7007 = vadd.f32 %v6996, %v7005
      %v7008 = vadd.f32 %v6997, %v7005
      %v7009 = vadd.f32 %v6998, %v7005
      %v7010 = vadd.f32 %v6999, %v7005
      %v7011 = vmax.f32 %v7007, 0.0
      %v7012 = vmax.f32 %v7008, 0.0
      %v7013 = vmax.f32 %v7009, 0.0
      %v7014 = vmax.f32 %v7010, 0.0
      %7015 = vst [vmem:[#allocation2 + $0x140] sm:$0xff] %v7011
      %7016 = vst [vmem:[#allocation2 + $0x148] sm:$0xff] %v7012
      %7017 = vst [vmem:[#allocation2 + $0x150] sm:$0xff] %v7013
      %7018 = vst [vmem:[#allocation2 + $0x158] sm:$0xff] %v7014
      %v7019 = vmax.f32 %v6630, %v6631
      %v7020 = vmax.f32 %v6632, %v6633
      %v7021 = vmax.f32 %v6634, %v6635
      %v7022 = vmax.f32 %v6636, %v6637
      %v7023 = vmax.f32 %v6638, %v6639
      %v7024 = vmax.f32 %v6640, %v6641
      %v7025 = vmax.f32 %v6642, %v6643
      %v7026 = vmax.f32 %v6644, %v6645
      %v7027 = vmax.f32 %v7019, %v7023
      %v7028 = vmax.f32 %v7020, %v7024
      %v7029 = vmax.f32 %v7021, %v7025
      %v7030 = vmax.f32 %v7022, %v7026
      %v7031 = vld [vmem:[%s2] sm:$0x1]
      %v7033 = vlaneseq
      %v7034 = vshrl.u32 %v7033, 7
      %v7035 = vsub.s32 0, %v7034
      %v7036 = vrot.slane %v7031, %v7035
      %v7038 = vadd.f32 %v7027, %v7036
      %v7039 = vadd.f32 %v7028, %v7036
      %v7040 = vadd.f32 %v7029, %v7036
      %v7041 = vadd.f32 %v7030, %v7036
      %v7042 = vmax.f32 %v7038, 0.0
      %v7043 = vmax.f32 %v7039, 0.0
      %v7044 = vmax.f32 %v7040, 0.0
      %v7045 = vmax.f32 %v7041, 0.0
      %7046 = vst [vmem:[#allocation2 + $0x160] sm:$0xff] %v7042
      %7047 = vst [vmem:[#allocation2 + $0x168] sm:$0xff] %v7043
      %7048 = vst [vmem:[#allocation2 + $0x170] sm:$0xff] %v7044
      %7049 = vst [vmem:[#allocation2 + $0x178] sm:$0xff] %v7045
      %v7050 = vmax.f32 %v6646, %v6647
      %v7051 = vmax.f32 %v6648, %v6649
      %v7052 = vmax.f32 %v6650, %v6651
      %v7053 = vmax.f32 %v6652, %v6653
      %v7054 = vmax.f32 %v6654, %v6655
      %v7055 = vmax.f32 %v6656, %v6657
      %v7056 = vmax.f32 %v6658, %v6659
      %v7057 = vmax.f32 %v6660, %v6661
      %v7058 = vmax.f32 %v7050, %v7054
      %v7059 = vmax.f32 %v7051, %v7055
      %v7060 = vmax.f32 %v7052, %v7056
      %v7061 = vmax.f32 %v7053, %v7057
      %v7062 = vld [vmem:[%s2] sm:$0x1]
      %v7064 = vlaneseq
      %v7065 = vshrl.u32 %v7064, 7
      %v7066 = vsub.s32 0, %v7065
      %v7067 = vrot.slane %v7062, %v7066
      %v7069 = vadd.f32 %v7058, %v7067
      %v7070 = vadd.f32 %v7059, %v7067
      %v7071 = vadd.f32 %v7060, %v7067
      %v7072 = vadd.f32 %v7061, %v7067
      %v7073 = vmax.f32 %v7069, 0.0
      %v7074 = vmax.f32 %v7070, 0.0
      %v7075 = vmax.f32 %v7071, 0.0
      %v7076 = vmax.f32 %v7072, 0.0
      %7077 = vst [vmem:[#allocation2 + $0x180] sm:$0xff] %v7073
      %7078 = vst [vmem:[#allocation2 + $0x188] sm:$0xff] %v7074
      %7079 = vst [vmem:[#allocation2 + $0x190] sm:$0xff] %v7075
      %7080 = vst [vmem:[#allocation2 + $0x198] sm:$0xff] %v7076
      %v7081 = vmax.f32 %v6662, %v6663
      %v7082 = vmax.f32 %v6664, %v6665
      %v7083 = vmax.f32 %v6666, %v6667
      %v7084 = vmax.f32 %v6668, %v6669
      %v7085 = vmax.f32 %v6670, %v6671
      %v7086 = vmax.f32 %v6672, %v6673
      %v7087 = vmax.f32 %v6674, %v6675
      %v7088 = vmax.f32 %v6676, %v6677
      %v7089 = vmax.f32 %v7081, %v7085
      %v7090 = vmax.f32 %v7082, %v7086
      %v7091 = vmax.f32 %v7083, %v7087
      %v7092 = vmax.f32 %v7084, %v7088
      %v7093 = vld [vmem:[%s2] sm:$0x1]
      %v7095 = vlaneseq
      %v7096 = vshrl.u32 %v7095, 7
      %v7097 = vsub.s32 0, %v7096
      %v7098 = vrot.slane %v7093, %v7097
      %v7100 = vadd.f32 %v7089, %v7098
      %v7101 = vadd.f32 %v7090, %v7098
      %v7102 = vadd.f32 %v7091, %v7098
      %v7103 = vadd.f32 %v7092, %v7098
      %v7104 = vmax.f32 %v7100, 0.0
      %v7105 = vmax.f32 %v7101, 0.0
      %v7106 = vmax.f32 %v7102, 0.0
      %v7107 = vmax.f32 %v7103, 0.0
      %7108 = vst [vmem:[#allocation2 + $0x1a0] sm:$0xff] %v7104
      %7109 = vst [vmem:[#allocation2 + $0x1a8] sm:$0xff] %v7105
      %7110 = vst [vmem:[#allocation2 + $0x1b0] sm:$0xff] %v7106
      %7111 = vst [vmem:[#allocation2 + $0x1b8] sm:$0xff] %v7107
      %v7112 = vld [vmem:[#allocation2] sm:$0xff]
      %v7113 = vld [vmem:[#allocation2 + $0x8] sm:$0xff]
      %v7114 = vld [vmem:[#allocation2 + $0x10] sm:$0xff]
      %v7115 = vld [vmem:[#allocation2 + $0x18] sm:$0xff]
      %v7116 = vld [vmem:[#allocation2 + $0x20] sm:$0xff]
      %v7117 = vld [vmem:[#allocation2 + $0x28] sm:$0xff]
      %v7118 = vld [vmem:[#allocation2 + $0x30] sm:$0xff]
      %v7119 = vld [vmem:[#allocation2 + $0x38] sm:$0xff]
      %v7120 = vld [vmem:[#allocation2 + $0x40] sm:$0xff]
      %v7121 = vld [vmem:[#allocation2 + $0x48] sm:$0xff]
      %v7122 = vld [vmem:[#allocation2 + $0x50] sm:$0xff]
      %v7123 = vld [vmem:[#allocation2 + $0x58] sm:$0xff]
      %v7124 = vld [vmem:[#allocation2 + $0x60] sm:$0xff]
      %v7125 = vld [vmem:[#allocation2 + $0x68] sm:$0xff]
      %v7126 = vld [vmem:[#allocation2 + $0x70] sm:$0xff]
      %v7127 = vld [vmem:[#allocation2 + $0x78] sm:$0xff]
      %v7128 = vld [vmem:[#allocation2 + $0x80] sm:$0xff]
      %v7129 = vld [vmem:[#allocation2 + $0x88] sm:$0xff]
      %v7130 = vld [vmem:[#allocation2 + $0x90] sm:$0xff]
      %v7131 = vld [vmem:[#allocation2 + $0x98] sm:$0xff]
      %v7132 = vld [vmem:[#allocation2 + $0xa0] sm:$0xff]
      %v7133 = vld [vmem:[#allocation2 + $0xa8] sm:$0xff]
      %v7134 = vld [vmem:[#allocation2 + $0xb0] sm:$0xff]
      %v7135 = vld [vmem:[#allocation2 + $0xb8] sm:$0xff]
      %v7136 = vld [vmem:[#allocation2 + $0xc0] sm:$0xff]
      %v7137 = vld [vmem:[#allocation2 + $0xc8] sm:$0xff]
      %v7138 = vld [vmem:[#allocation2 + $0xd0] sm:$0xff]
      %v7139 = vld [vmem:[#allocation2 + $0xd8] sm:$0xff]
      %v7140 = vld [vmem:[#allocation2 + $0xe0] sm:$0xff]
      %v7141 = vld [vmem:[#allocation2 + $0xe8] sm:$0xff]
      %v7142 = vld [vmem:[#allocation2 + $0xf0] sm:$0xff]
      %v7143 = vld [vmem:[#allocation2 + $0xf8] sm:$0xff]
      %v7144 = vld [vmem:[#allocation2 + $0x100] sm:$0xff]
      %v7145 = vld [vmem:[#allocation2 + $0x108] sm:$0xff]
      %v7146 = vld [vmem:[#allocation2 + $0x110] sm:$0xff]
      %v7147 = vld [vmem:[#allocation2 + $0x118] sm:$0xff]
      %v7148 = vld [vmem:[#allocation2 + $0x120] sm:$0xff]
      %v7149 = vld [vmem:[#allocation2 + $0x128] sm:$0xff]
      %v7150 = vld [vmem:[#allocation2 + $0x130] sm:$0xff]
      %v7151 = vld [vmem:[#allocation2 + $0x138] sm:$0xff]
      %v7152 = vld [vmem:[%s3] sm:$0xff]
      %v7153 = vld [vmem:[%s3 + $0x8] sm:$0xff]
      %v7154 = vld [vmem:[%s3 + $0x10] sm:$0xff]
      %v7155 = vld [vmem:[%s3 + $0x18] sm:$0xff]
      %v7156 = vld [vmem:[%s3 + $0x20] sm:$0xff]
      %v7157 = vld [vmem:[%s3 + $0x28] sm:$0xff]
      %v7158 = vld [vmem:[%s3 + $0x30] sm:$0xff]
      %v7159 = vld [vmem:[%s3 + $0x38] sm:$0xff]
      %v7160 = vld [vmem:[%s3 + $0x40] sm:$0xff]
      %v7161 = vld [vmem:[%s3 + $0x48] sm:$0xff]
      %v7162 = vld [vmem:[%s3 + $0x50] sm:$0xff]
      %v7163 = vld [vmem:[%s3 + $0x58] sm:$0xff]
      %v7164 = vld [vmem:[%s3 + $0x60] sm:$0xff]
      %v7165 = vld [vmem:[%s3 + $0x68] sm:$0xff]
      %v7166 = vld [vmem:[%s3 + $0x70] sm:$0xff]
      %v7167 = vld [vmem:[%s3 + $0x78] sm:$0xff]
      %v7168 = vld [vmem:[%s3 + $0x80] sm:$0xff]
      %v7169 = vld [vmem:[%s3 + $0x88] sm:$0xff]
      %v7170 = vld [vmem:[%s3 + $0x90] sm:$0xff]
      %v7171 = vld [vmem:[%s3 + $0x98] sm:$0xff]
      %v7172 = vld [vmem:[%s3 + $0xa0] sm:$0xff]
      %v7173 = vld [vmem:[%s3 + $0xa8] sm:$0xff]
      %v7174 = vld [vmem:[%s3 + $0xb0] sm:$0xff]
      %v7175 = vld [vmem:[%s3 + $0xb8] sm:$0xff]
      %v7176 = vld [vmem:[%s3 + $0xc0] sm:$0xff]
      %v7177 = vld [vmem:[%s3 + $0xc8] sm:$0xff]
      %v7178 = vld [vmem:[%s3 + $0xd0] sm:$0xff]
      %v7179 = vld [vmem:[%s3 + $0xd8] sm:$0xff]
      %v7180 = vld [vmem:[%s3 + $0xe0] sm:$0xff]
      %v7181 = vld [vmem:[%s3 + $0xe8] sm:$0xff]
      %v7182 = vld [vmem:[%s3 + $0xf0] sm:$0xff]
      %v7183 = vld [vmem:[%s3 + $0xf8] sm:$0xff]
      %v7184 = vld [vmem:[#allocation2 + $0x140] sm:$0xff]
      %v7185 = vld [vmem:[#allocation2 + $0x148] sm:$0xff]
      %v7186 = vld [vmem:[#allocation2 + $0x150] sm:$0xff]
      %v7187 = vld [vmem:[#allocation2 + $0x158] sm:$0xff]
      %s7188 = scalar_lea.vmem %s3, 256
      %v7189 = vld [vmem:[%s7188] sm:$0xff]
      %v7190 = vld [vmem:[%s7188 + $0x8] sm:$0xff]
      %v7191 = vld [vmem:[%s7188 + $0x10] sm:$0xff]
      %v7192 = vld [vmem:[%s7188 + $0x18] sm:$0xff]
      %v7193 = vld [vmem:[%s7188 + $0x20] sm:$0xff]
      %v7194 = vld [vmem:[%s7188 + $0x28] sm:$0xff]
      %v7195 = vld [vmem:[%s7188 + $0x30] sm:$0xff]
      %v7196 = vld [vmem:[%s7188 + $0x38] sm:$0xff]
      %v7197 = vld [vmem:[%s7188 + $0x40] sm:$0xff]
      %v7198 = vld [vmem:[%s7188 + $0x48] sm:$0xff]
      %v7199 = vld [vmem:[%s7188 + $0x50] sm:$0xff]
      %v7200 = vld [vmem:[%s7188 + $0x58] sm:$0xff]
      %v7201 = vld [vmem:[%s7188 + $0x60] sm:$0xff]
      %v7202 = vld [vmem:[%s7188 + $0x68] sm:$0xff]
      %v7203 = vld [vmem:[%s7188 + $0x70] sm:$0xff]
      %v7204 = vld [vmem:[%s7188 + $0x78] sm:$0xff]
      %v7205 = vld [vmem:[%s7188 + $0x80] sm:$0xff]
      %v7206 = vld [vmem:[%s7188 + $0x88] sm:$0xff]
      %v7207 = vld [vmem:[%s7188 + $0x90] sm:$0xff]
      %v7208 = vld [vmem:[%s7188 + $0x98] sm:$0xff]
      %v7209 = vld [vmem:[%s7188 + $0xa0] sm:$0xff]
      %v7210 = vld [vmem:[%s7188 + $0xa8] sm:$0xff]
      %v7211 = vld [vmem:[%s7188 + $0xb0] sm:$0xff]
      %v7212 = vld [vmem:[%s7188 + $0xb8] sm:$0xff]
      %v7213 = vld [vmem:[%s7188 + $0xc0] sm:$0xff]
      %v7214 = vld [vmem:[%s7188 + $0xc8] sm:$0xff]
      %v7215 = vld [vmem:[%s7188 + $0xd0] sm:$0xff]
      %v7216 = vld [vmem:[%s7188 + $0xd8] sm:$0xff]
      %v7217 = vld [vmem:[%s7188 + $0xe0] sm:$0xff]
      %v7218 = vld [vmem:[%s7188 + $0xe8] sm:$0xff]
      %v7219 = vld [vmem:[%s7188 + $0xf0] sm:$0xff]
      %v7220 = vld [vmem:[%s7188 + $0xf8] sm:$0xff]
      %7221 = vmatprep.subr.mxu0 %v7190
      %7222 = vmatpush1.msra.mxu0 %v7189
      %7223 = vmatprep.subr.mxu0 %v7192
      %7224 = vmatpush1.msra.mxu0 %v7191
      %7225 = vmatprep.subr.mxu0 %v7194
      %7226 = vmatpush1.msra.mxu0 %v7193
      %7227 = vmatprep.subr.mxu0 %v7196
      %7228 = vmatpush1.msra.mxu0 %v7195
      %7229 = vmatprep.subr.mxu0 %v7198
      %7230 = vmatpush1.msra.mxu0 %v7197
      %7231 = vmatprep.subr.mxu0 %v7200
      %7232 = vmatpush1.msra.mxu0 %v7199
      %7233 = vmatprep.subr.mxu0 %v7202
      %7234 = vmatpush1.msra.mxu0 %v7201
      %7235 = vmatprep.subr.mxu0 %v7204
      %7236 = vmatpush1.msra.mxu0 %v7203
      %7237 = vmatprep.subr.mxu0 %v7206
      %7238 = vmatpush1.msra.mxu0 %v7205
      %7239 = vmatprep.subr.mxu0 %v7208
      %7240 = vmatpush1.msra.mxu0 %v7207
      %7241 = vmatprep.subr.mxu0 %v7210
      %7242 = vmatpush1.msra.mxu0 %v7209
      %7243 = vmatprep.subr.mxu0 %v7212
      %7244 = vmatpush1.msra.mxu0 %v7211
      %7245 = vmatprep.subr.mxu0 %v7214
      %7246 = vmatpush1.msra.mxu0 %v7213
      %7247 = vmatprep.subr.mxu0 %v7216
      %7248 = vmatpush1.msra.mxu0 %v7215
      %7249 = vmatprep.subr.mxu0 %v7218
      %7250 = vmatpush1.msra.mxu0 %v7217
      %7251 = vmatprep.subr.mxu0 %v7220
      %7252 = vmatpush1.msra.mxu0 %v7219
      %7253 = vmatprep.subr.mxu0 0.0
      %7254 = vmatpush1.msra.mxu0 0.0
      %7255 = vmatprep.subr.mxu0 0.0
      %7256 = vmatpush1.msra.mxu0 0.0
      %7257 = vmatprep.subr.mxu0 0.0
      %7258 = vmatpush1.msra.mxu0 0.0
      %7259 = vmatprep.subr.mxu0 0.0
      %7260 = vmatpush1.msra.mxu0 0.0
      %7261 = vmatprep.subr.mxu0 0.0
      %7262 = vmatpush1.msra.mxu0 0.0
      %7263 = vmatprep.subr.mxu0 0.0
      %7264 = vmatpush1.msra.mxu0 0.0
      %7265 = vmatprep.subr.mxu0 0.0
      %7266 = vmatpush1.msra.mxu0 0.0
      %7267 = vmatprep.subr.mxu0 0.0
      %7268 = vmatpush1.msra.mxu0 0.0
      %7269 = vmatprep.subr.mxu0 0.0
      %7270 = vmatpush1.msra.mxu0 0.0
      %7271 = vmatprep.subr.mxu0 0.0
      %7272 = vmatpush1.msra.mxu0 0.0
      %7273 = vmatprep.subr.mxu0 0.0
      %7274 = vmatpush1.msra.mxu0 0.0
      %7275 = vmatprep.subr.mxu0 0.0
      %7276 = vmatpush1.msra.mxu0 0.0
      %7277 = vmatprep.subr.mxu0 0.0
      %7278 = vmatpush1.msra.mxu0 0.0
      %7279 = vmatprep.subr.mxu0 0.0
      %7280 = vmatpush1.msra.mxu0 0.0
      %7281 = vmatprep.subr.mxu0 0.0
      %7282 = vmatpush1.msra.mxu0 0.0
      %7283 = vmatprep.subr.mxu0 0.0
      %7284 = vmatpush1.msra.mxu0 0.0
      %7285 = vmatprep.mubr.f32.mxu0 0.0
      %7286 = vmatmul.mubr.f32.gmra.mrb[0].mxu0 %v7116
      %v7287 = vpop.f32.mrb[0].mxu0
      %v7288 = vadd.f32 0.0, %v7287
      %v7289 = vpop.f32.mrb[0].mxu0
      %v7290 = vadd.f32 0.0, %v7289
      %7291 = vmatprep.mubr.f32.mxu0 0.0
      %7292 = vmatmul.mubr.f32.gmra.mrb[0].mxu0 %v7117
      %v7293 = vpop.f32.mrb[0].mxu0
      %v7294 = vadd.f32 0.0, %v7293
      %v7295 = vpop.f32.mrb[0].mxu0
      %v7296 = vadd.f32 0.0, %v7295
      %7297 = vmatprep.mubr.f32.mxu0 0.0
      %7298 = vmatmul.mubr.f32.gmra.mrb[0].mxu0 %v7118
      %v7299 = vpop.f32.mrb[0].mxu0
      %v7300 = vadd.f32 0.0, %v7299
      %v7301 = vpop.f32.mrb[0].mxu0
      %v7302 = vadd.f32 0.0, %v7301
      %7303 = vmatprep.mubr.f32.mxu0 0.0
      %7304 = vmatmul.mubr.f32.gmra.mrb[0].mxu0 %v7119
      %v7305 = vpop.f32.mrb[0].mxu0
      %v7306 = vadd.f32 0.0, %v7305
      %v7307 = vpop.f32.mrb[0].mxu0
      %v7308 = vadd.f32 0.0, %v7307
      %7309 = vmatprep.mubr.f32.mxu0 0.0
      %7310 = vmatmul.mubr.f32.gmra.mrb[0].mxu0 %v7120
      %v7311 = vpop.f32.mrb[0].mxu0
      %v7312 = vadd.f32 0.0, %v7311
      %v7313 = vpop.f32.mrb[0].mxu0
      %v7314 = vadd.f32 0.0, %v7313
      %7315 = vmatprep.mubr.f32.mxu0 0.0
      %7316 = vmatmul.mubr.f32.gmra.mrb[0].mxu0 %v7121
      %v7317 = vpop.f32.mrb[0].mxu0
      %v7318 = vadd.f32 0.0, %v7317
      %v7319 = vpop.f32.mrb[0].mxu0
      %v7320 = vadd.f32 0.0, %v7319
      %7321 = vmatprep.mubr.f32.mxu0 0.0
      %7322 = vmatmul.mubr.f32.gmra.mrb[0].mxu0 %v7122
      %v7323 = vpop.f32.mrb[0].mxu0
      %v7324 = vadd.f32 0.0, %v7323
      %v7325 = vpop.f32.mrb[0].mxu0
      %v7326 = vadd.f32 0.0, %v7325
      %7327 = vmatprep.mubr.f32.mxu0 0.0
      %7328 = vmatmul.mubr.f32.gmra.mrb[0].mxu0 %v7123
      %v7329 = vpop.f32.mrb[0].mxu0
      %v7330 = vadd.f32 0.0, %v7329
      %v7331 = vpop.f32.mrb[0].mxu0
      %v7332 = vadd.f32 0.0, %v7331
      %7333 = vmatprep.mubr.f32.mxu0 0.0
      %7334 = vmatmul.mubr.f32.gmra.mrb[0].mxu0 %v7124
      %v7335 = vpop.f32.mrb[0].mxu0
      %v7336 = vadd.f32 0.0, %v7335
      %v7337 = vpop.f32.mrb[0].mxu0
      %v7338 = vadd.f32 0.0, %v7337
      %7339 = vmatprep.mubr.f32.mxu0 0.0
      %7340 = vmatmul.mubr.f32.gmra.mrb[0].mxu0 %v7125
      %v7341 = vpop.f32.mrb[0].mxu0
      %v7342 = vadd.f32 0.0, %v7341
      %v7343 = vpop.f32.mrb[0].mxu0
      %v7344 = vadd.f32 0.0, %v7343
      %7345 = vmatprep.mubr.f32.mxu0 0.0
      %7346 = vmatmul.mubr.f32.gmra.mrb[0].mxu0 %v7126
      %v7347 = vpop.f32.mrb[0].mxu0
      %v7348 = vadd.f32 0.0, %v7347
      %v7349 = vpop.f32.mrb[0].mxu0
      %v7350 = vadd.f32 0.0, %v7349
      %7351 = vmatprep.mubr.f32.mxu0 0.0
      %7352 = vmatmul.mubr.f32.gmra.mrb[0].mxu0 %v7127
      %v7353 = vpop.f32.mrb[0].mxu0
      %v7354 = vadd.f32 0.0, %v7353
      %v7355 = vpop.f32.mrb[0].mxu0
      %v7356 = vadd.f32 0.0, %v7355
      %7357 = vmatprep.mubr.f32.mxu0 0.0
      %7358 = vmatmul.mubr.f32.gmra.mrb[0].mxu0 %v7128
      %v7359 = vpop.f32.mrb[0].mxu0
      %v7360 = vadd.f32 0.0, %v7359
      %v7361 = vpop.f32.mrb[0].mxu0
      %v7362 = vadd.f32 0.0, %v7361
      %7363 = vmatprep.mubr.f32.mxu0 0.0
      %7364 = vmatmul.mubr.f32.gmra.mrb[0].mxu0 %v7129
      %v7365 = vpop.f32.mrb[0].mxu0
      %v7366 = vadd.f32 0.0, %v7365
      %v7367 = vpop.f32.mrb[0].mxu0
      %v7368 = vadd.f32 0.0, %v7367
      %7369 = vmatprep.mubr.f32.mxu0 0.0
      %7370 = vmatmul.mubr.f32.gmra.mrb[0].mxu0 %v7130
      %v7371 = vpop.f32.mrb[0].mxu0
      %v7372 = vadd.f32 0.0, %v7371
      %v7373 = vpop.f32.mrb[0].mxu0
      %v7374 = vadd.f32 0.0, %v7373
      %7375 = vmatprep.mubr.f32.mxu0 0.0
      %7376 = vmatmul.mubr.f32.gmra.mrb[0].mxu0 %v7131
      %v7377 = vpop.f32.mrb[0].mxu0
      %v7378 = vadd.f32 0.0, %v7377
      %v7379 = vpop.f32.mrb[0].mxu0
      %v7380 = vadd.f32 0.0, %v7379
      %7381 = vmatprep.mubr.f32.mxu0 0.0
      %7382 = vmatmul.mubr.f32.gmra.mrb[0].mxu0 %v7132
      %v7383 = vpop.f32.mrb[0].mxu0
      %v7384 = vadd.f32 0.0, %v7383
      %v7385 = vpop.f32.mrb[0].mxu0
      %v7386 = vadd.f32 0.0, %v7385
      %7387 = vmatprep.mubr.f32.mxu0 0.0
      %7388 = vmatmul.mubr.f32.gmra.mrb[0].mxu0 %v7133
      %v7389 = vpop.f32.mrb[0].mxu0
      %v7390 = vadd.f32 0.0, %v7389
      %v7391 = vpop.f32.mrb[0].mxu0
      %v7392 = vadd.f32 0.0, %v7391
      %7393 = vmatprep.mubr.f32.mxu0 0.0
      %7394 = vmatmul.mubr.f32.gmra.mrb[0].mxu0 %v7134
      %v7395 = vpop.f32.mrb[0].mxu0
      %v7396 = vadd.f32 0.0, %v7395
      %v7397 = vpop.f32.mrb[0].mxu0
      %v7398 = vadd.f32 0.0, %v7397
      %7399 = vmatprep.mubr.f32.mxu0 0.0
      %7400 = vmatmul.mubr.f32.gmra.mrb[0].mxu0 %v7135
      %v7401 = vpop.f32.mrb[0].mxu0
      %v7402 = vadd.f32 0.0, %v7401
      %v7403 = vpop.f32.mrb[0].mxu0
      %v7404 = vadd.f32 0.0, %v7403
      %7405 = vmatprep.mubr.f32.mxu0 0.0
      %7406 = vmatmul.mubr.f32.gmra.mrb[0].mxu0 %v7136
      %v7407 = vpop.f32.mrb[0].mxu0
      %v7408 = vadd.f32 0.0, %v7407
      %v7409 = vpop.f32.mrb[0].mxu0
      %v7410 = vadd.f32 0.0, %v7409
      %7411 = vmatprep.mubr.f32.mxu0 0.0
      %7412 = vmatmul.mubr.f32.gmra.mrb[0].mxu0 %v7137
      %v7413 = vpop.f32.mrb[0].mxu0
      %v7414 = vadd.f32 0.0, %v7413
      %v7415 = vpop.f32.mrb[0].mxu0
      %v7416 = vadd.f32 0.0, %v7415
      %7417 = vmatprep.mubr.f32.mxu0 0.0
      %7418 = vmatmul.mubr.f32.gmra.mrb[0].mxu0 %v7138
      %v7419 = vpop.f32.mrb[0].mxu0
      %v7420 = vadd.f32 0.0, %v7419
      %v7421 = vpop.f32.mrb[0].mxu0
      %v7422 = vadd.f32 0.0, %v7421
      %7423 = vmatprep.mubr.f32.mxu0 0.0
      %7424 = vmatmul.mubr.f32.gmra.mrb[0].mxu0 %v7139
      %v7425 = vpop.f32.mrb[0].mxu0
      %v7426 = vadd.f32 0.0, %v7425
      %v7427 = vpop.f32.mrb[0].mxu0
      %v7428 = vadd.f32 0.0, %v7427
      %7429 = vmatprep.mubr.f32.mxu0 0.0
      %7430 = vmatmul.mubr.f32.gmra.mrb[0].mxu0 %v7140
      %v7431 = vpop.f32.mrb[0].mxu0
      %v7432 = vadd.f32 0.0, %v7431
      %v7433 = vpop.f32.mrb[0].mxu0
      %v7434 = vadd.f32 0.0, %v7433
      %7435 = vmatprep.mubr.f32.mxu0 0.0
      %7436 = vmatmul.mubr.f32.gmra.mrb[0].mxu0 %v7141
      %v7437 = vpop.f32.mrb[0].mxu0
      %v7438 = vadd.f32 0.0, %v7437
      %v7439 = vpop.f32.mrb[0].mxu0
      %v7440 = vadd.f32 0.0, %v7439
      %7441 = vmatprep.mubr.f32.mxu0 0.0
      %7442 = vmatmul.mubr.f32.gmra.mrb[0].mxu0 %v7142
      %v7443 = vpop.f32.mrb[0].mxu0
      %v7444 = vadd.f32 0.0, %v7443
      %v7445 = vpop.f32.mrb[0].mxu0
      %v7446 = vadd.f32 0.0, %v7445
      %7447 = vmatprep.mubr.f32.mxu0 0.0
      %7448 = vmatmul.mubr.f32.gmra.mrb[0].mxu0 %v7143
      %v7449 = vpop.f32.mrb[0].mxu0
      %v7450 = vadd.f32 0.0, %v7449
      %v7451 = vpop.f32.mrb[0].mxu0
      %v7452 = vadd.f32 0.0, %v7451
      %7453 = vmatprep.mubr.f32.mxu0 0.0
      %7454 = vmatmul.mubr.f32.gmra.mrb[0].mxu0 %v7144
      %v7455 = vpop.f32.mrb[0].mxu0
      %v7456 = vadd.f32 0.0, %v7455
      %v7457 = vpop.f32.mrb[0].mxu0
      %v7458 = vadd.f32 0.0, %v7457
      %7459 = vmatprep.mubr.f32.mxu0 0.0
      %7460 = vmatmul.mubr.f32.gmra.mrb[0].mxu0 %v7145
      %v7461 = vpop.f32.mrb[0].mxu0
      %v7462 = vadd.f32 0.0, %v7461
      %v7463 = vpop.f32.mrb[0].mxu0
      %v7464 = vadd.f32 0.0, %v7463
      %7465 = vmatprep.mubr.f32.mxu0 0.0
      %7466 = vmatmul.mubr.f32.gmra.mrb[0].mxu0 %v7146
      %v7467 = vpop.f32.mrb[0].mxu0
      %v7468 = vadd.f32 0.0, %v7467
      %v7469 = vpop.f32.mrb[0].mxu0
      %v7470 = vadd.f32 0.0, %v7469
      %7471 = vmatprep.mubr.f32.mxu0 0.0
      %7472 = vmatmul.mubr.f32.gmra.mrb[0].mxu0 %v7147
      %v7473 = vpop.f32.mrb[0].mxu0
      %v7474 = vadd.f32 0.0, %v7473
      %v7475 = vpop.f32.mrb[0].mxu0
      %v7476 = vadd.f32 0.0, %v7475
      %7477 = vmatprep.mubr.f32.mxu0 0.0
      %7478 = vmatmul.mubr.f32.gmra.mrb[0].mxu0 %v7148
      %v7479 = vpop.f32.mrb[0].mxu0
      %v7480 = vadd.f32 0.0, %v7479
      %v7481 = vpop.f32.mrb[0].mxu0
      %v7482 = vadd.f32 0.0, %v7481
      %7483 = vmatprep.mubr.f32.mxu0 0.0
      %7484 = vmatmul.mubr.f32.gmra.mrb[0].mxu0 %v7149
      %v7485 = vpop.f32.mrb[0].mxu0
      %v7486 = vadd.f32 0.0, %v7485
      %v7487 = vpop.f32.mrb[0].mxu0
      %v7488 = vadd.f32 0.0, %v7487
      %7489 = vmatprep.mubr.f32.mxu0 0.0
      %7490 = vmatmul.mubr.f32.gmra.mrb[0].mxu0 %v7150
      %v7491 = vpop.f32.mrb[0].mxu0
      %v7492 = vadd.f32 0.0, %v7491
      %v7493 = vpop.f32.mrb[0].mxu0
      %v7494 = vadd.f32 0.0, %v7493
      %7495 = vmatprep.mubr.f32.mxu0 0.0
      %7496 = vmatmul.mubr.f32.gmra.mrb[0].mxu0 %v7151
      %v7497 = vpop.f32.mrb[0].mxu0
      %v7498 = vadd.f32 0.0, %v7497
      %v7499 = vpop.f32.mrb[0].mxu0
      %v7500 = vadd.f32 0.0, %v7499
      %7501 = vmatprep.mubr.f32.mxu0 0.0
      %7502 = vmatmul.mubr.f32.gmra.mrb[0].mxu0 %v7184
      %v7503 = vpop.f32.mrb[0].mxu0
      %v7504 = vadd.f32 0.0, %v7503
      %v7505 = vpop.f32.mrb[0].mxu0
      %v7506 = vadd.f32 0.0, %v7505
      %7507 = vmatprep.mubr.f32.mxu0 0.0
      %7508 = vmatmul.mubr.f32.gmra.mrb[0].mxu0 %v7185
      %v7509 = vpop.f32.mrb[0].mxu0
      %v7510 = vadd.f32 0.0, %v7509
      %v7511 = vpop.f32.mrb[0].mxu0
      %v7512 = vadd.f32 0.0, %v7511
      %7513 = vmatprep.mubr.f32.mxu0 0.0
      %7514 = vmatmul.mubr.f32.gmra.mrb[0].mxu0 %v7186
      %v7515 = vpop.f32.mrb[0].mxu0
      %v7516 = vadd.f32 0.0, %v7515
      %v7517 = vpop.f32.mrb[0].mxu0
      %v7518 = vadd.f32 0.0, %v7517
      %7519 = vmatprep.mubr.f32.mxu0 0.0
      %7520 = vmatmul.mubr.f32.gmra.mrb[0].mxu0 %v7187
      %v7521 = vpop.f32.mrb[0].mxu0
      %v7522 = vadd.f32 0.0, %v7521
      %v7523 = vpop.f32.mrb[0].mxu0
      %v7524 = vadd.f32 0.0, %v7523
      %7525 = vdwg.mxu0
      %7526 = vmatprep.subr.mxu0 %v7153
      %7527 = vmatpush1.msra.mxu0 %v7152
      %7528 = vmatprep.subr.mxu0 %v7155
      %7529 = vmatpush1.msra.mxu0 %v7154
      %7530 = vmatprep.subr.mxu0 %v7157
      %7531 = vmatpush1.msra.mxu0 %v7156
      %7532 = vmatprep.subr.mxu0 %v7159
      %7533 = vmatpush1.msra.mxu0 %v7158
      %7534 = vmatprep.subr.mxu0 %v7161
      %7535 = vmatpush1.msra.mxu0 %v7160
      %7536 = vmatprep.subr.mxu0 %v7163
      %7537 = vmatpush1.msra.mxu0 %v7162
      %7538 = vmatprep.subr.mxu0 %v7165
      %7539 = vmatpush1.msra.mxu0 %v7164
      %7540 = vmatprep.subr.mxu0 %v7167
      %7541 = vmatpush1.msra.mxu0 %v7166
      %7542 = vmatprep.subr.mxu0 %v7169
      %7543 = vmatpush1.msra.mxu0 %v7168
      %7544 = vmatprep.subr.mxu0 %v7171
      %7545 = vmatpush1.msra.mxu0 %v7170
      %7546 = vmatprep.subr.mxu0 %v7173
      %7547 = vmatpush1.msra.mxu0 %v7172
      %7548 = vmatprep.subr.mxu0 %v7175
      %7549 = vmatpush1.msra.mxu0 %v7174
      %7550 = vmatprep.subr.mxu0 %v7177
      %7551 = vmatpush1.msra.mxu0 %v7176
      %7552 = vmatprep.subr.mxu0 %v7179
      %7553 = vmatpush1.msra.mxu0 %v7178
      %7554 = vmatprep.subr.mxu0 %v7181
      %7555 = vmatpush1.msra.mxu0 %v7180
      %7556 = vmatprep.subr.mxu0 %v7183
      %7557 = vmatpush1.msra.mxu0 %v7182
      %7558 = vmatprep.subr.mxu0 0.0
      %7559 = vmatpush1.msra.mxu0 0.0
      %7560 = vmatprep.subr.mxu0 0.0
      %7561 = vmatpush1.msra.mxu0 0.0
      %7562 = vmatprep.subr.mxu0 0.0
      %7563 = vmatpush1.msra.mxu0 0.0
      %7564 = vmatprep.subr.mxu0 0.0
      %7565 = vmatpush1.msra.mxu0 0.0
      %7566 = vmatprep.subr.mxu0 0.0
      %7567 = vmatpush1.msra.mxu0 0.0
      %7568 = vmatprep.subr.mxu0 0.0
      %7569 = vmatpush1.msra.mxu0 0.0
      %7570 = vmatprep.subr.mxu0 0.0
      %7571 = vmatpush1.msra.mxu0 0.0
      %7572 = vmatprep.subr.mxu0 0.0
      %7573 = vmatpush1.msra.mxu0 0.0
      %7574 = vmatprep.subr.mxu0 0.0
      %7575 = vmatpush1.msra.mxu0 0.0
      %7576 = vmatprep.subr.mxu0 0.0
      %7577 = vmatpush1.msra.mxu0 0.0
      %7578 = vmatprep.subr.mxu0 0.0
      %7579 = vmatpush1.msra.mxu0 0.0
      %7580 = vmatprep.subr.mxu0 0.0
      %7581 = vmatpush1.msra.mxu0 0.0
      %7582 = vmatprep.subr.mxu0 0.0
      %7583 = vmatpush1.msra.mxu0 0.0
      %7584 = vmatprep.subr.mxu0 0.0
      %7585 = vmatpush1.msra.mxu0 0.0
      %7586 = vmatprep.subr.mxu0 0.0
      %7587 = vmatpush1.msra.mxu0 0.0
      %7588 = vmatprep.subr.mxu0 0.0
      %7589 = vmatpush1.msra.mxu0 0.0
      %7590 = vmatprep.mubr.f32.mxu0 0.0
      %7591 = vmatmul.mubr.f32.gmra.mrb[0].mxu0 %v7112
      %v7592 = vpop.f32.mrb[0].mxu0
      %v7593 = vadd.f32 %v7288, %v7592
      %v7594 = vpop.f32.mrb[0].mxu0
      %v7595 = vadd.f32 %v7290, %v7594
      %7596 = vmatprep.mubr.f32.mxu0 0.0
      %7597 = vmatmul.mubr.f32.gmra.mrb[0].mxu0 %v7113
      %v7598 = vpop.f32.mrb[0].mxu0
      %v7599 = vadd.f32 %v7294, %v7598
      %v7600 = vpop.f32.mrb[0].mxu0
      %v7601 = vadd.f32 %v7296, %v7600
      %7602 = vmatprep.mubr.f32.mxu0 0.0
      %7603 = vmatmul.mubr.f32.gmra.mrb[0].mxu0 %v7114
      %v7604 = vpop.f32.mrb[0].mxu0
      %v7605 = vadd.f32 %v7300, %v7604
      %v7606 = vpop.f32.mrb[0].mxu0
      %v7607 = vadd.f32 %v7302, %v7606
      %7608 = vmatprep.mubr.f32.mxu0 0.0
      %7609 = vmatmul.mubr.f32.gmra.mrb[0].mxu0 %v7115
      %v7610 = vpop.f32.mrb[0].mxu0
      %v7611 = vadd.f32 %v7306, %v7610
      %v7612 = vpop.f32.mrb[0].mxu0
      %v7613 = vadd.f32 %v7308, %v7612
      %7614 = vmatprep.mubr.f32.mxu0 0.0
      %7615 = vmatmul.mubr.f32.gmra.mrb[0].mxu0 %v7116
      %v7616 = vpop.f32.mrb[0].mxu0
      %v7617 = vadd.f32 %v7312, %v7616
      %v7618 = vpop.f32.mrb[0].mxu0
      %v7619 = vadd.f32 %v7314, %v7618
      %7620 = vmatprep.mubr.f32.mxu0 0.0
      %7621 = vmatmul.mubr.f32.gmra.mrb[0].mxu0 %v7117
      %v7622 = vpop.f32.mrb[0].mxu0
      %v7623 = vadd.f32 %v7318, %v7622
      %v7624 = vpop.f32.mrb[0].mxu0
      %v7625 = vadd.f32 %v7320, %v7624
      %7626 = vmatprep.mubr.f32.mxu0 0.0
      %7627 = vmatmul.mubr.f32.gmra.mrb[0].mxu0 %v7118
      %v7628 = vpop.f32.mrb[0].mxu0
      %v7629 = vadd.f32 %v7324, %v7628
      %v7630 = vpop.f32.mrb[0].mxu0
      %v7631 = vadd.f32 %v7326, %v7630
      %7632 = vmatprep.mubr.f32.mxu0 0.0
      %7633 = vmatmul.mubr.f32.gmra.mrb[0].mxu0 %v7119
      %v7634 = vpop.f32.mrb[0].mxu0
      %v7635 = vadd.f32 %v7330, %v7634
      %v7636 = vpop.f32.mrb[0].mxu0
      %v7637 = vadd.f32 %v7332, %v7636
      %7638 = vmatprep.mubr.f32.mxu0 0.0
      %7639 = vmatmul.mubr.f32.gmra.mrb[0].mxu0 %v7120
      %v7640 = vpop.f32.mrb[0].mxu0
      %v7641 = vadd.f32 %v7336, %v7640
      %v7642 = vpop.f32.mrb[0].mxu0
      %v7643 = vadd.f32 %v7338, %v7642
      %7644 = vmatprep.mubr.f32.mxu0 0.0
      %7645 = vmatmul.mubr.f32.gmra.mrb[0].mxu0 %v7121
      %v7646 = vpop.f32.mrb[0].mxu0
      %v7647 = vadd.f32 %v7342, %v7646
      %v7648 = vpop.f32.mrb[0].mxu0
      %v7649 = vadd.f32 %v7344, %v7648
      %7650 = vmatprep.mubr.f32.mxu0 0.0
      %7651 = vmatmul.mubr.f32.gmra.mrb[0].mxu0 %v7122
      %v7652 = vpop.f32.mrb[0].mxu0
      %v7653 = vadd.f32 %v7348, %v7652
      %v7654 = vpop.f32.mrb[0].mxu0
      %v7655 = vadd.f32 %v7350, %v7654
      %7656 = vmatprep.mubr.f32.mxu0 0.0
      %7657 = vmatmul.mubr.f32.gmra.mrb[0].mxu0 %v7123
      %v7658 = vpop.f32.mrb[0].mxu0
      %v7659 = vadd.f32 %v7354, %v7658
      %v7660 = vpop.f32.mrb[0].mxu0
      %v7661 = vadd.f32 %v7356, %v7660
      %7662 = vmatprep.mubr.f32.mxu0 0.0
      %7663 = vmatmul.mubr.f32.gmra.mrb[0].mxu0 %v7124
      %v7664 = vpop.f32.mrb[0].mxu0
      %v7665 = vadd.f32 %v7360, %v7664
      %v7666 = vpop.f32.mrb[0].mxu0
      %v7667 = vadd.f32 %v7362, %v7666
      %7668 = vmatprep.mubr.f32.mxu0 0.0
      %7669 = vmatmul.mubr.f32.gmra.mrb[0].mxu0 %v7125
      %v7670 = vpop.f32.mrb[0].mxu0
      %v7671 = vadd.f32 %v7366, %v7670
      %v7672 = vpop.f32.mrb[0].mxu0
      %v7673 = vadd.f32 %v7368, %v7672
      %7674 = vmatprep.mubr.f32.mxu0 0.0
      %7675 = vmatmul.mubr.f32.gmra.mrb[0].mxu0 %v7126
      %v7676 = vpop.f32.mrb[0].mxu0
      %v7677 = vadd.f32 %v7372, %v7676
      %v7678 = vpop.f32.mrb[0].mxu0
      %v7679 = vadd.f32 %v7374, %v7678
      %7680 = vmatprep.mubr.f32.mxu0 0.0
      %7681 = vmatmul.mubr.f32.gmra.mrb[0].mxu0 %v7127
      %v7682 = vpop.f32.mrb[0].mxu0
      %v7683 = vadd.f32 %v7378, %v7682
      %v7684 = vpop.f32.mrb[0].mxu0
      %v7685 = vadd.f32 %v7380, %v7684
      %7686 = vmatprep.mubr.f32.mxu0 0.0
      %7687 = vmatmul.mubr.f32.gmra.mrb[0].mxu0 %v7128
      %v7688 = vpop.f32.mrb[0].mxu0
      %v7689 = vadd.f32 %v7384, %v7688
      %v7690 = vpop.f32.mrb[0].mxu0
      %v7691 = vadd.f32 %v7386, %v7690
      %7692 = vmatprep.mubr.f32.mxu0 0.0
      %7693 = vmatmul.mubr.f32.gmra.mrb[0].mxu0 %v7129
      %v7694 = vpop.f32.mrb[0].mxu0
      %v7695 = vadd.f32 %v7390, %v7694
      %v7696 = vpop.f32.mrb[0].mxu0
      %v7697 = vadd.f32 %v7392, %v7696
      %7698 = vmatprep.mubr.f32.mxu0 0.0
      %7699 = vmatmul.mubr.f32.gmra.mrb[0].mxu0 %v7130
      %v7700 = vpop.f32.mrb[0].mxu0
      %v7701 = vadd.f32 %v7396, %v7700
      %v7702 = vpop.f32.mrb[0].mxu0
      %v7703 = vadd.f32 %v7398, %v7702
      %7704 = vmatprep.mubr.f32.mxu0 0.0
      %7705 = vmatmul.mubr.f32.gmra.mrb[0].mxu0 %v7131
      %v7706 = vpop.f32.mrb[0].mxu0
      %v7707 = vadd.f32 %v7402, %v7706
      %v7708 = vpop.f32.mrb[0].mxu0
      %v7709 = vadd.f32 %v7404, %v7708
      %7710 = vmatprep.mubr.f32.mxu0 0.0
      %7711 = vmatmul.mubr.f32.gmra.mrb[0].mxu0 %v7132
      %v7712 = vpop.f32.mrb[0].mxu0
      %v7713 = vadd.f32 %v7408, %v7712
      %v7714 = vpop.f32.mrb[0].mxu0
      %v7715 = vadd.f32 %v7410, %v7714
      %7716 = vmatprep.mubr.f32.mxu0 0.0
      %7717 = vmatmul.mubr.f32.gmra.mrb[0].mxu0 %v7133
      %v7718 = vpop.f32.mrb[0].mxu0
      %v7719 = vadd.f32 %v7414, %v7718
      %v7720 = vpop.f32.mrb[0].mxu0
      %v7721 = vadd.f32 %v7416, %v7720
      %7722 = vmatprep.mubr.f32.mxu0 0.0
      %7723 = vmatmul.mubr.f32.gmra.mrb[0].mxu0 %v7134
      %v7724 = vpop.f32.mrb[0].mxu0
      %v7725 = vadd.f32 %v7420, %v7724
      %v7726 = vpop.f32.mrb[0].mxu0
      %v7727 = vadd.f32 %v7422, %v7726
      %7728 = vmatprep.mubr.f32.mxu0 0.0
      %7729 = vmatmul.mubr.f32.gmra.mrb[0].mxu0 %v7135
      %v7730 = vpop.f32.mrb[0].mxu0
      %v7731 = vadd.f32 %v7426, %v7730
      %v7732 = vpop.f32.mrb[0].mxu0
      %v7733 = vadd.f32 %v7428, %v7732
      %7734 = vmatprep.mubr.f32.mxu0 0.0
      %7735 = vmatmul.mubr.f32.gmra.mrb[0].mxu0 %v7136
      %v7736 = vpop.f32.mrb[0].mxu0
      %v7737 = vadd.f32 %v7432, %v7736
      %v7738 = vpop.f32.mrb[0].mxu0
      %v7739 = vadd.f32 %v7434, %v7738
      %7740 = vmatprep.mubr.f32.mxu0 0.0
      %7741 = vmatmul.mubr.f32.gmra.mrb[0].mxu0 %v7137
      %v7742 = vpop.f32.mrb[0].mxu0
      %v7743 = vadd.f32 %v7438, %v7742
      %v7744 = vpop.f32.mrb[0].mxu0
      %v7745 = vadd.f32 %v7440, %v7744
      %7746 = vmatprep.mubr.f32.mxu0 0.0
      %7747 = vmatmul.mubr.f32.gmra.mrb[0].mxu0 %v7138
      %v7748 = vpop.f32.mrb[0].mxu0
      %v7749 = vadd.f32 %v7444, %v7748
      %v7750 = vpop.f32.mrb[0].mxu0
      %v7751 = vadd.f32 %v7446, %v7750
      %7752 = vmatprep.mubr.f32.mxu0 0.0
      %7753 = vmatmul.mubr.f32.gmra.mrb[0].mxu0 %v7139
      %v7754 = vpop.f32.mrb[0].mxu0
      %v7755 = vadd.f32 %v7450, %v7754
      %v7756 = vpop.f32.mrb[0].mxu0
      %v7757 = vadd.f32 %v7452, %v7756
      %7758 = vmatprep.mubr.f32.mxu0 0.0
      %7759 = vmatmul.mubr.f32.gmra.mrb[0].mxu0 %v7140
      %v7760 = vpop.f32.mrb[0].mxu0
      %v7761 = vadd.f32 %v7456, %v7760
      %v7762 = vpop.f32.mrb[0].mxu0
      %v7763 = vadd.f32 %v7458, %v7762
      %7764 = vmatprep.mubr.f32.mxu0 0.0
      %7765 = vmatmul.mubr.f32.gmra.mrb[0].mxu0 %v7141
      %v7766 = vpop.f32.mrb[0].mxu0
      %v7767 = vadd.f32 %v7462, %v7766
      %v7768 = vpop.f32.mrb[0].mxu0
      %v7769 = vadd.f32 %v7464, %v7768
      %7770 = vmatprep.mubr.f32.mxu0 0.0
      %7771 = vmatmul.mubr.f32.gmra.mrb[0].mxu0 %v7142
      %v7772 = vpop.f32.mrb[0].mxu0
      %v7773 = vadd.f32 %v7468, %v7772
      %v7774 = vpop.f32.mrb[0].mxu0
      %v7775 = vadd.f32 %v7470, %v7774
      %7776 = vmatprep.mubr.f32.mxu0 0.0
      %7777 = vmatmul.mubr.f32.gmra.mrb[0].mxu0 %v7143
      %v7778 = vpop.f32.mrb[0].mxu0
      %v7779 = vadd.f32 %v7474, %v7778
      %v7780 = vpop.f32.mrb[0].mxu0
      %v7781 = vadd.f32 %v7476, %v7780
      %7782 = vmatprep.mubr.f32.mxu0 0.0
      %7783 = vmatmul.mubr.f32.gmra.mrb[0].mxu0 %v7144
      %v7784 = vpop.f32.mrb[0].mxu0
      %v7785 = vadd.f32 %v7480, %v7784
      %v7786 = vpop.f32.mrb[0].mxu0
      %v7787 = vadd.f32 %v7482, %v7786
      %7788 = vmatprep.mubr.f32.mxu0 0.0
      %7789 = vmatmul.mubr.f32.gmra.mrb[0].mxu0 %v7145
      %v7790 = vpop.f32.mrb[0].mxu0
      %v7791 = vadd.f32 %v7486, %v7790
      %v7792 = vpop.f32.mrb[0].mxu0
      %v7793 = vadd.f32 %v7488, %v7792
      %7794 = vmatprep.mubr.f32.mxu0 0.0
      %7795 = vmatmul.mubr.f32.gmra.mrb[0].mxu0 %v7146
      %v7796 = vpop.f32.mrb[0].mxu0
      %v7797 = vadd.f32 %v7492, %v7796
      %v7798 = vpop.f32.mrb[0].mxu0
      %v7799 = vadd.f32 %v7494, %v7798
      %7800 = vmatprep.mubr.f32.mxu0 0.0
      %7801 = vmatmul.mubr.f32.gmra.mrb[0].mxu0 %v7147
      %v7802 = vpop.f32.mrb[0].mxu0
      %v7803 = vadd.f32 %v7498, %v7802
      %v7804 = vpop.f32.mrb[0].mxu0
      %v7805 = vadd.f32 %v7500, %v7804
      %7806 = vmatprep.mubr.f32.mxu0 0.0
      %7807 = vmatmul.mubr.f32.gmra.mrb[0].mxu0 %v7148
      %v7808 = vpop.f32.mrb[0].mxu0
      %v7809 = vadd.f32 %v7504, %v7808
      %v7810 = vpop.f32.mrb[0].mxu0
      %v7811 = vadd.f32 %v7506, %v7810
      %7812 = vmatprep.mubr.f32.mxu0 0.0
      %7813 = vmatmul.mubr.f32.gmra.mrb[0].mxu0 %v7149
      %v7814 = vpop.f32.mrb[0].mxu0
      %v7815 = vadd.f32 %v7510, %v7814
      %v7816 = vpop.f32.mrb[0].mxu0
      %v7817 = vadd.f32 %v7512, %v7816
      %7818 = vmatprep.mubr.f32.mxu0 0.0
      %7819 = vmatmul.mubr.f32.gmra.mrb[0].mxu0 %v7150
      %v7820 = vpop.f32.mrb[0].mxu0
      %v7821 = vadd.f32 %v7516, %v7820
      %v7822 = vpop.f32.mrb[0].mxu0
      %v7823 = vadd.f32 %v7518, %v7822
      %7824 = vmatprep.mubr.f32.mxu0 0.0
      %7825 = vmatmul.mubr.f32.gmra.mrb[0].mxu0 %v7151
      %v7826 = vpop.f32.mrb[0].mxu0
      %v7827 = vadd.f32 %v7522, %v7826
      %v7828 = vpop.f32.mrb[0].mxu0
      %v7829 = vadd.f32 %v7524, %v7828
      %7830 = vdwg.mxu0
      %v7831 = vld [vmem:[#allocation2 + $0x40] sm:$0xff]
      %v7832 = vld [vmem:[#allocation2 + $0x48] sm:$0xff]
      %v7833 = vld [vmem:[#allocation2 + $0x50] sm:$0xff]
      %v7834 = vld [vmem:[#allocation2 + $0x58] sm:$0xff]
      %v7835 = vld [vmem:[#allocation2 + $0x60] sm:$0xff]
      %v7836 = vld [vmem:[#allocation2 + $0x68] sm:$0xff]
      %v7837 = vld [vmem:[#allocation2 + $0x70] sm:$0xff]
      %v7838 = vld [vmem:[#allocation2 + $0x78] sm:$0xff]
      %v7839 = vld [vmem:[#allocation2 + $0x80] sm:$0xff]
      %v7840 = vld [vmem:[#allocation2 + $0x88] sm:$0xff]
      %v7841 = vld [vmem:[#allocation2 + $0x90] sm:$0xff]
      %v7842 = vld [vmem:[#allocation2 + $0x98] sm:$0xff]
      %v7843 = vld [vmem:[#allocation2 + $0xa0] sm:$0xff]
      %v7844 = vld [vmem:[#allocation2 + $0xa8] sm:$0xff]
      %v7845 = vld [vmem:[#allocation2 + $0xb0] sm:$0xff]
      %v7846 = vld [vmem:[#allocation2 + $0xb8] sm:$0xff]
      %v7847 = vld [vmem:[#allocation2 + $0xc0] sm:$0xff]
      %v7848 = vld [vmem:[#allocation2 + $0xc8] sm:$0xff]
      %v7849 = vld [vmem:[#allocation2 + $0xd0] sm:$0xff]
      %v7850 = vld [vmem:[#allocation2 + $0xd8] sm:$0xff]
      %v7851 = vld [vmem:[#allocation2 + $0xe0] sm:$0xff]
      %v7852 = vld [vmem:[#allocation2 + $0xe8] sm:$0xff]
      %v7853 = vld [vmem:[#allocation2 + $0xf0] sm:$0xff]
      %v7854 = vld [vmem:[#allocation2 + $0xf8] sm:$0xff]
      %v7855 = vld [vmem:[#allocation2 + $0x100] sm:$0xff]
      %v7856 = vld [vmem:[#allocation2 + $0x108] sm:$0xff]
      %v7857 = vld [vmem:[#allocation2 + $0x110] sm:$0xff]
      %v7858 = vld [vmem:[#allocation2 + $0x118] sm:$0xff]
      %v7859 = vld [vmem:[#allocation2 + $0x120] sm:$0xff]
      %v7860 = vld [vmem:[#allocation2 + $0x128] sm:$0xff]
      %v7861 = vld [vmem:[#allocation2 + $0x130] sm:$0xff]
      %v7862 = vld [vmem:[#allocation2 + $0x138] sm:$0xff]
      %v7863 = vld [vmem:[#allocation2 + $0x140] sm:$0xff]
      %v7864 = vld [vmem:[#allocation2 + $0x148] sm:$0xff]
      %v7865 = vld [vmem:[#allocation2 + $0x150] sm:$0xff]
      %v7866 = vld [vmem:[#allocation2 + $0x158] sm:$0xff]
      %v7867 = vld [vmem:[#allocation2 + $0x160] sm:$0xff]
      %v7868 = vld [vmem:[#allocation2 + $0x168] sm:$0xff]
      %v7869 = vld [vmem:[#allocation2 + $0x170] sm:$0xff]
      %v7870 = vld [vmem:[#allocation2 + $0x178] sm:$0xff]
      %s7871 = scalar_lea.vmem %s3, 512
      %v7872 = vld [vmem:[%s7871] sm:$0xff]
      %v7873 = vld [vmem:[%s7871 + $0x8] sm:$0xff]
      %v7874 = vld [vmem:[%s7871 + $0x10] sm:$0xff]
      %v7875 = vld [vmem:[%s7871 + $0x18] sm:$0xff]
      %v7876 = vld [vmem:[%s7871 + $0x20] sm:$0xff]
      %v7877 = vld [vmem:[%s7871 + $0x28] sm:$0xff]
      %v7878 = vld [vmem:[%s7871 + $0x30] sm:$0xff]
      %v7879 = vld [vmem:[%s7871 + $0x38] sm:$0xff]
      %v7880 = vld [vmem:[%s7871 + $0x40] sm:$0xff]
      %v7881 = vld [vmem:[%s7871 + $0x48] sm:$0xff]
      %v7882 = vld [vmem:[%s7871 + $0x50] sm:$0xff]
      %v7883 = vld [vmem:[%s7871 + $0x58] sm:$0xff]
      %v7884 = vld [vmem:[%s7871 + $0x60] sm:$0xff]
      %v7885 = vld [vmem:[%s7871 + $0x68] sm:$0xff]
      %v7886 = vld [vmem:[%s7871 + $0x70] sm:$0xff]
      %v7887 = vld [vmem:[%s7871 + $0x78] sm:$0xff]
      %v7888 = vld [vmem:[%s7871 + $0x80] sm:$0xff]
      %v7889 = vld [vmem:[%s7871 + $0x88] sm:$0xff]
      %v7890 = vld [vmem:[%s7871 + $0x90] sm:$0xff]
      %v7891 = vld [vmem:[%s7871 + $0x98] sm:$0xff]
      %v7892 = vld [vmem:[%s7871 + $0xa0] sm:$0xff]
      %v7893 = vld [vmem:[%s7871 + $0xa8] sm:$0xff]
      %v7894 = vld [vmem:[%s7871 + $0xb0] sm:$0xff]
      %v7895 = vld [vmem:[%s7871 + $0xb8] sm:$0xff]
      %v7896 = vld [vmem:[%s7871 + $0xc0] sm:$0xff]
      %v7897 = vld [vmem:[%s7871 + $0xc8] sm:$0xff]
      %v7898 = vld [vmem:[%s7871 + $0xd0] sm:$0xff]
      %v7899 = vld [vmem:[%s7871 + $0xd8] sm:$0xff]
      %v7900 = vld [vmem:[%s7871 + $0xe0] sm:$0xff]
      %v7901 = vld [vmem:[%s7871 + $0xe8] sm:$0xff]
      %v7902 = vld [vmem:[%s7871 + $0xf0] sm:$0xff]
      %v7903 = vld [vmem:[%s7871 + $0xf8] sm:$0xff]
      %7904 = vmatprep.subr.mxu0 %v7873
      %7905 = vmatpush1.msra.mxu0 %v7872
      %7906 = vmatprep.subr.mxu0 %v7875
      %7907 = vmatpush1.msra.mxu0 %v7874
      %7908 = vmatprep.subr.mxu0 %v7877
      %7909 = vmatpush1.msra.mxu0 %v7876
      %7910 = vmatprep.subr.mxu0 %v7879
      %7911 = vmatpush1.msra.mxu0 %v7878
      %7912 = vmatprep.subr.mxu0 %v7881
      %7913 = vmatpush1.msra.mxu0 %v7880
      %7914 = vmatprep.subr.mxu0 %v7883
      %7915 = vmatpush1.msra.mxu0 %v7882
      %7916 = vmatprep.subr.mxu0 %v7885
      %7917 = vmatpush1.msra.mxu0 %v7884
      %7918 = vmatprep.subr.mxu0 %v7887
      %7919 = vmatpush1.msra.mxu0 %v7886
      %7920 = vmatprep.subr.mxu0 %v7889
      %7921 = vmatpush1.msra.mxu0 %v7888
      %7922 = vmatprep.subr.mxu0 %v7891
      %7923 = vmatpush1.msra.mxu0 %v7890
      %7924 = vmatprep.subr.mxu0 %v7893
      %7925 = vmatpush1.msra.mxu0 %v7892
      %7926 = vmatprep.subr.mxu0 %v7895
      %7927 = vmatpush1.msra.mxu0 %v7894
      %7928 = vmatprep.subr.mxu0 %v7897
      %7929 = vmatpush1.msra.mxu0 %v7896
      %7930 = vmatprep.subr.mxu0 %v7899
      %7931 = vmatpush1.msra.mxu0 %v7898
      %7932 = vmatprep.subr.mxu0 %v7901
      %7933 = vmatpush1.msra.mxu0 %v7900
      %7934 = vmatprep.subr.mxu0 %v7903
      %7935 = vmatpush1.msra.mxu0 %v7902
      %7936 = vmatprep.subr.mxu0 0.0
      %7937 = vmatpush1.msra.mxu0 0.0
      %7938 = vmatprep.subr.mxu0 0.0
      %7939 = vmatpush1.msra.mxu0 0.0
      %7940 = vmatprep.subr.mxu0 0.0
      %7941 = vmatpush1.msra.mxu0 0.0
      %7942 = vmatprep.subr.mxu0 0.0
      %7943 = vmatpush1.msra.mxu0 0.0
      %7944 = vmatprep.subr.mxu0 0.0
      %7945 = vmatpush1.msra.mxu0 0.0
      %7946 = vmatprep.subr.mxu0 0.0
      %7947 = vmatpush1.msra.mxu0 0.0
      %7948 = vmatprep.subr.mxu0 0.0
      %7949 = vmatpush1.msra.mxu0 0.0
      %7950 = vmatprep.subr.mxu0 0.0
      %7951 = vmatpush1.msra.mxu0 0.0
      %7952 = vmatprep.subr.mxu0 0.0
      %7953 = vmatpush1.msra.mxu0 0.0
      %7954 = vmatprep.subr.mxu0 0.0
      %7955 = vmatpush1.msra.mxu0 0.0
      %7956 = vmatprep.subr.mxu0 0.0
      %7957 = vmatpush1.msra.mxu0 0.0
      %7958 = vmatprep.subr.mxu0 0.0
      %7959 = vmatpush1.msra.mxu0 0.0
      %7960 = vmatprep.subr.mxu0 0.0
      %7961 = vmatpush1.msra.mxu0 0.0
      %7962 = vmatprep.subr.mxu0 0.0
      %7963 = vmatpush1.msra.mxu0 0.0
      %7964 = vmatprep.subr.mxu0 0.0
      %7965 = vmatpush1.msra.mxu0 0.0
      %7966 = vmatprep.subr.mxu0 0.0
      %7967 = vmatpush1.msra.mxu0 0.0
      %7968 = vmatprep.mubr.f32.mxu0 0.0
      %7969 = vmatmul.mubr.f32.gmra.mrb[0].mxu0 %v7831
      %v7970 = vpop.f32.mrb[0].mxu0
      %v7971 = vadd.f32 0.0, %v7970
      %v7972 = vpop.f32.mrb[0].mxu0
      %v7973 = vadd.f32 0.0, %v7972
      %7974 = vmatprep.mubr.f32.mxu0 0.0
      %7975 = vmatmul.mubr.f32.gmra.mrb[0].mxu0 %v7832
      %v7976 = vpop.f32.mrb[0].mxu0
      %v7977 = vadd.f32 0.0, %v7976
      %v7978 = vpop.f32.mrb[0].mxu0
      %v7979 = vadd.f32 0.0, %v7978
      %7980 = vmatprep.mubr.f32.mxu0 0.0
      %7981 = vmatmul.mubr.f32.gmra.mrb[0].mxu0 %v7833
      %v7982 = vpop.f32.mrb[0].mxu0
      %v7983 = vadd.f32 0.0, %v7982
      %v7984 = vpop.f32.mrb[0].mxu0
      %v7985 = vadd.f32 0.0, %v7984
      %7986 = vmatprep.mubr.f32.mxu0 0.0
      %7987 = vmatmul.mubr.f32.gmra.mrb[0].mxu0 %v7834
      %v7988 = vpop.f32.mrb[0].mxu0
      %v7989 = vadd.f32 0.0, %v7988
      %v7990 = vpop.f32.mrb[0].mxu0
      %v7991 = vadd.f32 0.0, %v7990
      %7992 = vmatprep.mubr.f32.mxu0 0.0
      %7993 = vmatmul.mubr.f32.gmra.mrb[0].mxu0 %v7835
      %v7994 = vpop.f32.mrb[0].mxu0
      %v7995 = vadd.f32 0.0, %v7994
      %v7996 = vpop.f32.mrb[0].mxu0
      %v7997 = vadd.f32 0.0, %v7996
      %7998 = vmatprep.mubr.f32.mxu0 0.0
      %7999 = vmatmul.mubr.f32.gmra.mrb[0].mxu0 %v7836
      %v8000 = vpop.f32.mrb[0].mxu0
      %v8001 = vadd.f32 0.0, %v8000
      %v8002 = vpop.f32.mrb[0].mxu0
      %v8003 = vadd.f32 0.0, %v8002
      %8004 = vmatprep.mubr.f32.mxu0 0.0
      %8005 = vmatmul.mubr.f32.gmra.mrb[0].mxu0 %v7837
      %v8006 = vpop.f32.mrb[0].mxu0
      %v8007 = vadd.f32 0.0, %v8006
      %v8008 = vpop.f32.mrb[0].mxu0
      %v8009 = vadd.f32 0.0, %v8008
      %8010 = vmatprep.mubr.f32.mxu0 0.0
      %8011 = vmatmul.mubr.f32.gmra.mrb[0].mxu0 %v7838
      %v8012 = vpop.f32.mrb[0].mxu0
      %v8013 = vadd.f32 0.0, %v8012
      %v8014 = vpop.f32.mrb[0].mxu0
      %v8015 = vadd.f32 0.0, %v8014
      %8016 = vmatprep.mubr.f32.mxu0 0.0
      %8017 = vmatmul.mubr.f32.gmra.mrb[0].mxu0 %v7839
      %v8018 = vpop.f32.mrb[0].mxu0
      %v8019 = vadd.f32 0.0, %v8018
      %v8020 = vpop.f32.mrb[0].mxu0
      %v8021 = vadd.f32 0.0, %v8020
      %8022 = vmatprep.mubr.f32.mxu0 0.0
      %8023 = vmatmul.mubr.f32.gmra.mrb[0].mxu0 %v7840
      %v8024 = vpop.f32.mrb[0].mxu0
      %v8025 = vadd.f32 0.0, %v8024
      %v8026 = vpop.f32.mrb[0].mxu0
      %v8027 = vadd.f32 0.0, %v8026
      %8028 = vmatprep.mubr.f32.mxu0 0.0
      %8029 = vmatmul.mubr.f32.gmra.mrb[0].mxu0 %v7841
      %v8030 = vpop.f32.mrb[0].mxu0
      %v8031 = vadd.f32 0.0, %v8030
      %v8032 = vpop.f32.mrb[0].mxu0
      %v8033 = vadd.f32 0.0, %v8032
      %8034 = vmatprep.mubr.f32.mxu0 0.0
      %8035 = vmatmul.mubr.f32.gmra.mrb[0].mxu0 %v7842
      %v8036 = vpop.f32.mrb[0].mxu0
      %v8037 = vadd.f32 0.0, %v8036
      %v8038 = vpop.f32.mrb[0].mxu0
      %v8039 = vadd.f32 0.0, %v8038
      %8040 = vmatprep.mubr.f32.mxu0 0.0
      %8041 = vmatmul.mubr.f32.gmra.mrb[0].mxu0 %v7843
      %v8042 = vpop.f32.mrb[0].mxu0
      %v8043 = vadd.f32 0.0, %v8042
      %v8044 = vpop.f32.mrb[0].mxu0
      %v8045 = vadd.f32 0.0, %v8044
      %8046 = vmatprep.mubr.f32.mxu0 0.0
      %8047 = vmatmul.mubr.f32.gmra.mrb[0].mxu0 %v7844
      %v8048 = vpop.f32.mrb[0].mxu0
      %v8049 = vadd.f32 0.0, %v8048
      %v8050 = vpop.f32.mrb[0].mxu0
      %v8051 = vadd.f32 0.0, %v8050
      %8052 = vmatprep.mubr.f32.mxu0 0.0
      %8053 = vmatmul.mubr.f32.gmra.mrb[0].mxu0 %v7845
      %v8054 = vpop.f32.mrb[0].mxu0
      %v8055 = vadd.f32 0.0, %v8054
      %v8056 = vpop.f32.mrb[0].mxu0
      %v8057 = vadd.f32 0.0, %v8056
      %8058 = vmatprep.mubr.f32.mxu0 0.0
      %8059 = vmatmul.mubr.f32.gmra.mrb[0].mxu0 %v7846
      %v8060 = vpop.f32.mrb[0].mxu0
      %v8061 = vadd.f32 0.0, %v8060
      %v8062 = vpop.f32.mrb[0].mxu0
      %v8063 = vadd.f32 0.0, %v8062
      %8064 = vmatprep.mubr.f32.mxu0 0.0
      %8065 = vmatmul.mubr.f32.gmra.mrb[0].mxu0 %v7847
      %v8066 = vpop.f32.mrb[0].mxu0
      %v8067 = vadd.f32 0.0, %v8066
      %v8068 = vpop.f32.mrb[0].mxu0
      %v8069 = vadd.f32 0.0, %v8068
      %8070 = vmatprep.mubr.f32.mxu0 0.0
      %8071 = vmatmul.mubr.f32.gmra.mrb[0].mxu0 %v7848
      %v8072 = vpop.f32.mrb[0].mxu0
      %v8073 = vadd.f32 0.0, %v8072
      %v8074 = vpop.f32.mrb[0].mxu0
      %v8075 = vadd.f32 0.0, %v8074
      %8076 = vmatprep.mubr.f32.mxu0 0.0
      %8077 = vmatmul.mubr.f32.gmra.mrb[0].mxu0 %v7849
      %v8078 = vpop.f32.mrb[0].mxu0
      %v8079 = vadd.f32 0.0, %v8078
      %v8080 = vpop.f32.mrb[0].mxu0
      %v8081 = vadd.f32 0.0, %v8080
      %8082 = vmatprep.mubr.f32.mxu0 0.0
      %8083 = vmatmul.mubr.f32.gmra.mrb[0].mxu0 %v7850
      %v8084 = vpop.f32.mrb[0].mxu0
      %v8085 = vadd.f32 0.0, %v8084
      %v8086 = vpop.f32.mrb[0].mxu0
      %v8087 = vadd.f32 0.0, %v8086
      %8088 = vmatprep.mubr.f32.mxu0 0.0
      %8089 = vmatmul.mubr.f32.gmra.mrb[0].mxu0 %v7851
      %v8090 = vpop.f32.mrb[0].mxu0
      %v8091 = vadd.f32 0.0, %v8090
      %v8092 = vpop.f32.mrb[0].mxu0
      %v8093 = vadd.f32 0.0, %v8092
      %8094 = vmatprep.mubr.f32.mxu0 0.0
      %8095 = vmatmul.mubr.f32.gmra.mrb[0].mxu0 %v7852
      %v8096 = vpop.f32.mrb[0].mxu0
      %v8097 = vadd.f32 0.0, %v8096
      %v8098 = vpop.f32.mrb[0].mxu0
      %v8099 = vadd.f32 0.0, %v8098
      %8100 = vmatprep.mubr.f32.mxu0 0.0
      %8101 = vmatmul.mubr.f32.gmra.mrb[0].mxu0 %v7853
      %v8102 = vpop.f32.mrb[0].mxu0
      %v8103 = vadd.f32 0.0, %v8102
      %v8104 = vpop.f32.mrb[0].mxu0
      %v8105 = vadd.f32 0.0, %v8104
      %8106 = vmatprep.mubr.f32.mxu0 0.0
      %8107 = vmatmul.mubr.f32.gmra.mrb[0].mxu0 %v7854
      %v8108 = vpop.f32.mrb[0].mxu0
      %v8109 = vadd.f32 0.0, %v8108
      %v8110 = vpop.f32.mrb[0].mxu0
      %v8111 = vadd.f32 0.0, %v8110
      %8112 = vmatprep.mubr.f32.mxu0 0.0
      %8113 = vmatmul.mubr.f32.gmra.mrb[0].mxu0 %v7855
      %v8114 = vpop.f32.mrb[0].mxu0
      %v8115 = vadd.f32 0.0, %v8114
      %v8116 = vpop.f32.mrb[0].mxu0
      %v8117 = vadd.f32 0.0, %v8116
      %8118 = vmatprep.mubr.f32.mxu0 0.0
      %8119 = vmatmul.mubr.f32.gmra.mrb[0].mxu0 %v7856
      %v8120 = vpop.f32.mrb[0].mxu0
      %v8121 = vadd.f32 0.0, %v8120
      %v8122 = vpop.f32.mrb[0].mxu0
      %v8123 = vadd.f32 0.0, %v8122
      %8124 = vmatprep.mubr.f32.mxu0 0.0
      %8125 = vmatmul.mubr.f32.gmra.mrb[0].mxu0 %v7857
      %v8126 = vpop.f32.mrb[0].mxu0
      %v8127 = vadd.f32 0.0, %v8126
      %v8128 = vpop.f32.mrb[0].mxu0
      %v8129 = vadd.f32 0.0, %v8128
      %8130 = vmatprep.mubr.f32.mxu0 0.0
      %8131 = vmatmul.mubr.f32.gmra.mrb[0].mxu0 %v7858
      %v8132 = vpop.f32.mrb[0].mxu0
      %v8133 = vadd.f32 0.0, %v8132
      %v8134 = vpop.f32.mrb[0].mxu0
      %v8135 = vadd.f32 0.0, %v8134
      %8136 = vmatprep.mubr.f32.mxu0 0.0
      %8137 = vmatmul.mubr.f32.gmra.mrb[0].mxu0 %v7859
      %v8138 = vpop.f32.mrb[0].mxu0
      %v8139 = vadd.f32 0.0, %v8138
      %v8140 = vpop.f32.mrb[0].mxu0
      %v8141 = vadd.f32 0.0, %v8140
      %8142 = vmatprep.mubr.f32.mxu0 0.0
      %8143 = vmatmul.mubr.f32.gmra.mrb[0].mxu0 %v7860
      %v8144 = vpop.f32.mrb[0].mxu0
      %v8145 = vadd.f32 0.0, %v8144
      %v8146 = vpop.f32.mrb[0].mxu0
      %v8147 = vadd.f32 0.0, %v8146
      %8148 = vmatprep.mubr.f32.mxu0 0.0
      %8149 = vmatmul.mubr.f32.gmra.mrb[0].mxu0 %v7861
      %v8150 = vpop.f32.mrb[0].mxu0
      %v8151 = vadd.f32 0.0, %v8150
      %v8152 = vpop.f32.mrb[0].mxu0
      %v8153 = vadd.f32 0.0, %v8152
      %8154 = vmatprep.mubr.f32.mxu0 0.0
      %8155 = vmatmul.mubr.f32.gmra.mrb[0].mxu0 %v7862
      %v8156 = vpop.f32.mrb[0].mxu0
      %v8157 = vadd.f32 0.0, %v8156
      %v8158 = vpop.f32.mrb[0].mxu0
      %v8159 = vadd.f32 0.0, %v8158
      %8160 = vmatprep.mubr.f32.mxu0 0.0
      %8161 = vmatmul.mubr.f32.gmra.mrb[0].mxu0 %v7863
      %v8162 = vpop.f32.mrb[0].mxu0
      %v8163 = vadd.f32 0.0, %v8162
      %v8164 = vpop.f32.mrb[0].mxu0
      %v8165 = vadd.f32 0.0, %v8164
      %8166 = vmatprep.mubr.f32.mxu0 0.0
      %8167 = vmatmul.mubr.f32.gmra.mrb[0].mxu0 %v7864
      %v8168 = vpop.f32.mrb[0].mxu0
      %v8169 = vadd.f32 0.0, %v8168
      %v8170 = vpop.f32.mrb[0].mxu0
      %v8171 = vadd.f32 0.0, %v8170
      %8172 = vmatprep.mubr.f32.mxu0 0.0
      %8173 = vmatmul.mubr.f32.gmra.mrb[0].mxu0 %v7865
      %v8174 = vpop.f32.mrb[0].mxu0
      %v8175 = vadd.f32 0.0, %v8174
      %v8176 = vpop.f32.mrb[0].mxu0
      %v8177 = vadd.f32 0.0, %v8176
      %8178 = vmatprep.mubr.f32.mxu0 0.0
      %8179 = vmatmul.mubr.f32.gmra.mrb[0].mxu0 %v7866
      %v8180 = vpop.f32.mrb[0].mxu0
      %v8181 = vadd.f32 0.0, %v8180
      %v8182 = vpop.f32.mrb[0].mxu0
      %v8183 = vadd.f32 0.0, %v8182
      %8184 = vmatprep.mubr.f32.mxu0 0.0
      %8185 = vmatmul.mubr.f32.gmra.mrb[0].mxu0 %v7867
      %v8186 = vpop.f32.mrb[0].mxu0
      %v8187 = vadd.f32 0.0, %v8186
      %v8188 = vpop.f32.mrb[0].mxu0
      %v8189 = vadd.f32 0.0, %v8188
      %8190 = vmatprep.mubr.f32.mxu0 0.0
      %8191 = vmatmul.mubr.f32.gmra.mrb[0].mxu0 %v7868
      %v8192 = vpop.f32.mrb[0].mxu0
      %v8193 = vadd.f32 0.0, %v8192
      %v8194 = vpop.f32.mrb[0].mxu0
      %v8195 = vadd.f32 0.0, %v8194
      %8196 = vmatprep.mubr.f32.mxu0 0.0
      %8197 = vmatmul.mubr.f32.gmra.mrb[0].mxu0 %v7869
      %v8198 = vpop.f32.mrb[0].mxu0
      %v8199 = vadd.f32 0.0, %v8198
      %v8200 = vpop.f32.mrb[0].mxu0
      %v8201 = vadd.f32 0.0, %v8200
      %8202 = vmatprep.mubr.f32.mxu0 0.0
      %8203 = vmatmul.mubr.f32.gmra.mrb[0].mxu0 %v7870
      %v8204 = vpop.f32.mrb[0].mxu0
      %v8205 = vadd.f32 0.0, %v8204
      %v8206 = vpop.f32.mrb[0].mxu0
      %v8207 = vadd.f32 0.0, %v8206
      %8208 = vdwg.mxu0
      %v8209 = vadd.f32 %v7593, %v7971
      %v8210 = vadd.f32 %v7595, %v7973
      %v8211 = vadd.f32 %v7599, %v7977
      %v8212 = vadd.f32 %v7601, %v7979
      %v8213 = vadd.f32 %v7605, %v7983
      %v8214 = vadd.f32 %v7607, %v7985
      %v8215 = vadd.f32 %v7611, %v7989
      %v8216 = vadd.f32 %v7613, %v7991
      %v8217 = vadd.f32 %v7617, %v7995
      %v8218 = vadd.f32 %v7619, %v7997
      %v8219 = vadd.f32 %v7623, %v8001
      %v8220 = vadd.f32 %v7625, %v8003
      %v8221 = vadd.f32 %v7629, %v8007
      %v8222 = vadd.f32 %v7631, %v8009
      %v8223 = vadd.f32 %v7635, %v8013
      %v8224 = vadd.f32 %v7637, %v8015
      %v8225 = vadd.f32 %v7641, %v8019
      %v8226 = vadd.f32 %v7643, %v8021
      %v8227 = vadd.f32 %v7647, %v8025
      %v8228 = vadd.f32 %v7649, %v8027
      %v8229 = vadd.f32 %v7653, %v8031
      %v8230 = vadd.f32 %v7655, %v8033
      %v8231 = vadd.f32 %v7659, %v8037
      %v8232 = vadd.f32 %v7661, %v8039
      %v8233 = vadd.f32 %v7665, %v8043
      %v8234 = vadd.f32 %v7667, %v8045
      %v8235 = vadd.f32 %v7671, %v8049
      %v8236 = vadd.f32 %v7673, %v8051
      %v8237 = vadd.f32 %v7677, %v8055
      %v8238 = vadd.f32 %v7679, %v8057
      %v8239 = vadd.f32 %v7683, %v8061
      %v8240 = vadd.f32 %v7685, %v8063
      %v8241 = vadd.f32 %v7689, %v8067
      %v8242 = vadd.f32 %v7691, %v8069
      %v8243 = vadd.f32 %v7695, %v8073
      %v8244 = vadd.f32 %v7697, %v8075
      %v8245 = vadd.f32 %v7701, %v8079
      %v8246 = vadd.f32 %v7703, %v8081
      %v8247 = vadd.f32 %v7707, %v8085
      %v8248 = vadd.f32 %v7709, %v8087
      %v8249 = vadd.f32 %v7713, %v8091
      %v8250 = vadd.f32 %v7715, %v8093
      %v8251 = vadd.f32 %v7719, %v8097
      %v8252 = vadd.f32 %v7721, %v8099
      %v8253 = vadd.f32 %v7725, %v8103
      %v8254 = vadd.f32 %v7727, %v8105
      %v8255 = vadd.f32 %v7731, %v8109
      %v8256 = vadd.f32 %v7733, %v8111
      %v8257 = vadd.f32 %v7737, %v8115
      %v8258 = vadd.f32 %v7739, %v8117
      %v8259 = vadd.f32 %v7743, %v8121
      %v8260 = vadd.f32 %v7745, %v8123
      %v8261 = vadd.f32 %v7749, %v8127
      %v8262 = vadd.f32 %v7751, %v8129
      %v8263 = vadd.f32 %v7755, %v8133
      %v8264 = vadd.f32 %v7757, %v8135
      %v8265 = vadd.f32 %v7761, %v8139
      %v8266 = vadd.f32 %v7763, %v8141
      %v8267 = vadd.f32 %v7767, %v8145
      %v8268 = vadd.f32 %v7769, %v8147
      %v8269 = vadd.f32 %v7773, %v8151
      %v8270 = vadd.f32 %v7775, %v8153
      %v8271 = vadd.f32 %v7779, %v8157
      %v8272 = vadd.f32 %v7781, %v8159
      %v8273 = vadd.f32 %v7785, %v8163
      %v8274 = vadd.f32 %v7787, %v8165
      %v8275 = vadd.f32 %v7791, %v8169
      %v8276 = vadd.f32 %v7793, %v8171
      %v8277 = vadd.f32 %v7797, %v8175
      %v8278 = vadd.f32 %v7799, %v8177
      %v8279 = vadd.f32 %v7803, %v8181
      %v8280 = vadd.f32 %v7805, %v8183
      %v8281 = vadd.f32 %v7809, %v8187
      %v8282 = vadd.f32 %v7811, %v8189
      %v8283 = vadd.f32 %v7815, %v8193
      %v8284 = vadd.f32 %v7817, %v8195
      %v8285 = vadd.f32 %v7821, %v8199
      %v8286 = vadd.f32 %v7823, %v8201
      %v8287 = vadd.f32 %v7827, %v8205
      %v8288 = vadd.f32 %v7829, %v8207
      %v8289 = vld [vmem:[#allocation2 + $0x60] sm:$0xff]
      %v8290 = vld [vmem:[#allocation2 + $0x68] sm:$0xff]
      %v8291 = vld [vmem:[#allocation2 + $0x70] sm:$0xff]
      %v8292 = vld [vmem:[#allocation2 + $0x78] sm:$0xff]
      %v8293 = vld [vmem:[#allocation2 + $0x80] sm:$0xff]
      %v8294 = vld [vmem:[#allocation2 + $0x88] sm:$0xff]
      %v8295 = vld [vmem:[#allocation2 + $0x90] sm:$0xff]
      %v8296 = vld [vmem:[#allocation2 + $0x98] sm:$0xff]
      %v8297 = vld [vmem:[#allocation2 + $0xa0] sm:$0xff]
      %v8298 = vld [vmem:[#allocation2 + $0xa8] sm:$0xff]
      %v8299 = vld [vmem:[#allocation2 + $0xb0] sm:$0xff]
      %v8300 = vld [vmem:[#allocation2 + $0xb8] sm:$0xff]
      %v8301 = vld [vmem:[#allocation2 + $0xc0] sm:$0xff]
      %v8302 = vld [vmem:[#allocation2 + $0xc8] sm:$0xff]
      %v8303 = vld [vmem:[#allocation2 + $0xd0] sm:$0xff]
      %v8304 = vld [vmem:[#allocation2 + $0xd8] sm:$0xff]
      %v8305 = vld [vmem:[#allocation2 + $0xe0] sm:$0xff]
      %v8306 = vld [vmem:[#allocation2 + $0xe8] sm:$0xff]
      %v8307 = vld [vmem:[#allocation2 + $0xf0] sm:$0xff]
      %v8308 = vld [vmem:[#allocation2 + $0xf8] sm:$0xff]
      %v8309 = vld [vmem:[#allocation2 + $0x100] sm:$0xff]
      %v8310 = vld [vmem:[#allocation2 + $0x108] sm:$0xff]
      %v8311 = vld [vmem:[#allocation2 + $0x110] sm:$0xff]
      %v8312 = vld [vmem:[#allocation2 + $0x118] sm:$0xff]
      %v8313 = vld [vmem:[#allocation2 + $0x120] sm:$0xff]
      %v8314 = vld [vmem:[#allocation2 + $0x128] sm:$0xff]
      %v8315 = vld [vmem:[#allocation2 + $0x130] sm:$0xff]
      %v8316 = vld [vmem:[#allocation2 + $0x138] sm:$0xff]
      %v8317 = vld [vmem:[#allocation2 + $0x140] sm:$0xff]
      %v8318 = vld [vmem:[#allocation2 + $0x148] sm:$0xff]
      %v8319 = vld [vmem:[#allocation2 + $0x150] sm:$0xff]
      %v8320 = vld [vmem:[#allocation2 + $0x158] sm:$0xff]
      %v8321 = vld [vmem:[#allocation2 + $0x160] sm:$0xff]
      %v8322 = vld [vmem:[#allocation2 + $0x168] sm:$0xff]
      %v8323 = vld [vmem:[#allocation2 + $0x170] sm:$0xff]
      %v8324 = vld [vmem:[#allocation2 + $0x178] sm:$0xff]
      %v8325 = vld [vmem:[#allocation2 + $0x180] sm:$0xff]
      %v8326 = vld [vmem:[#allocation2 + $0x188] sm:$0xff]
      %v8327 = vld [vmem:[#allocation2 + $0x190] sm:$0xff]
      %v8328 = vld [vmem:[#allocation2 + $0x198] sm:$0xff]
      %s8329 = scalar_lea.vmem %s3, 768
      %v8330 = vld [vmem:[%s8329] sm:$0xff]
      %v8331 = vld [vmem:[%s8329 + $0x8] sm:$0xff]
      %v8332 = vld [vmem:[%s8329 + $0x10] sm:$0xff]
      %v8333 = vld [vmem:[%s8329 + $0x18] sm:$0xff]
      %v8334 = vld [vmem:[%s8329 + $0x20] sm:$0xff]
      %v8335 = vld [vmem:[%s8329 + $0x28] sm:$0xff]
      %v8336 = vld [vmem:[%s8329 + $0x30] sm:$0xff]
      %v8337 = vld [vmem:[%s8329 + $0x38] sm:$0xff]
      %v8338 = vld [vmem:[%s8329 + $0x40] sm:$0xff]
      %v8339 = vld [vmem:[%s8329 + $0x48] sm:$0xff]
      %v8340 = vld [vmem:[%s8329 + $0x50] sm:$0xff]
      %v8341 = vld [vmem:[%s8329 + $0x58] sm:$0xff]
      %v8342 = vld [vmem:[%s8329 + $0x60] sm:$0xff]
      %v8343 = vld [vmem:[%s8329 + $0x68] sm:$0xff]
      %v8344 = vld [vmem:[%s8329 + $0x70] sm:$0xff]
      %v8345 = vld [vmem:[%s8329 + $0x78] sm:$0xff]
      %v8346 = vld [vmem:[%s8329 + $0x80] sm:$0xff]
      %v8347 = vld [vmem:[%s8329 + $0x88] sm:$0xff]
      %v8348 = vld [vmem:[%s8329 + $0x90] sm:$0xff]
      %v8349 = vld [vmem:[%s8329 + $0x98] sm:$0xff]
      %v8350 = vld [vmem:[%s8329 + $0xa0] sm:$0xff]
      %v8351 = vld [vmem:[%s8329 + $0xa8] sm:$0xff]
      %v8352 = vld [vmem:[%s8329 + $0xb0] sm:$0xff]
      %v8353 = vld [vmem:[%s8329 + $0xb8] sm:$0xff]
      %v8354 = vld [vmem:[%s8329 + $0xc0] sm:$0xff]
      %v8355 = vld [vmem:[%s8329 + $0xc8] sm:$0xff]
      %v8356 = vld [vmem:[%s8329 + $0xd0] sm:$0xff]
      %v8357 = vld [vmem:[%s8329 + $0xd8] sm:$0xff]
      %v8358 = vld [vmem:[%s8329 + $0xe0] sm:$0xff]
      %v8359 = vld [vmem:[%s8329 + $0xe8] sm:$0xff]
      %v8360 = vld [vmem:[%s8329 + $0xf0] sm:$0xff]
      %v8361 = vld [vmem:[%s8329 + $0xf8] sm:$0xff]
      %8362 = vmatprep.subr.mxu0 %v8331
      %8363 = vmatpush1.msra.mxu0 %v8330
      %8364 = vmatprep.subr.mxu0 %v8333
      %8365 = vmatpush1.msra.mxu0 %v8332
      %8366 = vmatprep.subr.mxu0 %v8335
      %8367 = vmatpush1.msra.mxu0 %v8334
      %8368 = vmatprep.subr.mxu0 %v8337
      %8369 = vmatpush1.msra.mxu0 %v8336
      %8370 = vmatprep.subr.mxu0 %v8339
      %8371 = vmatpush1.msra.mxu0 %v8338
      %8372 = vmatprep.subr.mxu0 %v8341
      %8373 = vmatpush1.msra.mxu0 %v8340
      %8374 = vmatprep.subr.mxu0 %v8343
      %8375 = vmatpush1.msra.mxu0 %v8342
      %8376 = vmatprep.subr.mxu0 %v8345
      %8377 = vmatpush1.msra.mxu0 %v8344
      %8378 = vmatprep.subr.mxu0 %v8347
      %8379 = vmatpush1.msra.mxu0 %v8346
      %8380 = vmatprep.subr.mxu0 %v8349
      %8381 = vmatpush1.msra.mxu0 %v8348
      %8382 = vmatprep.subr.mxu0 %v8351
      %8383 = vmatpush1.msra.mxu0 %v8350
      %8384 = vmatprep.subr.mxu0 %v8353
      %8385 = vmatpush1.msra.mxu0 %v8352
      %8386 = vmatprep.subr.mxu0 %v8355
      %8387 = vmatpush1.msra.mxu0 %v8354
      %8388 = vmatprep.subr.mxu0 %v8357
      %8389 = vmatpush1.msra.mxu0 %v8356
      %8390 = vmatprep.subr.mxu0 %v8359
      %8391 = vmatpush1.msra.mxu0 %v8358
      %8392 = vmatprep.subr.mxu0 %v8361
      %8393 = vmatpush1.msra.mxu0 %v8360
      %8394 = vmatprep.subr.mxu0 0.0
      %8395 = vmatpush1.msra.mxu0 0.0
      %8396 = vmatprep.subr.mxu0 0.0
      %8397 = vmatpush1.msra.mxu0 0.0
      %8398 = vmatprep.subr.mxu0 0.0
      %8399 = vmatpush1.msra.mxu0 0.0
      %8400 = vmatprep.subr.mxu0 0.0
      %8401 = vmatpush1.msra.mxu0 0.0
      %8402 = vmatprep.subr.mxu0 0.0
      %8403 = vmatpush1.msra.mxu0 0.0
      %8404 = vmatprep.subr.mxu0 0.0
      %8405 = vmatpush1.msra.mxu0 0.0
      %8406 = vmatprep.subr.mxu0 0.0
      %8407 = vmatpush1.msra.mxu0 0.0
      %8408 = vmatprep.subr.mxu0 0.0
      %8409 = vmatpush1.msra.mxu0 0.0
      %8410 = vmatprep.subr.mxu0 0.0
      %8411 = vmatpush1.msra.mxu0 0.0
      %8412 = vmatprep.subr.mxu0 0.0
      %8413 = vmatpush1.msra.mxu0 0.0
      %8414 = vmatprep.subr.mxu0 0.0
      %8415 = vmatpush1.msra.mxu0 0.0
      %8416 = vmatprep.subr.mxu0 0.0
      %8417 = vmatpush1.msra.mxu0 0.0
      %8418 = vmatprep.subr.mxu0 0.0
      %8419 = vmatpush1.msra.mxu0 0.0
      %8420 = vmatprep.subr.mxu0 0.0
      %8421 = vmatpush1.msra.mxu0 0.0
      %8422 = vmatprep.subr.mxu0 0.0
      %8423 = vmatpush1.msra.mxu0 0.0
      %8424 = vmatprep.subr.mxu0 0.0
      %8425 = vmatpush1.msra.mxu0 0.0
      %8426 = vmatprep.mubr.f32.mxu0 0.0
      %8427 = vmatmul.mubr.f32.gmra.mrb[0].mxu0 %v8289
      %v8428 = vpop.f32.mrb[0].mxu0
      %v8429 = vadd.f32 0.0, %v8428
      %v8430 = vpop.f32.mrb[0].mxu0
      %v8431 = vadd.f32 0.0, %v8430
      %8432 = vmatprep.mubr.f32.mxu0 0.0
      %8433 = vmatmul.mubr.f32.gmra.mrb[0].mxu0 %v8290
      %v8434 = vpop.f32.mrb[0].mxu0
      %v8435 = vadd.f32 0.0, %v8434
      %v8436 = vpop.f32.mrb[0].mxu0
      %v8437 = vadd.f32 0.0, %v8436
      %8438 = vmatprep.mubr.f32.mxu0 0.0
      %8439 = vmatmul.mubr.f32.gmra.mrb[0].mxu0 %v8291
      %v8440 = vpop.f32.mrb[0].mxu0
      %v8441 = vadd.f32 0.0, %v8440
      %v8442 = vpop.f32.mrb[0].mxu0
      %v8443 = vadd.f32 0.0, %v8442
      %8444 = vmatprep.mubr.f32.mxu0 0.0
      %8445 = vmatmul.mubr.f32.gmra.mrb[0].mxu0 %v8292
      %v8446 = vpop.f32.mrb[0].mxu0
      %v8447 = vadd.f32 0.0, %v8446
      %v8448 = vpop.f32.mrb[0].mxu0
      %v8449 = vadd.f32 0.0, %v8448
      %8450 = vmatprep.mubr.f32.mxu0 0.0
      %8451 = vmatmul.mubr.f32.gmra.mrb[0].mxu0 %v8293
      %v8452 = vpop.f32.mrb[0].mxu0
      %v8453 = vadd.f32 0.0, %v8452
      %v8454 = vpop.f32.mrb[0].mxu0
      %v8455 = vadd.f32 0.0, %v8454
      %8456 = vmatprep.mubr.f32.mxu0 0.0
      %8457 = vmatmul.mubr.f32.gmra.mrb[0].mxu0 %v8294
      %v8458 = vpop.f32.mrb[0].mxu0
      %v8459 = vadd.f32 0.0, %v8458
      %v8460 = vpop.f32.mrb[0].mxu0
      %v8461 = vadd.f32 0.0, %v8460
      %8462 = vmatprep.mubr.f32.mxu0 0.0
      %8463 = vmatmul.mubr.f32.gmra.mrb[0].mxu0 %v8295
      %v8464 = vpop.f32.mrb[0].mxu0
      %v8465 = vadd.f32 0.0, %v8464
      %v8466 = vpop.f32.mrb[0].mxu0
      %v8467 = vadd.f32 0.0, %v8466
      %8468 = vmatprep.mubr.f32.mxu0 0.0
      %8469 = vmatmul.mubr.f32.gmra.mrb[0].mxu0 %v8296
      %v8470 = vpop.f32.mrb[0].mxu0
      %v8471 = vadd.f32 0.0, %v8470
      %v8472 = vpop.f32.mrb[0].mxu0
      %v8473 = vadd.f32 0.0, %v8472
      %8474 = vmatprep.mubr.f32.mxu0 0.0
      %8475 = vmatmul.mubr.f32.gmra.mrb[0].mxu0 %v8297
      %v8476 = vpop.f32.mrb[0].mxu0
      %v8477 = vadd.f32 0.0, %v8476
      %v8478 = vpop.f32.mrb[0].mxu0
      %v8479 = vadd.f32 0.0, %v8478
      %8480 = vmatprep.mubr.f32.mxu0 0.0
      %8481 = vmatmul.mubr.f32.gmra.mrb[0].mxu0 %v8298
      %v8482 = vpop.f32.mrb[0].mxu0
      %v8483 = vadd.f32 0.0, %v8482
      %v8484 = vpop.f32.mrb[0].mxu0
      %v8485 = vadd.f32 0.0, %v8484
      %8486 = vmatprep.mubr.f32.mxu0 0.0
      %8487 = vmatmul.mubr.f32.gmra.mrb[0].mxu0 %v8299
      %v8488 = vpop.f32.mrb[0].mxu0
      %v8489 = vadd.f32 0.0, %v8488
      %v8490 = vpop.f32.mrb[0].mxu0
      %v8491 = vadd.f32 0.0, %v8490
      %8492 = vmatprep.mubr.f32.mxu0 0.0
      %8493 = vmatmul.mubr.f32.gmra.mrb[0].mxu0 %v8300
      %v8494 = vpop.f32.mrb[0].mxu0
      %v8495 = vadd.f32 0.0, %v8494
      %v8496 = vpop.f32.mrb[0].mxu0
      %v8497 = vadd.f32 0.0, %v8496
      %8498 = vmatprep.mubr.f32.mxu0 0.0
      %8499 = vmatmul.mubr.f32.gmra.mrb[0].mxu0 %v8301
      %v8500 = vpop.f32.mrb[0].mxu0
      %v8501 = vadd.f32 0.0, %v8500
      %v8502 = vpop.f32.mrb[0].mxu0
      %v8503 = vadd.f32 0.0, %v8502
      %8504 = vmatprep.mubr.f32.mxu0 0.0
      %8505 = vmatmul.mubr.f32.gmra.mrb[0].mxu0 %v8302
      %v8506 = vpop.f32.mrb[0].mxu0
      %v8507 = vadd.f32 0.0, %v8506
      %v8508 = vpop.f32.mrb[0].mxu0
      %v8509 = vadd.f32 0.0, %v8508
      %8510 = vmatprep.mubr.f32.mxu0 0.0
      %8511 = vmatmul.mubr.f32.gmra.mrb[0].mxu0 %v8303
      %v8512 = vpop.f32.mrb[0].mxu0
      %v8513 = vadd.f32 0.0, %v8512
      %v8514 = vpop.f32.mrb[0].mxu0
      %v8515 = vadd.f32 0.0, %v8514
      %8516 = vmatprep.mubr.f32.mxu0 0.0
      %8517 = vmatmul.mubr.f32.gmra.mrb[0].mxu0 %v8304
      %v8518 = vpop.f32.mrb[0].mxu0
      %v8519 = vadd.f32 0.0, %v8518
      %v8520 = vpop.f32.mrb[0].mxu0
      %v8521 = vadd.f32 0.0, %v8520
      %8522 = vmatprep.mubr.f32.mxu0 0.0
      %8523 = vmatmul.mubr.f32.gmra.mrb[0].mxu0 %v8305
      %v8524 = vpop.f32.mrb[0].mxu0
      %v8525 = vadd.f32 0.0, %v8524
      %v8526 = vpop.f32.mrb[0].mxu0
      %v8527 = vadd.f32 0.0, %v8526
      %8528 = vmatprep.mubr.f32.mxu0 0.0
      %8529 = vmatmul.mubr.f32.gmra.mrb[0].mxu0 %v8306
      %v8530 = vpop.f32.mrb[0].mxu0
      %v8531 = vadd.f32 0.0, %v8530
      %v8532 = vpop.f32.mrb[0].mxu0
      %v8533 = vadd.f32 0.0, %v8532
      %8534 = vmatprep.mubr.f32.mxu0 0.0
      %8535 = vmatmul.mubr.f32.gmra.mrb[0].mxu0 %v8307
      %v8536 = vpop.f32.mrb[0].mxu0
      %v8537 = vadd.f32 0.0, %v8536
      %v8538 = vpop.f32.mrb[0].mxu0
      %v8539 = vadd.f32 0.0, %v8538
      %8540 = vmatprep.mubr.f32.mxu0 0.0
      %8541 = vmatmul.mubr.f32.gmra.mrb[0].mxu0 %v8308
      %v8542 = vpop.f32.mrb[0].mxu0
      %v8543 = vadd.f32 0.0, %v8542
      %v8544 = vpop.f32.mrb[0].mxu0
      %v8545 = vadd.f32 0.0, %v8544
      %8546 = vmatprep.mubr.f32.mxu0 0.0
      %8547 = vmatmul.mubr.f32.gmra.mrb[0].mxu0 %v8309
      %v8548 = vpop.f32.mrb[0].mxu0
      %v8549 = vadd.f32 0.0, %v8548
      %v8550 = vpop.f32.mrb[0].mxu0
      %v8551 = vadd.f32 0.0, %v8550
      %8552 = vmatprep.mubr.f32.mxu0 0.0
      %8553 = vmatmul.mubr.f32.gmra.mrb[0].mxu0 %v8310
      %v8554 = vpop.f32.mrb[0].mxu0
      %v8555 = vadd.f32 0.0, %v8554
      %v8556 = vpop.f32.mrb[0].mxu0
      %v8557 = vadd.f32 0.0, %v8556
      %8558 = vmatprep.mubr.f32.mxu0 0.0
      %8559 = vmatmul.mubr.f32.gmra.mrb[0].mxu0 %v8311
      %v8560 = vpop.f32.mrb[0].mxu0
      %v8561 = vadd.f32 0.0, %v8560
      %v8562 = vpop.f32.mrb[0].mxu0
      %v8563 = vadd.f32 0.0, %v8562
      %8564 = vmatprep.mubr.f32.mxu0 0.0
      %8565 = vmatmul.mubr.f32.gmra.mrb[0].mxu0 %v8312
      %v8566 = vpop.f32.mrb[0].mxu0
      %v8567 = vadd.f32 0.0, %v8566
      %v8568 = vpop.f32.mrb[0].mxu0
      %v8569 = vadd.f32 0.0, %v8568
      %8570 = vmatprep.mubr.f32.mxu0 0.0
      %8571 = vmatmul.mubr.f32.gmra.mrb[0].mxu0 %v8313
      %v8572 = vpop.f32.mrb[0].mxu0
      %v8573 = vadd.f32 0.0, %v8572
      %v8574 = vpop.f32.mrb[0].mxu0
      %v8575 = vadd.f32 0.0, %v8574
      %8576 = vmatprep.mubr.f32.mxu0 0.0
      %8577 = vmatmul.mubr.f32.gmra.mrb[0].mxu0 %v8314
      %v8578 = vpop.f32.mrb[0].mxu0
      %v8579 = vadd.f32 0.0, %v8578
      %v8580 = vpop.f32.mrb[0].mxu0
      %v8581 = vadd.f32 0.0, %v8580
      %8582 = vmatprep.mubr.f32.mxu0 0.0
      %8583 = vmatmul.mubr.f32.gmra.mrb[0].mxu0 %v8315
      %v8584 = vpop.f32.mrb[0].mxu0
      %v8585 = vadd.f32 0.0, %v8584
      %v8586 = vpop.f32.mrb[0].mxu0
      %v8587 = vadd.f32 0.0, %v8586
      %8588 = vmatprep.mubr.f32.mxu0 0.0
      %8589 = vmatmul.mubr.f32.gmra.mrb[0].mxu0 %v8316
      %v8590 = vpop.f32.mrb[0].mxu0
      %v8591 = vadd.f32 0.0, %v8590
      %v8592 = vpop.f32.mrb[0].mxu0
      %v8593 = vadd.f32 0.0, %v8592
      %8594 = vmatprep.mubr.f32.mxu0 0.0
      %8595 = vmatmul.mubr.f32.gmra.mrb[0].mxu0 %v8317
      %v8596 = vpop.f32.mrb[0].mxu0
      %v8597 = vadd.f32 0.0, %v8596
      %v8598 = vpop.f32.mrb[0].mxu0
      %v8599 = vadd.f32 0.0, %v8598
      %8600 = vmatprep.mubr.f32.mxu0 0.0
      %8601 = vmatmul.mubr.f32.gmra.mrb[0].mxu0 %v8318
      %v8602 = vpop.f32.mrb[0].mxu0
      %v8603 = vadd.f32 0.0, %v8602
      %v8604 = vpop.f32.mrb[0].mxu0
      %v8605 = vadd.f32 0.0, %v8604
      %8606 = vmatprep.mubr.f32.mxu0 0.0
      %8607 = vmatmul.mubr.f32.gmra.mrb[0].mxu0 %v8319
      %v8608 = vpop.f32.mrb[0].mxu0
      %v8609 = vadd.f32 0.0, %v8608
      %v8610 = vpop.f32.mrb[0].mxu0
      %v8611 = vadd.f32 0.0, %v8610
      %8612 = vmatprep.mubr.f32.mxu0 0.0
      %8613 = vmatmul.mubr.f32.gmra.mrb[0].mxu0 %v8320
      %v8614 = vpop.f32.mrb[0].mxu0
      %v8615 = vadd.f32 0.0, %v8614
      %v8616 = vpop.f32.mrb[0].mxu0
      %v8617 = vadd.f32 0.0, %v8616
      %8618 = vmatprep.mubr.f32.mxu0 0.0
      %8619 = vmatmul.mubr.f32.gmra.mrb[0].mxu0 %v8321
      %v8620 = vpop.f32.mrb[0].mxu0
      %v8621 = vadd.f32 0.0, %v8620
      %v8622 = vpop.f32.mrb[0].mxu0
      %v8623 = vadd.f32 0.0, %v8622
      %8624 = vmatprep.mubr.f32.mxu0 0.0
      %8625 = vmatmul.mubr.f32.gmra.mrb[0].mxu0 %v8322
      %v8626 = vpop.f32.mrb[0].mxu0
      %v8627 = vadd.f32 0.0, %v8626
      %v8628 = vpop.f32.mrb[0].mxu0
      %v8629 = vadd.f32 0.0, %v8628
      %8630 = vmatprep.mubr.f32.mxu0 0.0
      %8631 = vmatmul.mubr.f32.gmra.mrb[0].mxu0 %v8323
      %v8632 = vpop.f32.mrb[0].mxu0
      %v8633 = vadd.f32 0.0, %v8632
      %v8634 = vpop.f32.mrb[0].mxu0
      %v8635 = vadd.f32 0.0, %v8634
      %8636 = vmatprep.mubr.f32.mxu0 0.0
      %8637 = vmatmul.mubr.f32.gmra.mrb[0].mxu0 %v8324
      %v8638 = vpop.f32.mrb[0].mxu0
      %v8639 = vadd.f32 0.0, %v8638
      %v8640 = vpop.f32.mrb[0].mxu0
      %v8641 = vadd.f32 0.0, %v8640
      %8642 = vmatprep.mubr.f32.mxu0 0.0
      %8643 = vmatmul.mubr.f32.gmra.mrb[0].mxu0 %v8325
      %v8644 = vpop.f32.mrb[0].mxu0
      %v8645 = vadd.f32 0.0, %v8644
      %v8646 = vpop.f32.mrb[0].mxu0
      %v8647 = vadd.f32 0.0, %v8646
      %8648 = vmatprep.mubr.f32.mxu0 0.0
      %8649 = vmatmul.mubr.f32.gmra.mrb[0].mxu0 %v8326
      %v8650 = vpop.f32.mrb[0].mxu0
      %v8651 = vadd.f32 0.0, %v8650
      %v8652 = vpop.f32.mrb[0].mxu0
      %v8653 = vadd.f32 0.0, %v8652
      %8654 = vmatprep.mubr.f32.mxu0 0.0
      %8655 = vmatmul.mubr.f32.gmra.mrb[0].mxu0 %v8327
      %v8656 = vpop.f32.mrb[0].mxu0
      %v8657 = vadd.f32 0.0, %v8656
      %v8658 = vpop.f32.mrb[0].mxu0
      %v8659 = vadd.f32 0.0, %v8658
      %8660 = vmatprep.mubr.f32.mxu0 0.0
      %8661 = vmatmul.mubr.f32.gmra.mrb[0].mxu0 %v8328
      %v8662 = vpop.f32.mrb[0].mxu0
      %v8663 = vadd.f32 0.0, %v8662
      %v8664 = vpop.f32.mrb[0].mxu0
      %v8665 = vadd.f32 0.0, %v8664
      %8666 = vdwg.mxu0
      %v8667 = vadd.f32 %v8209, %v8429
      %v8668 = vadd.f32 %v8210, %v8431
      %v8669 = vadd.f32 %v8211, %v8435
      %v8670 = vadd.f32 %v8212, %v8437
      %v8671 = vadd.f32 %v8213, %v8441
      %v8672 = vadd.f32 %v8214, %v8443
      %v8673 = vadd.f32 %v8215, %v8447
      %v8674 = vadd.f32 %v8216, %v8449
      %v8675 = vadd.f32 %v8217, %v8453
      %v8676 = vadd.f32 %v8218, %v8455
      %v8677 = vadd.f32 %v8219, %v8459
      %v8678 = vadd.f32 %v8220, %v8461
      %v8679 = vadd.f32 %v8221, %v8465
      %v8680 = vadd.f32 %v8222, %v8467
      %v8681 = vadd.f32 %v8223, %v8471
      %v8682 = vadd.f32 %v8224, %v8473
      %v8683 = vadd.f32 %v8225, %v8477
      %v8684 = vadd.f32 %v8226, %v8479
      %v8685 = vadd.f32 %v8227, %v8483
      %v8686 = vadd.f32 %v8228, %v8485
      %v8687 = vadd.f32 %v8229, %v8489
      %v8688 = vadd.f32 %v8230, %v8491
      %v8689 = vadd.f32 %v8231, %v8495
      %v8690 = vadd.f32 %v8232, %v8497
      %v8691 = vadd.f32 %v8233, %v8501
      %v8692 = vadd.f32 %v8234, %v8503
      %v8693 = vadd.f32 %v8235, %v8507
      %v8694 = vadd.f32 %v8236, %v8509
      %v8695 = vadd.f32 %v8237, %v8513
      %v8696 = vadd.f32 %v8238, %v8515
      %v8697 = vadd.f32 %v8239, %v8519
      %v8698 = vadd.f32 %v8240, %v8521
      %v8699 = vadd.f32 %v8241, %v8525
      %v8700 = vadd.f32 %v8242, %v8527
      %v8701 = vadd.f32 %v8243, %v8531
      %v8702 = vadd.f32 %v8244, %v8533
      %v8703 = vadd.f32 %v8245, %v8537
      %v8704 = vadd.f32 %v8246, %v8539
      %v8705 = vadd.f32 %v8247, %v8543
      %v8706 = vadd.f32 %v8248, %v8545
      %v8707 = vadd.f32 %v8249, %v8549
      %v8708 = vadd.f32 %v8250, %v8551
      %v8709 = vadd.f32 %v8251, %v8555
      %v8710 = vadd.f32 %v8252, %v8557
      %v8711 = vadd.f32 %v8253, %v8561
      %v8712 = vadd.f32 %v8254, %v8563
      %v8713 = vadd.f32 %v8255, %v8567
      %v8714 = vadd.f32 %v8256, %v8569
      %v8715 = vadd.f32 %v8257, %v8573
      %v8716 = vadd.f32 %v8258, %v8575
      %v8717 = vadd.f32 %v8259, %v8579
      %v8718 = vadd.f32 %v8260, %v8581
      %v8719 = vadd.f32 %v8261, %v8585
      %v8720 = vadd.f32 %v8262, %v8587
      %v8721 = vadd.f32 %v8263, %v8591
      %v8722 = vadd.f32 %v8264, %v8593
      %v8723 = vadd.f32 %v8265, %v8597
      %v8724 = vadd.f32 %v8266, %v8599
      %v8725 = vadd.f32 %v8267, %v8603
      %v8726 = vadd.f32 %v8268, %v8605
      %v8727 = vadd.f32 %v8269, %v8609
      %v8728 = vadd.f32 %v8270, %v8611
      %v8729 = vadd.f32 %v8271, %v8615
      %v8730 = vadd.f32 %v8272, %v8617
      %v8731 = vadd.f32 %v8273, %v8621
      %v8732 = vadd.f32 %v8274, %v8623
      %v8733 = vadd.f32 %v8275, %v8627
      %v8734 = vadd.f32 %v8276, %v8629
      %v8735 = vadd.f32 %v8277, %v8633
      %v8736 = vadd.f32 %v8278, %v8635
      %v8737 = vadd.f32 %v8279, %v8639
      %v8738 = vadd.f32 %v8280, %v8641
      %v8739 = vadd.f32 %v8281, %v8645
      %v8740 = vadd.f32 %v8282, %v8647
      %v8741 = vadd.f32 %v8283, %v8651
      %v8742 = vadd.f32 %v8284, %v8653
      %v8743 = vadd.f32 %v8285, %v8657
      %v8744 = vadd.f32 %v8286, %v8659
      %v8745 = vadd.f32 %v8287, %v8663
      %v8746 = vadd.f32 %v8288, %v8665
      %v8747 = vld [vmem:[#allocation2 + $0x80] sm:$0xff]
      %v8748 = vld [vmem:[#allocation2 + $0x88] sm:$0xff]
      %v8749 = vld [vmem:[#allocation2 + $0x90] sm:$0xff]
      %v8750 = vld [vmem:[#allocation2 + $0x98] sm:$0xff]
      %v8751 = vld [vmem:[#allocation2 + $0xa0] sm:$0xff]
      %v8752 = vld [vmem:[#allocation2 + $0xa8] sm:$0xff]
      %v8753 = vld [vmem:[#allocation2 + $0xb0] sm:$0xff]
      %v8754 = vld [vmem:[#allocation2 + $0xb8] sm:$0xff]
      %v8755 = vld [vmem:[#allocation2 + $0xc0] sm:$0xff]
      %v8756 = vld [vmem:[#allocation2 + $0xc8] sm:$0xff]
      %v8757 = vld [vmem:[#allocation2 + $0xd0] sm:$0xff]
      %v8758 = vld [vmem:[#allocation2 + $0xd8] sm:$0xff]
      %v8759 = vld [vmem:[#allocation2 + $0xe0] sm:$0xff]
      %v8760 = vld [vmem:[#allocation2 + $0xe8] sm:$0xff]
      %v8761 = vld [vmem:[#allocation2 + $0xf0] sm:$0xff]
      %v8762 = vld [vmem:[#allocation2 + $0xf8] sm:$0xff]
      %v8763 = vld [vmem:[#allocation2 + $0x100] sm:$0xff]
      %v8764 = vld [vmem:[#allocation2 + $0x108] sm:$0xff]
      %v8765 = vld [vmem:[#allocation2 + $0x110] sm:$0xff]
      %v8766 = vld [vmem:[#allocation2 + $0x118] sm:$0xff]
      %v8767 = vld [vmem:[#allocation2 + $0x120] sm:$0xff]
      %v8768 = vld [vmem:[#allocation2 + $0x128] sm:$0xff]
      %v8769 = vld [vmem:[#allocation2 + $0x130] sm:$0xff]
      %v8770 = vld [vmem:[#allocation2 + $0x138] sm:$0xff]
      %v8771 = vld [vmem:[#allocation2 + $0x140] sm:$0xff]
      %v8772 = vld [vmem:[#allocation2 + $0x148] sm:$0xff]
      %v8773 = vld [vmem:[#allocation2 + $0x150] sm:$0xff]
      %v8774 = vld [vmem:[#allocation2 + $0x158] sm:$0xff]
      %v8775 = vld [vmem:[#allocation2 + $0x160] sm:$0xff]
      %v8776 = vld [vmem:[#allocation2 + $0x168] sm:$0xff]
      %v8777 = vld [vmem:[#allocation2 + $0x170] sm:$0xff]
      %v8778 = vld [vmem:[#allocation2 + $0x178] sm:$0xff]
      %v8779 = vld [vmem:[#allocation2 + $0x180] sm:$0xff]
      %v8780 = vld [vmem:[#allocation2 + $0x188] sm:$0xff]
      %v8781 = vld [vmem:[#allocation2 + $0x190] sm:$0xff]
      %v8782 = vld [vmem:[#allocation2 + $0x198] sm:$0xff]
      %v8783 = vld [vmem:[#allocation2 + $0x1a0] sm:$0xff]
      %v8784 = vld [vmem:[#allocation2 + $0x1a8] sm:$0xff]
      %v8785 = vld [vmem:[#allocation2 + $0x1b0] sm:$0xff]
      %v8786 = vld [vmem:[#allocation2 + $0x1b8] sm:$0xff]
      %s8787 = scalar_lea.vmem %s3, 1024
      %v8788 = vld [vmem:[%s8787] sm:$0xff]
      %v8789 = vld [vmem:[%s8787 + $0x8] sm:$0xff]
      %v8790 = vld [vmem:[%s8787 + $0x10] sm:$0xff]
      %v8791 = vld [vmem:[%s8787 + $0x18] sm:$0xff]
      %v8792 = vld [vmem:[%s8787 + $0x20] sm:$0xff]
      %v8793 = vld [vmem:[%s8787 + $0x28] sm:$0xff]
      %v8794 = vld [vmem:[%s8787 + $0x30] sm:$0xff]
      %v8795 = vld [vmem:[%s8787 + $0x38] sm:$0xff]
      %v8796 = vld [vmem:[%s8787 + $0x40] sm:$0xff]
      %v8797 = vld [vmem:[%s8787 + $0x48] sm:$0xff]
      %v8798 = vld [vmem:[%s8787 + $0x50] sm:$0xff]
      %v8799 = vld [vmem:[%s8787 + $0x58] sm:$0xff]
      %v8800 = vld [vmem:[%s8787 + $0x60] sm:$0xff]
      %v8801 = vld [vmem:[%s8787 + $0x68] sm:$0xff]
      %v8802 = vld [vmem:[%s8787 + $0x70] sm:$0xff]
      %v8803 = vld [vmem:[%s8787 + $0x78] sm:$0xff]
      %v8804 = vld [vmem:[%s8787 + $0x80] sm:$0xff]
      %v8805 = vld [vmem:[%s8787 + $0x88] sm:$0xff]
      %v8806 = vld [vmem:[%s8787 + $0x90] sm:$0xff]
      %v8807 = vld [vmem:[%s8787 + $0x98] sm:$0xff]
      %v8808 = vld [vmem:[%s8787 + $0xa0] sm:$0xff]
      %v8809 = vld [vmem:[%s8787 + $0xa8] sm:$0xff]
      %v8810 = vld [vmem:[%s8787 + $0xb0] sm:$0xff]
      %v8811 = vld [vmem:[%s8787 + $0xb8] sm:$0xff]
      %v8812 = vld [vmem:[%s8787 + $0xc0] sm:$0xff]
      %v8813 = vld [vmem:[%s8787 + $0xc8] sm:$0xff]
      %v8814 = vld [vmem:[%s8787 + $0xd0] sm:$0xff]
      %v8815 = vld [vmem:[%s8787 + $0xd8] sm:$0xff]
      %v8816 = vld [vmem:[%s8787 + $0xe0] sm:$0xff]
      %v8817 = vld [vmem:[%s8787 + $0xe8] sm:$0xff]
      %v8818 = vld [vmem:[%s8787 + $0xf0] sm:$0xff]
      %v8819 = vld [vmem:[%s8787 + $0xf8] sm:$0xff]
      %8820 = vmatprep.subr.mxu0 %v8789
      %8821 = vmatpush1.msra.mxu0 %v8788
      %8822 = vmatprep.subr.mxu0 %v8791
      %8823 = vmatpush1.msra.mxu0 %v8790
      %8824 = vmatprep.subr.mxu0 %v8793
      %8825 = vmatpush1.msra.mxu0 %v8792
      %8826 = vmatprep.subr.mxu0 %v8795
      %8827 = vmatpush1.msra.mxu0 %v8794
      %8828 = vmatprep.subr.mxu0 %v8797
      %8829 = vmatpush1.msra.mxu0 %v8796
      %8830 = vmatprep.subr.mxu0 %v8799
      %8831 = vmatpush1.msra.mxu0 %v8798
      %8832 = vmatprep.subr.mxu0 %v8801
      %8833 = vmatpush1.msra.mxu0 %v8800
      %8834 = vmatprep.subr.mxu0 %v8803
      %8835 = vmatpush1.msra.mxu0 %v8802
      %8836 = vmatprep.subr.mxu0 %v8805
      %8837 = vmatpush1.msra.mxu0 %v8804
      %8838 = vmatprep.subr.mxu0 %v8807
      %8839 = vmatpush1.msra.mxu0 %v8806
      %8840 = vmatprep.subr.mxu0 %v8809
      %8841 = vmatpush1.msra.mxu0 %v8808
      %8842 = vmatprep.subr.mxu0 %v8811
      %8843 = vmatpush1.msra.mxu0 %v8810
      %8844 = vmatprep.subr.mxu0 %v8813
      %8845 = vmatpush1.msra.mxu0 %v8812
      %8846 = vmatprep.subr.mxu0 %v8815
      %8847 = vmatpush1.msra.mxu0 %v8814
      %8848 = vmatprep.subr.mxu0 %v8817
      %8849 = vmatpush1.msra.mxu0 %v8816
      %8850 = vmatprep.subr.mxu0 %v8819
      %8851 = vmatpush1.msra.mxu0 %v8818
      %8852 = vmatprep.subr.mxu0 0.0
      %8853 = vmatpush1.msra.mxu0 0.0
      %8854 = vmatprep.subr.mxu0 0.0
      %8855 = vmatpush1.msra.mxu0 0.0
      %8856 = vmatprep.subr.mxu0 0.0
      %8857 = vmatpush1.msra.mxu0 0.0
      %8858 = vmatprep.subr.mxu0 0.0
      %8859 = vmatpush1.msra.mxu0 0.0
      %8860 = vmatprep.subr.mxu0 0.0
      %8861 = vmatpush1.msra.mxu0 0.0
      %8862 = vmatprep.subr.mxu0 0.0
      %8863 = vmatpush1.msra.mxu0 0.0
      %8864 = vmatprep.subr.mxu0 0.0
      %8865 = vmatpush1.msra.mxu0 0.0
      %8866 = vmatprep.subr.mxu0 0.0
      %8867 = vmatpush1.msra.mxu0 0.0
      %8868 = vmatprep.subr.mxu0 0.0
      %8869 = vmatpush1.msra.mxu0 0.0
      %8870 = vmatprep.subr.mxu0 0.0
      %8871 = vmatpush1.msra.mxu0 0.0
      %8872 = vmatprep.subr.mxu0 0.0
      %8873 = vmatpush1.msra.mxu0 0.0
      %8874 = vmatprep.subr.mxu0 0.0
      %8875 = vmatpush1.msra.mxu0 0.0
      %8876 = vmatprep.subr.mxu0 0.0
      %8877 = vmatpush1.msra.mxu0 0.0
      %8878 = vmatprep.subr.mxu0 0.0
      %8879 = vmatpush1.msra.mxu0 0.0
      %8880 = vmatprep.subr.mxu0 0.0
      %8881 = vmatpush1.msra.mxu0 0.0
      %8882 = vmatprep.subr.mxu0 0.0
      %8883 = vmatpush1.msra.mxu0 0.0
      %8884 = vmatprep.mubr.f32.mxu0 0.0
      %8885 = vmatmul.mubr.f32.gmra.mrb[0].mxu0 %v8747
      %v8886 = vpop.f32.mrb[0].mxu0
      %v8887 = vadd.f32 0.0, %v8886
      %v8888 = vpop.f32.mrb[0].mxu0
      %v8889 = vadd.f32 0.0, %v8888
      %8890 = vmatprep.mubr.f32.mxu0 0.0
      %8891 = vmatmul.mubr.f32.gmra.mrb[0].mxu0 %v8748
      %v8892 = vpop.f32.mrb[0].mxu0
      %v8893 = vadd.f32 0.0, %v8892
      %v8894 = vpop.f32.mrb[0].mxu0
      %v8895 = vadd.f32 0.0, %v8894
      %8896 = vmatprep.mubr.f32.mxu0 0.0
      %8897 = vmatmul.mubr.f32.gmra.mrb[0].mxu0 %v8749
      %v8898 = vpop.f32.mrb[0].mxu0
      %v8899 = vadd.f32 0.0, %v8898
      %v8900 = vpop.f32.mrb[0].mxu0
      %v8901 = vadd.f32 0.0, %v8900
      %8902 = vmatprep.mubr.f32.mxu0 0.0
      %8903 = vmatmul.mubr.f32.gmra.mrb[0].mxu0 %v8750
      %v8904 = vpop.f32.mrb[0].mxu0
      %v8905 = vadd.f32 0.0, %v8904
      %v8906 = vpop.f32.mrb[0].mxu0
      %v8907 = vadd.f32 0.0, %v8906
      %8908 = vmatprep.mubr.f32.mxu0 0.0
      %8909 = vmatmul.mubr.f32.gmra.mrb[0].mxu0 %v8751
      %v8910 = vpop.f32.mrb[0].mxu0
      %v8911 = vadd.f32 0.0, %v8910
      %v8912 = vpop.f32.mrb[0].mxu0
      %v8913 = vadd.f32 0.0, %v8912
      %8914 = vmatprep.mubr.f32.mxu0 0.0
      %8915 = vmatmul.mubr.f32.gmra.mrb[0].mxu0 %v8752
      %v8916 = vpop.f32.mrb[0].mxu0
      %v8917 = vadd.f32 0.0, %v8916
      %v8918 = vpop.f32.mrb[0].mxu0
      %v8919 = vadd.f32 0.0, %v8918
      %8920 = vmatprep.mubr.f32.mxu0 0.0
      %8921 = vmatmul.mubr.f32.gmra.mrb[0].mxu0 %v8753
      %v8922 = vpop.f32.mrb[0].mxu0
      %v8923 = vadd.f32 0.0, %v8922
      %v8924 = vpop.f32.mrb[0].mxu0
      %v8925 = vadd.f32 0.0, %v8924
      %8926 = vmatprep.mubr.f32.mxu0 0.0
      %8927 = vmatmul.mubr.f32.gmra.mrb[0].mxu0 %v8754
      %v8928 = vpop.f32.mrb[0].mxu0
      %v8929 = vadd.f32 0.0, %v8928
      %v8930 = vpop.f32.mrb[0].mxu0
      %v8931 = vadd.f32 0.0, %v8930
      %8932 = vmatprep.mubr.f32.mxu0 0.0
      %8933 = vmatmul.mubr.f32.gmra.mrb[0].mxu0 %v8755
      %v8934 = vpop.f32.mrb[0].mxu0
      %v8935 = vadd.f32 0.0, %v8934
      %v8936 = vpop.f32.mrb[0].mxu0
      %v8937 = vadd.f32 0.0, %v8936
      %8938 = vmatprep.mubr.f32.mxu0 0.0
      %8939 = vmatmul.mubr.f32.gmra.mrb[0].mxu0 %v8756
      %v8940 = vpop.f32.mrb[0].mxu0
      %v8941 = vadd.f32 0.0, %v8940
      %v8942 = vpop.f32.mrb[0].mxu0
      %v8943 = vadd.f32 0.0, %v8942
      %8944 = vmatprep.mubr.f32.mxu0 0.0
      %8945 = vmatmul.mubr.f32.gmra.mrb[0].mxu0 %v8757
      %v8946 = vpop.f32.mrb[0].mxu0
      %v8947 = vadd.f32 0.0, %v8946
      %v8948 = vpop.f32.mrb[0].mxu0
      %v8949 = vadd.f32 0.0, %v8948
      %8950 = vmatprep.mubr.f32.mxu0 0.0
      %8951 = vmatmul.mubr.f32.gmra.mrb[0].mxu0 %v8758
      %v8952 = vpop.f32.mrb[0].mxu0
      %v8953 = vadd.f32 0.0, %v8952
      %v8954 = vpop.f32.mrb[0].mxu0
      %v8955 = vadd.f32 0.0, %v8954
      %8956 = vmatprep.mubr.f32.mxu0 0.0
      %8957 = vmatmul.mubr.f32.gmra.mrb[0].mxu0 %v8759
      %v8958 = vpop.f32.mrb[0].mxu0
      %v8959 = vadd.f32 0.0, %v8958
      %v8960 = vpop.f32.mrb[0].mxu0
      %v8961 = vadd.f32 0.0, %v8960
      %8962 = vmatprep.mubr.f32.mxu0 0.0
      %8963 = vmatmul.mubr.f32.gmra.mrb[0].mxu0 %v8760
      %v8964 = vpop.f32.mrb[0].mxu0
      %v8965 = vadd.f32 0.0, %v8964
      %v8966 = vpop.f32.mrb[0].mxu0
      %v8967 = vadd.f32 0.0, %v8966
      %8968 = vmatprep.mubr.f32.mxu0 0.0
      %8969 = vmatmul.mubr.f32.gmra.mrb[0].mxu0 %v8761
      %v8970 = vpop.f32.mrb[0].mxu0
      %v8971 = vadd.f32 0.0, %v8970
      %v8972 = vpop.f32.mrb[0].mxu0
      %v8973 = vadd.f32 0.0, %v8972
      %8974 = vmatprep.mubr.f32.mxu0 0.0
      %8975 = vmatmul.mubr.f32.gmra.mrb[0].mxu0 %v8762
      %v8976 = vpop.f32.mrb[0].mxu0
      %v8977 = vadd.f32 0.0, %v8976
      %v8978 = vpop.f32.mrb[0].mxu0
      %v8979 = vadd.f32 0.0, %v8978
      %8980 = vmatprep.mubr.f32.mxu0 0.0
      %8981 = vmatmul.mubr.f32.gmra.mrb[0].mxu0 %v8763
      %v8982 = vpop.f32.mrb[0].mxu0
      %v8983 = vadd.f32 0.0, %v8982
      %v8984 = vpop.f32.mrb[0].mxu0
      %v8985 = vadd.f32 0.0, %v8984
      %8986 = vmatprep.mubr.f32.mxu0 0.0
      %8987 = vmatmul.mubr.f32.gmra.mrb[0].mxu0 %v8764
      %v8988 = vpop.f32.mrb[0].mxu0
      %v8989 = vadd.f32 0.0, %v8988
      %v8990 = vpop.f32.mrb[0].mxu0
      %v8991 = vadd.f32 0.0, %v8990
      %8992 = vmatprep.mubr.f32.mxu0 0.0
      %8993 = vmatmul.mubr.f32.gmra.mrb[0].mxu0 %v8765
      %v8994 = vpop.f32.mrb[0].mxu0
      %v8995 = vadd.f32 0.0, %v8994
      %v8996 = vpop.f32.mrb[0].mxu0
      %v8997 = vadd.f32 0.0, %v8996
      %8998 = vmatprep.mubr.f32.mxu0 0.0
      %8999 = vmatmul.mubr.f32.gmra.mrb[0].mxu0 %v8766
      %v9000 = vpop.f32.mrb[0].mxu0
      %v9001 = vadd.f32 0.0, %v9000
      %v9002 = vpop.f32.mrb[0].mxu0
      %v9003 = vadd.f32 0.0, %v9002
      %9004 = vmatprep.mubr.f32.mxu0 0.0
      %9005 = vmatmul.mubr.f32.gmra.mrb[0].mxu0 %v8767
      %v9006 = vpop.f32.mrb[0].mxu0
      %v9007 = vadd.f32 0.0, %v9006
      %v9008 = vpop.f32.mrb[0].mxu0
      %v9009 = vadd.f32 0.0, %v9008
      %9010 = vmatprep.mubr.f32.mxu0 0.0
      %9011 = vmatmul.mubr.f32.gmra.mrb[0].mxu0 %v8768
      %v9012 = vpop.f32.mrb[0].mxu0
      %v9013 = vadd.f32 0.0, %v9012
      %v9014 = vpop.f32.mrb[0].mxu0
      %v9015 = vadd.f32 0.0, %v9014
      %9016 = vmatprep.mubr.f32.mxu0 0.0
      %9017 = vmatmul.mubr.f32.gmra.mrb[0].mxu0 %v8769
      %v9018 = vpop.f32.mrb[0].mxu0
      %v9019 = vadd.f32 0.0, %v9018
      %v9020 = vpop.f32.mrb[0].mxu0
      %v9021 = vadd.f32 0.0, %v9020
      %9022 = vmatprep.mubr.f32.mxu0 0.0
      %9023 = vmatmul.mubr.f32.gmra.mrb[0].mxu0 %v8770
      %v9024 = vpop.f32.mrb[0].mxu0
      %v9025 = vadd.f32 0.0, %v9024
      %v9026 = vpop.f32.mrb[0].mxu0
      %v9027 = vadd.f32 0.0, %v9026
      %9028 = vmatprep.mubr.f32.mxu0 0.0
      %9029 = vmatmul.mubr.f32.gmra.mrb[0].mxu0 %v8771
      %v9030 = vpop.f32.mrb[0].mxu0
      %v9031 = vadd.f32 0.0, %v9030
      %v9032 = vpop.f32.mrb[0].mxu0
      %v9033 = vadd.f32 0.0, %v9032
      %9034 = vmatprep.mubr.f32.mxu0 0.0
      %9035 = vmatmul.mubr.f32.gmra.mrb[0].mxu0 %v8772
      %v9036 = vpop.f32.mrb[0].mxu0
      %v9037 = vadd.f32 0.0, %v9036
      %v9038 = vpop.f32.mrb[0].mxu0
      %v9039 = vadd.f32 0.0, %v9038
      %9040 = vmatprep.mubr.f32.mxu0 0.0
      %9041 = vmatmul.mubr.f32.gmra.mrb[0].mxu0 %v8773
      %v9042 = vpop.f32.mrb[0].mxu0
      %v9043 = vadd.f32 0.0, %v9042
      %v9044 = vpop.f32.mrb[0].mxu0
      %v9045 = vadd.f32 0.0, %v9044
      %9046 = vmatprep.mubr.f32.mxu0 0.0
      %9047 = vmatmul.mubr.f32.gmra.mrb[0].mxu0 %v8774
      %v9048 = vpop.f32.mrb[0].mxu0
      %v9049 = vadd.f32 0.0, %v9048
      %v9050 = vpop.f32.mrb[0].mxu0
      %v9051 = vadd.f32 0.0, %v9050
      %9052 = vmatprep.mubr.f32.mxu0 0.0
      %9053 = vmatmul.mubr.f32.gmra.mrb[0].mxu0 %v8775
      %v9054 = vpop.f32.mrb[0].mxu0
      %v9055 = vadd.f32 0.0, %v9054
      %v9056 = vpop.f32.mrb[0].mxu0
      %v9057 = vadd.f32 0.0, %v9056
      %9058 = vmatprep.mubr.f32.mxu0 0.0
      %9059 = vmatmul.mubr.f32.gmra.mrb[0].mxu0 %v8776
      %v9060 = vpop.f32.mrb[0].mxu0
      %v9061 = vadd.f32 0.0, %v9060
      %v9062 = vpop.f32.mrb[0].mxu0
      %v9063 = vadd.f32 0.0, %v9062
      %9064 = vmatprep.mubr.f32.mxu0 0.0
      %9065 = vmatmul.mubr.f32.gmra.mrb[0].mxu0 %v8777
      %v9066 = vpop.f32.mrb[0].mxu0
      %v9067 = vadd.f32 0.0, %v9066
      %v9068 = vpop.f32.mrb[0].mxu0
      %v9069 = vadd.f32 0.0, %v9068
      %9070 = vmatprep.mubr.f32.mxu0 0.0
      %9071 = vmatmul.mubr.f32.gmra.mrb[0].mxu0 %v8778
      %v9072 = vpop.f32.mrb[0].mxu0
      %v9073 = vadd.f32 0.0, %v9072
      %v9074 = vpop.f32.mrb[0].mxu0
      %v9075 = vadd.f32 0.0, %v9074
      %9076 = vmatprep.mubr.f32.mxu0 0.0
      %9077 = vmatmul.mubr.f32.gmra.mrb[0].mxu0 %v8779
      %v9078 = vpop.f32.mrb[0].mxu0
      %v9079 = vadd.f32 0.0, %v9078
      %v9080 = vpop.f32.mrb[0].mxu0
      %v9081 = vadd.f32 0.0, %v9080
      %9082 = vmatprep.mubr.f32.mxu0 0.0
      %9083 = vmatmul.mubr.f32.gmra.mrb[0].mxu0 %v8780
      %v9084 = vpop.f32.mrb[0].mxu0
      %v9085 = vadd.f32 0.0, %v9084
      %v9086 = vpop.f32.mrb[0].mxu0
      %v9087 = vadd.f32 0.0, %v9086
      %9088 = vmatprep.mubr.f32.mxu0 0.0
      %9089 = vmatmul.mubr.f32.gmra.mrb[0].mxu0 %v8781
      %v9090 = vpop.f32.mrb[0].mxu0
      %v9091 = vadd.f32 0.0, %v9090
      %v9092 = vpop.f32.mrb[0].mxu0
      %v9093 = vadd.f32 0.0, %v9092
      %9094 = vmatprep.mubr.f32.mxu0 0.0
      %9095 = vmatmul.mubr.f32.gmra.mrb[0].mxu0 %v8782
      %v9096 = vpop.f32.mrb[0].mxu0
      %v9097 = vadd.f32 0.0, %v9096
      %v9098 = vpop.f32.mrb[0].mxu0
      %v9099 = vadd.f32 0.0, %v9098
      %9100 = vmatprep.mubr.f32.mxu0 0.0
      %9101 = vmatmul.mubr.f32.gmra.mrb[0].mxu0 %v8783
      %v9102 = vpop.f32.mrb[0].mxu0
      %v9103 = vadd.f32 0.0, %v9102
      %v9104 = vpop.f32.mrb[0].mxu0
      %v9105 = vadd.f32 0.0, %v9104
      %9106 = vmatprep.mubr.f32.mxu0 0.0
      %9107 = vmatmul.mubr.f32.gmra.mrb[0].mxu0 %v8784
      %v9108 = vpop.f32.mrb[0].mxu0
      %v9109 = vadd.f32 0.0, %v9108
      %v9110 = vpop.f32.mrb[0].mxu0
      %v9111 = vadd.f32 0.0, %v9110
      %9112 = vmatprep.mubr.f32.mxu0 0.0
      %9113 = vmatmul.mubr.f32.gmra.mrb[0].mxu0 %v8785
      %v9114 = vpop.f32.mrb[0].mxu0
      %v9115 = vadd.f32 0.0, %v9114
      %v9116 = vpop.f32.mrb[0].mxu0
      %v9117 = vadd.f32 0.0, %v9116
      %9118 = vmatprep.mubr.f32.mxu0 0.0
      %9119 = vmatmul.mubr.f32.gmra.mrb[0].mxu0 %v8786
      %v9120 = vpop.f32.mrb[0].mxu0
      %v9121 = vadd.f32 0.0, %v9120
      %v9122 = vpop.f32.mrb[0].mxu0
      %v9123 = vadd.f32 0.0, %v9122
      %9124 = vdwg.mxu0
      %v9125 = vadd.f32 %v8667, %v8887
      %v9126 = vadd.f32 %v8668, %v8889
      %v9127 = vadd.f32 %v8669, %v8893
      %v9128 = vadd.f32 %v8670, %v8895
      %v9129 = vadd.f32 %v8671, %v8899
      %v9130 = vadd.f32 %v8672, %v8901
      %v9131 = vadd.f32 %v8673, %v8905
      %v9132 = vadd.f32 %v8674, %v8907
      %v9133 = vadd.f32 %v8675, %v8911
      %v9134 = vadd.f32 %v8676, %v8913
      %v9135 = vadd.f32 %v8677, %v8917
      %v9136 = vadd.f32 %v8678, %v8919
      %v9137 = vadd.f32 %v8679, %v8923
      %v9138 = vadd.f32 %v8680, %v8925
      %v9139 = vadd.f32 %v8681, %v8929
      %v9140 = vadd.f32 %v8682, %v8931
      %v9141 = vadd.f32 %v8683, %v8935
      %v9142 = vadd.f32 %v8684, %v8937
      %v9143 = vadd.f32 %v8685, %v8941
      %v9144 = vadd.f32 %v8686, %v8943
      %v9145 = vadd.f32 %v8687, %v8947
      %v9146 = vadd.f32 %v8688, %v8949
      %v9147 = vadd.f32 %v8689, %v8953
      %v9148 = vadd.f32 %v8690, %v8955
      %v9149 = vadd.f32 %v8691, %v8959
      %v9150 = vadd.f32 %v8692, %v8961
      %v9151 = vadd.f32 %v8693, %v8965
      %v9152 = vadd.f32 %v8694, %v8967
      %v9153 = vadd.f32 %v8695, %v8971
      %v9154 = vadd.f32 %v8696, %v8973
      %v9155 = vadd.f32 %v8697, %v8977
      %v9156 = vadd.f32 %v8698, %v8979
      %v9157 = vadd.f32 %v8699, %v8983
      %v9158 = vadd.f32 %v8700, %v8985
      %v9159 = vadd.f32 %v8701, %v8989
      %v9160 = vadd.f32 %v8702, %v8991
      %v9161 = vadd.f32 %v8703, %v8995
      %v9162 = vadd.f32 %v8704, %v8997
      %v9163 = vadd.f32 %v8705, %v9001
      %v9164 = vadd.f32 %v8706, %v9003
      %v9165 = vadd.f32 %v8707, %v9007
      %v9166 = vadd.f32 %v8708, %v9009
      %v9167 = vadd.f32 %v8709, %v9013
      %v9168 = vadd.f32 %v8710, %v9015
      %v9169 = vadd.f32 %v8711, %v9019
      %v9170 = vadd.f32 %v8712, %v9021
      %v9171 = vadd.f32 %v8713, %v9025
      %v9172 = vadd.f32 %v8714, %v9027
      %v9173 = vadd.f32 %v8715, %v9031
      %v9174 = vadd.f32 %v8716, %v9033
      %v9175 = vadd.f32 %v8717, %v9037
      %v9176 = vadd.f32 %v8718, %v9039
      %v9177 = vadd.f32 %v8719, %v9043
      %v9178 = vadd.f32 %v8720, %v9045
      %v9179 = vadd.f32 %v8721, %v9049
      %v9180 = vadd.f32 %v8722, %v9051
      %v9181 = vadd.f32 %v8723, %v9055
      %v9182 = vadd.f32 %v8724, %v9057
      %v9183 = vadd.f32 %v8725, %v9061
      %v9184 = vadd.f32 %v8726, %v9063
      %v9185 = vadd.f32 %v8727, %v9067
      %v9186 = vadd.f32 %v8728, %v9069
      %v9187 = vadd.f32 %v8729, %v9073
      %v9188 = vadd.f32 %v8730, %v9075
      %v9189 = vadd.f32 %v8731, %v9079
      %v9190 = vadd.f32 %v8732, %v9081
      %v9191 = vadd.f32 %v8733, %v9085
      %v9192 = vadd.f32 %v8734, %v9087
      %v9193 = vadd.f32 %v8735, %v9091
      %v9194 = vadd.f32 %v8736, %v9093
      %v9195 = vadd.f32 %v8737, %v9097
      %v9196 = vadd.f32 %v8738, %v9099
      %v9197 = vadd.f32 %v8739, %v9103
      %v9198 = vadd.f32 %v8740, %v9105
      %v9199 = vadd.f32 %v8741, %v9109
      %v9200 = vadd.f32 %v8742, %v9111
      %v9201 = vadd.f32 %v8743, %v9115
      %v9202 = vadd.f32 %v8744, %v9117
      %v9203 = vadd.f32 %v8745, %v9121
      %v9204 = vadd.f32 %v8746, %v9123
      %v9205 = vmax.f32 %v9125, %v9126
      %v9206 = vmax.f32 %v9127, %v9128
      %v9207 = vmax.f32 %v9129, %v9130
      %v9208 = vmax.f32 %v9131, %v9132
      %v9209 = vmax.f32 %v9133, %v9134
      %v9210 = vmax.f32 %v9135, %v9136
      %v9211 = vmax.f32 %v9137, %v9138
      %v9212 = vmax.f32 %v9139, %v9140
      %v9213 = vmax.f32 %v9205, %v9209
      %v9214 = vmax.f32 %v9206, %v9210
      %v9215 = vmax.f32 %v9207, %v9211
      %v9216 = vmax.f32 %v9208, %v9212
      %v9217 = vld [vmem:[%s4] sm:$0x1]
      %v9219 = vlaneseq
      %v9220 = vshrl.u32 %v9219, 7
      %v9221 = vsub.s32 0, %v9220
      %v9222 = vrot.slane %v9217, %v9221
      %v9224 = vadd.f32 %v9213, %v9222
      %v9225 = vadd.f32 %v9214, %v9222
      %v9226 = vadd.f32 %v9215, %v9222
      %v9227 = vadd.f32 %v9216, %v9222
      %v9228 = vmax.f32 %v9224, 0.0
      %v9229 = vmax.f32 %v9225, 0.0
      %v9230 = vmax.f32 %v9226, 0.0
      %v9231 = vmax.f32 %v9227, 0.0
      %9232 = vst [vmem:[#allocation3] sm:$0xff] %v9228
      %9233 = vst [vmem:[#allocation3 + $0x8] sm:$0xff] %v9229
      %9234 = vst [vmem:[#allocation3 + $0x10] sm:$0xff] %v9230
      %9235 = vst [vmem:[#allocation3 + $0x18] sm:$0xff] %v9231
      %v9236 = vmax.f32 %v9141, %v9142
      %v9237 = vmax.f32 %v9143, %v9144
      %v9238 = vmax.f32 %v9145, %v9146
      %v9239 = vmax.f32 %v9147, %v9148
      %v9240 = vmax.f32 %v9149, %v9150
      %v9241 = vmax.f32 %v9151, %v9152
      %v9242 = vmax.f32 %v9153, %v9154
      %v9243 = vmax.f32 %v9155, %v9156
      %v9244 = vmax.f32 %v9236, %v9240
      %v9245 = vmax.f32 %v9237, %v9241
      %v9246 = vmax.f32 %v9238, %v9242
      %v9247 = vmax.f32 %v9239, %v9243
      %v9248 = vld [vmem:[%s4] sm:$0x1]
      %v9250 = vlaneseq
      %v9251 = vshrl.u32 %v9250, 7
      %v9252 = vsub.s32 0, %v9251
      %v9253 = vrot.slane %v9248, %v9252
      %v9255 = vadd.f32 %v9244, %v9253
      %v9256 = vadd.f32 %v9245, %v9253
      %v9257 = vadd.f32 %v9246, %v9253
      %v9258 = vadd.f32 %v9247, %v9253
      %v9259 = vmax.f32 %v9255, 0.0
      %v9260 = vmax.f32 %v9256, 0.0
      %v9261 = vmax.f32 %v9257, 0.0
      %v9262 = vmax.f32 %v9258, 0.0
      %9263 = vst [vmem:[#allocation3 + $0x20] sm:$0xff] %v9259
      %9264 = vst [vmem:[#allocation3 + $0x28] sm:$0xff] %v9260
      %9265 = vst [vmem:[#allocation3 + $0x30] sm:$0xff] %v9261
      %9266 = vst [vmem:[#allocation3 + $0x38] sm:$0xff] %v9262
      %v9267 = vmax.f32 %v9157, %v9158
      %v9268 = vmax.f32 %v9159, %v9160
      %v9269 = vmax.f32 %v9161, %v9162
      %v9270 = vmax.f32 %v9163, %v9164
      %v9271 = vmax.f32 %v9165, %v9166
      %v9272 = vmax.f32 %v9167, %v9168
      %v9273 = vmax.f32 %v9169, %v9170
      %v9274 = vmax.f32 %v9171, %v9172
      %v9275 = vmax.f32 %v9267, %v9271
      %v9276 = vmax.f32 %v9268, %v9272
      %v9277 = vmax.f32 %v9269, %v9273
      %v9278 = vmax.f32 %v9270, %v9274
      %v9279 = vld [vmem:[%s4] sm:$0x1]
      %v9281 = vlaneseq
      %v9282 = vshrl.u32 %v9281, 7
      %v9283 = vsub.s32 0, %v9282
      %v9284 = vrot.slane %v9279, %v9283
      %v9286 = vadd.f32 %v9275, %v9284
      %v9287 = vadd.f32 %v9276, %v9284
      %v9288 = vadd.f32 %v9277, %v9284
      %v9289 = vadd.f32 %v9278, %v9284
      %v9290 = vmax.f32 %v9286, 0.0
      %v9291 = vmax.f32 %v9287, 0.0
      %v9292 = vmax.f32 %v9288, 0.0
      %v9293 = vmax.f32 %v9289, 0.0
      %9294 = vst [vmem:[#allocation3 + $0x40] sm:$0xff] %v9290
      %9295 = vst [vmem:[#allocation3 + $0x48] sm:$0xff] %v9291
      %9296 = vst [vmem:[#allocation3 + $0x50] sm:$0xff] %v9292
      %9297 = vst [vmem:[#allocation3 + $0x58] sm:$0xff] %v9293
      %v9298 = vmax.f32 %v9173, %v9174
      %v9299 = vmax.f32 %v9175, %v9176
      %v9300 = vmax.f32 %v9177, %v9178
      %v9301 = vmax.f32 %v9179, %v9180
      %v9302 = vmax.f32 %v9181, %v9182
      %v9303 = vmax.f32 %v9183, %v9184
      %v9304 = vmax.f32 %v9185, %v9186
      %v9305 = vmax.f32 %v9187, %v9188
      %v9306 = vmax.f32 %v9298, %v9302
      %v9307 = vmax.f32 %v9299, %v9303
      %v9308 = vmax.f32 %v9300, %v9304
      %v9309 = vmax.f32 %v9301, %v9305
      %v9310 = vld [vmem:[%s4] sm:$0x1]
      %v9312 = vlaneseq
      %v9313 = vshrl.u32 %v9312, 7
      %v9314 = vsub.s32 0, %v9313
      %v9315 = vrot.slane %v9310, %v9314
      %v9317 = vadd.f32 %v9306, %v9315
      %v9318 = vadd.f32 %v9307, %v9315
      %v9319 = vadd.f32 %v9308, %v9315
      %v9320 = vadd.f32 %v9309, %v9315
      %v9321 = vmax.f32 %v9317, 0.0
      %v9322 = vmax.f32 %v9318, 0.0
      %v9323 = vmax.f32 %v9319, 0.0
      %v9324 = vmax.f32 %v9320, 0.0
      %9325 = vst [vmem:[#allocation3 + $0x60] sm:$0xff] %v9321
      %9326 = vst [vmem:[#allocation3 + $0x68] sm:$0xff] %v9322
      %9327 = vst [vmem:[#allocation3 + $0x70] sm:$0xff] %v9323
      %9328 = vst [vmem:[#allocation3 + $0x78] sm:$0xff] %v9324
      %v9329 = vmax.f32 %v9189, %v9190
      %v9330 = vmax.f32 %v9191, %v9192
      %v9331 = vmax.f32 %v9193, %v9194
      %v9332 = vmax.f32 %v9195, %v9196
      %v9333 = vmax.f32 %v9197, %v9198
      %v9334 = vmax.f32 %v9199, %v9200
      %v9335 = vmax.f32 %v9201, %v9202
      %v9336 = vmax.f32 %v9203, %v9204
      %v9337 = vmax.f32 %v9329, %v9333
      %v9338 = vmax.f32 %v9330, %v9334
      %v9339 = vmax.f32 %v9331, %v9335
      %v9340 = vmax.f32 %v9332, %v9336
      %v9341 = vld [vmem:[%s4] sm:$0x1]
      %v9343 = vlaneseq
      %v9344 = vshrl.u32 %v9343, 7
      %v9345 = vsub.s32 0, %v9344
      %v9346 = vrot.slane %v9341, %v9345
      %v9348 = vadd.f32 %v9337, %v9346
      %v9349 = vadd.f32 %v9338, %v9346
      %v9350 = vadd.f32 %v9339, %v9346
      %v9351 = vadd.f32 %v9340, %v9346
      %v9352 = vmax.f32 %v9348, 0.0
      %v9353 = vmax.f32 %v9349, 0.0
      %v9354 = vmax.f32 %v9350, 0.0
      %v9355 = vmax.f32 %v9351, 0.0
      %9356 = vst [vmem:[#allocation3 + $0x80] sm:$0xff] %v9352
      %9357 = vst [vmem:[#allocation3 + $0x88] sm:$0xff] %v9353
      %9358 = vst [vmem:[#allocation3 + $0x90] sm:$0xff] %v9354
      %9359 = vst [vmem:[#allocation3 + $0x98] sm:$0xff] %v9355
      %v9360 = vld [vmem:[#allocation3] sm:$0xff]
      %v9361 = vld [vmem:[#allocation3 + $0x8] sm:$0xff]
      %v9362 = vld [vmem:[#allocation3 + $0x10] sm:$0xff]
      %v9363 = vld [vmem:[#allocation3 + $0x18] sm:$0xff]
      %v9364 = vld [vmem:[%s5] sm:$0xff]
      %v9365 = vld [vmem:[%s5 + $0x8] sm:$0xff]
      %v9366 = vld [vmem:[%s5 + $0x10] sm:$0xff]
      %v9367 = vld [vmem:[%s5 + $0x18] sm:$0xff]
      %v9368 = vld [vmem:[%s5 + $0x20] sm:$0xff]
      %v9369 = vld [vmem:[%s5 + $0x28] sm:$0xff]
      %v9370 = vld [vmem:[%s5 + $0x30] sm:$0xff]
      %v9371 = vld [vmem:[%s5 + $0x38] sm:$0xff]
      %v9372 = vld [vmem:[%s5 + $0x40] sm:$0xff]
      %v9373 = vld [vmem:[%s5 + $0x48] sm:$0xff]
      %v9374 = vld [vmem:[%s5 + $0x50] sm:$0xff]
      %v9375 = vld [vmem:[%s5 + $0x58] sm:$0xff]
      %v9376 = vld [vmem:[%s5 + $0x60] sm:$0xff]
      %v9377 = vld [vmem:[%s5 + $0x68] sm:$0xff]
      %v9378 = vld [vmem:[%s5 + $0x70] sm:$0xff]
      %v9379 = vld [vmem:[%s5 + $0x78] sm:$0xff]
      %v9380 = vld [vmem:[#allocation3 + $0x20] sm:$0xff]
      %v9381 = vld [vmem:[#allocation3 + $0x28] sm:$0xff]
      %v9382 = vld [vmem:[#allocation3 + $0x30] sm:$0xff]
      %v9383 = vld [vmem:[#allocation3 + $0x38] sm:$0xff]
      %s9384 = scalar_lea.vmem %s5, 128
      %v9385 = vld [vmem:[%s9384] sm:$0xff]
      %v9386 = vld [vmem:[%s9384 + $0x8] sm:$0xff]
      %v9387 = vld [vmem:[%s9384 + $0x10] sm:$0xff]
      %v9388 = vld [vmem:[%s9384 + $0x18] sm:$0xff]
      %v9389 = vld [vmem:[%s9384 + $0x20] sm:$0xff]
      %v9390 = vld [vmem:[%s9384 + $0x28] sm:$0xff]
      %v9391 = vld [vmem:[%s9384 + $0x30] sm:$0xff]
      %v9392 = vld [vmem:[%s9384 + $0x38] sm:$0xff]
      %v9393 = vld [vmem:[%s9384 + $0x40] sm:$0xff]
      %v9394 = vld [vmem:[%s9384 + $0x48] sm:$0xff]
      %v9395 = vld [vmem:[%s9384 + $0x50] sm:$0xff]
      %v9396 = vld [vmem:[%s9384 + $0x58] sm:$0xff]
      %v9397 = vld [vmem:[%s9384 + $0x60] sm:$0xff]
      %v9398 = vld [vmem:[%s9384 + $0x68] sm:$0xff]
      %v9399 = vld [vmem:[%s9384 + $0x70] sm:$0xff]
      %v9400 = vld [vmem:[%s9384 + $0x78] sm:$0xff]
      %9401 = vmatprep.subr.mxu0 0.0
      %9402 = vmatpush1.msra.mxu0 %v9385
      %9403 = vmatprep.subr.mxu0 0.0
      %9404 = vmatpush1.msra.mxu0 %v9386
      %9405 = vmatprep.subr.mxu0 0.0
      %9406 = vmatpush1.msra.mxu0 %v9387
      %9407 = vmatprep.subr.mxu0 0.0
      %9408 = vmatpush1.msra.mxu0 %v9388
      %9409 = vmatprep.subr.mxu0 0.0
      %9410 = vmatpush1.msra.mxu0 %v9389
      %9411 = vmatprep.subr.mxu0 0.0
      %9412 = vmatpush1.msra.mxu0 %v9390
      %9413 = vmatprep.subr.mxu0 0.0
      %9414 = vmatpush1.msra.mxu0 %v9391
      %9415 = vmatprep.subr.mxu0 0.0
      %9416 = vmatpush1.msra.mxu0 %v9392
      %9417 = vmatprep.subr.mxu0 0.0
      %9418 = vmatpush1.msra.mxu0 %v9393
      %9419 = vmatprep.subr.mxu0 0.0
      %9420 = vmatpush1.msra.mxu0 %v9394
      %9421 = vmatprep.subr.mxu0 0.0
      %9422 = vmatpush1.msra.mxu0 %v9395
      %9423 = vmatprep.subr.mxu0 0.0
      %9424 = vmatpush1.msra.mxu0 %v9396
      %9425 = vmatprep.subr.mxu0 0.0
      %9426 = vmatpush1.msra.mxu0 %v9397
      %9427 = vmatprep.subr.mxu0 0.0
      %9428 = vmatpush1.msra.mxu0 %v9398
      %9429 = vmatprep.subr.mxu0 0.0
      %9430 = vmatpush1.msra.mxu0 %v9399
      %9431 = vmatprep.subr.mxu0 0.0
      %9432 = vmatpush1.msra.mxu0 %v9400
      %9433 = vmatprep.subr.mxu0 0.0
      %9434 = vmatpush1.msra.mxu0 0.0
      %9435 = vmatprep.subr.mxu0 0.0
      %9436 = vmatpush1.msra.mxu0 0.0
      %9437 = vmatprep.subr.mxu0 0.0
      %9438 = vmatpush1.msra.mxu0 0.0
      %9439 = vmatprep.subr.mxu0 0.0
      %9440 = vmatpush1.msra.mxu0 0.0
      %9441 = vmatprep.subr.mxu0 0.0
      %9442 = vmatpush1.msra.mxu0 0.0
      %9443 = vmatprep.subr.mxu0 0.0
      %9444 = vmatpush1.msra.mxu0 0.0
      %9445 = vmatprep.subr.mxu0 0.0
      %9446 = vmatpush1.msra.mxu0 0.0
      %9447 = vmatprep.subr.mxu0 0.0
      %9448 = vmatpush1.msra.mxu0 0.0
      %9449 = vmatprep.subr.mxu0 0.0
      %9450 = vmatpush1.msra.mxu0 0.0
      %9451 = vmatprep.subr.mxu0 0.0
      %9452 = vmatpush1.msra.mxu0 0.0
      %9453 = vmatprep.subr.mxu0 0.0
      %9454 = vmatpush1.msra.mxu0 0.0
      %9455 = vmatprep.subr.mxu0 0.0
      %9456 = vmatpush1.msra.mxu0 0.0
      %9457 = vmatprep.subr.mxu0 0.0
      %9458 = vmatpush1.msra.mxu0 0.0
      %9459 = vmatprep.subr.mxu0 0.0
      %9460 = vmatpush1.msra.mxu0 0.0
      %9461 = vmatprep.subr.mxu0 0.0
      %9462 = vmatpush1.msra.mxu0 0.0
      %9463 = vmatprep.subr.mxu0 0.0
      %9464 = vmatpush1.msra.mxu0 0.0
      %9465 = vmatprep.mubr.f32.mxu0 0.0
      %9466 = vmatmul.mubr.f32.gmra.mrb[0].mxu0 %v9380
      %v9467 = vpop.f32.mrb[0].mxu0
      %v9468 = vadd.f32 0.0, %v9467
      %v9469 = vpop.f32.mrb[0].mxu0
      %9470 = vmatprep.mubr.f32.mxu0 0.0
      %9471 = vmatmul.mubr.f32.gmra.mrb[0].mxu0 %v9381
      %v9472 = vpop.f32.mrb[0].mxu0
      %v9473 = vadd.f32 0.0, %v9472
      %v9474 = vpop.f32.mrb[0].mxu0
      %9475 = vmatprep.mubr.f32.mxu0 0.0
      %9476 = vmatmul.mubr.f32.gmra.mrb[0].mxu0 %v9382
      %v9477 = vpop.f32.mrb[0].mxu0
      %v9478 = vadd.f32 0.0, %v9477
      %v9479 = vpop.f32.mrb[0].mxu0
      %9480 = vmatprep.mubr.f32.mxu0 0.0
      %9481 = vmatmul.mubr.f32.gmra.mrb[0].mxu0 %v9383
      %v9482 = vpop.f32.mrb[0].mxu0
      %v9483 = vadd.f32 0.0, %v9482
      %v9484 = vpop.f32.mrb[0].mxu0
      %9485 = vdwg.mxu0
      %9486 = vmatprep.subr.mxu0 0.0
      %9487 = vmatpush1.msra.mxu0 %v9364
      %9488 = vmatprep.subr.mxu0 0.0
      %9489 = vmatpush1.msra.mxu0 %v9365
      %9490 = vmatprep.subr.mxu0 0.0
      %9491 = vmatpush1.msra.mxu0 %v9366
      %9492 = vmatprep.subr.mxu0 0.0
      %9493 = vmatpush1.msra.mxu0 %v9367
      %9494 = vmatprep.subr.mxu0 0.0
      %9495 = vmatpush1.msra.mxu0 %v9368
      %9496 = vmatprep.subr.mxu0 0.0
      %9497 = vmatpush1.msra.mxu0 %v9369
      %9498 = vmatprep.subr.mxu0 0.0
      %9499 = vmatpush1.msra.mxu0 %v9370
      %9500 = vmatprep.subr.mxu0 0.0
      %9501 = vmatpush1.msra.mxu0 %v9371
      %9502 = vmatprep.subr.mxu0 0.0
      %9503 = vmatpush1.msra.mxu0 %v9372
      %9504 = vmatprep.subr.mxu0 0.0
      %9505 = vmatpush1.msra.mxu0 %v9373
      %9506 = vmatprep.subr.mxu0 0.0
      %9507 = vmatpush1.msra.mxu0 %v9374
      %9508 = vmatprep.subr.mxu0 0.0
      %9509 = vmatpush1.msra.mxu0 %v9375
      %9510 = vmatprep.subr.mxu0 0.0
      %9511 = vmatpush1.msra.mxu0 %v9376
      %9512 = vmatprep.subr.mxu0 0.0
      %9513 = vmatpush1.msra.mxu0 %v9377
      %9514 = vmatprep.subr.mxu0 0.0
      %9515 = vmatpush1.msra.mxu0 %v9378
      %9516 = vmatprep.subr.mxu0 0.0
      %9517 = vmatpush1.msra.mxu0 %v9379
      %9518 = vmatprep.subr.mxu0 0.0
      %9519 = vmatpush1.msra.mxu0 0.0
      %9520 = vmatprep.subr.mxu0 0.0
      %9521 = vmatpush1.msra.mxu0 0.0
      %9522 = vmatprep.subr.mxu0 0.0
      %9523 = vmatpush1.msra.mxu0 0.0
      %9524 = vmatprep.subr.mxu0 0.0
      %9525 = vmatpush1.msra.mxu0 0.0
      %9526 = vmatprep.subr.mxu0 0.0
      %9527 = vmatpush1.msra.mxu0 0.0
      %9528 = vmatprep.subr.mxu0 0.0
      %9529 = vmatpush1.msra.mxu0 0.0
      %9530 = vmatprep.subr.mxu0 0.0
      %9531 = vmatpush1.msra.mxu0 0.0
      %9532 = vmatprep.subr.mxu0 0.0
      %9533 = vmatpush1.msra.mxu0 0.0
      %9534 = vmatprep.subr.mxu0 0.0
      %9535 = vmatpush1.msra.mxu0 0.0
      %9536 = vmatprep.subr.mxu0 0.0
      %9537 = vmatpush1.msra.mxu0 0.0
      %9538 = vmatprep.subr.mxu0 0.0
      %9539 = vmatpush1.msra.mxu0 0.0
      %9540 = vmatprep.subr.mxu0 0.0
      %9541 = vmatpush1.msra.mxu0 0.0
      %9542 = vmatprep.subr.mxu0 0.0
      %9543 = vmatpush1.msra.mxu0 0.0
      %9544 = vmatprep.subr.mxu0 0.0
      %9545 = vmatpush1.msra.mxu0 0.0
      %9546 = vmatprep.subr.mxu0 0.0
      %9547 = vmatpush1.msra.mxu0 0.0
      %9548 = vmatprep.subr.mxu0 0.0
      %9549 = vmatpush1.msra.mxu0 0.0
      %9550 = vmatprep.mubr.f32.mxu0 0.0
      %9551 = vmatmul.mubr.f32.gmra.mrb[0].mxu0 %v9360
      %v9552 = vpop.f32.mrb[0].mxu0
      %v9553 = vadd.f32 %v9468, %v9552
      %v9554 = vpop.f32.mrb[0].mxu0
      %9555 = vmatprep.mubr.f32.mxu0 0.0
      %9556 = vmatmul.mubr.f32.gmra.mrb[0].mxu0 %v9361
      %v9557 = vpop.f32.mrb[0].mxu0
      %v9558 = vadd.f32 %v9473, %v9557
      %v9559 = vpop.f32.mrb[0].mxu0
      %9560 = vmatprep.mubr.f32.mxu0 0.0
      %9561 = vmatmul.mubr.f32.gmra.mrb[0].mxu0 %v9362
      %v9562 = vpop.f32.mrb[0].mxu0
      %v9563 = vadd.f32 %v9478, %v9562
      %v9564 = vpop.f32.mrb[0].mxu0
      %9565 = vmatprep.mubr.f32.mxu0 0.0
      %9566 = vmatmul.mubr.f32.gmra.mrb[0].mxu0 %v9363
      %v9567 = vpop.f32.mrb[0].mxu0
      %v9568 = vadd.f32 %v9483, %v9567
      %v9569 = vpop.f32.mrb[0].mxu0
      %9570 = vdwg.mxu0
      %v9571 = vld [vmem:[#allocation3 + $0x40] sm:$0xff]
      %v9572 = vld [vmem:[#allocation3 + $0x48] sm:$0xff]
      %v9573 = vld [vmem:[#allocation3 + $0x50] sm:$0xff]
      %v9574 = vld [vmem:[#allocation3 + $0x58] sm:$0xff]
      %s9575 = scalar_lea.vmem %s5, 256
      %v9576 = vld [vmem:[%s9575] sm:$0xff]
      %v9577 = vld [vmem:[%s9575 + $0x8] sm:$0xff]
      %v9578 = vld [vmem:[%s9575 + $0x10] sm:$0xff]
      %v9579 = vld [vmem:[%s9575 + $0x18] sm:$0xff]
      %v9580 = vld [vmem:[%s9575 + $0x20] sm:$0xff]
      %v9581 = vld [vmem:[%s9575 + $0x28] sm:$0xff]
      %v9582 = vld [vmem:[%s9575 + $0x30] sm:$0xff]
      %v9583 = vld [vmem:[%s9575 + $0x38] sm:$0xff]
      %v9584 = vld [vmem:[%s9575 + $0x40] sm:$0xff]
      %v9585 = vld [vmem:[%s9575 + $0x48] sm:$0xff]
      %v9586 = vld [vmem:[%s9575 + $0x50] sm:$0xff]
      %v9587 = vld [vmem:[%s9575 + $0x58] sm:$0xff]
      %v9588 = vld [vmem:[%s9575 + $0x60] sm:$0xff]
      %v9589 = vld [vmem:[%s9575 + $0x68] sm:$0xff]
      %v9590 = vld [vmem:[%s9575 + $0x70] sm:$0xff]
      %v9591 = vld [vmem:[%s9575 + $0x78] sm:$0xff]
      %9592 = vmatprep.subr.mxu0 0.0
      %9593 = vmatpush1.msra.mxu0 %v9576
      %9594 = vmatprep.subr.mxu0 0.0
      %9595 = vmatpush1.msra.mxu0 %v9577
      %9596 = vmatprep.subr.mxu0 0.0
      %9597 = vmatpush1.msra.mxu0 %v9578
      %9598 = vmatprep.subr.mxu0 0.0
      %9599 = vmatpush1.msra.mxu0 %v9579
      %9600 = vmatprep.subr.mxu0 0.0
      %9601 = vmatpush1.msra.mxu0 %v9580
      %9602 = vmatprep.subr.mxu0 0.0
      %9603 = vmatpush1.msra.mxu0 %v9581
      %9604 = vmatprep.subr.mxu0 0.0
      %9605 = vmatpush1.msra.mxu0 %v9582
      %9606 = vmatprep.subr.mxu0 0.0
      %9607 = vmatpush1.msra.mxu0 %v9583
      %9608 = vmatprep.subr.mxu0 0.0
      %9609 = vmatpush1.msra.mxu0 %v9584
      %9610 = vmatprep.subr.mxu0 0.0
      %9611 = vmatpush1.msra.mxu0 %v9585
      %9612 = vmatprep.subr.mxu0 0.0
      %9613 = vmatpush1.msra.mxu0 %v9586
      %9614 = vmatprep.subr.mxu0 0.0
      %9615 = vmatpush1.msra.mxu0 %v9587
      %9616 = vmatprep.subr.mxu0 0.0
      %9617 = vmatpush1.msra.mxu0 %v9588
      %9618 = vmatprep.subr.mxu0 0.0
      %9619 = vmatpush1.msra.mxu0 %v9589
      %9620 = vmatprep.subr.mxu0 0.0
      %9621 = vmatpush1.msra.mxu0 %v9590
      %9622 = vmatprep.subr.mxu0 0.0
      %9623 = vmatpush1.msra.mxu0 %v9591
      %9624 = vmatprep.subr.mxu0 0.0
      %9625 = vmatpush1.msra.mxu0 0.0
      %9626 = vmatprep.subr.mxu0 0.0
      %9627 = vmatpush1.msra.mxu0 0.0
      %9628 = vmatprep.subr.mxu0 0.0
      %9629 = vmatpush1.msra.mxu0 0.0
      %9630 = vmatprep.subr.mxu0 0.0
      %9631 = vmatpush1.msra.mxu0 0.0
      %9632 = vmatprep.subr.mxu0 0.0
      %9633 = vmatpush1.msra.mxu0 0.0
      %9634 = vmatprep.subr.mxu0 0.0
      %9635 = vmatpush1.msra.mxu0 0.0
      %9636 = vmatprep.subr.mxu0 0.0
      %9637 = vmatpush1.msra.mxu0 0.0
      %9638 = vmatprep.subr.mxu0 0.0
      %9639 = vmatpush1.msra.mxu0 0.0
      %9640 = vmatprep.subr.mxu0 0.0
      %9641 = vmatpush1.msra.mxu0 0.0
      %9642 = vmatprep.subr.mxu0 0.0
      %9643 = vmatpush1.msra.mxu0 0.0
      %9644 = vmatprep.subr.mxu0 0.0
      %9645 = vmatpush1.msra.mxu0 0.0
      %9646 = vmatprep.subr.mxu0 0.0
      %9647 = vmatpush1.msra.mxu0 0.0
      %9648 = vmatprep.subr.mxu0 0.0
      %9649 = vmatpush1.msra.mxu0 0.0
      %9650 = vmatprep.subr.mxu0 0.0
      %9651 = vmatpush1.msra.mxu0 0.0
      %9652 = vmatprep.subr.mxu0 0.0
      %9653 = vmatpush1.msra.mxu0 0.0
      %9654 = vmatprep.subr.mxu0 0.0
      %9655 = vmatpush1.msra.mxu0 0.0
      %9656 = vmatprep.mubr.f32.mxu0 0.0
      %9657 = vmatmul.mubr.f32.gmra.mrb[0].mxu0 %v9571
      %v9658 = vpop.f32.mrb[0].mxu0
      %v9659 = vadd.f32 0.0, %v9658
      %v9660 = vpop.f32.mrb[0].mxu0
      %9661 = vmatprep.mubr.f32.mxu0 0.0
      %9662 = vmatmul.mubr.f32.gmra.mrb[0].mxu0 %v9572
      %v9663 = vpop.f32.mrb[0].mxu0
      %v9664 = vadd.f32 0.0, %v9663
      %v9665 = vpop.f32.mrb[0].mxu0
      %9666 = vmatprep.mubr.f32.mxu0 0.0
      %9667 = vmatmul.mubr.f32.gmra.mrb[0].mxu0 %v9573
      %v9668 = vpop.f32.mrb[0].mxu0
      %v9669 = vadd.f32 0.0, %v9668
      %v9670 = vpop.f32.mrb[0].mxu0
      %9671 = vmatprep.mubr.f32.mxu0 0.0
      %9672 = vmatmul.mubr.f32.gmra.mrb[0].mxu0 %v9574
      %v9673 = vpop.f32.mrb[0].mxu0
      %v9674 = vadd.f32 0.0, %v9673
      %v9675 = vpop.f32.mrb[0].mxu0
      %9676 = vdwg.mxu0
      %v9677 = vadd.f32 %v9553, %v9659
      %v9678 = vadd.f32 %v9558, %v9664
      %v9679 = vadd.f32 %v9563, %v9669
      %v9680 = vadd.f32 %v9568, %v9674
      %v9681 = vld [vmem:[#allocation3 + $0x60] sm:$0xff]
      %v9682 = vld [vmem:[#allocation3 + $0x68] sm:$0xff]
      %v9683 = vld [vmem:[#allocation3 + $0x70] sm:$0xff]
      %v9684 = vld [vmem:[#allocation3 + $0x78] sm:$0xff]
      %s9685 = scalar_lea.vmem %s5, 384
      %v9686 = vld [vmem:[%s9685] sm:$0xff]
      %v9687 = vld [vmem:[%s9685 + $0x8] sm:$0xff]
      %v9688 = vld [vmem:[%s9685 + $0x10] sm:$0xff]
      %v9689 = vld [vmem:[%s9685 + $0x18] sm:$0xff]
      %v9690 = vld [vmem:[%s9685 + $0x20] sm:$0xff]
      %v9691 = vld [vmem:[%s9685 + $0x28] sm:$0xff]
      %v9692 = vld [vmem:[%s9685 + $0x30] sm:$0xff]
      %v9693 = vld [vmem:[%s9685 + $0x38] sm:$0xff]
      %v9694 = vld [vmem:[%s9685 + $0x40] sm:$0xff]
      %v9695 = vld [vmem:[%s9685 + $0x48] sm:$0xff]
      %v9696 = vld [vmem:[%s9685 + $0x50] sm:$0xff]
      %v9697 = vld [vmem:[%s9685 + $0x58] sm:$0xff]
      %v9698 = vld [vmem:[%s9685 + $0x60] sm:$0xff]
      %v9699 = vld [vmem:[%s9685 + $0x68] sm:$0xff]
      %v9700 = vld [vmem:[%s9685 + $0x70] sm:$0xff]
      %v9701 = vld [vmem:[%s9685 + $0x78] sm:$0xff]
      %9702 = vmatprep.subr.mxu0 0.0
      %9703 = vmatpush1.msra.mxu0 %v9686
      %9704 = vmatprep.subr.mxu0 0.0
      %9705 = vmatpush1.msra.mxu0 %v9687
      %9706 = vmatprep.subr.mxu0 0.0
      %9707 = vmatpush1.msra.mxu0 %v9688
      %9708 = vmatprep.subr.mxu0 0.0
      %9709 = vmatpush1.msra.mxu0 %v9689
      %9710 = vmatprep.subr.mxu0 0.0
      %9711 = vmatpush1.msra.mxu0 %v9690
      %9712 = vmatprep.subr.mxu0 0.0
      %9713 = vmatpush1.msra.mxu0 %v9691
      %9714 = vmatprep.subr.mxu0 0.0
      %9715 = vmatpush1.msra.mxu0 %v9692
      %9716 = vmatprep.subr.mxu0 0.0
      %9717 = vmatpush1.msra.mxu0 %v9693
      %9718 = vmatprep.subr.mxu0 0.0
      %9719 = vmatpush1.msra.mxu0 %v9694
      %9720 = vmatprep.subr.mxu0 0.0
      %9721 = vmatpush1.msra.mxu0 %v9695
      %9722 = vmatprep.subr.mxu0 0.0
      %9723 = vmatpush1.msra.mxu0 %v9696
      %9724 = vmatprep.subr.mxu0 0.0
      %9725 = vmatpush1.msra.mxu0 %v9697
      %9726 = vmatprep.subr.mxu0 0.0
      %9727 = vmatpush1.msra.mxu0 %v9698
      %9728 = vmatprep.subr.mxu0 0.0
      %9729 = vmatpush1.msra.mxu0 %v9699
      %9730 = vmatprep.subr.mxu0 0.0
      %9731 = vmatpush1.msra.mxu0 %v9700
      %9732 = vmatprep.subr.mxu0 0.0
      %9733 = vmatpush1.msra.mxu0 %v9701
      %9734 = vmatprep.subr.mxu0 0.0
      %9735 = vmatpush1.msra.mxu0 0.0
      %9736 = vmatprep.subr.mxu0 0.0
      %9737 = vmatpush1.msra.mxu0 0.0
      %9738 = vmatprep.subr.mxu0 0.0
      %9739 = vmatpush1.msra.mxu0 0.0
      %9740 = vmatprep.subr.mxu0 0.0
      %9741 = vmatpush1.msra.mxu0 0.0
      %9742 = vmatprep.subr.mxu0 0.0
      %9743 = vmatpush1.msra.mxu0 0.0
      %9744 = vmatprep.subr.mxu0 0.0
      %9745 = vmatpush1.msra.mxu0 0.0
      %9746 = vmatprep.subr.mxu0 0.0
      %9747 = vmatpush1.msra.mxu0 0.0
      %9748 = vmatprep.subr.mxu0 0.0
      %9749 = vmatpush1.msra.mxu0 0.0
      %9750 = vmatprep.subr.mxu0 0.0
      %9751 = vmatpush1.msra.mxu0 0.0
      %9752 = vmatprep.subr.mxu0 0.0
      %9753 = vmatpush1.msra.mxu0 0.0
      %9754 = vmatprep.subr.mxu0 0.0
      %9755 = vmatpush1.msra.mxu0 0.0
      %9756 = vmatprep.subr.mxu0 0.0
      %9757 = vmatpush1.msra.mxu0 0.0
      %9758 = vmatprep.subr.mxu0 0.0
      %9759 = vmatpush1.msra.mxu0 0.0
      %9760 = vmatprep.subr.mxu0 0.0
      %9761 = vmatpush1.msra.mxu0 0.0
      %9762 = vmatprep.subr.mxu0 0.0
      %9763 = vmatpush1.msra.mxu0 0.0
      %9764 = vmatprep.subr.mxu0 0.0
      %9765 = vmatpush1.msra.mxu0 0.0
      %9766 = vmatprep.mubr.f32.mxu0 0.0
      %9767 = vmatmul.mubr.f32.gmra.mrb[0].mxu0 %v9681
      %v9768 = vpop.f32.mrb[0].mxu0
      %v9769 = vadd.f32 0.0, %v9768
      %v9770 = vpop.f32.mrb[0].mxu0
      %9771 = vmatprep.mubr.f32.mxu0 0.0
      %9772 = vmatmul.mubr.f32.gmra.mrb[0].mxu0 %v9682
      %v9773 = vpop.f32.mrb[0].mxu0
      %v9774 = vadd.f32 0.0, %v9773
      %v9775 = vpop.f32.mrb[0].mxu0
      %9776 = vmatprep.mubr.f32.mxu0 0.0
      %9777 = vmatmul.mubr.f32.gmra.mrb[0].mxu0 %v9683
      %v9778 = vpop.f32.mrb[0].mxu0
      %v9779 = vadd.f32 0.0, %v9778
      %v9780 = vpop.f32.mrb[0].mxu0
      %9781 = vmatprep.mubr.f32.mxu0 0.0
      %9782 = vmatmul.mubr.f32.gmra.mrb[0].mxu0 %v9684
      %v9783 = vpop.f32.mrb[0].mxu0
      %v9784 = vadd.f32 0.0, %v9783
      %v9785 = vpop.f32.mrb[0].mxu0
      %9786 = vdwg.mxu0
      %v9787 = vadd.f32 %v9677, %v9769
      %v9788 = vadd.f32 %v9678, %v9774
      %v9789 = vadd.f32 %v9679, %v9779
      %v9790 = vadd.f32 %v9680, %v9784
      %v9791 = vld [vmem:[#allocation3 + $0x80] sm:$0xff]
      %v9792 = vld [vmem:[#allocation3 + $0x88] sm:$0xff]
      %v9793 = vld [vmem:[#allocation3 + $0x90] sm:$0xff]
      %v9794 = vld [vmem:[#allocation3 + $0x98] sm:$0xff]
      %s9795 = scalar_lea.vmem %s5, 512
      %v9796 = vld [vmem:[%s9795] sm:$0xff]
      %v9797 = vld [vmem:[%s9795 + $0x8] sm:$0xff]
      %v9798 = vld [vmem:[%s9795 + $0x10] sm:$0xff]
      %v9799 = vld [vmem:[%s9795 + $0x18] sm:$0xff]
      %v9800 = vld [vmem:[%s9795 + $0x20] sm:$0xff]
      %v9801 = vld [vmem:[%s9795 + $0x28] sm:$0xff]
      %v9802 = vld [vmem:[%s9795 + $0x30] sm:$0xff]
      %v9803 = vld [vmem:[%s9795 + $0x38] sm:$0xff]
      %v9804 = vld [vmem:[%s9795 + $0x40] sm:$0xff]
      %v9805 = vld [vmem:[%s9795 + $0x48] sm:$0xff]
      %v9806 = vld [vmem:[%s9795 + $0x50] sm:$0xff]
      %v9807 = vld [vmem:[%s9795 + $0x58] sm:$0xff]
      %v9808 = vld [vmem:[%s9795 + $0x60] sm:$0xff]
      %v9809 = vld [vmem:[%s9795 + $0x68] sm:$0xff]
      %v9810 = vld [vmem:[%s9795 + $0x70] sm:$0xff]
      %v9811 = vld [vmem:[%s9795 + $0x78] sm:$0xff]
      %9812 = vmatprep.subr.mxu0 0.0
      %9813 = vmatpush1.msra.mxu0 %v9796
      %9814 = vmatprep.subr.mxu0 0.0
      %9815 = vmatpush1.msra.mxu0 %v9797
      %9816 = vmatprep.subr.mxu0 0.0
      %9817 = vmatpush1.msra.mxu0 %v9798
      %9818 = vmatprep.subr.mxu0 0.0
      %9819 = vmatpush1.msra.mxu0 %v9799
      %9820 = vmatprep.subr.mxu0 0.0
      %9821 = vmatpush1.msra.mxu0 %v9800
      %9822 = vmatprep.subr.mxu0 0.0
      %9823 = vmatpush1.msra.mxu0 %v9801
      %9824 = vmatprep.subr.mxu0 0.0
      %9825 = vmatpush1.msra.mxu0 %v9802
      %9826 = vmatprep.subr.mxu0 0.0
      %9827 = vmatpush1.msra.mxu0 %v9803
      %9828 = vmatprep.subr.mxu0 0.0
      %9829 = vmatpush1.msra.mxu0 %v9804
      %9830 = vmatprep.subr.mxu0 0.0
      %9831 = vmatpush1.msra.mxu0 %v9805
      %9832 = vmatprep.subr.mxu0 0.0
      %9833 = vmatpush1.msra.mxu0 %v9806
      %9834 = vmatprep.subr.mxu0 0.0
      %9835 = vmatpush1.msra.mxu0 %v9807
      %9836 = vmatprep.subr.mxu0 0.0
      %9837 = vmatpush1.msra.mxu0 %v9808
      %9838 = vmatprep.subr.mxu0 0.0
      %9839 = vmatpush1.msra.mxu0 %v9809
      %9840 = vmatprep.subr.mxu0 0.0
      %9841 = vmatpush1.msra.mxu0 %v9810
      %9842 = vmatprep.subr.mxu0 0.0
      %9843 = vmatpush1.msra.mxu0 %v9811
      %9844 = vmatprep.subr.mxu0 0.0
      %9845 = vmatpush1.msra.mxu0 0.0
      %9846 = vmatprep.subr.mxu0 0.0
      %9847 = vmatpush1.msra.mxu0 0.0
      %9848 = vmatprep.subr.mxu0 0.0
      %9849 = vmatpush1.msra.mxu0 0.0
      %9850 = vmatprep.subr.mxu0 0.0
      %9851 = vmatpush1.msra.mxu0 0.0
      %9852 = vmatprep.subr.mxu0 0.0
      %9853 = vmatpush1.msra.mxu0 0.0
      %9854 = vmatprep.subr.mxu0 0.0
      %9855 = vmatpush1.msra.mxu0 0.0
      %9856 = vmatprep.subr.mxu0 0.0
      %9857 = vmatpush1.msra.mxu0 0.0
      %9858 = vmatprep.subr.mxu0 0.0
      %9859 = vmatpush1.msra.mxu0 0.0
      %9860 = vmatprep.subr.mxu0 0.0
      %9861 = vmatpush1.msra.mxu0 0.0
      %9862 = vmatprep.subr.mxu0 0.0
      %9863 = vmatpush1.msra.mxu0 0.0
      %9864 = vmatprep.subr.mxu0 0.0
      %9865 = vmatpush1.msra.mxu0 0.0
      %9866 = vmatprep.subr.mxu0 0.0
      %9867 = vmatpush1.msra.mxu0 0.0
      %9868 = vmatprep.subr.mxu0 0.0
      %9869 = vmatpush1.msra.mxu0 0.0
      %9870 = vmatprep.subr.mxu0 0.0
      %9871 = vmatpush1.msra.mxu0 0.0
      %9872 = vmatprep.subr.mxu0 0.0
      %9873 = vmatpush1.msra.mxu0 0.0
      %9874 = vmatprep.subr.mxu0 0.0
      %9875 = vmatpush1.msra.mxu0 0.0
      %9876 = vmatprep.mubr.f32.mxu0 0.0
      %9877 = vmatmul.mubr.f32.gmra.mrb[0].mxu0 %v9791
      %v9878 = vpop.f32.mrb[0].mxu0
      %v9879 = vadd.f32 0.0, %v9878
      %v9880 = vpop.f32.mrb[0].mxu0
      %9881 = vmatprep.mubr.f32.mxu0 0.0
      %9882 = vmatmul.mubr.f32.gmra.mrb[0].mxu0 %v9792
      %v9883 = vpop.f32.mrb[0].mxu0
      %v9884 = vadd.f32 0.0, %v9883
      %v9885 = vpop.f32.mrb[0].mxu0
      %9886 = vmatprep.mubr.f32.mxu0 0.0
      %9887 = vmatmul.mubr.f32.gmra.mrb[0].mxu0 %v9793
      %v9888 = vpop.f32.mrb[0].mxu0
      %v9889 = vadd.f32 0.0, %v9888
      %v9890 = vpop.f32.mrb[0].mxu0
      %9891 = vmatprep.mubr.f32.mxu0 0.0
      %9892 = vmatmul.mubr.f32.gmra.mrb[0].mxu0 %v9794
      %v9893 = vpop.f32.mrb[0].mxu0
      %v9894 = vadd.f32 0.0, %v9893
      %v9895 = vpop.f32.mrb[0].mxu0
      %9896 = vdwg.mxu0
      %v9897 = vadd.f32 %v9787, %v9879
      %v9898 = vadd.f32 %v9788, %v9884
      %v9899 = vadd.f32 %v9789, %v9889
      %v9900 = vadd.f32 %v9790, %v9894
      %v9901 = vld [vmem:[%s6] sm:$0x1]
      %v9903 = vlaneseq
      %v9904 = vshrl.u32 %v9903, 7
      %v9905 = vsub.s32 0, %v9904
      %v9906 = vrot.slane %v9901, %v9905
      %v9908 = vadd.f32 %v9897, %v9906
      %v9909 = vadd.f32 %v9898, %v9906
      %v9910 = vadd.f32 %v9899, %v9906
      %v9911 = vadd.f32 %v9900, %v9906
      %v9912 = vmax.f32 %v9908, 0.0
      %v9913 = vmax.f32 %v9909, 0.0
      %v9914 = vmax.f32 %v9910, 0.0
      %v9915 = vmax.f32 %v9911, 0.0
      %v9916 = vld [vmem:[%s7] sm:$0xff]
      %v9917 = vld [vmem:[%s7 + $0x8] sm:$0xff]
      %v9918 = vld [vmem:[%s7 + $0x10] sm:$0xff]
      %v9919 = vld [vmem:[%s7 + $0x18] sm:$0xff]
      %v9920 = vld [vmem:[%s7 + $0x20] sm:$0xff]
      %v9921 = vld [vmem:[%s7 + $0x28] sm:$0xff]
      %v9922 = vld [vmem:[%s7 + $0x30] sm:$0xff]
      %v9923 = vld [vmem:[%s7 + $0x38] sm:$0xff]
      %v9924 = vld [vmem:[%s7 + $0x40] sm:$0xff]
      %v9925 = vld [vmem:[%s7 + $0x48] sm:$0xff]
      %v9926 = vld [vmem:[%s7 + $0x50] sm:$0xff]
      %v9927 = vld [vmem:[%s7 + $0x58] sm:$0xff]
      %v9928 = vld [vmem:[%s7 + $0x60] sm:$0xff]
      %v9929 = vld [vmem:[%s7 + $0x68] sm:$0xff]
      %v9930 = vld [vmem:[%s7 + $0x70] sm:$0xff]
      %v9931 = vld [vmem:[%s8] sm:$0x1]
      %v9933 = vlaneseq
      %v9934 = vshrl.u32 %v9933, 7
      %v9935 = vsub.s32 0, %v9934
      %v9936 = vrot.slane %v9931, %v9935
      %vm9938 = vcmask 982016
      %v9940 = vsel %vm9938, %v9912, 0
      %v9943 = vsel %vm9938, %v9913, 0
      %v9946 = vsel %vm9938, %v9914, 0
      %v9949 = vsel %vm9938, %v9915, 0
      %9951 = vmatprep.subr.mxu0 0.0
      %9952 = vmatpush1.msra.mxu0 %v9916
      %9953 = vmatprep.subr.mxu0 0.0
      %9954 = vmatpush1.msra.mxu0 %v9917
      %9955 = vmatprep.subr.mxu0 0.0
      %9956 = vmatpush1.msra.mxu0 %v9918
      %9957 = vmatprep.subr.mxu0 0.0
      %9958 = vmatpush1.msra.mxu0 %v9919
      %9959 = vmatprep.subr.mxu0 0.0
      %9960 = vmatpush1.msra.mxu0 %v9920
      %9961 = vmatprep.subr.mxu0 0.0
      %9962 = vmatpush1.msra.mxu0 %v9921
      %9963 = vmatprep.subr.mxu0 0.0
      %9964 = vmatpush1.msra.mxu0 %v9922
      %9965 = vmatprep.subr.mxu0 0.0
      %9966 = vmatpush1.msra.mxu0 %v9923
      %9967 = vmatprep.subr.mxu0 0.0
      %9968 = vmatpush1.msra.mxu0 %v9924
      %9969 = vmatprep.subr.mxu0 0.0
      %9970 = vmatpush1.msra.mxu0 %v9925
      %9971 = vmatprep.subr.mxu0 0.0
      %9972 = vmatpush1.msra.mxu0 %v9926
      %9973 = vmatprep.subr.mxu0 0.0
      %9974 = vmatpush1.msra.mxu0 %v9927
      %9975 = vmatprep.subr.mxu0 0.0
      %9976 = vmatpush1.msra.mxu0 %v9928
      %9977 = vmatprep.subr.mxu0 0.0
      %9978 = vmatpush1.msra.mxu0 %v9929
      %9979 = vmatprep.subr.mxu0 0.0
      %9980 = vmatpush1.msra.mxu0 %v9930
      %9981 = vmatprep.subr.mxu0 0.0
      %9982 = vmatpush1.msra.mxu0 0.0
      %9983 = vmatprep.subr.mxu0 0.0
      %9984 = vmatpush1.msra.mxu0 0.0
      %9985 = vmatprep.subr.mxu0 0.0
      %9986 = vmatpush1.msra.mxu0 0.0
      %9987 = vmatprep.subr.mxu0 0.0
      %9988 = vmatpush1.msra.mxu0 0.0
      %9989 = vmatprep.subr.mxu0 0.0
      %9990 = vmatpush1.msra.mxu0 0.0
      %9991 = vmatprep.subr.mxu0 0.0
      %9992 = vmatpush1.msra.mxu0 0.0
      %9993 = vmatprep.subr.mxu0 0.0
      %9994 = vmatpush1.msra.mxu0 0.0
      %9995 = vmatprep.subr.mxu0 0.0
      %9996 = vmatpush1.msra.mxu0 0.0
      %9997 = vmatprep.subr.mxu0 0.0
      %9998 = vmatpush1.msra.mxu0 0.0
      %9999 = vmatprep.subr.mxu0 0.0
      %10000 = vmatpush1.msra.mxu0 0.0
      %10001 = vmatprep.subr.mxu0 0.0
      %10002 = vmatpush1.msra.mxu0 0.0
      %10003 = vmatprep.subr.mxu0 0.0
      %10004 = vmatpush1.msra.mxu0 0.0
      %10005 = vmatprep.subr.mxu0 0.0
      %10006 = vmatpush1.msra.mxu0 0.0
      %10007 = vmatprep.subr.mxu0 0.0
      %10008 = vmatpush1.msra.mxu0 0.0
      %10009 = vmatprep.subr.mxu0 0.0
      %10010 = vmatpush1.msra.mxu0 0.0
      %10011 = vmatprep.subr.mxu0 0.0
      %10012 = vmatpush1.msra.mxu0 0.0
      %10013 = vmatprep.subr.mxu0 0.0
      %10014 = vmatpush1.msra.mxu0 0.0
      %10015 = vmatprep.mubr.f32.mxu0 0.0
      %10016 = vmatmul.mubr.f32.gmra.mrb[0].mxu0 %v9940
      %v10017 = vpop.f32.mrb[0].mxu0
      %v10018 = vadd.f32 %v9936, %v10017
      %v10019 = vpop.f32.mrb[0].mxu0
      %10020 = vmatprep.mubr.f32.mxu0 0.0
      %10021 = vmatmul.mubr.f32.gmra.mrb[0].mxu0 %v9943
      %v10022 = vpop.f32.mrb[0].mxu0
      %v10023 = vadd.f32 %v9936, %v10022
      %v10024 = vpop.f32.mrb[0].mxu0
      %10025 = vmatprep.mubr.f32.mxu0 0.0
      %10026 = vmatmul.mubr.f32.gmra.mrb[0].mxu0 %v9946
      %v10027 = vpop.f32.mrb[0].mxu0
      %v10028 = vadd.f32 %v9936, %v10027
      %v10029 = vpop.f32.mrb[0].mxu0
      %10030 = vmatprep.mubr.f32.mxu0 0.0
      %10031 = vmatmul.mubr.f32.gmra.mrb[0].mxu0 %v9949
      %v10032 = vpop.f32.mrb[0].mxu0
      %v10033 = vadd.f32 %v9936, %v10032
      %v10034 = vpop.f32.mrb[0].mxu0
      %10035 = vdwg.mxu0
      %v10036 = vmax.f32 %v10018, 0.0
      %v10037 = vmax.f32 %v10023, 0.0
      %v10038 = vmax.f32 %v10028, 0.0
      %v10039 = vmax.f32 %v10033, 0.0
      %v10040 = vld [vmem:[%s9] sm:$0xff]
      %v10041 = vld [vmem:[%s9 + $0x8] sm:$0xff]
      %v10042 = vld [vmem:[%s9 + $0x10] sm:$0xff]
      %v10043 = vld [vmem:[%s9 + $0x18] sm:$0xff]
      %v10044 = vld [vmem:[%s9 + $0x20] sm:$0xff]
      %v10045 = vld [vmem:[%s9 + $0x28] sm:$0xff]
      %v10046 = vld [vmem:[%s9 + $0x30] sm:$0xff]
      %v10047 = vld [vmem:[%s9 + $0x38] sm:$0xff]
      %v10048 = vld [vmem:[%s9 + $0x40] sm:$0xff]
      %v10049 = vld [vmem:[%s9 + $0x48] sm:$0xff]
      %v10050 = vld [vmem:[%s9 + $0x50] sm:$0xf]
      %v10051 = vld [vmem:[%s10] sm:$0x1]
      %v10053 = vlaneseq
      %v10054 = vshrl.u32 %v10053, 7
      %v10055 = vsub.s32 0, %v10054
      %v10056 = vrot.slane %v10051, %v10055
      %vm10058 = vcmask 687104
      %v10060 = vsel %vm10058, %v10036, 0
      %v10063 = vsel %vm10058, %v10037, 0
      %v10066 = vsel %vm10058, %v10038, 0
      %v10069 = vsel %vm10058, %v10039, 0
      %vm10071 = vcmask 1043456
      %v10073 = vsel %vm10071, %v10050, 0
      %10075 = vmatprep.subr.mxu0 0.0
      %10076 = vmatpush1.msra.mxu0 %v10040
      %10077 = vmatprep.subr.mxu0 0.0
      %10078 = vmatpush1.msra.mxu0 %v10041
      %10079 = vmatprep.subr.mxu0 0.0
      %10080 = vmatpush1.msra.mxu0 %v10042
      %10081 = vmatprep.subr.mxu0 0.0
      %10082 = vmatpush1.msra.mxu0 %v10043
      %10083 = vmatprep.subr.mxu0 0.0
      %10084 = vmatpush1.msra.mxu0 %v10044
      %10085 = vmatprep.subr.mxu0 0.0
      %10086 = vmatpush1.msra.mxu0 %v10045
      %10087 = vmatprep.subr.mxu0 0.0
      %10088 = vmatpush1.msra.mxu0 %v10046
      %10089 = vmatprep.subr.mxu0 0.0
      %10090 = vmatpush1.msra.mxu0 %v10047
      %10091 = vmatprep.subr.mxu0 0.0
      %10092 = vmatpush1.msra.mxu0 %v10048
      %10093 = vmatprep.subr.mxu0 0.0
      %10094 = vmatpush1.msra.mxu0 %v10049
      %10095 = vmatprep.subr.mxu0 0.0
      %10096 = vmatpush1.msra.mxu0 %v10073
      %10097 = vmatprep.subr.mxu0 0.0
      %10098 = vmatpush1.msra.mxu0 0.0
      %10099 = vmatprep.subr.mxu0 0.0
      %10100 = vmatpush1.msra.mxu0 0.0
      %10101 = vmatprep.subr.mxu0 0.0
      %10102 = vmatpush1.msra.mxu0 0.0
      %10103 = vmatprep.subr.mxu0 0.0
      %10104 = vmatpush1.msra.mxu0 0.0
      %10105 = vmatprep.subr.mxu0 0.0
      %10106 = vmatpush1.msra.mxu0 0.0
      %10107 = vmatprep.subr.mxu0 0.0
      %10108 = vmatpush1.msra.mxu0 0.0
      %10109 = vmatprep.subr.mxu0 0.0
      %10110 = vmatpush1.msra.mxu0 0.0
      %10111 = vmatprep.subr.mxu0 0.0
      %10112 = vmatpush1.msra.mxu0 0.0
      %10113 = vmatprep.subr.mxu0 0.0
      %10114 = vmatpush1.msra.mxu0 0.0
      %10115 = vmatprep.subr.mxu0 0.0
      %10116 = vmatpush1.msra.mxu0 0.0
      %10117 = vmatprep.subr.mxu0 0.0
      %10118 = vmatpush1.msra.mxu0 0.0
      %10119 = vmatprep.subr.mxu0 0.0
      %10120 = vmatpush1.msra.mxu0 0.0
      %10121 = vmatprep.subr.mxu0 0.0
      %10122 = vmatpush1.msra.mxu0 0.0
      %10123 = vmatprep.subr.mxu0 0.0
      %10124 = vmatpush1.msra.mxu0 0.0
      %10125 = vmatprep.subr.mxu0 0.0
      %10126 = vmatpush1.msra.mxu0 0.0
      %10127 = vmatprep.subr.mxu0 0.0
      %10128 = vmatpush1.msra.mxu0 0.0
      %10129 = vmatprep.subr.mxu0 0.0
      %10130 = vmatpush1.msra.mxu0 0.0
      %10131 = vmatprep.subr.mxu0 0.0
      %10132 = vmatpush1.msra.mxu0 0.0
      %10133 = vmatprep.subr.mxu0 0.0
      %10134 = vmatpush1.msra.mxu0 0.0
      %10135 = vmatprep.subr.mxu0 0.0
      %10136 = vmatpush1.msra.mxu0 0.0
      %10137 = vmatprep.subr.mxu0 0.0
      %10138 = vmatpush1.msra.mxu0 0.0
      %10139 = vmatprep.mubr.f32.mxu0 0.0
      %10140 = vmatmul.mubr.f32.gmra.mrb[0].mxu0 %v10060
      %v10141 = vpop.f32.mrb[0].mxu0
      %v10142 = vadd.f32 %v10056, %v10141
      %v10143 = vpop.f32.mrb[0].mxu0
      %10144 = vmatprep.mubr.f32.mxu0 0.0
      %10145 = vmatmul.mubr.f32.gmra.mrb[0].mxu0 %v10063
      %v10146 = vpop.f32.mrb[0].mxu0
      %v10147 = vadd.f32 %v10056, %v10146
      %v10148 = vpop.f32.mrb[0].mxu0
      %10149 = vmatprep.mubr.f32.mxu0 0.0
      %10150 = vmatmul.mubr.f32.gmra.mrb[0].mxu0 %v10066
      %v10151 = vpop.f32.mrb[0].mxu0
      %v10152 = vadd.f32 %v10056, %v10151
      %v10153 = vpop.f32.mrb[0].mxu0
      %10154 = vmatprep.mubr.f32.mxu0 0.0
      %10155 = vmatmul.mubr.f32.gmra.mrb[0].mxu0 %v10069
      %v10156 = vpop.f32.mrb[0].mxu0
      %v10157 = vadd.f32 %v10056, %v10156
      %v10158 = vpop.f32.mrb[0].mxu0
      %10159 = vdwg.mxu0
      %vm10160 = vcmask 80896
      %10161 = vst.msk [vmem:[%s386] sm:$0xff] %vm10160, %v10142
      %10162 = vst.msk [vmem:[%s386 + $0x8] sm:$0xff] %vm10160, %v10147
      %10163 = vst.msk [vmem:[%s386 + $0x10] sm:$0xff] %vm10160, %v10152
      %10164 = vst.msk [vmem:[%s386 + $0x18] sm:$0xff] %vm10160, %v10157
      %s10165 = smul.u32 4, %s22
      %p10166 = scmp.lt.s32.totalorder %s10165, 7
      %s10167 = scalar_select %p10166, %s10165, 7
      %s10168 = smul.addr %s10167, 8
      %s10169 = scalar_lea.vmem %s11, %s10168
      // Predicated region
      $region65: #{cifar_lenet_forward.1} parent=63 // pred_check
        %p10170 = pneg %p276
      $region66: #{cifar_lenet_forward.1} parent=63 // pred_check_branch
        %10172 = sbr.rel (%p10170) target = $region68
      $region67: #{cifar_lenet_forward.1} parent=63 // pred_region
        %s10173 = smul.u32 4, %s22
      $region68: #{cifar_lenet_forward.1} parent=63 // pred_fallthru
        _
    $region64: #{cifar_lenet_forward.1} parent=5 // pred_fallthru
      _
    %p10174 = scmp.le.s32.totalorder 2, %s17
    // Predicated region
    $region69: #{cifar_lenet_forward.1} parent=5 // pred_check
      %p10175 = pneg %p10174
    $region70: #{cifar_lenet_forward.1} parent=5 // pred_check_branch
      %10177 = sbr.rel (%p10175) target = $region72
    $region71: #{cifar_lenet_forward.1} parent=5 // pred_region
      %s10178 = ssub.s32 %s17, 2
      // Predicated region
      $region73: #{cifar_lenet_forward.1} parent=71 // pred_check
        %p10179 = pneg %p282
      $region74: #{cifar_lenet_forward.1} parent=71 // pred_check_branch
        %10181 = sbr.rel (%p10179) target = $region76
      $region75: #{cifar_lenet_forward.1} parent=71 // pred_region
        %s10182 = smul.u32 4, %s23
        %p10183 = scmp.lt.s32.totalorder %s10182, 7
        %s10184 = scalar_select %p10183, %s10182, 7
        %s10185 = smul.addr %s10184, 8
        %s10186 = scalar_lea.vmem %s11, %s10185
      $region76: #{cifar_lenet_forward.1} parent=71 // pred_fallthru
        _
    $region72: #{cifar_lenet_forward.1} parent=5 // pred_fallthru
      _
  $region6: #{cifar_lenet_forward.1} parent=0 // loop_footer
    %s21 = sadd.s32 1, %s17
  $region7: #{cifar_lenet_forward.1} parent=0 // loop_footer_branch
    %16 = sbr.rel target = $region3
  $region8: #{cifar_lenet_forward.1} parent=0 // loop_exit
    _

</llo_original>
